<compile_context>
chip_gen: v7x
topology: tpu7x:2x2x1
jax: 0.10.0
libtpu: 0.0.40
codegen_flags: <defaults>
</compile_context>

<pallas_src>
import jax
import jax.numpy as jnp
from jax.experimental import pallas as pl
from jax.experimental.pallas import tpu as pltpu

LATENT_DIM = 100
LATENT_PAD = 128          # 100 padded up to one full lane tile
HIDDEN_DIM = 256
IMAGE_DIM = 28 * 28       # 784
IMAGE_PAD = 896           # 7 * 128, lane-aligned matmul N for the last layer
BN_EPS = 1e-5
LEAKY_SLOPE = 0.01        # PyTorch nn.LeakyReLU default


def _generator_kernel(
    z_ref,
    w1_ref, g1_ref, be1_ref,
    w2_ref, g2_ref, be2_ref,
    w3_ref, g3_ref, be3_ref,
    w4_ref, g4_ref, be4_ref,
    w5_hbm_ref, b5_ref,
    out_ref,
    w5_vmem, w5_sem,
):
    # Start the w5 HBM->VMEM DMA immediately; it overlaps with the four
    # hidden layers and is waited on right before the final matmul.
    w5_copy = pltpu.make_async_copy(w5_hbm_ref, w5_vmem, w5_sem)
    w5_copy.start()

    def matmul(x, w):
        # bf16 operands on the MXU, f32 accumulation.
        return jnp.dot(x.astype(jnp.bfloat16), w,
                       preferred_element_type=jnp.float32)

    def bn_leaky(h, g_ref, be_ref):
        # Training-mode BatchNorm1d: batch mean + biased batch variance per
        # feature, fused into a single per-feature scale/shift.  All in f32.
        mean = jnp.mean(h, axis=0, keepdims=True)
        c = h - mean
        var = jnp.mean(c * c, axis=0, keepdims=True)
        scale = g_ref[...] * jax.lax.rsqrt(var + BN_EPS)
        shift = be_ref[...] - mean * scale
        h = h * scale + shift
        # LeakyReLU (slope 0.01).
        return jnp.where(h >= 0, h, LEAKY_SLOPE * h)

    # Pre-BN linear biases are omitted: exactly cancelled by the BN mean
    # subtraction (training mode), so semantics are unchanged.
    h = bn_leaky(matmul(z_ref[...], w1_ref[...]), g1_ref, be1_ref)
    h = bn_leaky(matmul(h, w2_ref[...]), g2_ref, be2_ref)
    h = bn_leaky(matmul(h, w3_ref[...]), g3_ref, be3_ref)
    h = bn_leaky(matmul(h, w4_ref[...]), g4_ref, be4_ref)

    w5_copy.wait()
    h = matmul(h, w5_vmem[...])                       # (B, IMAGE_PAD)
    h = h[:, :IMAGE_DIM] + b5_ref[...]                # drop lane padding
    out_ref[...] = jnp.tanh(h).astype(out_ref.dtype)  # bf16 writeback


def generator_forward(z, params):
    """z: (B, LATENT_DIM) f32.  params: flat list matching the kernel signature.

    Returns (B, IMAGE_DIM) bfloat16 (true 784-wide output, no host slice).
    """
    B = z.shape[0]
    # Training-mode BN needs B > 1; keep B a sublane multiple for clean layout.
    assert B > 1 and B % 8 == 0, "batch must be > 1 and a multiple of 8"

    # Zero-pad the latent lane dimension 100 -> 128 (exact: padded weight rows
    # are also zero) and pre-cast to bf16 so the z DMA is half-sized.
    z_pad = jnp.pad(z, ((0, 0), (0, LATENT_PAD - LATENT_DIM))).astype(jnp.bfloat16)

    vmem = pl.BlockSpec(memory_space=pltpu.MemorySpace.VMEM)
    hbm = pl.BlockSpec(memory_space=pl.ANY)   # w5 stays in HBM; manual DMA
    # params layout: 4 x (w, gamma, beta), then w5 (HBM), b5.
    in_specs = [vmem] + [vmem] * 12 + [hbm, vmem]

    return pl.pallas_call(
        _generator_kernel,
        out_shape=jax.ShapeDtypeStruct((B, IMAGE_DIM), jnp.bfloat16),
        in_specs=in_specs,
        out_specs=vmem,
        scratch_shapes=[
            pltpu.VMEM((HIDDEN_DIM, IMAGE_PAD), jnp.bfloat16),  # w5 landing buf
            pltpu.SemaphoreType.DMA(()),
        ],
    )(z_pad, *params)


def init_params(key):
    """Deterministic init mimicking nn.Linear defaults U(-1/sqrt(fan_in), +).

    Weights stored transposed vs. PyTorch, i.e. (in, out), cast to bf16, and
    padded to lane-aligned shapes.  BatchNorm gamma=1, beta=0 (f32).  Pre-BN
    biases b1..b4 are not materialized (exactly cancelled by training-mode BN).
    Final bias b5 is stored unpadded (1, 784) in f32.
    """
    dims = [
        (LATENT_DIM, HIDDEN_DIM),
        (HIDDEN_DIM, HIDDEN_DIM),
        (HIDDEN_DIM, HIDDEN_DIM),
        (HIDDEN_DIM, HIDDEN_DIM),
        (HIDDEN_DIM, IMAGE_DIM),
    ]
    params = []
    keys = jax.random.split(key, 2 * len(dims))
    for i, (fan_in, fan_out) in enumerate(dims):
        bound = 1.0 / (fan_in ** 0.5)
        w = jax.random.uniform(keys[2 * i], (fan_in, fan_out), jnp.float32,
                               -bound, bound)
        b = jax.random.uniform(keys[2 * i + 1], (1, fan_out), jnp.float32,
                               -bound, bound)
        if i == 0:
            # Pad K: 100 -> 128 with zero rows.
            w = jnp.zeros((LATENT_PAD, fan_out), jnp.float32).at[:fan_in, :].set(w)
        if i == 4:
            # Pad N: 784 -> 896 with zero cols (sliced off in-kernel).
            w = jnp.zeros((w.shape[0], IMAGE_PAD), jnp.float32).at[:, :fan_out].set(w)
        params.append(w.astype(jnp.bfloat16))
        if i < 4:
            params.append(jnp.ones((1, fan_out), jnp.float32))    # gamma
            params.append(jnp.zeros((1, fan_out), jnp.float32))   # beta
        else:
            params.append(b)                                      # (1, 784) f32
    return params


def reference_forward(z, params):
    """Pure-JAX reference with identical bf16-weight / f32-accumulate math."""
    B = z.shape[0]
    h = jnp.pad(z, ((0, 0), (0, LATENT_PAD - LATENT_DIM))).astype(jnp.bfloat16)
    idx = 0
    for _ in range(4):
        w, g, be = params[idx], params[idx + 1], params[idx + 2]
        idx += 3
        h = jnp.dot(h.astype(jnp.bfloat16), w, preferred_element_type=jnp.float32)
        mean = jnp.mean(h, axis=0, keepdims=True)
        var = jnp.mean((h - mean) ** 2, axis=0, keepdims=True)
        h = (h - mean) * jax.lax.rsqrt(var + BN_EPS) * g + be
        h = jnp.where(h >= 0, h, LEAKY_SLOPE * h)
    w5, b5 = params[idx], params[idx + 1]
    h = jnp.dot(h.astype(jnp.bfloat16), w5, preferred_element_type=jnp.float32)
    h = h[:, :IMAGE_DIM] + b5
    return jnp.tanh(h)


if __name__ == "__main__":
    key = jax.random.PRNGKey(0)
    k_params, k_z = jax.random.split(key)

    batch = 256  # amortizes the weight DMA and fills the 256-row MXU (v6e/v7x)
    params = init_params(k_params)
    z = jax.random.normal(k_z, (batch, LATENT_DIM), jnp.float32)

    out = generator_forward(z, params)
    out = jax.block_until_ready(out)

    ref = reference_forward(z, params)
    assert out.shape == (batch, IMAGE_DIM)
    assert out.dtype == jnp.bfloat16
    # Kernel output is bf16; compare in f32 with a tolerance covering the
    # bf16 cast of a tanh-bounded output.
    assert jnp.allclose(out.astype(jnp.float32), ref, atol=2e-2, rtol=2e-2), \
        "mismatch vs reference"

    print("KERNEL_OK")
</pallas_src>

<mosaic_0001>
module attributes {stable_mosaic.version = 11 : i64} {
  func.func @_generator_kernel(%arg0: memref<256x128xbf16, #tpu.memory_space<vmem>>, %arg1: memref<128x256xbf16, #tpu.memory_space<vmem>>, %arg2: memref<1x256xf32, #tpu.memory_space<vmem>>, %arg3: memref<1x256xf32, #tpu.memory_space<vmem>>, %arg4: memref<256x256xbf16, #tpu.memory_space<vmem>>, %arg5: memref<1x256xf32, #tpu.memory_space<vmem>>, %arg6: memref<1x256xf32, #tpu.memory_space<vmem>>, %arg7: memref<256x256xbf16, #tpu.memory_space<vmem>>, %arg8: memref<1x256xf32, #tpu.memory_space<vmem>>, %arg9: memref<1x256xf32, #tpu.memory_space<vmem>>, %arg10: memref<256x256xbf16, #tpu.memory_space<vmem>>, %arg11: memref<1x256xf32, #tpu.memory_space<vmem>>, %arg12: memref<1x256xf32, #tpu.memory_space<vmem>>, %arg13: memref<256x896xbf16, #tpu.memory_space<any>>, %arg14: memref<1x784xf32, #tpu.memory_space<vmem>>, %arg15: memref<256x784xbf16, #tpu.memory_space<vmem>>, %arg16: memref<256x896xbf16, #tpu.memory_space<vmem>>, %arg17: memref<!tpu.dma_semaphore, #tpu.memory_space<semaphore_mem>>) attributes {dimension_semantics = [], scalar_prefetch = 0 : i64, scratch_operands = 2 : i64, tpu.core_type = #tpu.core_type<tc>} {
    tpu.enqueue_dma source(%arg13 : memref<256x896xbf16, #tpu.memory_space<any>>) target(%arg16 : memref<256x896xbf16, #tpu.memory_space<vmem>>) target_semaphore(%arg17 : memref<!tpu.dma_semaphore, #tpu.memory_space<semaphore_mem>>)
    %c0 = arith.constant 0 : index
    %c0_0 = arith.constant 0 : index
    %0 = vector.load %arg0[%c0, %c0_0] : memref<256x128xbf16, #tpu.memory_space<vmem>>, vector<256x128xbf16>
    %c0_1 = arith.constant 0 : index
    %c0_2 = arith.constant 0 : index
    %1 = vector.load %arg1[%c0_1, %c0_2] : memref<128x256xbf16, #tpu.memory_space<vmem>>, vector<128x256xbf16>
    %cst = arith.constant dense<0.000000e+00> : vector<256x256xf32>
    %2 = tpu.matmul %0, %1, %cst {dimension_numbers = #tpu.dot_dimension_numbers<[1], [0], [0], [1], [0, 0, 1, 1], [], []>} : vector<256x128xbf16>, vector<128x256xbf16>, vector<256x256xf32> -> vector<256x256xf32>
    %cst_3 = arith.constant dense<0.000000e+00> : vector<256xf32>
    %3 = vector.multi_reduction <add>, %2, %cst_3 [0] : vector<256x256xf32> to vector<256xf32>
    %4 = vector.shape_cast %3 : vector<256xf32> to vector<1x256xf32>
    %cst_4 = arith.constant 2.560000e+02 : f32
    %5 = vector.broadcast %cst_4 : f32 to vector<1x256xf32>
    %6 = arith.divf %4, %5 : vector<1x256xf32>
    %7 = vector.broadcast %6 : vector<1x256xf32> to vector<256x256xf32>
    %8 = arith.subf %2, %7 : vector<256x256xf32>
    %9 = arith.mulf %8, %8 : vector<256x256xf32>
    %cst_5 = arith.constant dense<0.000000e+00> : vector<256xf32>
    %10 = vector.multi_reduction <add>, %9, %cst_5 [0] : vector<256x256xf32> to vector<256xf32>
    %11 = vector.shape_cast %10 : vector<256xf32> to vector<1x256xf32>
    %cst_6 = arith.constant 2.560000e+02 : f32
    %12 = vector.broadcast %cst_6 : f32 to vector<1x256xf32>
    %13 = arith.divf %11, %12 : vector<1x256xf32>
    %c0_7 = arith.constant 0 : index
    %c0_8 = arith.constant 0 : index
    %14 = vector.load %arg2[%c0_7, %c0_8] : memref<1x256xf32, #tpu.memory_space<vmem>>, vector<1x256xf32>
    %cst_9 = arith.constant 9.99999974E-6 : f32
    %15 = vector.broadcast %cst_9 : f32 to vector<1x256xf32>
    %16 = arith.addf %13, %15 : vector<1x256xf32>
    %17 = math.rsqrt %16 : vector<1x256xf32>
    %18 = arith.mulf %14, %17 : vector<1x256xf32>
    %c0_10 = arith.constant 0 : index
    %c0_11 = arith.constant 0 : index
    %19 = vector.load %arg3[%c0_10, %c0_11] : memref<1x256xf32, #tpu.memory_space<vmem>>, vector<1x256xf32>
    %20 = arith.mulf %6, %18 : vector<1x256xf32>
    %21 = arith.subf %19, %20 : vector<1x256xf32>
    %22 = vector.broadcast %18 : vector<1x256xf32> to vector<256x256xf32>
    %23 = arith.mulf %2, %22 : vector<256x256xf32>
    %24 = vector.broadcast %21 : vector<1x256xf32> to vector<256x256xf32>
    %25 = arith.addf %23, %24 : vector<256x256xf32>
    %cst_12 = arith.constant 0.000000e+00 : f32
    %26 = vector.broadcast %cst_12 : f32 to vector<256x256xf32>
    %27 = arith.cmpf oge, %25, %26 : vector<256x256xf32>
    %cst_13 = arith.constant 0.00999999977 : f32
    %28 = vector.broadcast %cst_13 : f32 to vector<256x256xf32>
    %29 = arith.mulf %28, %25 : vector<256x256xf32>
    %30 = arith.select %27, %25, %29 : vector<256x256xi1>, vector<256x256xf32>
    %c0_14 = arith.constant 0 : index
    %c0_15 = arith.constant 0 : index
    %31 = vector.load %arg4[%c0_14, %c0_15] : memref<256x256xbf16, #tpu.memory_space<vmem>>, vector<256x256xbf16>
    %32 = arith.truncf %30 : vector<256x256xf32> to vector<256x256xbf16>
    %cst_16 = arith.constant dense<0.000000e+00> : vector<256x256xf32>
    %33 = tpu.matmul %32, %31, %cst_16 {dimension_numbers = #tpu.dot_dimension_numbers<[1], [0], [0], [1], [0, 0, 1, 1], [], []>} : vector<256x256xbf16>, vector<256x256xbf16>, vector<256x256xf32> -> vector<256x256xf32>
    %cst_17 = arith.constant dense<0.000000e+00> : vector<256xf32>
    %34 = vector.multi_reduction <add>, %33, %cst_17 [0] : vector<256x256xf32> to vector<256xf32>
    %35 = vector.shape_cast %34 : vector<256xf32> to vector<1x256xf32>
    %cst_18 = arith.constant 2.560000e+02 : f32
    %36 = vector.broadcast %cst_18 : f32 to vector<1x256xf32>
    %37 = arith.divf %35, %36 : vector<1x256xf32>
    %38 = vector.broadcast %37 : vector<1x256xf32> to vector<256x256xf32>
    %39 = arith.subf %33, %38 : vector<256x256xf32>
    %40 = arith.mulf %39, %39 : vector<256x256xf32>
    %cst_19 = arith.constant dense<0.000000e+00> : vector<256xf32>
    %41 = vector.multi_reduction <add>, %40, %cst_19 [0] : vector<256x256xf32> to vector<256xf32>
    %42 = vector.shape_cast %41 : vector<256xf32> to vector<1x256xf32>
    %cst_20 = arith.constant 2.560000e+02 : f32
    %43 = vector.broadcast %cst_20 : f32 to vector<1x256xf32>
    %44 = arith.divf %42, %43 : vector<1x256xf32>
    %c0_21 = arith.constant 0 : index
    %c0_22 = arith.constant 0 : index
    %45 = vector.load %arg5[%c0_21, %c0_22] : memref<1x256xf32, #tpu.memory_space<vmem>>, vector<1x256xf32>
    %cst_23 = arith.constant 9.99999974E-6 : f32
    %46 = vector.broadcast %cst_23 : f32 to vector<1x256xf32>
    %47 = arith.addf %44, %46 : vector<1x256xf32>
    %48 = math.rsqrt %47 : vector<1x256xf32>
    %49 = arith.mulf %45, %48 : vector<1x256xf32>
    %c0_24 = arith.constant 0 : index
    %c0_25 = arith.constant 0 : index
    %50 = vector.load %arg6[%c0_24, %c0_25] : memref<1x256xf32, #tpu.memory_space<vmem>>, vector<1x256xf32>
    %51 = arith.mulf %37, %49 : vector<1x256xf32>
    %52 = arith.subf %50, %51 : vector<1x256xf32>
    %53 = vector.broadcast %49 : vector<1x256xf32> to vector<256x256xf32>
    %54 = arith.mulf %33, %53 : vector<256x256xf32>
    %55 = vector.broadcast %52 : vector<1x256xf32> to vector<256x256xf32>
    %56 = arith.addf %54, %55 : vector<256x256xf32>
    %cst_26 = arith.constant 0.000000e+00 : f32
    %57 = vector.broadcast %cst_26 : f32 to vector<256x256xf32>
    %58 = arith.cmpf oge, %56, %57 : vector<256x256xf32>
    %cst_27 = arith.constant 0.00999999977 : f32
    %59 = vector.broadcast %cst_27 : f32 to vector<256x256xf32>
    %60 = arith.mulf %59, %56 : vector<256x256xf32>
    %61 = arith.select %58, %56, %60 : vector<256x256xi1>, vector<256x256xf32>
    %c0_28 = arith.constant 0 : index
    %c0_29 = arith.constant 0 : index
    %62 = vector.load %arg7[%c0_28, %c0_29] : memref<256x256xbf16, #tpu.memory_space<vmem>>, vector<256x256xbf16>
    %63 = arith.truncf %61 : vector<256x256xf32> to vector<256x256xbf16>
    %cst_30 = arith.constant dense<0.000000e+00> : vector<256x256xf32>
    %64 = tpu.matmul %63, %62, %cst_30 {dimension_numbers = #tpu.dot_dimension_numbers<[1], [0], [0], [1], [0, 0, 1, 1], [], []>} : vector<256x256xbf16>, vector<256x256xbf16>, vector<256x256xf32> -> vector<256x256xf32>
    %cst_31 = arith.constant dense<0.000000e+00> : vector<256xf32>
    %65 = vector.multi_reduction <add>, %64, %cst_31 [0] : vector<256x256xf32> to vector<256xf32>
    %66 = vector.shape_cast %65 : vector<256xf32> to vector<1x256xf32>
    %cst_32 = arith.constant 2.560000e+02 : f32
    %67 = vector.broadcast %cst_32 : f32 to vector<1x256xf32>
    %68 = arith.divf %66, %67 : vector<1x256xf32>
    %69 = vector.broadcast %68 : vector<1x256xf32> to vector<256x256xf32>
    %70 = arith.subf %64, %69 : vector<256x256xf32>
    %71 = arith.mulf %70, %70 : vector<256x256xf32>
    %cst_33 = arith.constant dense<0.000000e+00> : vector<256xf32>
    %72 = vector.multi_reduction <add>, %71, %cst_33 [0] : vector<256x256xf32> to vector<256xf32>
    %73 = vector.shape_cast %72 : vector<256xf32> to vector<1x256xf32>
    %cst_34 = arith.constant 2.560000e+02 : f32
    %74 = vector.broadcast %cst_34 : f32 to vector<1x256xf32>
    %75 = arith.divf %73, %74 : vector<1x256xf32>
    %c0_35 = arith.constant 0 : index
    %c0_36 = arith.constant 0 : index
    %76 = vector.load %arg8[%c0_35, %c0_36] : memref<1x256xf32, #tpu.memory_space<vmem>>, vector<1x256xf32>
    %cst_37 = arith.constant 9.99999974E-6 : f32
    %77 = vector.broadcast %cst_37 : f32 to vector<1x256xf32>
    %78 = arith.addf %75, %77 : vector<1x256xf32>
    %79 = math.rsqrt %78 : vector<1x256xf32>
    %80 = arith.mulf %76, %79 : vector<1x256xf32>
    %c0_38 = arith.constant 0 : index
    %c0_39 = arith.constant 0 : index
    %81 = vector.load %arg9[%c0_38, %c0_39] : memref<1x256xf32, #tpu.memory_space<vmem>>, vector<1x256xf32>
    %82 = arith.mulf %68, %80 : vector<1x256xf32>
    %83 = arith.subf %81, %82 : vector<1x256xf32>
    %84 = vector.broadcast %80 : vector<1x256xf32> to vector<256x256xf32>
    %85 = arith.mulf %64, %84 : vector<256x256xf32>
    %86 = vector.broadcast %83 : vector<1x256xf32> to vector<256x256xf32>
    %87 = arith.addf %85, %86 : vector<256x256xf32>
    %cst_40 = arith.constant 0.000000e+00 : f32
    %88 = vector.broadcast %cst_40 : f32 to vector<256x256xf32>
    %89 = arith.cmpf oge, %87, %88 : vector<256x256xf32>
    %cst_41 = arith.constant 0.00999999977 : f32
    %90 = vector.broadcast %cst_41 : f32 to vector<256x256xf32>
    %91 = arith.mulf %90, %87 : vector<256x256xf32>
    %92 = arith.select %89, %87, %91 : vector<256x256xi1>, vector<256x256xf32>
    %c0_42 = arith.constant 0 : index
    %c0_43 = arith.constant 0 : index
    %93 = vector.load %arg10[%c0_42, %c0_43] : memref<256x256xbf16, #tpu.memory_space<vmem>>, vector<256x256xbf16>
    %94 = arith.truncf %92 : vector<256x256xf32> to vector<256x256xbf16>
    %cst_44 = arith.constant dense<0.000000e+00> : vector<256x256xf32>
    %95 = tpu.matmul %94, %93, %cst_44 {dimension_numbers = #tpu.dot_dimension_numbers<[1], [0], [0], [1], [0, 0, 1, 1], [], []>} : vector<256x256xbf16>, vector<256x256xbf16>, vector<256x256xf32> -> vector<256x256xf32>
    %cst_45 = arith.constant dense<0.000000e+00> : vector<256xf32>
    %96 = vector.multi_reduction <add>, %95, %cst_45 [0] : vector<256x256xf32> to vector<256xf32>
    %97 = vector.shape_cast %96 : vector<256xf32> to vector<1x256xf32>
    %cst_46 = arith.constant 2.560000e+02 : f32
    %98 = vector.broadcast %cst_46 : f32 to vector<1x256xf32>
    %99 = arith.divf %97, %98 : vector<1x256xf32>
    %100 = vector.broadcast %99 : vector<1x256xf32> to vector<256x256xf32>
    %101 = arith.subf %95, %100 : vector<256x256xf32>
    %102 = arith.mulf %101, %101 : vector<256x256xf32>
    %cst_47 = arith.constant dense<0.000000e+00> : vector<256xf32>
    %103 = vector.multi_reduction <add>, %102, %cst_47 [0] : vector<256x256xf32> to vector<256xf32>
    %104 = vector.shape_cast %103 : vector<256xf32> to vector<1x256xf32>
    %cst_48 = arith.constant 2.560000e+02 : f32
    %105 = vector.broadcast %cst_48 : f32 to vector<1x256xf32>
    %106 = arith.divf %104, %105 : vector<1x256xf32>
    %c0_49 = arith.constant 0 : index
    %c0_50 = arith.constant 0 : index
    %107 = vector.load %arg11[%c0_49, %c0_50] : memref<1x256xf32, #tpu.memory_space<vmem>>, vector<1x256xf32>
    %cst_51 = arith.constant 9.99999974E-6 : f32
    %108 = vector.broadcast %cst_51 : f32 to vector<1x256xf32>
    %109 = arith.addf %106, %108 : vector<1x256xf32>
    %110 = math.rsqrt %109 : vector<1x256xf32>
    %111 = arith.mulf %107, %110 : vector<1x256xf32>
    %c0_52 = arith.constant 0 : index
    %c0_53 = arith.constant 0 : index
    %112 = vector.load %arg12[%c0_52, %c0_53] : memref<1x256xf32, #tpu.memory_space<vmem>>, vector<1x256xf32>
    %113 = arith.mulf %99, %111 : vector<1x256xf32>
    %114 = arith.subf %112, %113 : vector<1x256xf32>
    %115 = vector.broadcast %111 : vector<1x256xf32> to vector<256x256xf32>
    %116 = arith.mulf %95, %115 : vector<256x256xf32>
    %117 = vector.broadcast %114 : vector<1x256xf32> to vector<256x256xf32>
    %118 = arith.addf %116, %117 : vector<256x256xf32>
    %cst_54 = arith.constant 0.000000e+00 : f32
    %119 = vector.broadcast %cst_54 : f32 to vector<256x256xf32>
    %120 = arith.cmpf oge, %118, %119 : vector<256x256xf32>
    %cst_55 = arith.constant 0.00999999977 : f32
    %121 = vector.broadcast %cst_55 : f32 to vector<256x256xf32>
    %122 = arith.mulf %121, %118 : vector<256x256xf32>
    %123 = arith.select %120, %118, %122 : vector<256x256xi1>, vector<256x256xf32>
    tpu.wait_dma2 semaphore(%arg17 : memref<!tpu.dma_semaphore, #tpu.memory_space<semaphore_mem>>) src(%arg13 : memref<256x896xbf16, #tpu.memory_space<any>>) dst(%arg16 : memref<256x896xbf16, #tpu.memory_space<vmem>>)
    %c0_56 = arith.constant 0 : index
    %c0_57 = arith.constant 0 : index
    %124 = vector.load %arg16[%c0_56, %c0_57] : memref<256x896xbf16, #tpu.memory_space<vmem>>, vector<256x896xbf16>
    %125 = arith.truncf %123 : vector<256x256xf32> to vector<256x256xbf16>
    %cst_58 = arith.constant dense<0.000000e+00> : vector<256x896xf32>
    %126 = tpu.matmul %125, %124, %cst_58 {dimension_numbers = #tpu.dot_dimension_numbers<[1], [0], [0], [1], [0, 0, 1, 1], [], []>} : vector<256x256xbf16>, vector<256x896xbf16>, vector<256x896xf32> -> vector<256x896xf32>
    %127 = vector.extract_strided_slice %126 {offsets = [0, 0], sizes = [256, 784], strides = [1, 1]} : vector<256x896xf32> to vector<256x784xf32>
    %c0_59 = arith.constant 0 : index
    %c0_60 = arith.constant 0 : index
    %128 = vector.load %arg14[%c0_59, %c0_60] : memref<1x784xf32, #tpu.memory_space<vmem>>, vector<1x784xf32>
    %129 = vector.broadcast %128 : vector<1x784xf32> to vector<256x784xf32>
    %130 = arith.addf %127, %129 : vector<256x784xf32>
    %131 = math.tanh %130 : vector<256x784xf32>
    %132 = arith.truncf %131 : vector<256x784xf32> to vector<256x784xbf16>
    %c0_61 = arith.constant 0 : index
    %c0_62 = arith.constant 0 : index
    %133 = vector.load %arg15[%c0_61, %c0_62] : memref<256x784xbf16, #tpu.memory_space<vmem>>, vector<256x784xbf16>
    tpu.vector_store %arg15[%c0_61, %c0_62], %132 {strides = array<i32>} : memref<256x784xbf16, #tpu.memory_space<vmem>>, vector<256x784xbf16>,
    return
  }
}

</mosaic_0001>

<llo_original>
// kernel: tpu_custom_call.1
$region0: #{tpu_custom_call.1}
  #allocation0 [shape = 'u32[]', space=smem, size = 0x4, offset = 0x4, fixed_abs, tag = 'smem constant byte address 0x4 - core index']
  #allocation1 [shape = 'u32[144,128]{1,0:T(1,128)}', space=vmem, size = 0x12000, scoped, tag = 'internal scratch']
  #allocation2 [shape = 'bf16[256,896]{1,0:T(16,128)(2,1)}', space=vmem, size = 0x70000, scoped, tag = 'scratch operand']
  #allocation3 [shape = 's32[1]{0}', space=sflag, size = 0x4, scoped, tag = 'scratch operand']
  #allocation12 [shape = 's32[]', space=sflag, size = 0x4, offset = 0, fixed_abs, tag = 'sflag constant byte address 0x0 - dummy sync flag']
  %s0 = inlined_call_operand.hbm [shape: bf16[256,128], index: 0, kind: input, shape index: {}]
  %s1 = inlined_call_operand.hbm [shape: bf16[128,256], index: 1, kind: input, shape index: {}]
  %s2 = inlined_call_operand.vmem [shape: f32[1,256], index: 2, kind: input, shape index: {}]
  %s3 = inlined_call_operand.vmem [shape: f32[1,256], index: 3, kind: input, shape index: {}]
  %s4 = inlined_call_operand.hbm [shape: bf16[256,256], index: 4, kind: input, shape index: {}]
  %s5 = inlined_call_operand.vmem [shape: f32[1,256], index: 5, kind: input, shape index: {}]
  %s6 = inlined_call_operand.vmem [shape: f32[1,256], index: 6, kind: input, shape index: {}]
  %s7 = inlined_call_operand.hbm [shape: bf16[256,256], index: 7, kind: input, shape index: {}]
  %s8 = inlined_call_operand.vmem [shape: f32[1,256], index: 8, kind: input, shape index: {}]
  %s9 = inlined_call_operand.vmem [shape: f32[1,256], index: 9, kind: input, shape index: {}]
  %s10 = inlined_call_operand.hbm [shape: bf16[256,256], index: 10, kind: input, shape index: {}]
  %s11 = inlined_call_operand.vmem [shape: f32[1,256], index: 11, kind: input, shape index: {}]
  %s12 = inlined_call_operand.vmem [shape: f32[1,256], index: 12, kind: input, shape index: {}]
  %s13 = inlined_call_operand.hbm [shape: bf16[256,896], index: 13, kind: input, shape index: {}]
  %s14 = inlined_call_operand.vmem [shape: f32[1,784], index: 14, kind: input, shape index: {}]
  %s15 = inlined_call_operand.vmem [shape: bf16[256,784], index: 15, kind: output, shape index: {}]
  %s16 = sld [smem:[#allocation0]]
  $region86: #{tpu_custom_call.1} parent=0
    _
  %s18 = ssub.s32 1, %s16
  %s19 = scalar_select 0, %s18, %s16
  $region1: #{tpu_custom_call.1} parent=0
    #allocation4 [shape = 'u8[65536]{0}', space=vmem, size = 0x10000, scoped, tag = 'input window, operand 0, single buffered']
    #allocation5 [shape = 's32[1]{0}', space=sflag, size = 0x4, scoped, tag = 'scoped memory for tpu_custom_call.1']
    #allocation6 [shape = 'u8[65536]{0}', space=vmem, size = 0x10000, scoped, tag = 'input window, operand 1, single buffered']
    #allocation7 [shape = 's32[1]{0}', space=sflag, size = 0x4, scoped, tag = 'scoped memory for tpu_custom_call.1']
    #allocation8 [shape = 'u8[131072]{0}', space=vmem, size = 0x20000, scoped, tag = 'input window, operand 4, single buffered']
    #allocation9 [shape = 'u8[131072]{0}', space=vmem, size = 0x20000, scoped, tag = 'input window, operand 7, single buffered']
    #allocation10 [shape = 's32[1]{0}', space=sflag, size = 0x4, scoped, tag = 'scoped memory for tpu_custom_call.1']
    #allocation11 [shape = 'u8[131072]{0}', space=vmem, size = 0x20000, scoped, tag = 'input window, operand 10, single buffered']
    #allocation13 [shape = 'u32[9]{0}', space=smem, size = 0x24, scoped, tag = 'DMA stride descriptor']
    %20 = vsyncpa [#allocation5], 0
    %21 = vsyncpa [#allocation7], 0
    %22 = vsyncpa [#allocation10], 0
    // Predicated region
    $region2: #{tpu_custom_call.1} parent=1 // pred_check
      _
    $region3: #{tpu_custom_call.1} parent=1 // pred_check_branch
      %24 = sbr.rel (0) target = $region5
    $region4: #{tpu_custom_call.1} parent=1 // pred_region
      %s26 = ssub.s32 2048, 2048
      %27 = vsyncadd [#allocation5], %s26
      %s28 = sshll.u32 [#allocation4], 4
      %s29 = int_to_ptr.vmem [resolvable:$true] %s28
      %34 = dma.hbm_to_vmem [thread:$0]  %s0, 2048, %s29, [#allocation5], 64, 64, 4
    $region5: #{tpu_custom_call.1} parent=1 // pred_fallthru
      _
    // Predicated region
    $region6: #{tpu_custom_call.1} parent=1 // pred_check
      _
    $region7: #{tpu_custom_call.1} parent=1 // pred_check_branch
      %36 = sbr.rel (0) target = $region9
    $region8: #{tpu_custom_call.1} parent=1 // pred_region
      %s38 = ssub.s32 2048, 2048
      %39 = vsyncadd [#allocation7], %s38
      %s40 = sshll.u32 [#allocation6], 4
      %s41 = int_to_ptr.vmem [resolvable:$true] %s40
      %46 = dma.hbm_to_vmem [thread:$0]  %s1, 2048, %s41, [#allocation7], 128, 128, 8
    $region9: #{tpu_custom_call.1} parent=1 // pred_fallthru
      _
    // Predicated region
    $region10: #{tpu_custom_call.1} parent=1 // pred_check
      _
    $region11: #{tpu_custom_call.1} parent=1 // pred_check_branch
      %48 = sbr.rel (0) target = $region13
    $region12: #{tpu_custom_call.1} parent=1 // pred_region
      _
    $region13: #{tpu_custom_call.1} parent=1 // pred_fallthru
      _
    // Predicated region
    $region14: #{tpu_custom_call.1} parent=1 // pred_check
      _
    $region15: #{tpu_custom_call.1} parent=1 // pred_check_branch
      %50 = sbr.rel (0) target = $region17
    $region16: #{tpu_custom_call.1} parent=1 // pred_region
      _
    $region17: #{tpu_custom_call.1} parent=1 // pred_fallthru
      _
    // Predicated region
    $region18: #{tpu_custom_call.1} parent=1 // pred_check
      _
    $region19: #{tpu_custom_call.1} parent=1 // pred_check_branch
      %52 = sbr.rel (0) target = $region21
    $region20: #{tpu_custom_call.1} parent=1 // pred_region
      %s54 = ssub.s32 4096, 4096
      %55 = vsyncadd [#allocation7], %s54
      %s56 = sshll.u32 [#allocation8], 4
      %s57 = int_to_ptr.vmem [resolvable:$true] %s56
      %62 = dma.hbm_to_vmem [thread:$0]  %s4, 4096, %s57, [#allocation7], 128, 128, 8
    $region21: #{tpu_custom_call.1} parent=1 // pred_fallthru
      _
    // Predicated region
    $region22: #{tpu_custom_call.1} parent=1 // pred_check
      _
    $region23: #{tpu_custom_call.1} parent=1 // pred_check_branch
      %64 = sbr.rel (0) target = $region25
    $region24: #{tpu_custom_call.1} parent=1 // pred_region
      _
    $region25: #{tpu_custom_call.1} parent=1 // pred_fallthru
      _
    // Predicated region
    $region26: #{tpu_custom_call.1} parent=1 // pred_check
      _
    $region27: #{tpu_custom_call.1} parent=1 // pred_check_branch
      %66 = sbr.rel (0) target = $region29
    $region28: #{tpu_custom_call.1} parent=1 // pred_region
      _
    $region29: #{tpu_custom_call.1} parent=1 // pred_fallthru
      _
    // Predicated region
    $region30: #{tpu_custom_call.1} parent=1 // pred_check
      _
    $region31: #{tpu_custom_call.1} parent=1 // pred_check_branch
      %68 = sbr.rel (0) target = $region33
    $region32: #{tpu_custom_call.1} parent=1 // pred_region
      %s70 = ssub.s32 4096, 4096
      %71 = vsyncadd [#allocation10], %s70
      %s72 = sshll.u32 [#allocation9], 4
      %s73 = int_to_ptr.vmem [resolvable:$true] %s72
      %78 = dma.hbm_to_vmem [thread:$0]  %s7, 4096, %s73, [#allocation10], 128, 128, 8
    $region33: #{tpu_custom_call.1} parent=1 // pred_fallthru
      _
    // Predicated region
    $region34: #{tpu_custom_call.1} parent=1 // pred_check
      _
    $region35: #{tpu_custom_call.1} parent=1 // pred_check_branch
      %80 = sbr.rel (0) target = $region37
    $region36: #{tpu_custom_call.1} parent=1 // pred_region
      _
    $region37: #{tpu_custom_call.1} parent=1 // pred_fallthru
      _
    // Predicated region
    $region38: #{tpu_custom_call.1} parent=1 // pred_check
      _
    $region39: #{tpu_custom_call.1} parent=1 // pred_check_branch
      %82 = sbr.rel (0) target = $region41
    $region40: #{tpu_custom_call.1} parent=1 // pred_region
      _
    $region41: #{tpu_custom_call.1} parent=1 // pred_fallthru
      _
    // Predicated region
    $region42: #{tpu_custom_call.1} parent=1 // pred_check
      _
    $region43: #{tpu_custom_call.1} parent=1 // pred_check_branch
      %84 = sbr.rel (0) target = $region45
    $region44: #{tpu_custom_call.1} parent=1 // pred_region
      %s86 = ssub.s32 4096, 4096
      %87 = vsyncadd [#allocation10], %s86
      %s88 = sshll.u32 [#allocation11], 4
      %s89 = int_to_ptr.vmem [resolvable:$true] %s88
      %94 = dma.hbm_to_vmem [thread:$0]  %s10, 4096, %s89, [#allocation10], 128, 128, 8
    $region45: #{tpu_custom_call.1} parent=1 // pred_fallthru
      _
    // Predicated region
    $region46: #{tpu_custom_call.1} parent=1 // pred_check
      _
    $region47: #{tpu_custom_call.1} parent=1 // pred_check_branch
      %96 = sbr.rel (0) target = $region49
    $region48: #{tpu_custom_call.1} parent=1 // pred_region
      _
    $region49: #{tpu_custom_call.1} parent=1 // pred_fallthru
      _
    // Predicated region
    $region50: #{tpu_custom_call.1} parent=1 // pred_check
      _
    $region51: #{tpu_custom_call.1} parent=1 // pred_check_branch
      %98 = sbr.rel (0) target = $region53
    $region52: #{tpu_custom_call.1} parent=1 // pred_region
      _
    $region53: #{tpu_custom_call.1} parent=1 // pred_fallthru
      _
    // Predicated region
    $region54: #{tpu_custom_call.1} parent=1 // pred_check
      _
    $region55: #{tpu_custom_call.1} parent=1 // pred_check_branch
      %100 = sbr.rel (0) target = $region57
    $region56: #{tpu_custom_call.1} parent=1 // pred_region
      _
    $region57: #{tpu_custom_call.1} parent=1 // pred_fallthru
      _
    // Predicated region
    $region58: #{tpu_custom_call.1} parent=1 // pred_check
      _
    $region59: #{tpu_custom_call.1} parent=1 // pred_check_branch
      %102 = sbr.rel (0) target = $region61
    $region60: #{tpu_custom_call.1} parent=1 // pred_region
      %103 = dma.done [#allocation5], 2048
    $region61: #{tpu_custom_call.1} parent=1 // pred_fallthru
      _
    // Predicated region
    $region62: #{tpu_custom_call.1} parent=1 // pred_check
      _
    $region63: #{tpu_custom_call.1} parent=1 // pred_check_branch
      %105 = sbr.rel (0) target = $region65
    $region64: #{tpu_custom_call.1} parent=1 // pred_region
      %106 = dma.done [#allocation7], 2048
    $region65: #{tpu_custom_call.1} parent=1 // pred_fallthru
      _
    // Predicated region
    $region66: #{tpu_custom_call.1} parent=1 // pred_check
      _
    $region67: #{tpu_custom_call.1} parent=1 // pred_check_branch
      %108 = sbr.rel (0) target = $region69
    $region68: #{tpu_custom_call.1} parent=1 // pred_region
      %109 = dma.done [#allocation7], 4096
    $region69: #{tpu_custom_call.1} parent=1 // pred_fallthru
      _
    // Predicated region
    $region70: #{tpu_custom_call.1} parent=1 // pred_check
      _
    $region71: #{tpu_custom_call.1} parent=1 // pred_check_branch
      %111 = sbr.rel (0) target = $region73
    $region72: #{tpu_custom_call.1} parent=1 // pred_region
      %112 = dma.done [#allocation10], 4096
    $region73: #{tpu_custom_call.1} parent=1 // pred_fallthru
      _
    // Predicated region
    $region74: #{tpu_custom_call.1} parent=1 // pred_check
      _
    $region75: #{tpu_custom_call.1} parent=1 // pred_check_branch
      %114 = sbr.rel (0) target = $region77
    $region76: #{tpu_custom_call.1} parent=1 // pred_region
      %115 = dma.done [#allocation10], 4096
    $region77: #{tpu_custom_call.1} parent=1 // pred_fallthru
      _
    %s118 = sshll.u32 1, 14
    %s119 = sxor.u32 4294967295, %s118
    %s121 = sld [smem:[#allocation0]]
    %s122 = sadd.s32 2, %s121
    %s124 = sshll.u32 7, 26
    %s125 = sxor.u32 4294967295, %s124
    %s126 = sand.u32 0, %s125
    %s127 = sshll.u32 %s122, 26
    %s128 = sor.u32 %s126, %s127
    %s129 = sshll.u32 [#allocation2], 4
    %s130 = int_to_ptr.vmem [resolvable:$true] %s129
    %133 = sst [smem:[#allocation13]] 896
    %s134 = scalar_lea.smem [#allocation13], 1
    %135 = sst [smem:[%s134]] 896
    %s136 = scalar_lea.smem [#allocation13], 2
    %137 = sst [smem:[%s136]] 7
    %s138 = scalar_lea.smem [#allocation13], 3
    %139 = sst [smem:[%s138]] 64
    %s140 = scalar_lea.smem [#allocation13], 4
    %141 = sst [smem:[%s140]] 128
    %s142 = scalar_lea.smem [#allocation13], 5
    %143 = sst [smem:[%s142]] 2
    %s144 = scalar_lea.smem [#allocation13], 6
    %145 = sst [smem:[%s144]] 448
    %s146 = scalar_lea.smem [#allocation13], 7
    %147 = sst [smem:[%s146]] 64
    %s148 = scalar_lea.smem [#allocation13], 8
    %149 = sst [smem:[%s148]] 4
    %151 = dma.general %s13, 14336, %s130, [#allocation3], [#allocation12], [#allocation13], %s128, 0
    %v152 = vld [vmem:[#allocation4] sm:$0xf]
    %v153 = vld [vmem:[#allocation4 + $0x4] sm:$0xf]
    %v154 = vld [vmem:[#allocation4 + $0x8] sm:$0xf]
    %v155 = vld [vmem:[#allocation4 + $0xc] sm:$0xf]
    %v156 = vld [vmem:[#allocation4 + $0x10] sm:$0xf]
    %v157 = vld [vmem:[#allocation4 + $0x14] sm:$0xf]
    %v158 = vld [vmem:[#allocation4 + $0x18] sm:$0xf]
    %v159 = vld [vmem:[#allocation4 + $0x1c] sm:$0xf]
    %v160 = vld [vmem:[#allocation4 + $0x20] sm:$0xf]
    %v161 = vld [vmem:[#allocation4 + $0x24] sm:$0xf]
    %v162 = vld [vmem:[#allocation4 + $0x28] sm:$0xf]
    %v163 = vld [vmem:[#allocation4 + $0x2c] sm:$0xf]
    %v164 = vld [vmem:[#allocation4 + $0x30] sm:$0xf]
    %v165 = vld [vmem:[#allocation4 + $0x34] sm:$0xf]
    %v166 = vld [vmem:[#allocation4 + $0x38] sm:$0xf]
    %v167 = vld [vmem:[#allocation4 + $0x3c] sm:$0xf]
    %v168 = vld [vmem:[#allocation4 + $0x40] sm:$0xf]
    %v169 = vld [vmem:[#allocation4 + $0x44] sm:$0xf]
    %v170 = vld [vmem:[#allocation4 + $0x48] sm:$0xf]
    %v171 = vld [vmem:[#allocation4 + $0x4c] sm:$0xf]
    %v172 = vld [vmem:[#allocation4 + $0x50] sm:$0xf]
    %v173 = vld [vmem:[#allocation4 + $0x54] sm:$0xf]
    %v174 = vld [vmem:[#allocation4 + $0x58] sm:$0xf]
    %v175 = vld [vmem:[#allocation4 + $0x5c] sm:$0xf]
    %v176 = vld [vmem:[#allocation4 + $0x60] sm:$0xf]
    %v177 = vld [vmem:[#allocation4 + $0x64] sm:$0xf]
    %v178 = vld [vmem:[#allocation4 + $0x68] sm:$0xf]
    %v179 = vld [vmem:[#allocation4 + $0x6c] sm:$0xf]
    %v180 = vld [vmem:[#allocation4 + $0x70] sm:$0xf]
    %v181 = vld [vmem:[#allocation4 + $0x74] sm:$0xf]
    %v182 = vld [vmem:[#allocation4 + $0x78] sm:$0xf]
    %v183 = vld [vmem:[#allocation4 + $0x7c] sm:$0xf]
    %v184 = vld [vmem:[#allocation6] sm:$0xff]
    %v185 = vld [vmem:[#allocation6 + $0x8] sm:$0xff]
    %v186 = vld [vmem:[#allocation6 + $0x10] sm:$0xff]
    %v187 = vld [vmem:[#allocation6 + $0x18] sm:$0xff]
    %v188 = vld [vmem:[#allocation6 + $0x20] sm:$0xff]
    %v189 = vld [vmem:[#allocation6 + $0x28] sm:$0xff]
    %v190 = vld [vmem:[#allocation6 + $0x30] sm:$0xff]
    %v191 = vld [vmem:[#allocation6 + $0x38] sm:$0xff]
    %v192 = vld [vmem:[#allocation6 + $0x40] sm:$0xff]
    %v193 = vld [vmem:[#allocation6 + $0x48] sm:$0xff]
    %v194 = vld [vmem:[#allocation6 + $0x50] sm:$0xff]
    %v195 = vld [vmem:[#allocation6 + $0x58] sm:$0xff]
    %v196 = vld [vmem:[#allocation6 + $0x60] sm:$0xff]
    %v197 = vld [vmem:[#allocation6 + $0x68] sm:$0xff]
    %v198 = vld [vmem:[#allocation6 + $0x70] sm:$0xff]
    %v199 = vld [vmem:[#allocation6 + $0x78] sm:$0xff]
    %v232 = vunpack.c.l.b16 %v152
    %v233 = vunpack.c.l.b16 %v153
    %v234 = vunpack.c.l.b16 %v154
    %v235 = vunpack.c.l.b16 %v155
    %v236 = vunpack.c.l.b16 %v156
    %v237 = vunpack.c.l.b16 %v157
    %v238 = vunpack.c.l.b16 %v158
    %v239 = vunpack.c.l.b16 %v159
    %v240 = vunpack.c.l.b16 %v160
    %v241 = vunpack.c.l.b16 %v161
    %v242 = vunpack.c.l.b16 %v162
    %v243 = vunpack.c.l.b16 %v163
    %v244 = vunpack.c.l.b16 %v164
    %v245 = vunpack.c.l.b16 %v165
    %v246 = vunpack.c.l.b16 %v166
    %v247 = vunpack.c.l.b16 %v167
    %v248 = vunpack.c.l.b16 %v168
    %v249 = vunpack.c.l.b16 %v169
    %v250 = vunpack.c.l.b16 %v170
    %v251 = vunpack.c.l.b16 %v171
    %v252 = vunpack.c.l.b16 %v172
    %v253 = vunpack.c.l.b16 %v173
    %v254 = vunpack.c.l.b16 %v174
    %v255 = vunpack.c.l.b16 %v175
    %v256 = vunpack.c.l.b16 %v176
    %v257 = vunpack.c.l.b16 %v177
    %v258 = vunpack.c.l.b16 %v178
    %v259 = vunpack.c.l.b16 %v179
    %v260 = vunpack.c.l.b16 %v180
    %v261 = vunpack.c.l.b16 %v181
    %v262 = vunpack.c.l.b16 %v182
    %v263 = vunpack.c.l.b16 %v183
    %v264 = vpack.c.b16 %v233, %v232
    %v265 = vpack.c.b16 %v235, %v234
    %v266 = vpack.c.b16 %v237, %v236
    %v267 = vpack.c.b16 %v239, %v238
    %v268 = vpack.c.b16 %v241, %v240
    %v269 = vpack.c.b16 %v243, %v242
    %v270 = vpack.c.b16 %v245, %v244
    %v271 = vpack.c.b16 %v247, %v246
    %v272 = vpack.c.b16 %v249, %v248
    %v273 = vpack.c.b16 %v251, %v250
    %v274 = vpack.c.b16 %v253, %v252
    %v275 = vpack.c.b16 %v255, %v254
    %v276 = vpack.c.b16 %v257, %v256
    %v277 = vpack.c.b16 %v259, %v258
    %v278 = vpack.c.b16 %v261, %v260
    %v279 = vpack.c.b16 %v263, %v262
    %v312 = vunpack.c.l.b16 %v184
    %v313 = vunpack.c.h.b16 %v184
    %v314 = vunpack.c.l.b16 %v185
    %v315 = vunpack.c.h.b16 %v185
    %v316 = vunpack.c.l.b16 %v186
    %v317 = vunpack.c.h.b16 %v186
    %v318 = vunpack.c.l.b16 %v187
    %v319 = vunpack.c.h.b16 %v187
    %v320 = vunpack.c.l.b16 %v188
    %v321 = vunpack.c.h.b16 %v188
    %v322 = vunpack.c.l.b16 %v189
    %v323 = vunpack.c.h.b16 %v189
    %v324 = vunpack.c.l.b16 %v190
    %v325 = vunpack.c.h.b16 %v190
    %v326 = vunpack.c.l.b16 %v191
    %v327 = vunpack.c.h.b16 %v191
    %v328 = vunpack.c.l.b16 %v192
    %v329 = vunpack.c.h.b16 %v192
    %v330 = vunpack.c.l.b16 %v193
    %v331 = vunpack.c.h.b16 %v193
    %v332 = vunpack.c.l.b16 %v194
    %v333 = vunpack.c.h.b16 %v194
    %v334 = vunpack.c.l.b16 %v195
    %v335 = vunpack.c.h.b16 %v195
    %v336 = vunpack.c.l.b16 %v196
    %v337 = vunpack.c.h.b16 %v196
    %v338 = vunpack.c.l.b16 %v197
    %v339 = vunpack.c.h.b16 %v197
    %v340 = vunpack.c.l.b16 %v198
    %v341 = vunpack.c.h.b16 %v198
    %v342 = vunpack.c.l.b16 %v199
    %v343 = vunpack.c.h.b16 %v199
    %v344 = vpack.c.b16 %v314, %v312
    %v345 = vpack.c.b16 %v315, %v313
    %v346 = vpack.c.b16 %v318, %v316
    %v347 = vpack.c.b16 %v319, %v317
    %v348 = vpack.c.b16 %v322, %v320
    %v349 = vpack.c.b16 %v323, %v321
    %v350 = vpack.c.b16 %v326, %v324
    %v351 = vpack.c.b16 %v327, %v325
    %v352 = vpack.c.b16 %v330, %v328
    %v353 = vpack.c.b16 %v331, %v329
    %v354 = vpack.c.b16 %v334, %v332
    %v355 = vpack.c.b16 %v335, %v333
    %v356 = vpack.c.b16 %v338, %v336
    %v357 = vpack.c.b16 %v339, %v337
    %v358 = vpack.c.b16 %v342, %v340
    %v359 = vpack.c.b16 %v343, %v341
    %376 = vmatprep.subr.bf16.mxu0 %v345
    %377 = vmatpush1.bf16.msra.mxu0 %v344
    %378 = vmatprep.subr.bf16.mxu0 %v347
    %379 = vmatpush1.bf16.msra.mxu0 %v346
    %380 = vmatprep.subr.bf16.mxu0 %v349
    %381 = vmatpush1.bf16.msra.mxu0 %v348
    %382 = vmatprep.subr.bf16.mxu0 %v351
    %383 = vmatpush1.bf16.msra.mxu0 %v350
    %384 = vmatprep.subr.bf16.mxu0 %v353
    %385 = vmatpush1.bf16.msra.mxu0 %v352
    %386 = vmatprep.subr.bf16.mxu0 %v355
    %387 = vmatpush1.bf16.msra.mxu0 %v354
    %388 = vmatprep.subr.bf16.mxu0 %v357
    %389 = vmatpush1.bf16.msra.mxu0 %v356
    %390 = vmatprep.subr.bf16.mxu0 %v359
    %391 = vmatpush1.bf16.msra.mxu0 %v358
    %392 = vmatprep.subr.bf16.mxu0 0
    %393 = vmatpush1.bf16.msra.mxu0 0
    %394 = vmatprep.subr.bf16.mxu0 0
    %395 = vmatpush1.bf16.msra.mxu0 0
    %396 = vmatprep.subr.bf16.mxu0 0
    %397 = vmatpush1.bf16.msra.mxu0 0
    %398 = vmatprep.subr.bf16.mxu0 0
    %399 = vmatpush1.bf16.msra.mxu0 0
    %400 = vmatprep.subr.bf16.mxu0 0
    %401 = vmatpush1.bf16.msra.mxu0 0
    %402 = vmatprep.subr.bf16.mxu0 0
    %403 = vmatpush1.bf16.msra.mxu0 0
    %404 = vmatprep.subr.bf16.mxu0 0
    %405 = vmatpush1.bf16.msra.mxu0 0
    %406 = vmatprep.subr.bf16.mxu0 0
    %407 = vmatpush1.bf16.msra.mxu0 0
    %408 = vmatprep.mubr.bf16.mxu0 0
    %409 = vmatmul.mubr.bf16.gmra.mrb[0].mxu0 %v264
    %v410 = vpop.f32.mrb[0].mxu0
    %v411 = vadd.f32 0.0, %v410
    %v412 = vpop.f32.mrb[0].mxu0
    %v413 = vadd.f32 0.0, %v412
    %v414 = vpop.f32.mrb[0].mxu0
    %v415 = vadd.f32 0.0, %v414
    %v416 = vpop.f32.mrb[0].mxu0
    %v417 = vadd.f32 0.0, %v416
    %418 = vmatprep.mubr.bf16.mxu0 0
    %419 = vmatmul.mubr.bf16.gmra.mrb[0].mxu0 %v265
    %v420 = vpop.f32.mrb[0].mxu0
    %v421 = vadd.f32 0.0, %v420
    %v422 = vpop.f32.mrb[0].mxu0
    %v423 = vadd.f32 0.0, %v422
    %v424 = vpop.f32.mrb[0].mxu0
    %v425 = vadd.f32 0.0, %v424
    %v426 = vpop.f32.mrb[0].mxu0
    %v427 = vadd.f32 0.0, %v426
    %428 = vmatprep.mubr.bf16.mxu0 0
    %429 = vmatmul.mubr.bf16.gmra.mrb[0].mxu0 %v266
    %v430 = vpop.f32.mrb[0].mxu0
    %v431 = vadd.f32 0.0, %v430
    %v432 = vpop.f32.mrb[0].mxu0
    %v433 = vadd.f32 0.0, %v432
    %v434 = vpop.f32.mrb[0].mxu0
    %v435 = vadd.f32 0.0, %v434
    %v436 = vpop.f32.mrb[0].mxu0
    %v437 = vadd.f32 0.0, %v436
    %438 = vmatprep.mubr.bf16.mxu0 0
    %439 = vmatmul.mubr.bf16.gmra.mrb[0].mxu0 %v267
    %v440 = vpop.f32.mrb[0].mxu0
    %v441 = vadd.f32 0.0, %v440
    %v442 = vpop.f32.mrb[0].mxu0
    %v443 = vadd.f32 0.0, %v442
    %v444 = vpop.f32.mrb[0].mxu0
    %v445 = vadd.f32 0.0, %v444
    %v446 = vpop.f32.mrb[0].mxu0
    %v447 = vadd.f32 0.0, %v446
    %448 = vmatprep.mubr.bf16.mxu0 0
    %449 = vmatmul.mubr.bf16.gmra.mrb[0].mxu0 %v268
    %v450 = vpop.f32.mrb[0].mxu0
    %v451 = vadd.f32 0.0, %v450
    %v452 = vpop.f32.mrb[0].mxu0
    %v453 = vadd.f32 0.0, %v452
    %v454 = vpop.f32.mrb[0].mxu0
    %v455 = vadd.f32 0.0, %v454
    %v456 = vpop.f32.mrb[0].mxu0
    %v457 = vadd.f32 0.0, %v456
    %458 = vmatprep.mubr.bf16.mxu0 0
    %459 = vmatmul.mubr.bf16.gmra.mrb[0].mxu0 %v269
    %v460 = vpop.f32.mrb[0].mxu0
    %v461 = vadd.f32 0.0, %v460
    %v462 = vpop.f32.mrb[0].mxu0
    %v463 = vadd.f32 0.0, %v462
    %v464 = vpop.f32.mrb[0].mxu0
    %v465 = vadd.f32 0.0, %v464
    %v466 = vpop.f32.mrb[0].mxu0
    %v467 = vadd.f32 0.0, %v466
    %468 = vmatprep.mubr.bf16.mxu0 0
    %469 = vmatmul.mubr.bf16.gmra.mrb[0].mxu0 %v270
    %v470 = vpop.f32.mrb[0].mxu0
    %v471 = vadd.f32 0.0, %v470
    %v472 = vpop.f32.mrb[0].mxu0
    %v473 = vadd.f32 0.0, %v472
    %v474 = vpop.f32.mrb[0].mxu0
    %v475 = vadd.f32 0.0, %v474
    %v476 = vpop.f32.mrb[0].mxu0
    %v477 = vadd.f32 0.0, %v476
    %478 = vmatprep.mubr.bf16.mxu0 0
    %479 = vmatmul.mubr.bf16.gmra.mrb[0].mxu0 %v271
    %v480 = vpop.f32.mrb[0].mxu0
    %v481 = vadd.f32 0.0, %v480
    %v482 = vpop.f32.mrb[0].mxu0
    %v483 = vadd.f32 0.0, %v482
    %v484 = vpop.f32.mrb[0].mxu0
    %v485 = vadd.f32 0.0, %v484
    %v486 = vpop.f32.mrb[0].mxu0
    %v487 = vadd.f32 0.0, %v486
    %488 = vmatprep.mubr.bf16.mxu0 0
    %489 = vmatmul.mubr.bf16.gmra.mrb[0].mxu0 %v272
    %v490 = vpop.f32.mrb[0].mxu0
    %v491 = vadd.f32 0.0, %v490
    %v492 = vpop.f32.mrb[0].mxu0
    %v493 = vadd.f32 0.0, %v492
    %v494 = vpop.f32.mrb[0].mxu0
    %v495 = vadd.f32 0.0, %v494
    %v496 = vpop.f32.mrb[0].mxu0
    %v497 = vadd.f32 0.0, %v496
    %498 = vmatprep.mubr.bf16.mxu0 0
    %499 = vmatmul.mubr.bf16.gmra.mrb[0].mxu0 %v273
    %v500 = vpop.f32.mrb[0].mxu0
    %v501 = vadd.f32 0.0, %v500
    %v502 = vpop.f32.mrb[0].mxu0
    %v503 = vadd.f32 0.0, %v502
    %v504 = vpop.f32.mrb[0].mxu0
    %v505 = vadd.f32 0.0, %v504
    %v506 = vpop.f32.mrb[0].mxu0
    %v507 = vadd.f32 0.0, %v506
    %508 = vmatprep.mubr.bf16.mxu0 0
    %509 = vmatmul.mubr.bf16.gmra.mrb[0].mxu0 %v274
    %v510 = vpop.f32.mrb[0].mxu0
    %v511 = vadd.f32 0.0, %v510
    %v512 = vpop.f32.mrb[0].mxu0
    %v513 = vadd.f32 0.0, %v512
    %v514 = vpop.f32.mrb[0].mxu0
    %v515 = vadd.f32 0.0, %v514
    %v516 = vpop.f32.mrb[0].mxu0
    %v517 = vadd.f32 0.0, %v516
    %518 = vmatprep.mubr.bf16.mxu0 0
    %519 = vmatmul.mubr.bf16.gmra.mrb[0].mxu0 %v275
    %v520 = vpop.f32.mrb[0].mxu0
    %v521 = vadd.f32 0.0, %v520
    %v522 = vpop.f32.mrb[0].mxu0
    %v523 = vadd.f32 0.0, %v522
    %v524 = vpop.f32.mrb[0].mxu0
    %v525 = vadd.f32 0.0, %v524
    %v526 = vpop.f32.mrb[0].mxu0
    %v527 = vadd.f32 0.0, %v526
    %528 = vmatprep.mubr.bf16.mxu0 0
    %529 = vmatmul.mubr.bf16.gmra.mrb[0].mxu0 %v276
    %v530 = vpop.f32.mrb[0].mxu0
    %v531 = vadd.f32 0.0, %v530
    %v532 = vpop.f32.mrb[0].mxu0
    %v533 = vadd.f32 0.0, %v532
    %v534 = vpop.f32.mrb[0].mxu0
    %v535 = vadd.f32 0.0, %v534
    %v536 = vpop.f32.mrb[0].mxu0
    %v537 = vadd.f32 0.0, %v536
    %538 = vmatprep.mubr.bf16.mxu0 0
    %539 = vmatmul.mubr.bf16.gmra.mrb[0].mxu0 %v277
    %v540 = vpop.f32.mrb[0].mxu0
    %v541 = vadd.f32 0.0, %v540
    %v542 = vpop.f32.mrb[0].mxu0
    %v543 = vadd.f32 0.0, %v542
    %v544 = vpop.f32.mrb[0].mxu0
    %v545 = vadd.f32 0.0, %v544
    %v546 = vpop.f32.mrb[0].mxu0
    %v547 = vadd.f32 0.0, %v546
    %548 = vmatprep.mubr.bf16.mxu0 0
    %549 = vmatmul.mubr.bf16.gmra.mrb[0].mxu0 %v278
    %v550 = vpop.f32.mrb[0].mxu0
    %v551 = vadd.f32 0.0, %v550
    %v552 = vpop.f32.mrb[0].mxu0
    %v553 = vadd.f32 0.0, %v552
    %v554 = vpop.f32.mrb[0].mxu0
    %v555 = vadd.f32 0.0, %v554
    %v556 = vpop.f32.mrb[0].mxu0
    %v557 = vadd.f32 0.0, %v556
    %558 = vmatprep.mubr.bf16.mxu0 0
    %559 = vmatmul.mubr.bf16.gmra.mrb[0].mxu0 %v279
    %v560 = vpop.f32.mrb[0].mxu0
    %v561 = vadd.f32 0.0, %v560
    %v562 = vpop.f32.mrb[0].mxu0
    %v563 = vadd.f32 0.0, %v562
    %v564 = vpop.f32.mrb[0].mxu0
    %v565 = vadd.f32 0.0, %v564
    %v566 = vpop.f32.mrb[0].mxu0
    %v567 = vadd.f32 0.0, %v566
    %568 = vdwg.mxu0
    %v569 = vadd.f32 %v411, %v415
    %v570 = vadd.f32 %v569, %v421
    %v571 = vadd.f32 %v570, %v425
    %v572 = vadd.f32 %v571, %v431
    %v573 = vadd.f32 %v572, %v435
    %v574 = vadd.f32 %v573, %v441
    %v575 = vadd.f32 %v574, %v445
    %v576 = vadd.f32 %v575, %v451
    %v577 = vadd.f32 %v576, %v455
    %v578 = vadd.f32 %v577, %v461
    %v579 = vadd.f32 %v578, %v465
    %v580 = vadd.f32 %v579, %v471
    %v581 = vadd.f32 %v580, %v475
    %v582 = vadd.f32 %v581, %v481
    %v583 = vadd.f32 %v582, %v485
    %v584 = vadd.f32 %v583, %v491
    %v585 = vadd.f32 %v584, %v495
    %v586 = vadd.f32 %v585, %v501
    %v587 = vadd.f32 %v586, %v505
    %v588 = vadd.f32 %v587, %v511
    %v589 = vadd.f32 %v588, %v515
    %v590 = vadd.f32 %v589, %v521
    %v591 = vadd.f32 %v590, %v525
    %v592 = vadd.f32 %v591, %v531
    %v593 = vadd.f32 %v592, %v535
    %v594 = vadd.f32 %v593, %v541
    %v595 = vadd.f32 %v594, %v545
    %v596 = vadd.f32 %v595, %v551
    %v597 = vadd.f32 %v596, %v555
    %v598 = vadd.f32 %v597, %v561
    %v599 = vadd.f32 %v598, %v565
    %v600 = vrot.slane %v599, 4
    %v601 = vadd.f32 %v599, %v600
    %v602 = vrot.slane %v601, 2
    %v603 = vadd.f32 %v601, %v602
    %v604 = vrot.slane %v603, 1
    %v605 = vadd.f32 %v603, %v604
    %v606 = vadd.f32 %v413, %v417
    %v607 = vadd.f32 %v606, %v423
    %v608 = vadd.f32 %v607, %v427
    %v609 = vadd.f32 %v608, %v433
    %v610 = vadd.f32 %v609, %v437
    %v611 = vadd.f32 %v610, %v443
    %v612 = vadd.f32 %v611, %v447
    %v613 = vadd.f32 %v612, %v453
    %v614 = vadd.f32 %v613, %v457
    %v615 = vadd.f32 %v614, %v463
    %v616 = vadd.f32 %v615, %v467
    %v617 = vadd.f32 %v616, %v473
    %v618 = vadd.f32 %v617, %v477
    %v619 = vadd.f32 %v618, %v483
    %v620 = vadd.f32 %v619, %v487
    %v621 = vadd.f32 %v620, %v493
    %v622 = vadd.f32 %v621, %v497
    %v623 = vadd.f32 %v622, %v503
    %v624 = vadd.f32 %v623, %v507
    %v625 = vadd.f32 %v624, %v513
    %v626 = vadd.f32 %v625, %v517
    %v627 = vadd.f32 %v626, %v523
    %v628 = vadd.f32 %v627, %v527
    %v629 = vadd.f32 %v628, %v533
    %v630 = vadd.f32 %v629, %v537
    %v631 = vadd.f32 %v630, %v543
    %v632 = vadd.f32 %v631, %v547
    %v633 = vadd.f32 %v632, %v553
    %v634 = vadd.f32 %v633, %v557
    %v635 = vadd.f32 %v634, %v563
    %v636 = vadd.f32 %v635, %v567
    %v637 = vrot.slane %v636, 4
    %v638 = vadd.f32 %v636, %v637
    %v639 = vrot.slane %v638, 2
    %v640 = vadd.f32 %v638, %v639
    %v641 = vrot.slane %v640, 1
    %v642 = vadd.f32 %v640, %v641
    %v643 = vrcp.pop 256.0
    %v644 = vmul.f32 %v605, %v643
    %v645 = vmul.f32 %v642, %v643
    %v646 = vsub.f32 %v411, %v644
    %v647 = vsub.f32 %v413, %v645
    %v648 = vsub.f32 %v415, %v644
    %v649 = vsub.f32 %v417, %v645
    %v650 = vsub.f32 %v421, %v644
    %v651 = vsub.f32 %v423, %v645
    %v652 = vsub.f32 %v425, %v644
    %v653 = vsub.f32 %v427, %v645
    %v654 = vsub.f32 %v431, %v644
    %v655 = vsub.f32 %v433, %v645
    %v656 = vsub.f32 %v435, %v644
    %v657 = vsub.f32 %v437, %v645
    %v658 = vsub.f32 %v441, %v644
    %v659 = vsub.f32 %v443, %v645
    %v660 = vsub.f32 %v445, %v644
    %v661 = vsub.f32 %v447, %v645
    %v662 = vsub.f32 %v451, %v644
    %v663 = vsub.f32 %v453, %v645
    %v664 = vsub.f32 %v455, %v644
    %v665 = vsub.f32 %v457, %v645
    %v666 = vsub.f32 %v461, %v644
    %v667 = vsub.f32 %v463, %v645
    %v668 = vsub.f32 %v465, %v644
    %v669 = vsub.f32 %v467, %v645
    %v670 = vsub.f32 %v471, %v644
    %v671 = vsub.f32 %v473, %v645
    %v672 = vsub.f32 %v475, %v644
    %v673 = vsub.f32 %v477, %v645
    %v674 = vsub.f32 %v481, %v644
    %v675 = vsub.f32 %v483, %v645
    %v676 = vsub.f32 %v485, %v644
    %v677 = vsub.f32 %v487, %v645
    %v678 = vsub.f32 %v491, %v644
    %v679 = vsub.f32 %v493, %v645
    %v680 = vsub.f32 %v495, %v644
    %v681 = vsub.f32 %v497, %v645
    %v682 = vsub.f32 %v501, %v644
    %v683 = vsub.f32 %v503, %v645
    %v684 = vsub.f32 %v505, %v644
    %v685 = vsub.f32 %v507, %v645
    %v686 = vsub.f32 %v511, %v644
    %v687 = vsub.f32 %v513, %v645
    %v688 = vsub.f32 %v515, %v644
    %v689 = vsub.f32 %v517, %v645
    %v690 = vsub.f32 %v521, %v644
    %v691 = vsub.f32 %v523, %v645
    %v692 = vsub.f32 %v525, %v644
    %v693 = vsub.f32 %v527, %v645
    %v694 = vsub.f32 %v531, %v644
    %v695 = vsub.f32 %v533, %v645
    %v696 = vsub.f32 %v535, %v644
    %v697 = vsub.f32 %v537, %v645
    %v698 = vsub.f32 %v541, %v644
    %v699 = vsub.f32 %v543, %v645
    %v700 = vsub.f32 %v545, %v644
    %v701 = vsub.f32 %v547, %v645
    %v702 = vsub.f32 %v551, %v644
    %v703 = vsub.f32 %v553, %v645
    %v704 = vsub.f32 %v555, %v644
    %v705 = vsub.f32 %v557, %v645
    %v706 = vsub.f32 %v561, %v644
    %v707 = vsub.f32 %v563, %v645
    %v708 = vsub.f32 %v565, %v644
    %v709 = vsub.f32 %v567, %v645
    %v710 = vmul.f32 %v646, %v646
    %v711 = vmul.f32 %v647, %v647
    %v712 = vmul.f32 %v648, %v648
    %v713 = vmul.f32 %v649, %v649
    %v714 = vmul.f32 %v650, %v650
    %v715 = vmul.f32 %v651, %v651
    %v716 = vmul.f32 %v652, %v652
    %v717 = vmul.f32 %v653, %v653
    %v718 = vmul.f32 %v654, %v654
    %v719 = vmul.f32 %v655, %v655
    %v720 = vmul.f32 %v656, %v656
    %v721 = vmul.f32 %v657, %v657
    %v722 = vmul.f32 %v658, %v658
    %v723 = vmul.f32 %v659, %v659
    %v724 = vmul.f32 %v660, %v660
    %v725 = vmul.f32 %v661, %v661
    %v726 = vmul.f32 %v662, %v662
    %v727 = vmul.f32 %v663, %v663
    %v728 = vmul.f32 %v664, %v664
    %v729 = vmul.f32 %v665, %v665
    %v730 = vmul.f32 %v666, %v666
    %v731 = vmul.f32 %v667, %v667
    %v732 = vmul.f32 %v668, %v668
    %v733 = vmul.f32 %v669, %v669
    %v734 = vmul.f32 %v670, %v670
    %v735 = vmul.f32 %v671, %v671
    %v736 = vmul.f32 %v672, %v672
    %v737 = vmul.f32 %v673, %v673
    %v738 = vmul.f32 %v674, %v674
    %v739 = vmul.f32 %v675, %v675
    %v740 = vmul.f32 %v676, %v676
    %v741 = vmul.f32 %v677, %v677
    %v742 = vmul.f32 %v678, %v678
    %v743 = vmul.f32 %v679, %v679
    %v744 = vmul.f32 %v680, %v680
    %v745 = vmul.f32 %v681, %v681
    %v746 = vmul.f32 %v682, %v682
    %v747 = vmul.f32 %v683, %v683
    %v748 = vmul.f32 %v684, %v684
    %v749 = vmul.f32 %v685, %v685
    %v750 = vmul.f32 %v686, %v686
    %v751 = vmul.f32 %v687, %v687
    %v752 = vmul.f32 %v688, %v688
    %v753 = vmul.f32 %v689, %v689
    %v754 = vmul.f32 %v690, %v690
    %v755 = vmul.f32 %v691, %v691
    %v756 = vmul.f32 %v692, %v692
    %v757 = vmul.f32 %v693, %v693
    %v758 = vmul.f32 %v694, %v694
    %v759 = vmul.f32 %v695, %v695
    %v760 = vmul.f32 %v696, %v696
    %v761 = vmul.f32 %v697, %v697
    %v762 = vmul.f32 %v698, %v698
    %v763 = vmul.f32 %v699, %v699
    %v764 = vmul.f32 %v700, %v700
    %v765 = vmul.f32 %v701, %v701
    %v766 = vmul.f32 %v702, %v702
    %v767 = vmul.f32 %v703, %v703
    %v768 = vmul.f32 %v704, %v704
    %v769 = vmul.f32 %v705, %v705
    %v770 = vmul.f32 %v706, %v706
    %v771 = vmul.f32 %v707, %v707
    %v772 = vmul.f32 %v708, %v708
    %v773 = vmul.f32 %v709, %v709
    %v774 = vadd.f32 %v710, %v712
    %v775 = vadd.f32 %v774, %v714
    %v776 = vadd.f32 %v775, %v716
    %v777 = vadd.f32 %v776, %v718
    %v778 = vadd.f32 %v777, %v720
    %v779 = vadd.f32 %v778, %v722
    %v780 = vadd.f32 %v779, %v724
    %v781 = vadd.f32 %v780, %v726
    %v782 = vadd.f32 %v781, %v728
    %v783 = vadd.f32 %v782, %v730
    %v784 = vadd.f32 %v783, %v732
    %v785 = vadd.f32 %v784, %v734
    %v786 = vadd.f32 %v785, %v736
    %v787 = vadd.f32 %v786, %v738
    %v788 = vadd.f32 %v787, %v740
    %v789 = vadd.f32 %v788, %v742
    %v790 = vadd.f32 %v789, %v744
    %v791 = vadd.f32 %v790, %v746
    %v792 = vadd.f32 %v791, %v748
    %v793 = vadd.f32 %v792, %v750
    %v794 = vadd.f32 %v793, %v752
    %v795 = vadd.f32 %v794, %v754
    %v796 = vadd.f32 %v795, %v756
    %v797 = vadd.f32 %v796, %v758
    %v798 = vadd.f32 %v797, %v760
    %v799 = vadd.f32 %v798, %v762
    %v800 = vadd.f32 %v799, %v764
    %v801 = vadd.f32 %v800, %v766
    %v802 = vadd.f32 %v801, %v768
    %v803 = vadd.f32 %v802, %v770
    %v804 = vadd.f32 %v803, %v772
    %v805 = vrot.slane %v804, 4
    %v806 = vadd.f32 %v804, %v805
    %v807 = vrot.slane %v806, 2
    %v808 = vadd.f32 %v806, %v807
    %v809 = vrot.slane %v808, 1
    %v810 = vadd.f32 %v808, %v809
    %v811 = vadd.f32 %v711, %v713
    %v812 = vadd.f32 %v811, %v715
    %v813 = vadd.f32 %v812, %v717
    %v814 = vadd.f32 %v813, %v719
    %v815 = vadd.f32 %v814, %v721
    %v816 = vadd.f32 %v815, %v723
    %v817 = vadd.f32 %v816, %v725
    %v818 = vadd.f32 %v817, %v727
    %v819 = vadd.f32 %v818, %v729
    %v820 = vadd.f32 %v819, %v731
    %v821 = vadd.f32 %v820, %v733
    %v822 = vadd.f32 %v821, %v735
    %v823 = vadd.f32 %v822, %v737
    %v824 = vadd.f32 %v823, %v739
    %v825 = vadd.f32 %v824, %v741
    %v826 = vadd.f32 %v825, %v743
    %v827 = vadd.f32 %v826, %v745
    %v828 = vadd.f32 %v827, %v747
    %v829 = vadd.f32 %v828, %v749
    %v830 = vadd.f32 %v829, %v751
    %v831 = vadd.f32 %v830, %v753
    %v832 = vadd.f32 %v831, %v755
    %v833 = vadd.f32 %v832, %v757
    %v834 = vadd.f32 %v833, %v759
    %v835 = vadd.f32 %v834, %v761
    %v836 = vadd.f32 %v835, %v763
    %v837 = vadd.f32 %v836, %v765
    %v838 = vadd.f32 %v837, %v767
    %v839 = vadd.f32 %v838, %v769
    %v840 = vadd.f32 %v839, %v771
    %v841 = vadd.f32 %v840, %v773
    %v842 = vrot.slane %v841, 4
    %v843 = vadd.f32 %v841, %v842
    %v844 = vrot.slane %v843, 2
    %v845 = vadd.f32 %v843, %v844
    %v846 = vrot.slane %v845, 1
    %v847 = vadd.f32 %v845, %v846
    %v848 = vmul.f32 %v810, %v643
    %v849 = vmul.f32 %v847, %v643
    %v850 = vld [vmem:[%s2] sm:$0x3]
    %v851 = vadd.f32 %v848, 1e-05
    %v852 = vadd.f32 %v849, 1e-05
    %v853 = vrsqrt.pop %v851
    %v854 = vrsqrt.pop %v852
    %v857 = vcombine.low %v853, %v854
    %v859 = vunpack.c.l.s4 1966171168
    %v860 = vunpack.c.0.s8 %v859
    %v861 = vlaneseq
    %v862 = vshrl.u32 %v861, 7
    %v863 = vsub.s32 %v860, %v862
    %v864 = vrot.slane %v857, %v863
    %v866 = vunpack.c.l.s4 1966171168
    %v867 = vunpack.c.0.s8 %v866
    %v868 = vlaneseq
    %v869 = vshrl.u32 %v868, 7
    %v870 = vsub.s32 %v867, %v869
    %v871 = vrot.slane %v864, %v870
    %v873 = vmul.f32 %v850, %v871
    %v874 = vld [vmem:[%s3] sm:$0x3]
    %v876 = vlaneseq
    %v877 = vshrl.u32 %v876, 7
    %v878 = vsub.s32 0, %v877
    %v879 = vrot.slane %v873, %v878
    %v880 = vlaneseq
    %v881 = vshrl.u32 %v880, 7
    %v882 = vsub.s32 1, %v881
    %v883 = vrot.slane %v873, %v882
    %v886 = vmul.f32 %v644, %v879
    %v887 = vmul.f32 %v645, %v883
    %v890 = vcombine.low %v886, %v887
    %v892 = vunpack.c.l.s4 1966171168
    %v893 = vunpack.c.0.s8 %v892
    %v894 = vlaneseq
    %v895 = vshrl.u32 %v894, 7
    %v896 = vsub.s32 %v893, %v895
    %v897 = vrot.slane %v890, %v896
    %v899 = vunpack.c.l.s4 1966171168
    %v900 = vunpack.c.0.s8 %v899
    %v901 = vlaneseq
    %v902 = vshrl.u32 %v901, 7
    %v903 = vsub.s32 %v900, %v902
    %v904 = vrot.slane %v897, %v903
    %v906 = vsub.f32 %v874, %v904
    %v907 = vmul.f32 %v411, %v879
    %v908 = vmul.f32 %v413, %v883
    %v909 = vmul.f32 %v415, %v879
    %v910 = vmul.f32 %v417, %v883
    %v911 = vmul.f32 %v421, %v879
    %v912 = vmul.f32 %v423, %v883
    %v913 = vmul.f32 %v425, %v879
    %v914 = vmul.f32 %v427, %v883
    %v915 = vmul.f32 %v431, %v879
    %v916 = vmul.f32 %v433, %v883
    %v917 = vmul.f32 %v435, %v879
    %v918 = vmul.f32 %v437, %v883
    %v919 = vmul.f32 %v441, %v879
    %v920 = vmul.f32 %v443, %v883
    %v921 = vmul.f32 %v445, %v879
    %v922 = vmul.f32 %v447, %v883
    %v923 = vmul.f32 %v451, %v879
    %v924 = vmul.f32 %v453, %v883
    %v925 = vmul.f32 %v455, %v879
    %v926 = vmul.f32 %v457, %v883
    %v927 = vmul.f32 %v461, %v879
    %v928 = vmul.f32 %v463, %v883
    %v929 = vmul.f32 %v465, %v879
    %v930 = vmul.f32 %v467, %v883
    %v931 = vmul.f32 %v471, %v879
    %v932 = vmul.f32 %v473, %v883
    %v933 = vmul.f32 %v475, %v879
    %v934 = vmul.f32 %v477, %v883
    %v935 = vmul.f32 %v481, %v879
    %v936 = vmul.f32 %v483, %v883
    %v937 = vmul.f32 %v485, %v879
    %v938 = vmul.f32 %v487, %v883
    %v939 = vmul.f32 %v491, %v879
    %v940 = vmul.f32 %v493, %v883
    %v941 = vmul.f32 %v495, %v879
    %v942 = vmul.f32 %v497, %v883
    %v943 = vmul.f32 %v501, %v879
    %v944 = vmul.f32 %v503, %v883
    %v945 = vmul.f32 %v505, %v879
    %v946 = vmul.f32 %v507, %v883
    %v947 = vmul.f32 %v511, %v879
    %v948 = vmul.f32 %v513, %v883
    %v949 = vmul.f32 %v515, %v879
    %v950 = vmul.f32 %v517, %v883
    %v951 = vmul.f32 %v521, %v879
    %v952 = vmul.f32 %v523, %v883
    %v953 = vmul.f32 %v525, %v879
    %v954 = vmul.f32 %v527, %v883
    %v955 = vmul.f32 %v531, %v879
    %v956 = vmul.f32 %v533, %v883
    %v957 = vmul.f32 %v535, %v879
    %v958 = vmul.f32 %v537, %v883
    %v959 = vmul.f32 %v541, %v879
    %v960 = vmul.f32 %v543, %v883
    %v961 = vmul.f32 %v545, %v879
    %v962 = vmul.f32 %v547, %v883
    %v963 = vmul.f32 %v551, %v879
    %v964 = vmul.f32 %v553, %v883
    %v965 = vmul.f32 %v555, %v879
    %v966 = vmul.f32 %v557, %v883
    %v967 = vmul.f32 %v561, %v879
    %v968 = vmul.f32 %v563, %v883
    %v969 = vmul.f32 %v565, %v879
    %v970 = vmul.f32 %v567, %v883
    %v972 = vlaneseq
    %v973 = vshrl.u32 %v972, 7
    %v974 = vsub.s32 0, %v973
    %v975 = vrot.slane %v906, %v974
    %v976 = vlaneseq
    %v977 = vshrl.u32 %v976, 7
    %v978 = vsub.s32 1, %v977
    %v979 = vrot.slane %v906, %v978
    %v982 = vadd.f32 %v907, %v975
    %v983 = vadd.f32 %v908, %v979
    %v984 = vadd.f32 %v909, %v975
    %v985 = vadd.f32 %v910, %v979
    %v986 = vadd.f32 %v911, %v975
    %v987 = vadd.f32 %v912, %v979
    %v988 = vadd.f32 %v913, %v975
    %v989 = vadd.f32 %v914, %v979
    %v990 = vadd.f32 %v915, %v975
    %v991 = vadd.f32 %v916, %v979
    %v992 = vadd.f32 %v917, %v975
    %v993 = vadd.f32 %v918, %v979
    %v994 = vadd.f32 %v919, %v975
    %v995 = vadd.f32 %v920, %v979
    %v996 = vadd.f32 %v921, %v975
    %v997 = vadd.f32 %v922, %v979
    %v998 = vadd.f32 %v923, %v975
    %v999 = vadd.f32 %v924, %v979
    %v1000 = vadd.f32 %v925, %v975
    %v1001 = vadd.f32 %v926, %v979
    %v1002 = vadd.f32 %v927, %v975
    %v1003 = vadd.f32 %v928, %v979
    %v1004 = vadd.f32 %v929, %v975
    %v1005 = vadd.f32 %v930, %v979
    %v1006 = vadd.f32 %v931, %v975
    %v1007 = vadd.f32 %v932, %v979
    %v1008 = vadd.f32 %v933, %v975
    %v1009 = vadd.f32 %v934, %v979
    %v1010 = vadd.f32 %v935, %v975
    %v1011 = vadd.f32 %v936, %v979
    %v1012 = vadd.f32 %v937, %v975
    %v1013 = vadd.f32 %v938, %v979
    %v1014 = vadd.f32 %v939, %v975
    %v1015 = vadd.f32 %v940, %v979
    %v1016 = vadd.f32 %v941, %v975
    %v1017 = vadd.f32 %v942, %v979
    %v1018 = vadd.f32 %v943, %v975
    %v1019 = vadd.f32 %v944, %v979
    %v1020 = vadd.f32 %v945, %v975
    %v1021 = vadd.f32 %v946, %v979
    %v1022 = vadd.f32 %v947, %v975
    %v1023 = vadd.f32 %v948, %v979
    %v1024 = vadd.f32 %v949, %v975
    %v1025 = vadd.f32 %v950, %v979
    %v1026 = vadd.f32 %v951, %v975
    %v1027 = vadd.f32 %v952, %v979
    %v1028 = vadd.f32 %v953, %v975
    %v1029 = vadd.f32 %v954, %v979
    %v1030 = vadd.f32 %v955, %v975
    %v1031 = vadd.f32 %v956, %v979
    %v1032 = vadd.f32 %v957, %v975
    %v1033 = vadd.f32 %v958, %v979
    %v1034 = vadd.f32 %v959, %v975
    %v1035 = vadd.f32 %v960, %v979
    %v1036 = vadd.f32 %v961, %v975
    %v1037 = vadd.f32 %v962, %v979
    %v1038 = vadd.f32 %v963, %v975
    %v1039 = vadd.f32 %v964, %v979
    %v1040 = vadd.f32 %v965, %v975
    %v1041 = vadd.f32 %v966, %v979
    %v1042 = vadd.f32 %v967, %v975
    %v1043 = vadd.f32 %v968, %v979
    %v1044 = vadd.f32 %v969, %v975
    %v1045 = vadd.f32 %v970, %v979
    %vm1046 = vcmp.ge.f32.partialorder %v982, 0.0
    %vm1047 = vcmp.ge.f32.partialorder %v983, 0.0
    %vm1048 = vcmp.ge.f32.partialorder %v984, 0.0
    %vm1049 = vcmp.ge.f32.partialorder %v985, 0.0
    %vm1050 = vcmp.ge.f32.partialorder %v986, 0.0
    %vm1051 = vcmp.ge.f32.partialorder %v987, 0.0
    %vm1052 = vcmp.ge.f32.partialorder %v988, 0.0
    %vm1053 = vcmp.ge.f32.partialorder %v989, 0.0
    %vm1054 = vcmp.ge.f32.partialorder %v990, 0.0
    %vm1055 = vcmp.ge.f32.partialorder %v991, 0.0
    %vm1056 = vcmp.ge.f32.partialorder %v992, 0.0
    %vm1057 = vcmp.ge.f32.partialorder %v993, 0.0
    %vm1058 = vcmp.ge.f32.partialorder %v994, 0.0
    %vm1059 = vcmp.ge.f32.partialorder %v995, 0.0
    %vm1060 = vcmp.ge.f32.partialorder %v996, 0.0
    %vm1061 = vcmp.ge.f32.partialorder %v997, 0.0
    %vm1062 = vcmp.ge.f32.partialorder %v998, 0.0
    %vm1063 = vcmp.ge.f32.partialorder %v999, 0.0
    %vm1064 = vcmp.ge.f32.partialorder %v1000, 0.0
    %vm1065 = vcmp.ge.f32.partialorder %v1001, 0.0
    %vm1066 = vcmp.ge.f32.partialorder %v1002, 0.0
    %vm1067 = vcmp.ge.f32.partialorder %v1003, 0.0
    %vm1068 = vcmp.ge.f32.partialorder %v1004, 0.0
    %vm1069 = vcmp.ge.f32.partialorder %v1005, 0.0
    %vm1070 = vcmp.ge.f32.partialorder %v1006, 0.0
    %vm1071 = vcmp.ge.f32.partialorder %v1007, 0.0
    %vm1072 = vcmp.ge.f32.partialorder %v1008, 0.0
    %vm1073 = vcmp.ge.f32.partialorder %v1009, 0.0
    %vm1074 = vcmp.ge.f32.partialorder %v1010, 0.0
    %vm1075 = vcmp.ge.f32.partialorder %v1011, 0.0
    %vm1076 = vcmp.ge.f32.partialorder %v1012, 0.0
    %vm1077 = vcmp.ge.f32.partialorder %v1013, 0.0
    %vm1078 = vcmp.ge.f32.partialorder %v1014, 0.0
    %vm1079 = vcmp.ge.f32.partialorder %v1015, 0.0
    %vm1080 = vcmp.ge.f32.partialorder %v1016, 0.0
    %vm1081 = vcmp.ge.f32.partialorder %v1017, 0.0
    %vm1082 = vcmp.ge.f32.partialorder %v1018, 0.0
    %vm1083 = vcmp.ge.f32.partialorder %v1019, 0.0
    %vm1084 = vcmp.ge.f32.partialorder %v1020, 0.0
    %vm1085 = vcmp.ge.f32.partialorder %v1021, 0.0
    %vm1086 = vcmp.ge.f32.partialorder %v1022, 0.0
    %vm1087 = vcmp.ge.f32.partialorder %v1023, 0.0
    %vm1088 = vcmp.ge.f32.partialorder %v1024, 0.0
    %vm1089 = vcmp.ge.f32.partialorder %v1025, 0.0
    %vm1090 = vcmp.ge.f32.partialorder %v1026, 0.0
    %vm1091 = vcmp.ge.f32.partialorder %v1027, 0.0
    %vm1092 = vcmp.ge.f32.partialorder %v1028, 0.0
    %vm1093 = vcmp.ge.f32.partialorder %v1029, 0.0
    %vm1094 = vcmp.ge.f32.partialorder %v1030, 0.0
    %vm1095 = vcmp.ge.f32.partialorder %v1031, 0.0
    %vm1096 = vcmp.ge.f32.partialorder %v1032, 0.0
    %vm1097 = vcmp.ge.f32.partialorder %v1033, 0.0
    %vm1098 = vcmp.ge.f32.partialorder %v1034, 0.0
    %vm1099 = vcmp.ge.f32.partialorder %v1035, 0.0
    %vm1100 = vcmp.ge.f32.partialorder %v1036, 0.0
    %vm1101 = vcmp.ge.f32.partialorder %v1037, 0.0
    %vm1102 = vcmp.ge.f32.partialorder %v1038, 0.0
    %vm1103 = vcmp.ge.f32.partialorder %v1039, 0.0
    %vm1104 = vcmp.ge.f32.partialorder %v1040, 0.0
    %vm1105 = vcmp.ge.f32.partialorder %v1041, 0.0
    %vm1106 = vcmp.ge.f32.partialorder %v1042, 0.0
    %vm1107 = vcmp.ge.f32.partialorder %v1043, 0.0
    %vm1108 = vcmp.ge.f32.partialorder %v1044, 0.0
    %vm1109 = vcmp.ge.f32.partialorder %v1045, 0.0
    %v1110 = vmul.f32 %v982, 0.01
    %v1111 = vmul.f32 %v983, 0.01
    %v1112 = vmul.f32 %v984, 0.01
    %v1113 = vmul.f32 %v985, 0.01
    %v1114 = vmul.f32 %v986, 0.01
    %v1115 = vmul.f32 %v987, 0.01
    %v1116 = vmul.f32 %v988, 0.01
    %v1117 = vmul.f32 %v989, 0.01
    %v1118 = vmul.f32 %v990, 0.01
    %v1119 = vmul.f32 %v991, 0.01
    %v1120 = vmul.f32 %v992, 0.01
    %v1121 = vmul.f32 %v993, 0.01
    %v1122 = vmul.f32 %v994, 0.01
    %v1123 = vmul.f32 %v995, 0.01
    %v1124 = vmul.f32 %v996, 0.01
    %v1125 = vmul.f32 %v997, 0.01
    %v1126 = vmul.f32 %v998, 0.01
    %v1127 = vmul.f32 %v999, 0.01
    %v1128 = vmul.f32 %v1000, 0.01
    %v1129 = vmul.f32 %v1001, 0.01
    %v1130 = vmul.f32 %v1002, 0.01
    %v1131 = vmul.f32 %v1003, 0.01
    %v1132 = vmul.f32 %v1004, 0.01
    %v1133 = vmul.f32 %v1005, 0.01
    %v1134 = vmul.f32 %v1006, 0.01
    %v1135 = vmul.f32 %v1007, 0.01
    %v1136 = vmul.f32 %v1008, 0.01
    %v1137 = vmul.f32 %v1009, 0.01
    %v1138 = vmul.f32 %v1010, 0.01
    %v1139 = vmul.f32 %v1011, 0.01
    %v1140 = vmul.f32 %v1012, 0.01
    %v1141 = vmul.f32 %v1013, 0.01
    %v1142 = vmul.f32 %v1014, 0.01
    %v1143 = vmul.f32 %v1015, 0.01
    %v1144 = vmul.f32 %v1016, 0.01
    %v1145 = vmul.f32 %v1017, 0.01
    %v1146 = vmul.f32 %v1018, 0.01
    %v1147 = vmul.f32 %v1019, 0.01
    %v1148 = vmul.f32 %v1020, 0.01
    %v1149 = vmul.f32 %v1021, 0.01
    %v1150 = vmul.f32 %v1022, 0.01
    %v1151 = vmul.f32 %v1023, 0.01
    %v1152 = vmul.f32 %v1024, 0.01
    %v1153 = vmul.f32 %v1025, 0.01
    %v1154 = vmul.f32 %v1026, 0.01
    %v1155 = vmul.f32 %v1027, 0.01
    %v1156 = vmul.f32 %v1028, 0.01
    %v1157 = vmul.f32 %v1029, 0.01
    %v1158 = vmul.f32 %v1030, 0.01
    %v1159 = vmul.f32 %v1031, 0.01
    %v1160 = vmul.f32 %v1032, 0.01
    %v1161 = vmul.f32 %v1033, 0.01
    %v1162 = vmul.f32 %v1034, 0.01
    %v1163 = vmul.f32 %v1035, 0.01
    %v1164 = vmul.f32 %v1036, 0.01
    %v1165 = vmul.f32 %v1037, 0.01
    %v1166 = vmul.f32 %v1038, 0.01
    %v1167 = vmul.f32 %v1039, 0.01
    %v1168 = vmul.f32 %v1040, 0.01
    %v1169 = vmul.f32 %v1041, 0.01
    %v1170 = vmul.f32 %v1042, 0.01
    %v1171 = vmul.f32 %v1043, 0.01
    %v1172 = vmul.f32 %v1044, 0.01
    %v1173 = vmul.f32 %v1045, 0.01
    %v1174 = vsel %vm1046, %v982, %v1110
    %v1175 = vsel %vm1047, %v983, %v1111
    %v1176 = vsel %vm1048, %v984, %v1112
    %v1177 = vsel %vm1049, %v985, %v1113
    %v1178 = vsel %vm1050, %v986, %v1114
    %v1179 = vsel %vm1051, %v987, %v1115
    %v1180 = vsel %vm1052, %v988, %v1116
    %v1181 = vsel %vm1053, %v989, %v1117
    %v1182 = vsel %vm1054, %v990, %v1118
    %v1183 = vsel %vm1055, %v991, %v1119
    %v1184 = vsel %vm1056, %v992, %v1120
    %v1185 = vsel %vm1057, %v993, %v1121
    %v1186 = vsel %vm1058, %v994, %v1122
    %v1187 = vsel %vm1059, %v995, %v1123
    %v1188 = vsel %vm1060, %v996, %v1124
    %v1189 = vsel %vm1061, %v997, %v1125
    %v1190 = vsel %vm1062, %v998, %v1126
    %v1191 = vsel %vm1063, %v999, %v1127
    %v1192 = vsel %vm1064, %v1000, %v1128
    %v1193 = vsel %vm1065, %v1001, %v1129
    %v1194 = vsel %vm1066, %v1002, %v1130
    %v1195 = vsel %vm1067, %v1003, %v1131
    %v1196 = vsel %vm1068, %v1004, %v1132
    %v1197 = vsel %vm1069, %v1005, %v1133
    %v1198 = vsel %vm1070, %v1006, %v1134
    %v1199 = vsel %vm1071, %v1007, %v1135
    %v1200 = vsel %vm1072, %v1008, %v1136
    %v1201 = vsel %vm1073, %v1009, %v1137
    %v1202 = vsel %vm1074, %v1010, %v1138
    %v1203 = vsel %vm1075, %v1011, %v1139
    %v1204 = vsel %vm1076, %v1012, %v1140
    %v1205 = vsel %vm1077, %v1013, %v1141
    %v1206 = vsel %vm1078, %v1014, %v1142
    %v1207 = vsel %vm1079, %v1015, %v1143
    %v1208 = vsel %vm1080, %v1016, %v1144
    %v1209 = vsel %vm1081, %v1017, %v1145
    %v1210 = vsel %vm1082, %v1018, %v1146
    %v1211 = vsel %vm1083, %v1019, %v1147
    %v1212 = vsel %vm1084, %v1020, %v1148
    %v1213 = vsel %vm1085, %v1021, %v1149
    %v1214 = vsel %vm1086, %v1022, %v1150
    %v1215 = vsel %vm1087, %v1023, %v1151
    %v1216 = vsel %vm1088, %v1024, %v1152
    %v1217 = vsel %vm1089, %v1025, %v1153
    %v1218 = vsel %vm1090, %v1026, %v1154
    %v1219 = vsel %vm1091, %v1027, %v1155
    %v1220 = vsel %vm1092, %v1028, %v1156
    %v1221 = vsel %vm1093, %v1029, %v1157
    %v1222 = vsel %vm1094, %v1030, %v1158
    %v1223 = vsel %vm1095, %v1031, %v1159
    %v1224 = vsel %vm1096, %v1032, %v1160
    %v1225 = vsel %vm1097, %v1033, %v1161
    %v1226 = vsel %vm1098, %v1034, %v1162
    %v1227 = vsel %vm1099, %v1035, %v1163
    %v1228 = vsel %vm1100, %v1036, %v1164
    %v1229 = vsel %vm1101, %v1037, %v1165
    %v1230 = vsel %vm1102, %v1038, %v1166
    %v1231 = vsel %vm1103, %v1039, %v1167
    %v1232 = vsel %vm1104, %v1040, %v1168
    %v1233 = vsel %vm1105, %v1041, %v1169
    %v1234 = vsel %vm1106, %v1042, %v1170
    %v1235 = vsel %vm1107, %v1043, %v1171
    %v1236 = vsel %vm1108, %v1044, %v1172
    %v1237 = vsel %vm1109, %v1045, %v1173
    %v1238 = vld [vmem:[#allocation8] sm:$0xff]
    %v1239 = vld [vmem:[#allocation8 + $0x8] sm:$0xff]
    %v1240 = vld [vmem:[#allocation8 + $0x10] sm:$0xff]
    %v1241 = vld [vmem:[#allocation8 + $0x18] sm:$0xff]
    %v1242 = vld [vmem:[#allocation8 + $0x20] sm:$0xff]
    %v1243 = vld [vmem:[#allocation8 + $0x28] sm:$0xff]
    %v1244 = vld [vmem:[#allocation8 + $0x30] sm:$0xff]
    %v1245 = vld [vmem:[#allocation8 + $0x38] sm:$0xff]
    %v1246 = vld [vmem:[#allocation8 + $0x40] sm:$0xff]
    %v1247 = vld [vmem:[#allocation8 + $0x48] sm:$0xff]
    %v1248 = vld [vmem:[#allocation8 + $0x50] sm:$0xff]
    %v1249 = vld [vmem:[#allocation8 + $0x58] sm:$0xff]
    %v1250 = vld [vmem:[#allocation8 + $0x60] sm:$0xff]
    %v1251 = vld [vmem:[#allocation8 + $0x68] sm:$0xff]
    %v1252 = vld [vmem:[#allocation8 + $0x70] sm:$0xff]
    %v1253 = vld [vmem:[#allocation8 + $0x78] sm:$0xff]
    %v1254 = vld [vmem:[#allocation8 + $0x80] sm:$0xff]
    %v1255 = vld [vmem:[#allocation8 + $0x88] sm:$0xff]
    %v1256 = vld [vmem:[#allocation8 + $0x90] sm:$0xff]
    %v1257 = vld [vmem:[#allocation8 + $0x98] sm:$0xff]
    %v1258 = vld [vmem:[#allocation8 + $0xa0] sm:$0xff]
    %v1259 = vld [vmem:[#allocation8 + $0xa8] sm:$0xff]
    %v1260 = vld [vmem:[#allocation8 + $0xb0] sm:$0xff]
    %v1261 = vld [vmem:[#allocation8 + $0xb8] sm:$0xff]
    %v1262 = vld [vmem:[#allocation8 + $0xc0] sm:$0xff]
    %v1263 = vld [vmem:[#allocation8 + $0xc8] sm:$0xff]
    %v1264 = vld [vmem:[#allocation8 + $0xd0] sm:$0xff]
    %v1265 = vld [vmem:[#allocation8 + $0xd8] sm:$0xff]
    %v1266 = vld [vmem:[#allocation8 + $0xe0] sm:$0xff]
    %v1267 = vld [vmem:[#allocation8 + $0xe8] sm:$0xff]
    %v1268 = vld [vmem:[#allocation8 + $0xf0] sm:$0xff]
    %v1269 = vld [vmem:[#allocation8 + $0xf8] sm:$0xff]
    %v1270 = vpack.c.bf16 %v1176, %v1174
    %v1271 = vpack.c.bf16 %v1177, %v1175
    %v1272 = vpack.c.bf16 %v1180, %v1178
    %v1273 = vpack.c.bf16 %v1181, %v1179
    %v1274 = vpack.c.bf16 %v1184, %v1182
    %v1275 = vpack.c.bf16 %v1185, %v1183
    %v1276 = vpack.c.bf16 %v1188, %v1186
    %v1277 = vpack.c.bf16 %v1189, %v1187
    %v1278 = vpack.c.bf16 %v1192, %v1190
    %v1279 = vpack.c.bf16 %v1193, %v1191
    %v1280 = vpack.c.bf16 %v1196, %v1194
    %v1281 = vpack.c.bf16 %v1197, %v1195
    %v1282 = vpack.c.bf16 %v1200, %v1198
    %v1283 = vpack.c.bf16 %v1201, %v1199
    %v1284 = vpack.c.bf16 %v1204, %v1202
    %v1285 = vpack.c.bf16 %v1205, %v1203
    %v1286 = vpack.c.bf16 %v1208, %v1206
    %v1287 = vpack.c.bf16 %v1209, %v1207
    %v1288 = vpack.c.bf16 %v1212, %v1210
    %v1289 = vpack.c.bf16 %v1213, %v1211
    %v1290 = vpack.c.bf16 %v1216, %v1214
    %v1291 = vpack.c.bf16 %v1217, %v1215
    %v1292 = vpack.c.bf16 %v1220, %v1218
    %v1293 = vpack.c.bf16 %v1221, %v1219
    %v1294 = vpack.c.bf16 %v1224, %v1222
    %v1295 = vpack.c.bf16 %v1225, %v1223
    %v1296 = vpack.c.bf16 %v1228, %v1226
    %v1297 = vpack.c.bf16 %v1229, %v1227
    %v1298 = vpack.c.bf16 %v1232, %v1230
    %v1299 = vpack.c.bf16 %v1233, %v1231
    %v1300 = vpack.c.bf16 %v1236, %v1234
    %v1301 = vpack.c.bf16 %v1237, %v1235
    %v1334 = vunpack.c.l.b16 %v1238
    %v1335 = vunpack.c.h.b16 %v1238
    %v1336 = vunpack.c.l.b16 %v1239
    %v1337 = vunpack.c.h.b16 %v1239
    %v1338 = vunpack.c.l.b16 %v1240
    %v1339 = vunpack.c.h.b16 %v1240
    %v1340 = vunpack.c.l.b16 %v1241
    %v1341 = vunpack.c.h.b16 %v1241
    %v1342 = vunpack.c.l.b16 %v1242
    %v1343 = vunpack.c.h.b16 %v1242
    %v1344 = vunpack.c.l.b16 %v1243
    %v1345 = vunpack.c.h.b16 %v1243
    %v1346 = vunpack.c.l.b16 %v1244
    %v1347 = vunpack.c.h.b16 %v1244
    %v1348 = vunpack.c.l.b16 %v1245
    %v1349 = vunpack.c.h.b16 %v1245
    %v1350 = vunpack.c.l.b16 %v1246
    %v1351 = vunpack.c.h.b16 %v1246
    %v1352 = vunpack.c.l.b16 %v1247
    %v1353 = vunpack.c.h.b16 %v1247
    %v1354 = vunpack.c.l.b16 %v1248
    %v1355 = vunpack.c.h.b16 %v1248
    %v1356 = vunpack.c.l.b16 %v1249
    %v1357 = vunpack.c.h.b16 %v1249
    %v1358 = vunpack.c.l.b16 %v1250
    %v1359 = vunpack.c.h.b16 %v1250
    %v1360 = vunpack.c.l.b16 %v1251
    %v1361 = vunpack.c.h.b16 %v1251
    %v1362 = vunpack.c.l.b16 %v1252
    %v1363 = vunpack.c.h.b16 %v1252
    %v1364 = vunpack.c.l.b16 %v1253
    %v1365 = vunpack.c.h.b16 %v1253
    %v1366 = vunpack.c.l.b16 %v1254
    %v1367 = vunpack.c.h.b16 %v1254
    %v1368 = vunpack.c.l.b16 %v1255
    %v1369 = vunpack.c.h.b16 %v1255
    %v1370 = vunpack.c.l.b16 %v1256
    %v1371 = vunpack.c.h.b16 %v1256
    %v1372 = vunpack.c.l.b16 %v1257
    %v1373 = vunpack.c.h.b16 %v1257
    %v1374 = vunpack.c.l.b16 %v1258
    %v1375 = vunpack.c.h.b16 %v1258
    %v1376 = vunpack.c.l.b16 %v1259
    %v1377 = vunpack.c.h.b16 %v1259
    %v1378 = vunpack.c.l.b16 %v1260
    %v1379 = vunpack.c.h.b16 %v1260
    %v1380 = vunpack.c.l.b16 %v1261
    %v1381 = vunpack.c.h.b16 %v1261
    %v1382 = vunpack.c.l.b16 %v1262
    %v1383 = vunpack.c.h.b16 %v1262
    %v1384 = vunpack.c.l.b16 %v1263
    %v1385 = vunpack.c.h.b16 %v1263
    %v1386 = vunpack.c.l.b16 %v1264
    %v1387 = vunpack.c.h.b16 %v1264
    %v1388 = vunpack.c.l.b16 %v1265
    %v1389 = vunpack.c.h.b16 %v1265
    %v1390 = vunpack.c.l.b16 %v1266
    %v1391 = vunpack.c.h.b16 %v1266
    %v1392 = vunpack.c.l.b16 %v1267
    %v1393 = vunpack.c.h.b16 %v1267
    %v1394 = vunpack.c.l.b16 %v1268
    %v1395 = vunpack.c.h.b16 %v1268
    %v1396 = vunpack.c.l.b16 %v1269
    %v1397 = vunpack.c.h.b16 %v1269
    %v1398 = vpack.c.b16 %v1336, %v1334
    %v1399 = vpack.c.b16 %v1337, %v1335
    %v1400 = vpack.c.b16 %v1340, %v1338
    %v1401 = vpack.c.b16 %v1341, %v1339
    %v1402 = vpack.c.b16 %v1344, %v1342
    %v1403 = vpack.c.b16 %v1345, %v1343
    %v1404 = vpack.c.b16 %v1348, %v1346
    %v1405 = vpack.c.b16 %v1349, %v1347
    %v1406 = vpack.c.b16 %v1352, %v1350
    %v1407 = vpack.c.b16 %v1353, %v1351
    %v1408 = vpack.c.b16 %v1356, %v1354
    %v1409 = vpack.c.b16 %v1357, %v1355
    %v1410 = vpack.c.b16 %v1360, %v1358
    %v1411 = vpack.c.b16 %v1361, %v1359
    %v1412 = vpack.c.b16 %v1364, %v1362
    %v1413 = vpack.c.b16 %v1365, %v1363
    %v1414 = vpack.c.b16 %v1368, %v1366
    %v1415 = vpack.c.b16 %v1369, %v1367
    %v1416 = vpack.c.b16 %v1372, %v1370
    %v1417 = vpack.c.b16 %v1373, %v1371
    %v1418 = vpack.c.b16 %v1376, %v1374
    %v1419 = vpack.c.b16 %v1377, %v1375
    %v1420 = vpack.c.b16 %v1380, %v1378
    %v1421 = vpack.c.b16 %v1381, %v1379
    %v1422 = vpack.c.b16 %v1384, %v1382
    %v1423 = vpack.c.b16 %v1385, %v1383
    %v1424 = vpack.c.b16 %v1388, %v1386
    %v1425 = vpack.c.b16 %v1389, %v1387
    %v1426 = vpack.c.b16 %v1392, %v1390
    %v1427 = vpack.c.b16 %v1393, %v1391
    %v1428 = vpack.c.b16 %v1396, %v1394
    %v1429 = vpack.c.b16 %v1397, %v1395
    %1462 = vmatprep.subr.bf16.mxu0 %v1399
    %1463 = vmatpush1.bf16.msra.mxu0 %v1398
    %1464 = vmatprep.subr.bf16.mxu0 %v1401
    %1465 = vmatpush1.bf16.msra.mxu0 %v1400
    %1466 = vmatprep.subr.bf16.mxu0 %v1403
    %1467 = vmatpush1.bf16.msra.mxu0 %v1402
    %1468 = vmatprep.subr.bf16.mxu0 %v1405
    %1469 = vmatpush1.bf16.msra.mxu0 %v1404
    %1470 = vmatprep.subr.bf16.mxu0 %v1407
    %1471 = vmatpush1.bf16.msra.mxu0 %v1406
    %1472 = vmatprep.subr.bf16.mxu0 %v1409
    %1473 = vmatpush1.bf16.msra.mxu0 %v1408
    %1474 = vmatprep.subr.bf16.mxu0 %v1411
    %1475 = vmatpush1.bf16.msra.mxu0 %v1410
    %1476 = vmatprep.subr.bf16.mxu0 %v1413
    %1477 = vmatpush1.bf16.msra.mxu0 %v1412
    %1478 = vmatprep.subr.bf16.mxu0 %v1415
    %1479 = vmatpush1.bf16.msra.mxu0 %v1414
    %1480 = vmatprep.subr.bf16.mxu0 %v1417
    %1481 = vmatpush1.bf16.msra.mxu0 %v1416
    %1482 = vmatprep.subr.bf16.mxu0 %v1419
    %1483 = vmatpush1.bf16.msra.mxu0 %v1418
    %1484 = vmatprep.subr.bf16.mxu0 %v1421
    %1485 = vmatpush1.bf16.msra.mxu0 %v1420
    %1486 = vmatprep.subr.bf16.mxu0 %v1423
    %1487 = vmatpush1.bf16.msra.mxu0 %v1422
    %1488 = vmatprep.subr.bf16.mxu0 %v1425
    %1489 = vmatpush1.bf16.msra.mxu0 %v1424
    %1490 = vmatprep.subr.bf16.mxu0 %v1427
    %1491 = vmatpush1.bf16.msra.mxu0 %v1426
    %1492 = vmatprep.subr.bf16.mxu0 %v1429
    %1493 = vmatpush1.bf16.msra.mxu0 %v1428
    %1494 = vmatprep.mubr.bf16.mxu0 %v1271
    %1495 = vmatmul.mubr.bf16.gmra.mrb[0].mxu0 %v1270
    %v1496 = vpop.f32.mrb[0].mxu0
    %v1497 = vadd.f32 0.0, %v1496
    %v1498 = vpop.f32.mrb[0].mxu0
    %v1499 = vadd.f32 0.0, %v1498
    %v1500 = vpop.f32.mrb[0].mxu0
    %v1501 = vadd.f32 0.0, %v1500
    %v1502 = vpop.f32.mrb[0].mxu0
    %v1503 = vadd.f32 0.0, %v1502
    %1504 = vmatprep.mubr.bf16.mxu0 %v1273
    %1505 = vmatmul.mubr.bf16.gmra.mrb[0].mxu0 %v1272
    %v1506 = vpop.f32.mrb[0].mxu0
    %v1507 = vadd.f32 0.0, %v1506
    %v1508 = vpop.f32.mrb[0].mxu0
    %v1509 = vadd.f32 0.0, %v1508
    %v1510 = vpop.f32.mrb[0].mxu0
    %v1511 = vadd.f32 0.0, %v1510
    %v1512 = vpop.f32.mrb[0].mxu0
    %v1513 = vadd.f32 0.0, %v1512
    %1514 = vmatprep.mubr.bf16.mxu0 %v1275
    %1515 = vmatmul.mubr.bf16.gmra.mrb[0].mxu0 %v1274
    %v1516 = vpop.f32.mrb[0].mxu0
    %v1517 = vadd.f32 0.0, %v1516
    %v1518 = vpop.f32.mrb[0].mxu0
    %v1519 = vadd.f32 0.0, %v1518
    %v1520 = vpop.f32.mrb[0].mxu0
    %v1521 = vadd.f32 0.0, %v1520
    %v1522 = vpop.f32.mrb[0].mxu0
    %v1523 = vadd.f32 0.0, %v1522
    %1524 = vmatprep.mubr.bf16.mxu0 %v1277
    %1525 = vmatmul.mubr.bf16.gmra.mrb[0].mxu0 %v1276
    %v1526 = vpop.f32.mrb[0].mxu0
    %v1527 = vadd.f32 0.0, %v1526
    %v1528 = vpop.f32.mrb[0].mxu0
    %v1529 = vadd.f32 0.0, %v1528
    %v1530 = vpop.f32.mrb[0].mxu0
    %v1531 = vadd.f32 0.0, %v1530
    %v1532 = vpop.f32.mrb[0].mxu0
    %v1533 = vadd.f32 0.0, %v1532
    %1534 = vmatprep.mubr.bf16.mxu0 %v1279
    %1535 = vmatmul.mubr.bf16.gmra.mrb[0].mxu0 %v1278
    %v1536 = vpop.f32.mrb[0].mxu0
    %v1537 = vadd.f32 0.0, %v1536
    %v1538 = vpop.f32.mrb[0].mxu0
    %v1539 = vadd.f32 0.0, %v1538
    %v1540 = vpop.f32.mrb[0].mxu0
    %v1541 = vadd.f32 0.0, %v1540
    %v1542 = vpop.f32.mrb[0].mxu0
    %v1543 = vadd.f32 0.0, %v1542
    %1544 = vmatprep.mubr.bf16.mxu0 %v1281
    %1545 = vmatmul.mubr.bf16.gmra.mrb[0].mxu0 %v1280
    %v1546 = vpop.f32.mrb[0].mxu0
    %v1547 = vadd.f32 0.0, %v1546
    %v1548 = vpop.f32.mrb[0].mxu0
    %v1549 = vadd.f32 0.0, %v1548
    %v1550 = vpop.f32.mrb[0].mxu0
    %v1551 = vadd.f32 0.0, %v1550
    %v1552 = vpop.f32.mrb[0].mxu0
    %v1553 = vadd.f32 0.0, %v1552
    %1554 = vmatprep.mubr.bf16.mxu0 %v1283
    %1555 = vmatmul.mubr.bf16.gmra.mrb[0].mxu0 %v1282
    %v1556 = vpop.f32.mrb[0].mxu0
    %v1557 = vadd.f32 0.0, %v1556
    %v1558 = vpop.f32.mrb[0].mxu0
    %v1559 = vadd.f32 0.0, %v1558
    %v1560 = vpop.f32.mrb[0].mxu0
    %v1561 = vadd.f32 0.0, %v1560
    %v1562 = vpop.f32.mrb[0].mxu0
    %v1563 = vadd.f32 0.0, %v1562
    %1564 = vmatprep.mubr.bf16.mxu0 %v1285
    %1565 = vmatmul.mubr.bf16.gmra.mrb[0].mxu0 %v1284
    %v1566 = vpop.f32.mrb[0].mxu0
    %v1567 = vadd.f32 0.0, %v1566
    %v1568 = vpop.f32.mrb[0].mxu0
    %v1569 = vadd.f32 0.0, %v1568
    %v1570 = vpop.f32.mrb[0].mxu0
    %v1571 = vadd.f32 0.0, %v1570
    %v1572 = vpop.f32.mrb[0].mxu0
    %v1573 = vadd.f32 0.0, %v1572
    %1574 = vmatprep.mubr.bf16.mxu0 %v1287
    %1575 = vmatmul.mubr.bf16.gmra.mrb[0].mxu0 %v1286
    %v1576 = vpop.f32.mrb[0].mxu0
    %v1577 = vadd.f32 0.0, %v1576
    %v1578 = vpop.f32.mrb[0].mxu0
    %v1579 = vadd.f32 0.0, %v1578
    %v1580 = vpop.f32.mrb[0].mxu0
    %v1581 = vadd.f32 0.0, %v1580
    %v1582 = vpop.f32.mrb[0].mxu0
    %v1583 = vadd.f32 0.0, %v1582
    %1584 = vmatprep.mubr.bf16.mxu0 %v1289
    %1585 = vmatmul.mubr.bf16.gmra.mrb[0].mxu0 %v1288
    %v1586 = vpop.f32.mrb[0].mxu0
    %v1587 = vadd.f32 0.0, %v1586
    %v1588 = vpop.f32.mrb[0].mxu0
    %v1589 = vadd.f32 0.0, %v1588
    %v1590 = vpop.f32.mrb[0].mxu0
    %v1591 = vadd.f32 0.0, %v1590
    %v1592 = vpop.f32.mrb[0].mxu0
    %v1593 = vadd.f32 0.0, %v1592
    %1594 = vmatprep.mubr.bf16.mxu0 %v1291
    %1595 = vmatmul.mubr.bf16.gmra.mrb[0].mxu0 %v1290
    %v1596 = vpop.f32.mrb[0].mxu0
    %v1597 = vadd.f32 0.0, %v1596
    %v1598 = vpop.f32.mrb[0].mxu0
    %v1599 = vadd.f32 0.0, %v1598
    %v1600 = vpop.f32.mrb[0].mxu0
    %v1601 = vadd.f32 0.0, %v1600
    %v1602 = vpop.f32.mrb[0].mxu0
    %v1603 = vadd.f32 0.0, %v1602
    %1604 = vmatprep.mubr.bf16.mxu0 %v1293
    %1605 = vmatmul.mubr.bf16.gmra.mrb[0].mxu0 %v1292
    %v1606 = vpop.f32.mrb[0].mxu0
    %v1607 = vadd.f32 0.0, %v1606
    %v1608 = vpop.f32.mrb[0].mxu0
    %v1609 = vadd.f32 0.0, %v1608
    %v1610 = vpop.f32.mrb[0].mxu0
    %v1611 = vadd.f32 0.0, %v1610
    %v1612 = vpop.f32.mrb[0].mxu0
    %v1613 = vadd.f32 0.0, %v1612
    %1614 = vmatprep.mubr.bf16.mxu0 %v1295
    %1615 = vmatmul.mubr.bf16.gmra.mrb[0].mxu0 %v1294
    %v1616 = vpop.f32.mrb[0].mxu0
    %v1617 = vadd.f32 0.0, %v1616
    %v1618 = vpop.f32.mrb[0].mxu0
    %v1619 = vadd.f32 0.0, %v1618
    %v1620 = vpop.f32.mrb[0].mxu0
    %v1621 = vadd.f32 0.0, %v1620
    %v1622 = vpop.f32.mrb[0].mxu0
    %v1623 = vadd.f32 0.0, %v1622
    %1624 = vmatprep.mubr.bf16.mxu0 %v1297
    %1625 = vmatmul.mubr.bf16.gmra.mrb[0].mxu0 %v1296
    %v1626 = vpop.f32.mrb[0].mxu0
    %v1627 = vadd.f32 0.0, %v1626
    %v1628 = vpop.f32.mrb[0].mxu0
    %v1629 = vadd.f32 0.0, %v1628
    %v1630 = vpop.f32.mrb[0].mxu0
    %v1631 = vadd.f32 0.0, %v1630
    %v1632 = vpop.f32.mrb[0].mxu0
    %v1633 = vadd.f32 0.0, %v1632
    %1634 = vmatprep.mubr.bf16.mxu0 %v1299
    %1635 = vmatmul.mubr.bf16.gmra.mrb[0].mxu0 %v1298
    %v1636 = vpop.f32.mrb[0].mxu0
    %v1637 = vadd.f32 0.0, %v1636
    %v1638 = vpop.f32.mrb[0].mxu0
    %v1639 = vadd.f32 0.0, %v1638
    %v1640 = vpop.f32.mrb[0].mxu0
    %v1641 = vadd.f32 0.0, %v1640
    %v1642 = vpop.f32.mrb[0].mxu0
    %v1643 = vadd.f32 0.0, %v1642
    %1644 = vmatprep.mubr.bf16.mxu0 %v1301
    %1645 = vmatmul.mubr.bf16.gmra.mrb[0].mxu0 %v1300
    %v1646 = vpop.f32.mrb[0].mxu0
    %v1647 = vadd.f32 0.0, %v1646
    %v1648 = vpop.f32.mrb[0].mxu0
    %v1649 = vadd.f32 0.0, %v1648
    %v1650 = vpop.f32.mrb[0].mxu0
    %v1651 = vadd.f32 0.0, %v1650
    %v1652 = vpop.f32.mrb[0].mxu0
    %v1653 = vadd.f32 0.0, %v1652
    %1654 = vdwg.mxu0
    %v1655 = vadd.f32 %v1497, %v1501
    %v1656 = vadd.f32 %v1655, %v1507
    %v1657 = vadd.f32 %v1656, %v1511
    %v1658 = vadd.f32 %v1657, %v1517
    %v1659 = vadd.f32 %v1658, %v1521
    %v1660 = vadd.f32 %v1659, %v1527
    %v1661 = vadd.f32 %v1660, %v1531
    %v1662 = vadd.f32 %v1661, %v1537
    %v1663 = vadd.f32 %v1662, %v1541
    %v1664 = vadd.f32 %v1663, %v1547
    %v1665 = vadd.f32 %v1664, %v1551
    %v1666 = vadd.f32 %v1665, %v1557
    %v1667 = vadd.f32 %v1666, %v1561
    %v1668 = vadd.f32 %v1667, %v1567
    %v1669 = vadd.f32 %v1668, %v1571
    %v1670 = vadd.f32 %v1669, %v1577
    %v1671 = vadd.f32 %v1670, %v1581
    %v1672 = vadd.f32 %v1671, %v1587
    %v1673 = vadd.f32 %v1672, %v1591
    %v1674 = vadd.f32 %v1673, %v1597
    %v1675 = vadd.f32 %v1674, %v1601
    %v1676 = vadd.f32 %v1675, %v1607
    %v1677 = vadd.f32 %v1676, %v1611
    %v1678 = vadd.f32 %v1677, %v1617
    %v1679 = vadd.f32 %v1678, %v1621
    %v1680 = vadd.f32 %v1679, %v1627
    %v1681 = vadd.f32 %v1680, %v1631
    %v1682 = vadd.f32 %v1681, %v1637
    %v1683 = vadd.f32 %v1682, %v1641
    %v1684 = vadd.f32 %v1683, %v1647
    %v1685 = vadd.f32 %v1684, %v1651
    %v1686 = vrot.slane %v1685, 4
    %v1687 = vadd.f32 %v1685, %v1686
    %v1688 = vrot.slane %v1687, 2
    %v1689 = vadd.f32 %v1687, %v1688
    %v1690 = vrot.slane %v1689, 1
    %v1691 = vadd.f32 %v1689, %v1690
    %v1692 = vadd.f32 %v1499, %v1503
    %v1693 = vadd.f32 %v1692, %v1509
    %v1694 = vadd.f32 %v1693, %v1513
    %v1695 = vadd.f32 %v1694, %v1519
    %v1696 = vadd.f32 %v1695, %v1523
    %v1697 = vadd.f32 %v1696, %v1529
    %v1698 = vadd.f32 %v1697, %v1533
    %v1699 = vadd.f32 %v1698, %v1539
    %v1700 = vadd.f32 %v1699, %v1543
    %v1701 = vadd.f32 %v1700, %v1549
    %v1702 = vadd.f32 %v1701, %v1553
    %v1703 = vadd.f32 %v1702, %v1559
    %v1704 = vadd.f32 %v1703, %v1563
    %v1705 = vadd.f32 %v1704, %v1569
    %v1706 = vadd.f32 %v1705, %v1573
    %v1707 = vadd.f32 %v1706, %v1579
    %v1708 = vadd.f32 %v1707, %v1583
    %v1709 = vadd.f32 %v1708, %v1589
    %v1710 = vadd.f32 %v1709, %v1593
    %v1711 = vadd.f32 %v1710, %v1599
    %v1712 = vadd.f32 %v1711, %v1603
    %v1713 = vadd.f32 %v1712, %v1609
    %v1714 = vadd.f32 %v1713, %v1613
    %v1715 = vadd.f32 %v1714, %v1619
    %v1716 = vadd.f32 %v1715, %v1623
    %v1717 = vadd.f32 %v1716, %v1629
    %v1718 = vadd.f32 %v1717, %v1633
    %v1719 = vadd.f32 %v1718, %v1639
    %v1720 = vadd.f32 %v1719, %v1643
    %v1721 = vadd.f32 %v1720, %v1649
    %v1722 = vadd.f32 %v1721, %v1653
    %v1723 = vrot.slane %v1722, 4
    %v1724 = vadd.f32 %v1722, %v1723
    %v1725 = vrot.slane %v1724, 2
    %v1726 = vadd.f32 %v1724, %v1725
    %v1727 = vrot.slane %v1726, 1
    %v1728 = vadd.f32 %v1726, %v1727
    %v1729 = vmul.f32 %v1691, %v643
    %v1730 = vmul.f32 %v1728, %v643
    %v1731 = vsub.f32 %v1497, %v1729
    %v1732 = vsub.f32 %v1499, %v1730
    %v1733 = vsub.f32 %v1501, %v1729
    %v1734 = vsub.f32 %v1503, %v1730
    %v1735 = vsub.f32 %v1507, %v1729
    %v1736 = vsub.f32 %v1509, %v1730
    %v1737 = vsub.f32 %v1511, %v1729
    %v1738 = vsub.f32 %v1513, %v1730
    %v1739 = vsub.f32 %v1517, %v1729
    %v1740 = vsub.f32 %v1519, %v1730
    %v1741 = vsub.f32 %v1521, %v1729
    %v1742 = vsub.f32 %v1523, %v1730
    %v1743 = vsub.f32 %v1527, %v1729
    %v1744 = vsub.f32 %v1529, %v1730
    %v1745 = vsub.f32 %v1531, %v1729
    %v1746 = vsub.f32 %v1533, %v1730
    %v1747 = vsub.f32 %v1537, %v1729
    %v1748 = vsub.f32 %v1539, %v1730
    %v1749 = vsub.f32 %v1541, %v1729
    %v1750 = vsub.f32 %v1543, %v1730
    %v1751 = vsub.f32 %v1547, %v1729
    %v1752 = vsub.f32 %v1549, %v1730
    %v1753 = vsub.f32 %v1551, %v1729
    %v1754 = vsub.f32 %v1553, %v1730
    %v1755 = vsub.f32 %v1557, %v1729
    %v1756 = vsub.f32 %v1559, %v1730
    %v1757 = vsub.f32 %v1561, %v1729
    %v1758 = vsub.f32 %v1563, %v1730
    %v1759 = vsub.f32 %v1567, %v1729
    %v1760 = vsub.f32 %v1569, %v1730
    %v1761 = vsub.f32 %v1571, %v1729
    %v1762 = vsub.f32 %v1573, %v1730
    %v1763 = vsub.f32 %v1577, %v1729
    %v1764 = vsub.f32 %v1579, %v1730
    %v1765 = vsub.f32 %v1581, %v1729
    %v1766 = vsub.f32 %v1583, %v1730
    %v1767 = vsub.f32 %v1587, %v1729
    %v1768 = vsub.f32 %v1589, %v1730
    %v1769 = vsub.f32 %v1591, %v1729
    %v1770 = vsub.f32 %v1593, %v1730
    %v1771 = vsub.f32 %v1597, %v1729
    %v1772 = vsub.f32 %v1599, %v1730
    %v1773 = vsub.f32 %v1601, %v1729
    %v1774 = vsub.f32 %v1603, %v1730
    %v1775 = vsub.f32 %v1607, %v1729
    %v1776 = vsub.f32 %v1609, %v1730
    %v1777 = vsub.f32 %v1611, %v1729
    %v1778 = vsub.f32 %v1613, %v1730
    %v1779 = vsub.f32 %v1617, %v1729
    %v1780 = vsub.f32 %v1619, %v1730
    %v1781 = vsub.f32 %v1621, %v1729
    %v1782 = vsub.f32 %v1623, %v1730
    %v1783 = vsub.f32 %v1627, %v1729
    %v1784 = vsub.f32 %v1629, %v1730
    %v1785 = vsub.f32 %v1631, %v1729
    %v1786 = vsub.f32 %v1633, %v1730
    %v1787 = vsub.f32 %v1637, %v1729
    %v1788 = vsub.f32 %v1639, %v1730
    %v1789 = vsub.f32 %v1641, %v1729
    %v1790 = vsub.f32 %v1643, %v1730
    %v1791 = vsub.f32 %v1647, %v1729
    %v1792 = vsub.f32 %v1649, %v1730
    %v1793 = vsub.f32 %v1651, %v1729
    %v1794 = vsub.f32 %v1653, %v1730
    %v1795 = vmul.f32 %v1731, %v1731
    %v1796 = vmul.f32 %v1732, %v1732
    %v1797 = vmul.f32 %v1733, %v1733
    %v1798 = vmul.f32 %v1734, %v1734
    %v1799 = vmul.f32 %v1735, %v1735
    %v1800 = vmul.f32 %v1736, %v1736
    %v1801 = vmul.f32 %v1737, %v1737
    %v1802 = vmul.f32 %v1738, %v1738
    %v1803 = vmul.f32 %v1739, %v1739
    %v1804 = vmul.f32 %v1740, %v1740
    %v1805 = vmul.f32 %v1741, %v1741
    %v1806 = vmul.f32 %v1742, %v1742
    %v1807 = vmul.f32 %v1743, %v1743
    %v1808 = vmul.f32 %v1744, %v1744
    %v1809 = vmul.f32 %v1745, %v1745
    %v1810 = vmul.f32 %v1746, %v1746
    %v1811 = vmul.f32 %v1747, %v1747
    %v1812 = vmul.f32 %v1748, %v1748
    %v1813 = vmul.f32 %v1749, %v1749
    %v1814 = vmul.f32 %v1750, %v1750
    %v1815 = vmul.f32 %v1751, %v1751
    %v1816 = vmul.f32 %v1752, %v1752
    %v1817 = vmul.f32 %v1753, %v1753
    %v1818 = vmul.f32 %v1754, %v1754
    %v1819 = vmul.f32 %v1755, %v1755
    %v1820 = vmul.f32 %v1756, %v1756
    %v1821 = vmul.f32 %v1757, %v1757
    %v1822 = vmul.f32 %v1758, %v1758
    %v1823 = vmul.f32 %v1759, %v1759
    %v1824 = vmul.f32 %v1760, %v1760
    %v1825 = vmul.f32 %v1761, %v1761
    %v1826 = vmul.f32 %v1762, %v1762
    %v1827 = vmul.f32 %v1763, %v1763
    %v1828 = vmul.f32 %v1764, %v1764
    %v1829 = vmul.f32 %v1765, %v1765
    %v1830 = vmul.f32 %v1766, %v1766
    %v1831 = vmul.f32 %v1767, %v1767
    %v1832 = vmul.f32 %v1768, %v1768
    %v1833 = vmul.f32 %v1769, %v1769
    %v1834 = vmul.f32 %v1770, %v1770
    %v1835 = vmul.f32 %v1771, %v1771
    %v1836 = vmul.f32 %v1772, %v1772
    %v1837 = vmul.f32 %v1773, %v1773
    %v1838 = vmul.f32 %v1774, %v1774
    %v1839 = vmul.f32 %v1775, %v1775
    %v1840 = vmul.f32 %v1776, %v1776
    %v1841 = vmul.f32 %v1777, %v1777
    %v1842 = vmul.f32 %v1778, %v1778
    %v1843 = vmul.f32 %v1779, %v1779
    %v1844 = vmul.f32 %v1780, %v1780
    %v1845 = vmul.f32 %v1781, %v1781
    %v1846 = vmul.f32 %v1782, %v1782
    %v1847 = vmul.f32 %v1783, %v1783
    %v1848 = vmul.f32 %v1784, %v1784
    %v1849 = vmul.f32 %v1785, %v1785
    %v1850 = vmul.f32 %v1786, %v1786
    %v1851 = vmul.f32 %v1787, %v1787
    %v1852 = vmul.f32 %v1788, %v1788
    %v1853 = vmul.f32 %v1789, %v1789
    %v1854 = vmul.f32 %v1790, %v1790
    %v1855 = vmul.f32 %v1791, %v1791
    %v1856 = vmul.f32 %v1792, %v1792
    %v1857 = vmul.f32 %v1793, %v1793
    %v1858 = vmul.f32 %v1794, %v1794
    %v1859 = vadd.f32 %v1795, %v1797
    %v1860 = vadd.f32 %v1859, %v1799
    %v1861 = vadd.f32 %v1860, %v1801
    %v1862 = vadd.f32 %v1861, %v1803
    %v1863 = vadd.f32 %v1862, %v1805
    %v1864 = vadd.f32 %v1863, %v1807
    %v1865 = vadd.f32 %v1864, %v1809
    %v1866 = vadd.f32 %v1865, %v1811
    %v1867 = vadd.f32 %v1866, %v1813
    %v1868 = vadd.f32 %v1867, %v1815
    %v1869 = vadd.f32 %v1868, %v1817
    %v1870 = vadd.f32 %v1869, %v1819
    %v1871 = vadd.f32 %v1870, %v1821
    %v1872 = vadd.f32 %v1871, %v1823
    %v1873 = vadd.f32 %v1872, %v1825
    %v1874 = vadd.f32 %v1873, %v1827
    %v1875 = vadd.f32 %v1874, %v1829
    %v1876 = vadd.f32 %v1875, %v1831
    %v1877 = vadd.f32 %v1876, %v1833
    %v1878 = vadd.f32 %v1877, %v1835
    %v1879 = vadd.f32 %v1878, %v1837
    %v1880 = vadd.f32 %v1879, %v1839
    %v1881 = vadd.f32 %v1880, %v1841
    %v1882 = vadd.f32 %v1881, %v1843
    %v1883 = vadd.f32 %v1882, %v1845
    %v1884 = vadd.f32 %v1883, %v1847
    %v1885 = vadd.f32 %v1884, %v1849
    %v1886 = vadd.f32 %v1885, %v1851
    %v1887 = vadd.f32 %v1886, %v1853
    %v1888 = vadd.f32 %v1887, %v1855
    %v1889 = vadd.f32 %v1888, %v1857
    %v1890 = vrot.slane %v1889, 4
    %v1891 = vadd.f32 %v1889, %v1890
    %v1892 = vrot.slane %v1891, 2
    %v1893 = vadd.f32 %v1891, %v1892
    %v1894 = vrot.slane %v1893, 1
    %v1895 = vadd.f32 %v1893, %v1894
    %v1896 = vadd.f32 %v1796, %v1798
    %v1897 = vadd.f32 %v1896, %v1800
    %v1898 = vadd.f32 %v1897, %v1802
    %v1899 = vadd.f32 %v1898, %v1804
    %v1900 = vadd.f32 %v1899, %v1806
    %v1901 = vadd.f32 %v1900, %v1808
    %v1902 = vadd.f32 %v1901, %v1810
    %v1903 = vadd.f32 %v1902, %v1812
    %v1904 = vadd.f32 %v1903, %v1814
    %v1905 = vadd.f32 %v1904, %v1816
    %v1906 = vadd.f32 %v1905, %v1818
    %v1907 = vadd.f32 %v1906, %v1820
    %v1908 = vadd.f32 %v1907, %v1822
    %v1909 = vadd.f32 %v1908, %v1824
    %v1910 = vadd.f32 %v1909, %v1826
    %v1911 = vadd.f32 %v1910, %v1828
    %v1912 = vadd.f32 %v1911, %v1830
    %v1913 = vadd.f32 %v1912, %v1832
    %v1914 = vadd.f32 %v1913, %v1834
    %v1915 = vadd.f32 %v1914, %v1836
    %v1916 = vadd.f32 %v1915, %v1838
    %v1917 = vadd.f32 %v1916, %v1840
    %v1918 = vadd.f32 %v1917, %v1842
    %v1919 = vadd.f32 %v1918, %v1844
    %v1920 = vadd.f32 %v1919, %v1846
    %v1921 = vadd.f32 %v1920, %v1848
    %v1922 = vadd.f32 %v1921, %v1850
    %v1923 = vadd.f32 %v1922, %v1852
    %v1924 = vadd.f32 %v1923, %v1854
    %v1925 = vadd.f32 %v1924, %v1856
    %v1926 = vadd.f32 %v1925, %v1858
    %v1927 = vrot.slane %v1926, 4
    %v1928 = vadd.f32 %v1926, %v1927
    %v1929 = vrot.slane %v1928, 2
    %v1930 = vadd.f32 %v1928, %v1929
    %v1931 = vrot.slane %v1930, 1
    %v1932 = vadd.f32 %v1930, %v1931
    %v1933 = vmul.f32 %v1895, %v643
    %v1934 = vmul.f32 %v1932, %v643
    %v1935 = vld [vmem:[%s5] sm:$0x3]
    %v1936 = vadd.f32 %v1933, 1e-05
    %v1937 = vadd.f32 %v1934, 1e-05
    %v1938 = vrsqrt.pop %v1936
    %v1939 = vrsqrt.pop %v1937
    %v1942 = vcombine.low %v1938, %v1939
    %v1944 = vunpack.c.l.s4 1966171168
    %v1945 = vunpack.c.0.s8 %v1944
    %v1946 = vlaneseq
    %v1947 = vshrl.u32 %v1946, 7
    %v1948 = vsub.s32 %v1945, %v1947
    %v1949 = vrot.slane %v1942, %v1948
    %v1951 = vunpack.c.l.s4 1966171168
    %v1952 = vunpack.c.0.s8 %v1951
    %v1953 = vlaneseq
    %v1954 = vshrl.u32 %v1953, 7
    %v1955 = vsub.s32 %v1952, %v1954
    %v1956 = vrot.slane %v1949, %v1955
    %v1958 = vmul.f32 %v1935, %v1956
    %v1959 = vld [vmem:[%s6] sm:$0x3]
    %v1961 = vlaneseq
    %v1962 = vshrl.u32 %v1961, 7
    %v1963 = vsub.s32 0, %v1962
    %v1964 = vrot.slane %v1958, %v1963
    %v1965 = vlaneseq
    %v1966 = vshrl.u32 %v1965, 7
    %v1967 = vsub.s32 1, %v1966
    %v1968 = vrot.slane %v1958, %v1967
    %v1971 = vmul.f32 %v1729, %v1964
    %v1972 = vmul.f32 %v1730, %v1968
    %v1975 = vcombine.low %v1971, %v1972
    %v1977 = vunpack.c.l.s4 1966171168
    %v1978 = vunpack.c.0.s8 %v1977
    %v1979 = vlaneseq
    %v1980 = vshrl.u32 %v1979, 7
    %v1981 = vsub.s32 %v1978, %v1980
    %v1982 = vrot.slane %v1975, %v1981
    %v1984 = vunpack.c.l.s4 1966171168
    %v1985 = vunpack.c.0.s8 %v1984
    %v1986 = vlaneseq
    %v1987 = vshrl.u32 %v1986, 7
    %v1988 = vsub.s32 %v1985, %v1987
    %v1989 = vrot.slane %v1982, %v1988
    %v1991 = vsub.f32 %v1959, %v1989
    %v1992 = vmul.f32 %v1497, %v1964
    %v1993 = vmul.f32 %v1499, %v1968
    %v1994 = vmul.f32 %v1501, %v1964
    %v1995 = vmul.f32 %v1503, %v1968
    %v1996 = vmul.f32 %v1507, %v1964
    %v1997 = vmul.f32 %v1509, %v1968
    %v1998 = vmul.f32 %v1511, %v1964
    %v1999 = vmul.f32 %v1513, %v1968
    %v2000 = vmul.f32 %v1517, %v1964
    %v2001 = vmul.f32 %v1519, %v1968
    %v2002 = vmul.f32 %v1521, %v1964
    %v2003 = vmul.f32 %v1523, %v1968
    %v2004 = vmul.f32 %v1527, %v1964
    %v2005 = vmul.f32 %v1529, %v1968
    %v2006 = vmul.f32 %v1531, %v1964
    %v2007 = vmul.f32 %v1533, %v1968
    %v2008 = vmul.f32 %v1537, %v1964
    %v2009 = vmul.f32 %v1539, %v1968
    %v2010 = vmul.f32 %v1541, %v1964
    %v2011 = vmul.f32 %v1543, %v1968
    %v2012 = vmul.f32 %v1547, %v1964
    %v2013 = vmul.f32 %v1549, %v1968
    %v2014 = vmul.f32 %v1551, %v1964
    %v2015 = vmul.f32 %v1553, %v1968
    %v2016 = vmul.f32 %v1557, %v1964
    %v2017 = vmul.f32 %v1559, %v1968
    %v2018 = vmul.f32 %v1561, %v1964
    %v2019 = vmul.f32 %v1563, %v1968
    %v2020 = vmul.f32 %v1567, %v1964
    %v2021 = vmul.f32 %v1569, %v1968
    %v2022 = vmul.f32 %v1571, %v1964
    %v2023 = vmul.f32 %v1573, %v1968
    %v2024 = vmul.f32 %v1577, %v1964
    %v2025 = vmul.f32 %v1579, %v1968
    %v2026 = vmul.f32 %v1581, %v1964
    %v2027 = vmul.f32 %v1583, %v1968
    %v2028 = vmul.f32 %v1587, %v1964
    %v2029 = vmul.f32 %v1589, %v1968
    %v2030 = vmul.f32 %v1591, %v1964
    %v2031 = vmul.f32 %v1593, %v1968
    %v2032 = vmul.f32 %v1597, %v1964
    %v2033 = vmul.f32 %v1599, %v1968
    %v2034 = vmul.f32 %v1601, %v1964
    %v2035 = vmul.f32 %v1603, %v1968
    %v2036 = vmul.f32 %v1607, %v1964
    %v2037 = vmul.f32 %v1609, %v1968
    %v2038 = vmul.f32 %v1611, %v1964
    %v2039 = vmul.f32 %v1613, %v1968
    %v2040 = vmul.f32 %v1617, %v1964
    %v2041 = vmul.f32 %v1619, %v1968
    %v2042 = vmul.f32 %v1621, %v1964
    %v2043 = vmul.f32 %v1623, %v1968
    %v2044 = vmul.f32 %v1627, %v1964
    %v2045 = vmul.f32 %v1629, %v1968
    %v2046 = vmul.f32 %v1631, %v1964
    %v2047 = vmul.f32 %v1633, %v1968
    %v2048 = vmul.f32 %v1637, %v1964
    %v2049 = vmul.f32 %v1639, %v1968
    %v2050 = vmul.f32 %v1641, %v1964
    %v2051 = vmul.f32 %v1643, %v1968
    %v2052 = vmul.f32 %v1647, %v1964
    %v2053 = vmul.f32 %v1649, %v1968
    %v2054 = vmul.f32 %v1651, %v1964
    %v2055 = vmul.f32 %v1653, %v1968
    %v2057 = vlaneseq
    %v2058 = vshrl.u32 %v2057, 7
    %v2059 = vsub.s32 0, %v2058
    %v2060 = vrot.slane %v1991, %v2059
    %v2061 = vlaneseq
    %v2062 = vshrl.u32 %v2061, 7
    %v2063 = vsub.s32 1, %v2062
    %v2064 = vrot.slane %v1991, %v2063
    %v2067 = vadd.f32 %v1992, %v2060
    %v2068 = vadd.f32 %v1993, %v2064
    %v2069 = vadd.f32 %v1994, %v2060
    %v2070 = vadd.f32 %v1995, %v2064
    %v2071 = vadd.f32 %v1996, %v2060
    %v2072 = vadd.f32 %v1997, %v2064
    %v2073 = vadd.f32 %v1998, %v2060
    %v2074 = vadd.f32 %v1999, %v2064
    %v2075 = vadd.f32 %v2000, %v2060
    %v2076 = vadd.f32 %v2001, %v2064
    %v2077 = vadd.f32 %v2002, %v2060
    %v2078 = vadd.f32 %v2003, %v2064
    %v2079 = vadd.f32 %v2004, %v2060
    %v2080 = vadd.f32 %v2005, %v2064
    %v2081 = vadd.f32 %v2006, %v2060
    %v2082 = vadd.f32 %v2007, %v2064
    %v2083 = vadd.f32 %v2008, %v2060
    %v2084 = vadd.f32 %v2009, %v2064
    %v2085 = vadd.f32 %v2010, %v2060
    %v2086 = vadd.f32 %v2011, %v2064
    %v2087 = vadd.f32 %v2012, %v2060
    %v2088 = vadd.f32 %v2013, %v2064
    %v2089 = vadd.f32 %v2014, %v2060
    %v2090 = vadd.f32 %v2015, %v2064
    %v2091 = vadd.f32 %v2016, %v2060
    %v2092 = vadd.f32 %v2017, %v2064
    %v2093 = vadd.f32 %v2018, %v2060
    %v2094 = vadd.f32 %v2019, %v2064
    %v2095 = vadd.f32 %v2020, %v2060
    %v2096 = vadd.f32 %v2021, %v2064
    %v2097 = vadd.f32 %v2022, %v2060
    %v2098 = vadd.f32 %v2023, %v2064
    %v2099 = vadd.f32 %v2024, %v2060
    %v2100 = vadd.f32 %v2025, %v2064
    %v2101 = vadd.f32 %v2026, %v2060
    %v2102 = vadd.f32 %v2027, %v2064
    %v2103 = vadd.f32 %v2028, %v2060
    %v2104 = vadd.f32 %v2029, %v2064
    %v2105 = vadd.f32 %v2030, %v2060
    %v2106 = vadd.f32 %v2031, %v2064
    %v2107 = vadd.f32 %v2032, %v2060
    %v2108 = vadd.f32 %v2033, %v2064
    %v2109 = vadd.f32 %v2034, %v2060
    %v2110 = vadd.f32 %v2035, %v2064
    %v2111 = vadd.f32 %v2036, %v2060
    %v2112 = vadd.f32 %v2037, %v2064
    %v2113 = vadd.f32 %v2038, %v2060
    %v2114 = vadd.f32 %v2039, %v2064
    %v2115 = vadd.f32 %v2040, %v2060
    %v2116 = vadd.f32 %v2041, %v2064
    %v2117 = vadd.f32 %v2042, %v2060
    %v2118 = vadd.f32 %v2043, %v2064
    %v2119 = vadd.f32 %v2044, %v2060
    %v2120 = vadd.f32 %v2045, %v2064
    %v2121 = vadd.f32 %v2046, %v2060
    %v2122 = vadd.f32 %v2047, %v2064
    %v2123 = vadd.f32 %v2048, %v2060
    %v2124 = vadd.f32 %v2049, %v2064
    %v2125 = vadd.f32 %v2050, %v2060
    %v2126 = vadd.f32 %v2051, %v2064
    %v2127 = vadd.f32 %v2052, %v2060
    %v2128 = vadd.f32 %v2053, %v2064
    %v2129 = vadd.f32 %v2054, %v2060
    %v2130 = vadd.f32 %v2055, %v2064
    %vm2131 = vcmp.ge.f32.partialorder %v2067, 0.0
    %vm2132 = vcmp.ge.f32.partialorder %v2068, 0.0
    %vm2133 = vcmp.ge.f32.partialorder %v2069, 0.0
    %vm2134 = vcmp.ge.f32.partialorder %v2070, 0.0
    %vm2135 = vcmp.ge.f32.partialorder %v2071, 0.0
    %vm2136 = vcmp.ge.f32.partialorder %v2072, 0.0
    %vm2137 = vcmp.ge.f32.partialorder %v2073, 0.0
    %vm2138 = vcmp.ge.f32.partialorder %v2074, 0.0
    %vm2139 = vcmp.ge.f32.partialorder %v2075, 0.0
    %vm2140 = vcmp.ge.f32.partialorder %v2076, 0.0
    %vm2141 = vcmp.ge.f32.partialorder %v2077, 0.0
    %vm2142 = vcmp.ge.f32.partialorder %v2078, 0.0
    %vm2143 = vcmp.ge.f32.partialorder %v2079, 0.0
    %vm2144 = vcmp.ge.f32.partialorder %v2080, 0.0
    %vm2145 = vcmp.ge.f32.partialorder %v2081, 0.0
    %vm2146 = vcmp.ge.f32.partialorder %v2082, 0.0
    %vm2147 = vcmp.ge.f32.partialorder %v2083, 0.0
    %vm2148 = vcmp.ge.f32.partialorder %v2084, 0.0
    %vm2149 = vcmp.ge.f32.partialorder %v2085, 0.0
    %vm2150 = vcmp.ge.f32.partialorder %v2086, 0.0
    %vm2151 = vcmp.ge.f32.partialorder %v2087, 0.0
    %vm2152 = vcmp.ge.f32.partialorder %v2088, 0.0
    %vm2153 = vcmp.ge.f32.partialorder %v2089, 0.0
    %vm2154 = vcmp.ge.f32.partialorder %v2090, 0.0
    %vm2155 = vcmp.ge.f32.partialorder %v2091, 0.0
    %vm2156 = vcmp.ge.f32.partialorder %v2092, 0.0
    %vm2157 = vcmp.ge.f32.partialorder %v2093, 0.0
    %vm2158 = vcmp.ge.f32.partialorder %v2094, 0.0
    %vm2159 = vcmp.ge.f32.partialorder %v2095, 0.0
    %vm2160 = vcmp.ge.f32.partialorder %v2096, 0.0
    %vm2161 = vcmp.ge.f32.partialorder %v2097, 0.0
    %vm2162 = vcmp.ge.f32.partialorder %v2098, 0.0
    %vm2163 = vcmp.ge.f32.partialorder %v2099, 0.0
    %vm2164 = vcmp.ge.f32.partialorder %v2100, 0.0
    %vm2165 = vcmp.ge.f32.partialorder %v2101, 0.0
    %vm2166 = vcmp.ge.f32.partialorder %v2102, 0.0
    %vm2167 = vcmp.ge.f32.partialorder %v2103, 0.0
    %vm2168 = vcmp.ge.f32.partialorder %v2104, 0.0
    %vm2169 = vcmp.ge.f32.partialorder %v2105, 0.0
    %vm2170 = vcmp.ge.f32.partialorder %v2106, 0.0
    %vm2171 = vcmp.ge.f32.partialorder %v2107, 0.0
    %vm2172 = vcmp.ge.f32.partialorder %v2108, 0.0
    %vm2173 = vcmp.ge.f32.partialorder %v2109, 0.0
    %vm2174 = vcmp.ge.f32.partialorder %v2110, 0.0
    %vm2175 = vcmp.ge.f32.partialorder %v2111, 0.0
    %vm2176 = vcmp.ge.f32.partialorder %v2112, 0.0
    %vm2177 = vcmp.ge.f32.partialorder %v2113, 0.0
    %vm2178 = vcmp.ge.f32.partialorder %v2114, 0.0
    %vm2179 = vcmp.ge.f32.partialorder %v2115, 0.0
    %vm2180 = vcmp.ge.f32.partialorder %v2116, 0.0
    %vm2181 = vcmp.ge.f32.partialorder %v2117, 0.0
    %vm2182 = vcmp.ge.f32.partialorder %v2118, 0.0
    %vm2183 = vcmp.ge.f32.partialorder %v2119, 0.0
    %vm2184 = vcmp.ge.f32.partialorder %v2120, 0.0
    %vm2185 = vcmp.ge.f32.partialorder %v2121, 0.0
    %vm2186 = vcmp.ge.f32.partialorder %v2122, 0.0
    %vm2187 = vcmp.ge.f32.partialorder %v2123, 0.0
    %vm2188 = vcmp.ge.f32.partialorder %v2124, 0.0
    %vm2189 = vcmp.ge.f32.partialorder %v2125, 0.0
    %vm2190 = vcmp.ge.f32.partialorder %v2126, 0.0
    %vm2191 = vcmp.ge.f32.partialorder %v2127, 0.0
    %vm2192 = vcmp.ge.f32.partialorder %v2128, 0.0
    %vm2193 = vcmp.ge.f32.partialorder %v2129, 0.0
    %vm2194 = vcmp.ge.f32.partialorder %v2130, 0.0
    %v2195 = vmul.f32 %v2067, 0.01
    %v2196 = vmul.f32 %v2068, 0.01
    %v2197 = vmul.f32 %v2069, 0.01
    %v2198 = vmul.f32 %v2070, 0.01
    %v2199 = vmul.f32 %v2071, 0.01
    %v2200 = vmul.f32 %v2072, 0.01
    %v2201 = vmul.f32 %v2073, 0.01
    %v2202 = vmul.f32 %v2074, 0.01
    %v2203 = vmul.f32 %v2075, 0.01
    %v2204 = vmul.f32 %v2076, 0.01
    %v2205 = vmul.f32 %v2077, 0.01
    %v2206 = vmul.f32 %v2078, 0.01
    %v2207 = vmul.f32 %v2079, 0.01
    %v2208 = vmul.f32 %v2080, 0.01
    %v2209 = vmul.f32 %v2081, 0.01
    %v2210 = vmul.f32 %v2082, 0.01
    %v2211 = vmul.f32 %v2083, 0.01
    %v2212 = vmul.f32 %v2084, 0.01
    %v2213 = vmul.f32 %v2085, 0.01
    %v2214 = vmul.f32 %v2086, 0.01
    %v2215 = vmul.f32 %v2087, 0.01
    %v2216 = vmul.f32 %v2088, 0.01
    %v2217 = vmul.f32 %v2089, 0.01
    %v2218 = vmul.f32 %v2090, 0.01
    %v2219 = vmul.f32 %v2091, 0.01
    %v2220 = vmul.f32 %v2092, 0.01
    %v2221 = vmul.f32 %v2093, 0.01
    %v2222 = vmul.f32 %v2094, 0.01
    %v2223 = vmul.f32 %v2095, 0.01
    %v2224 = vmul.f32 %v2096, 0.01
    %v2225 = vmul.f32 %v2097, 0.01
    %v2226 = vmul.f32 %v2098, 0.01
    %v2227 = vmul.f32 %v2099, 0.01
    %v2228 = vmul.f32 %v2100, 0.01
    %v2229 = vmul.f32 %v2101, 0.01
    %v2230 = vmul.f32 %v2102, 0.01
    %v2231 = vmul.f32 %v2103, 0.01
    %v2232 = vmul.f32 %v2104, 0.01
    %v2233 = vmul.f32 %v2105, 0.01
    %v2234 = vmul.f32 %v2106, 0.01
    %v2235 = vmul.f32 %v2107, 0.01
    %v2236 = vmul.f32 %v2108, 0.01
    %v2237 = vmul.f32 %v2109, 0.01
    %v2238 = vmul.f32 %v2110, 0.01
    %v2239 = vmul.f32 %v2111, 0.01
    %v2240 = vmul.f32 %v2112, 0.01
    %v2241 = vmul.f32 %v2113, 0.01
    %v2242 = vmul.f32 %v2114, 0.01
    %v2243 = vmul.f32 %v2115, 0.01
    %v2244 = vmul.f32 %v2116, 0.01
    %v2245 = vmul.f32 %v2117, 0.01
    %v2246 = vmul.f32 %v2118, 0.01
    %v2247 = vmul.f32 %v2119, 0.01
    %v2248 = vmul.f32 %v2120, 0.01
    %v2249 = vmul.f32 %v2121, 0.01
    %v2250 = vmul.f32 %v2122, 0.01
    %v2251 = vmul.f32 %v2123, 0.01
    %v2252 = vmul.f32 %v2124, 0.01
    %v2253 = vmul.f32 %v2125, 0.01
    %v2254 = vmul.f32 %v2126, 0.01
    %v2255 = vmul.f32 %v2127, 0.01
    %v2256 = vmul.f32 %v2128, 0.01
    %v2257 = vmul.f32 %v2129, 0.01
    %v2258 = vmul.f32 %v2130, 0.01
    %v2259 = vsel %vm2131, %v2067, %v2195
    %v2260 = vsel %vm2132, %v2068, %v2196
    %v2261 = vsel %vm2133, %v2069, %v2197
    %v2262 = vsel %vm2134, %v2070, %v2198
    %v2263 = vsel %vm2135, %v2071, %v2199
    %v2264 = vsel %vm2136, %v2072, %v2200
    %v2265 = vsel %vm2137, %v2073, %v2201
    %v2266 = vsel %vm2138, %v2074, %v2202
    %v2267 = vsel %vm2139, %v2075, %v2203
    %v2268 = vsel %vm2140, %v2076, %v2204
    %v2269 = vsel %vm2141, %v2077, %v2205
    %v2270 = vsel %vm2142, %v2078, %v2206
    %v2271 = vsel %vm2143, %v2079, %v2207
    %v2272 = vsel %vm2144, %v2080, %v2208
    %v2273 = vsel %vm2145, %v2081, %v2209
    %v2274 = vsel %vm2146, %v2082, %v2210
    %v2275 = vsel %vm2147, %v2083, %v2211
    %v2276 = vsel %vm2148, %v2084, %v2212
    %v2277 = vsel %vm2149, %v2085, %v2213
    %v2278 = vsel %vm2150, %v2086, %v2214
    %v2279 = vsel %vm2151, %v2087, %v2215
    %v2280 = vsel %vm2152, %v2088, %v2216
    %v2281 = vsel %vm2153, %v2089, %v2217
    %v2282 = vsel %vm2154, %v2090, %v2218
    %v2283 = vsel %vm2155, %v2091, %v2219
    %v2284 = vsel %vm2156, %v2092, %v2220
    %v2285 = vsel %vm2157, %v2093, %v2221
    %v2286 = vsel %vm2158, %v2094, %v2222
    %v2287 = vsel %vm2159, %v2095, %v2223
    %v2288 = vsel %vm2160, %v2096, %v2224
    %v2289 = vsel %vm2161, %v2097, %v2225
    %v2290 = vsel %vm2162, %v2098, %v2226
    %v2291 = vsel %vm2163, %v2099, %v2227
    %v2292 = vsel %vm2164, %v2100, %v2228
    %v2293 = vsel %vm2165, %v2101, %v2229
    %v2294 = vsel %vm2166, %v2102, %v2230
    %v2295 = vsel %vm2167, %v2103, %v2231
    %v2296 = vsel %vm2168, %v2104, %v2232
    %v2297 = vsel %vm2169, %v2105, %v2233
    %v2298 = vsel %vm2170, %v2106, %v2234
    %v2299 = vsel %vm2171, %v2107, %v2235
    %v2300 = vsel %vm2172, %v2108, %v2236
    %v2301 = vsel %vm2173, %v2109, %v2237
    %v2302 = vsel %vm2174, %v2110, %v2238
    %v2303 = vsel %vm2175, %v2111, %v2239
    %v2304 = vsel %vm2176, %v2112, %v2240
    %v2305 = vsel %vm2177, %v2113, %v2241
    %v2306 = vsel %vm2178, %v2114, %v2242
    %v2307 = vsel %vm2179, %v2115, %v2243
    %v2308 = vsel %vm2180, %v2116, %v2244
    %v2309 = vsel %vm2181, %v2117, %v2245
    %v2310 = vsel %vm2182, %v2118, %v2246
    %v2311 = vsel %vm2183, %v2119, %v2247
    %v2312 = vsel %vm2184, %v2120, %v2248
    %v2313 = vsel %vm2185, %v2121, %v2249
    %v2314 = vsel %vm2186, %v2122, %v2250
    %v2315 = vsel %vm2187, %v2123, %v2251
    %v2316 = vsel %vm2188, %v2124, %v2252
    %v2317 = vsel %vm2189, %v2125, %v2253
    %v2318 = vsel %vm2190, %v2126, %v2254
    %v2319 = vsel %vm2191, %v2127, %v2255
    %v2320 = vsel %vm2192, %v2128, %v2256
    %v2321 = vsel %vm2193, %v2129, %v2257
    %v2322 = vsel %vm2194, %v2130, %v2258
    %v2323 = vld [vmem:[#allocation9] sm:$0xff]
    %v2324 = vld [vmem:[#allocation9 + $0x8] sm:$0xff]
    %v2325 = vld [vmem:[#allocation9 + $0x10] sm:$0xff]
    %v2326 = vld [vmem:[#allocation9 + $0x18] sm:$0xff]
    %v2327 = vld [vmem:[#allocation9 + $0x20] sm:$0xff]
    %v2328 = vld [vmem:[#allocation9 + $0x28] sm:$0xff]
    %v2329 = vld [vmem:[#allocation9 + $0x30] sm:$0xff]
    %v2330 = vld [vmem:[#allocation9 + $0x38] sm:$0xff]
    %v2331 = vld [vmem:[#allocation9 + $0x40] sm:$0xff]
    %v2332 = vld [vmem:[#allocation9 + $0x48] sm:$0xff]
    %v2333 = vld [vmem:[#allocation9 + $0x50] sm:$0xff]
    %v2334 = vld [vmem:[#allocation9 + $0x58] sm:$0xff]
    %v2335 = vld [vmem:[#allocation9 + $0x60] sm:$0xff]
    %v2336 = vld [vmem:[#allocation9 + $0x68] sm:$0xff]
    %v2337 = vld [vmem:[#allocation9 + $0x70] sm:$0xff]
    %v2338 = vld [vmem:[#allocation9 + $0x78] sm:$0xff]
    %v2339 = vld [vmem:[#allocation9 + $0x80] sm:$0xff]
    %v2340 = vld [vmem:[#allocation9 + $0x88] sm:$0xff]
    %v2341 = vld [vmem:[#allocation9 + $0x90] sm:$0xff]
    %v2342 = vld [vmem:[#allocation9 + $0x98] sm:$0xff]
    %v2343 = vld [vmem:[#allocation9 + $0xa0] sm:$0xff]
    %v2344 = vld [vmem:[#allocation9 + $0xa8] sm:$0xff]
    %v2345 = vld [vmem:[#allocation9 + $0xb0] sm:$0xff]
    %v2346 = vld [vmem:[#allocation9 + $0xb8] sm:$0xff]
    %v2347 = vld [vmem:[#allocation9 + $0xc0] sm:$0xff]
    %v2348 = vld [vmem:[#allocation9 + $0xc8] sm:$0xff]
    %v2349 = vld [vmem:[#allocation9 + $0xd0] sm:$0xff]
    %v2350 = vld [vmem:[#allocation9 + $0xd8] sm:$0xff]
    %v2351 = vld [vmem:[#allocation9 + $0xe0] sm:$0xff]
    %v2352 = vld [vmem:[#allocation9 + $0xe8] sm:$0xff]
    %v2353 = vld [vmem:[#allocation9 + $0xf0] sm:$0xff]
    %v2354 = vld [vmem:[#allocation9 + $0xf8] sm:$0xff]
    %v2355 = vpack.c.bf16 %v2261, %v2259
    %v2356 = vpack.c.bf16 %v2262, %v2260
    %v2357 = vpack.c.bf16 %v2265, %v2263
    %v2358 = vpack.c.bf16 %v2266, %v2264
    %v2359 = vpack.c.bf16 %v2269, %v2267
    %v2360 = vpack.c.bf16 %v2270, %v2268
    %v2361 = vpack.c.bf16 %v2273, %v2271
    %v2362 = vpack.c.bf16 %v2274, %v2272
    %v2363 = vpack.c.bf16 %v2277, %v2275
    %v2364 = vpack.c.bf16 %v2278, %v2276
    %v2365 = vpack.c.bf16 %v2281, %v2279
    %v2366 = vpack.c.bf16 %v2282, %v2280
    %v2367 = vpack.c.bf16 %v2285, %v2283
    %v2368 = vpack.c.bf16 %v2286, %v2284
    %v2369 = vpack.c.bf16 %v2289, %v2287
    %v2370 = vpack.c.bf16 %v2290, %v2288
    %v2371 = vpack.c.bf16 %v2293, %v2291
    %v2372 = vpack.c.bf16 %v2294, %v2292
    %v2373 = vpack.c.bf16 %v2297, %v2295
    %v2374 = vpack.c.bf16 %v2298, %v2296
    %v2375 = vpack.c.bf16 %v2301, %v2299
    %v2376 = vpack.c.bf16 %v2302, %v2300
    %v2377 = vpack.c.bf16 %v2305, %v2303
    %v2378 = vpack.c.bf16 %v2306, %v2304
    %v2379 = vpack.c.bf16 %v2309, %v2307
    %v2380 = vpack.c.bf16 %v2310, %v2308
    %v2381 = vpack.c.bf16 %v2313, %v2311
    %v2382 = vpack.c.bf16 %v2314, %v2312
    %v2383 = vpack.c.bf16 %v2317, %v2315
    %v2384 = vpack.c.bf16 %v2318, %v2316
    %v2385 = vpack.c.bf16 %v2321, %v2319
    %v2386 = vpack.c.bf16 %v2322, %v2320
    %v2419 = vunpack.c.l.b16 %v2323
    %v2420 = vunpack.c.h.b16 %v2323
    %v2421 = vunpack.c.l.b16 %v2324
    %v2422 = vunpack.c.h.b16 %v2324
    %v2423 = vunpack.c.l.b16 %v2325
    %v2424 = vunpack.c.h.b16 %v2325
    %v2425 = vunpack.c.l.b16 %v2326
    %v2426 = vunpack.c.h.b16 %v2326
    %v2427 = vunpack.c.l.b16 %v2327
    %v2428 = vunpack.c.h.b16 %v2327
    %v2429 = vunpack.c.l.b16 %v2328
    %v2430 = vunpack.c.h.b16 %v2328
    %v2431 = vunpack.c.l.b16 %v2329
    %v2432 = vunpack.c.h.b16 %v2329
    %v2433 = vunpack.c.l.b16 %v2330
    %v2434 = vunpack.c.h.b16 %v2330
    %v2435 = vunpack.c.l.b16 %v2331
    %v2436 = vunpack.c.h.b16 %v2331
    %v2437 = vunpack.c.l.b16 %v2332
    %v2438 = vunpack.c.h.b16 %v2332
    %v2439 = vunpack.c.l.b16 %v2333
    %v2440 = vunpack.c.h.b16 %v2333
    %v2441 = vunpack.c.l.b16 %v2334
    %v2442 = vunpack.c.h.b16 %v2334
    %v2443 = vunpack.c.l.b16 %v2335
    %v2444 = vunpack.c.h.b16 %v2335
    %v2445 = vunpack.c.l.b16 %v2336
    %v2446 = vunpack.c.h.b16 %v2336
    %v2447 = vunpack.c.l.b16 %v2337
    %v2448 = vunpack.c.h.b16 %v2337
    %v2449 = vunpack.c.l.b16 %v2338
    %v2450 = vunpack.c.h.b16 %v2338
    %v2451 = vunpack.c.l.b16 %v2339
    %v2452 = vunpack.c.h.b16 %v2339
    %v2453 = vunpack.c.l.b16 %v2340
    %v2454 = vunpack.c.h.b16 %v2340
    %v2455 = vunpack.c.l.b16 %v2341
    %v2456 = vunpack.c.h.b16 %v2341
    %v2457 = vunpack.c.l.b16 %v2342
    %v2458 = vunpack.c.h.b16 %v2342
    %v2459 = vunpack.c.l.b16 %v2343
    %v2460 = vunpack.c.h.b16 %v2343
    %v2461 = vunpack.c.l.b16 %v2344
    %v2462 = vunpack.c.h.b16 %v2344
    %v2463 = vunpack.c.l.b16 %v2345
    %v2464 = vunpack.c.h.b16 %v2345
    %v2465 = vunpack.c.l.b16 %v2346
    %v2466 = vunpack.c.h.b16 %v2346
    %v2467 = vunpack.c.l.b16 %v2347
    %v2468 = vunpack.c.h.b16 %v2347
    %v2469 = vunpack.c.l.b16 %v2348
    %v2470 = vunpack.c.h.b16 %v2348
    %v2471 = vunpack.c.l.b16 %v2349
    %v2472 = vunpack.c.h.b16 %v2349
    %v2473 = vunpack.c.l.b16 %v2350
    %v2474 = vunpack.c.h.b16 %v2350
    %v2475 = vunpack.c.l.b16 %v2351
    %v2476 = vunpack.c.h.b16 %v2351
    %v2477 = vunpack.c.l.b16 %v2352
    %v2478 = vunpack.c.h.b16 %v2352
    %v2479 = vunpack.c.l.b16 %v2353
    %v2480 = vunpack.c.h.b16 %v2353
    %v2481 = vunpack.c.l.b16 %v2354
    %v2482 = vunpack.c.h.b16 %v2354
    %v2483 = vpack.c.b16 %v2421, %v2419
    %v2484 = vpack.c.b16 %v2422, %v2420
    %v2485 = vpack.c.b16 %v2425, %v2423
    %v2486 = vpack.c.b16 %v2426, %v2424
    %v2487 = vpack.c.b16 %v2429, %v2427
    %v2488 = vpack.c.b16 %v2430, %v2428
    %v2489 = vpack.c.b16 %v2433, %v2431
    %v2490 = vpack.c.b16 %v2434, %v2432
    %v2491 = vpack.c.b16 %v2437, %v2435
    %v2492 = vpack.c.b16 %v2438, %v2436
    %v2493 = vpack.c.b16 %v2441, %v2439
    %v2494 = vpack.c.b16 %v2442, %v2440
    %v2495 = vpack.c.b16 %v2445, %v2443
    %v2496 = vpack.c.b16 %v2446, %v2444
    %v2497 = vpack.c.b16 %v2449, %v2447
    %v2498 = vpack.c.b16 %v2450, %v2448
    %v2499 = vpack.c.b16 %v2453, %v2451
    %v2500 = vpack.c.b16 %v2454, %v2452
    %v2501 = vpack.c.b16 %v2457, %v2455
    %v2502 = vpack.c.b16 %v2458, %v2456
    %v2503 = vpack.c.b16 %v2461, %v2459
    %v2504 = vpack.c.b16 %v2462, %v2460
    %v2505 = vpack.c.b16 %v2465, %v2463
    %v2506 = vpack.c.b16 %v2466, %v2464
    %v2507 = vpack.c.b16 %v2469, %v2467
    %v2508 = vpack.c.b16 %v2470, %v2468
    %v2509 = vpack.c.b16 %v2473, %v2471
    %v2510 = vpack.c.b16 %v2474, %v2472
    %v2511 = vpack.c.b16 %v2477, %v2475
    %v2512 = vpack.c.b16 %v2478, %v2476
    %v2513 = vpack.c.b16 %v2481, %v2479
    %v2514 = vpack.c.b16 %v2482, %v2480
    %2547 = vmatprep.subr.bf16.mxu0 %v2484
    %2548 = vmatpush1.bf16.msra.mxu0 %v2483
    %2549 = vmatprep.subr.bf16.mxu0 %v2486
    %2550 = vmatpush1.bf16.msra.mxu0 %v2485
    %2551 = vmatprep.subr.bf16.mxu0 %v2488
    %2552 = vmatpush1.bf16.msra.mxu0 %v2487
    %2553 = vmatprep.subr.bf16.mxu0 %v2490
    %2554 = vmatpush1.bf16.msra.mxu0 %v2489
    %2555 = vmatprep.subr.bf16.mxu0 %v2492
    %2556 = vmatpush1.bf16.msra.mxu0 %v2491
    %2557 = vmatprep.subr.bf16.mxu0 %v2494
    %2558 = vmatpush1.bf16.msra.mxu0 %v2493
    %2559 = vmatprep.subr.bf16.mxu0 %v2496
    %2560 = vmatpush1.bf16.msra.mxu0 %v2495
    %2561 = vmatprep.subr.bf16.mxu0 %v2498
    %2562 = vmatpush1.bf16.msra.mxu0 %v2497
    %2563 = vmatprep.subr.bf16.mxu0 %v2500
    %2564 = vmatpush1.bf16.msra.mxu0 %v2499
    %2565 = vmatprep.subr.bf16.mxu0 %v2502
    %2566 = vmatpush1.bf16.msra.mxu0 %v2501
    %2567 = vmatprep.subr.bf16.mxu0 %v2504
    %2568 = vmatpush1.bf16.msra.mxu0 %v2503
    %2569 = vmatprep.subr.bf16.mxu0 %v2506
    %2570 = vmatpush1.bf16.msra.mxu0 %v2505
    %2571 = vmatprep.subr.bf16.mxu0 %v2508
    %2572 = vmatpush1.bf16.msra.mxu0 %v2507
    %2573 = vmatprep.subr.bf16.mxu0 %v2510
    %2574 = vmatpush1.bf16.msra.mxu0 %v2509
    %2575 = vmatprep.subr.bf16.mxu0 %v2512
    %2576 = vmatpush1.bf16.msra.mxu0 %v2511
    %2577 = vmatprep.subr.bf16.mxu0 %v2514
    %2578 = vmatpush1.bf16.msra.mxu0 %v2513
    %2579 = vmatprep.mubr.bf16.mxu0 %v2356
    %2580 = vmatmul.mubr.bf16.gmra.mrb[0].mxu0 %v2355
    %v2581 = vpop.f32.mrb[0].mxu0
    %v2582 = vadd.f32 0.0, %v2581
    %v2583 = vpop.f32.mrb[0].mxu0
    %v2584 = vadd.f32 0.0, %v2583
    %v2585 = vpop.f32.mrb[0].mxu0
    %v2586 = vadd.f32 0.0, %v2585
    %v2587 = vpop.f32.mrb[0].mxu0
    %v2588 = vadd.f32 0.0, %v2587
    %2589 = vmatprep.mubr.bf16.mxu0 %v2358
    %2590 = vmatmul.mubr.bf16.gmra.mrb[0].mxu0 %v2357
    %v2591 = vpop.f32.mrb[0].mxu0
    %v2592 = vadd.f32 0.0, %v2591
    %v2593 = vpop.f32.mrb[0].mxu0
    %v2594 = vadd.f32 0.0, %v2593
    %v2595 = vpop.f32.mrb[0].mxu0
    %v2596 = vadd.f32 0.0, %v2595
    %v2597 = vpop.f32.mrb[0].mxu0
    %v2598 = vadd.f32 0.0, %v2597
    %2599 = vmatprep.mubr.bf16.mxu0 %v2360
    %2600 = vmatmul.mubr.bf16.gmra.mrb[0].mxu0 %v2359
    %v2601 = vpop.f32.mrb[0].mxu0
    %v2602 = vadd.f32 0.0, %v2601
    %v2603 = vpop.f32.mrb[0].mxu0
    %v2604 = vadd.f32 0.0, %v2603
    %v2605 = vpop.f32.mrb[0].mxu0
    %v2606 = vadd.f32 0.0, %v2605
    %v2607 = vpop.f32.mrb[0].mxu0
    %v2608 = vadd.f32 0.0, %v2607
    %2609 = vmatprep.mubr.bf16.mxu0 %v2362
    %2610 = vmatmul.mubr.bf16.gmra.mrb[0].mxu0 %v2361
    %v2611 = vpop.f32.mrb[0].mxu0
    %v2612 = vadd.f32 0.0, %v2611
    %v2613 = vpop.f32.mrb[0].mxu0
    %v2614 = vadd.f32 0.0, %v2613
    %v2615 = vpop.f32.mrb[0].mxu0
    %v2616 = vadd.f32 0.0, %v2615
    %v2617 = vpop.f32.mrb[0].mxu0
    %v2618 = vadd.f32 0.0, %v2617
    %2619 = vmatprep.mubr.bf16.mxu0 %v2364
    %2620 = vmatmul.mubr.bf16.gmra.mrb[0].mxu0 %v2363
    %v2621 = vpop.f32.mrb[0].mxu0
    %v2622 = vadd.f32 0.0, %v2621
    %v2623 = vpop.f32.mrb[0].mxu0
    %v2624 = vadd.f32 0.0, %v2623
    %v2625 = vpop.f32.mrb[0].mxu0
    %v2626 = vadd.f32 0.0, %v2625
    %v2627 = vpop.f32.mrb[0].mxu0
    %v2628 = vadd.f32 0.0, %v2627
    %2629 = vmatprep.mubr.bf16.mxu0 %v2366
    %2630 = vmatmul.mubr.bf16.gmra.mrb[0].mxu0 %v2365
    %v2631 = vpop.f32.mrb[0].mxu0
    %v2632 = vadd.f32 0.0, %v2631
    %v2633 = vpop.f32.mrb[0].mxu0
    %v2634 = vadd.f32 0.0, %v2633
    %v2635 = vpop.f32.mrb[0].mxu0
    %v2636 = vadd.f32 0.0, %v2635
    %v2637 = vpop.f32.mrb[0].mxu0
    %v2638 = vadd.f32 0.0, %v2637
    %2639 = vmatprep.mubr.bf16.mxu0 %v2368
    %2640 = vmatmul.mubr.bf16.gmra.mrb[0].mxu0 %v2367
    %v2641 = vpop.f32.mrb[0].mxu0
    %v2642 = vadd.f32 0.0, %v2641
    %v2643 = vpop.f32.mrb[0].mxu0
    %v2644 = vadd.f32 0.0, %v2643
    %v2645 = vpop.f32.mrb[0].mxu0
    %v2646 = vadd.f32 0.0, %v2645
    %v2647 = vpop.f32.mrb[0].mxu0
    %v2648 = vadd.f32 0.0, %v2647
    %2649 = vmatprep.mubr.bf16.mxu0 %v2370
    %2650 = vmatmul.mubr.bf16.gmra.mrb[0].mxu0 %v2369
    %v2651 = vpop.f32.mrb[0].mxu0
    %v2652 = vadd.f32 0.0, %v2651
    %v2653 = vpop.f32.mrb[0].mxu0
    %v2654 = vadd.f32 0.0, %v2653
    %v2655 = vpop.f32.mrb[0].mxu0
    %v2656 = vadd.f32 0.0, %v2655
    %v2657 = vpop.f32.mrb[0].mxu0
    %v2658 = vadd.f32 0.0, %v2657
    %2659 = vmatprep.mubr.bf16.mxu0 %v2372
    %2660 = vmatmul.mubr.bf16.gmra.mrb[0].mxu0 %v2371
    %v2661 = vpop.f32.mrb[0].mxu0
    %v2662 = vadd.f32 0.0, %v2661
    %v2663 = vpop.f32.mrb[0].mxu0
    %v2664 = vadd.f32 0.0, %v2663
    %v2665 = vpop.f32.mrb[0].mxu0
    %v2666 = vadd.f32 0.0, %v2665
    %v2667 = vpop.f32.mrb[0].mxu0
    %v2668 = vadd.f32 0.0, %v2667
    %2669 = vmatprep.mubr.bf16.mxu0 %v2374
    %2670 = vmatmul.mubr.bf16.gmra.mrb[0].mxu0 %v2373
    %v2671 = vpop.f32.mrb[0].mxu0
    %v2672 = vadd.f32 0.0, %v2671
    %v2673 = vpop.f32.mrb[0].mxu0
    %v2674 = vadd.f32 0.0, %v2673
    %v2675 = vpop.f32.mrb[0].mxu0
    %v2676 = vadd.f32 0.0, %v2675
    %v2677 = vpop.f32.mrb[0].mxu0
    %v2678 = vadd.f32 0.0, %v2677
    %2679 = vmatprep.mubr.bf16.mxu0 %v2376
    %2680 = vmatmul.mubr.bf16.gmra.mrb[0].mxu0 %v2375
    %v2681 = vpop.f32.mrb[0].mxu0
    %v2682 = vadd.f32 0.0, %v2681
    %v2683 = vpop.f32.mrb[0].mxu0
    %v2684 = vadd.f32 0.0, %v2683
    %v2685 = vpop.f32.mrb[0].mxu0
    %v2686 = vadd.f32 0.0, %v2685
    %v2687 = vpop.f32.mrb[0].mxu0
    %v2688 = vadd.f32 0.0, %v2687
    %2689 = vmatprep.mubr.bf16.mxu0 %v2378
    %2690 = vmatmul.mubr.bf16.gmra.mrb[0].mxu0 %v2377
    %v2691 = vpop.f32.mrb[0].mxu0
    %v2692 = vadd.f32 0.0, %v2691
    %v2693 = vpop.f32.mrb[0].mxu0
    %v2694 = vadd.f32 0.0, %v2693
    %v2695 = vpop.f32.mrb[0].mxu0
    %v2696 = vadd.f32 0.0, %v2695
    %v2697 = vpop.f32.mrb[0].mxu0
    %v2698 = vadd.f32 0.0, %v2697
    %2699 = vmatprep.mubr.bf16.mxu0 %v2380
    %2700 = vmatmul.mubr.bf16.gmra.mrb[0].mxu0 %v2379
    %v2701 = vpop.f32.mrb[0].mxu0
    %v2702 = vadd.f32 0.0, %v2701
    %v2703 = vpop.f32.mrb[0].mxu0
    %v2704 = vadd.f32 0.0, %v2703
    %v2705 = vpop.f32.mrb[0].mxu0
    %v2706 = vadd.f32 0.0, %v2705
    %v2707 = vpop.f32.mrb[0].mxu0
    %v2708 = vadd.f32 0.0, %v2707
    %2709 = vmatprep.mubr.bf16.mxu0 %v2382
    %2710 = vmatmul.mubr.bf16.gmra.mrb[0].mxu0 %v2381
    %v2711 = vpop.f32.mrb[0].mxu0
    %v2712 = vadd.f32 0.0, %v2711
    %v2713 = vpop.f32.mrb[0].mxu0
    %v2714 = vadd.f32 0.0, %v2713
    %v2715 = vpop.f32.mrb[0].mxu0
    %v2716 = vadd.f32 0.0, %v2715
    %v2717 = vpop.f32.mrb[0].mxu0
    %v2718 = vadd.f32 0.0, %v2717
    %2719 = vmatprep.mubr.bf16.mxu0 %v2384
    %2720 = vmatmul.mubr.bf16.gmra.mrb[0].mxu0 %v2383
    %v2721 = vpop.f32.mrb[0].mxu0
    %v2722 = vadd.f32 0.0, %v2721
    %v2723 = vpop.f32.mrb[0].mxu0
    %v2724 = vadd.f32 0.0, %v2723
    %v2725 = vpop.f32.mrb[0].mxu0
    %v2726 = vadd.f32 0.0, %v2725
    %v2727 = vpop.f32.mrb[0].mxu0
    %v2728 = vadd.f32 0.0, %v2727
    %2729 = vmatprep.mubr.bf16.mxu0 %v2386
    %2730 = vmatmul.mubr.bf16.gmra.mrb[0].mxu0 %v2385
    %v2731 = vpop.f32.mrb[0].mxu0
    %v2732 = vadd.f32 0.0, %v2731
    %v2733 = vpop.f32.mrb[0].mxu0
    %v2734 = vadd.f32 0.0, %v2733
    %v2735 = vpop.f32.mrb[0].mxu0
    %v2736 = vadd.f32 0.0, %v2735
    %v2737 = vpop.f32.mrb[0].mxu0
    %v2738 = vadd.f32 0.0, %v2737
    %2739 = vdwg.mxu0
    %v2740 = vadd.f32 %v2582, %v2586
    %v2741 = vadd.f32 %v2740, %v2592
    %v2742 = vadd.f32 %v2741, %v2596
    %v2743 = vadd.f32 %v2742, %v2602
    %v2744 = vadd.f32 %v2743, %v2606
    %v2745 = vadd.f32 %v2744, %v2612
    %v2746 = vadd.f32 %v2745, %v2616
    %v2747 = vadd.f32 %v2746, %v2622
    %v2748 = vadd.f32 %v2747, %v2626
    %v2749 = vadd.f32 %v2748, %v2632
    %v2750 = vadd.f32 %v2749, %v2636
    %v2751 = vadd.f32 %v2750, %v2642
    %v2752 = vadd.f32 %v2751, %v2646
    %v2753 = vadd.f32 %v2752, %v2652
    %v2754 = vadd.f32 %v2753, %v2656
    %v2755 = vadd.f32 %v2754, %v2662
    %v2756 = vadd.f32 %v2755, %v2666
    %v2757 = vadd.f32 %v2756, %v2672
    %v2758 = vadd.f32 %v2757, %v2676
    %v2759 = vadd.f32 %v2758, %v2682
    %v2760 = vadd.f32 %v2759, %v2686
    %v2761 = vadd.f32 %v2760, %v2692
    %v2762 = vadd.f32 %v2761, %v2696
    %v2763 = vadd.f32 %v2762, %v2702
    %v2764 = vadd.f32 %v2763, %v2706
    %v2765 = vadd.f32 %v2764, %v2712
    %v2766 = vadd.f32 %v2765, %v2716
    %v2767 = vadd.f32 %v2766, %v2722
    %v2768 = vadd.f32 %v2767, %v2726
    %v2769 = vadd.f32 %v2768, %v2732
    %v2770 = vadd.f32 %v2769, %v2736
    %v2771 = vrot.slane %v2770, 4
    %v2772 = vadd.f32 %v2770, %v2771
    %v2773 = vrot.slane %v2772, 2
    %v2774 = vadd.f32 %v2772, %v2773
    %v2775 = vrot.slane %v2774, 1
    %v2776 = vadd.f32 %v2774, %v2775
    %v2777 = vadd.f32 %v2584, %v2588
    %v2778 = vadd.f32 %v2777, %v2594
    %v2779 = vadd.f32 %v2778, %v2598
    %v2780 = vadd.f32 %v2779, %v2604
    %v2781 = vadd.f32 %v2780, %v2608
    %v2782 = vadd.f32 %v2781, %v2614
    %v2783 = vadd.f32 %v2782, %v2618
    %v2784 = vadd.f32 %v2783, %v2624
    %v2785 = vadd.f32 %v2784, %v2628
    %v2786 = vadd.f32 %v2785, %v2634
    %v2787 = vadd.f32 %v2786, %v2638
    %v2788 = vadd.f32 %v2787, %v2644
    %v2789 = vadd.f32 %v2788, %v2648
    %v2790 = vadd.f32 %v2789, %v2654
    %v2791 = vadd.f32 %v2790, %v2658
    %v2792 = vadd.f32 %v2791, %v2664
    %v2793 = vadd.f32 %v2792, %v2668
    %v2794 = vadd.f32 %v2793, %v2674
    %v2795 = vadd.f32 %v2794, %v2678
    %v2796 = vadd.f32 %v2795, %v2684
    %v2797 = vadd.f32 %v2796, %v2688
    %v2798 = vadd.f32 %v2797, %v2694
    %v2799 = vadd.f32 %v2798, %v2698
    %v2800 = vadd.f32 %v2799, %v2704
    %v2801 = vadd.f32 %v2800, %v2708
    %v2802 = vadd.f32 %v2801, %v2714
    %v2803 = vadd.f32 %v2802, %v2718
    %v2804 = vadd.f32 %v2803, %v2724
    %v2805 = vadd.f32 %v2804, %v2728
    %v2806 = vadd.f32 %v2805, %v2734
    %v2807 = vadd.f32 %v2806, %v2738
    %v2808 = vrot.slane %v2807, 4
    %v2809 = vadd.f32 %v2807, %v2808
    %v2810 = vrot.slane %v2809, 2
    %v2811 = vadd.f32 %v2809, %v2810
    %v2812 = vrot.slane %v2811, 1
    %v2813 = vadd.f32 %v2811, %v2812
    %v2814 = vmul.f32 %v2776, %v643
    %v2815 = vmul.f32 %v2813, %v643
    %v2816 = vsub.f32 %v2582, %v2814
    %v2817 = vsub.f32 %v2584, %v2815
    %v2818 = vsub.f32 %v2586, %v2814
    %v2819 = vsub.f32 %v2588, %v2815
    %v2820 = vsub.f32 %v2592, %v2814
    %v2821 = vsub.f32 %v2594, %v2815
    %v2822 = vsub.f32 %v2596, %v2814
    %v2823 = vsub.f32 %v2598, %v2815
    %v2824 = vsub.f32 %v2602, %v2814
    %v2825 = vsub.f32 %v2604, %v2815
    %v2826 = vsub.f32 %v2606, %v2814
    %v2827 = vsub.f32 %v2608, %v2815
    %v2828 = vsub.f32 %v2612, %v2814
    %v2829 = vsub.f32 %v2614, %v2815
    %v2830 = vsub.f32 %v2616, %v2814
    %v2831 = vsub.f32 %v2618, %v2815
    %v2832 = vsub.f32 %v2622, %v2814
    %v2833 = vsub.f32 %v2624, %v2815
    %v2834 = vsub.f32 %v2626, %v2814
    %v2835 = vsub.f32 %v2628, %v2815
    %v2836 = vsub.f32 %v2632, %v2814
    %v2837 = vsub.f32 %v2634, %v2815
    %v2838 = vsub.f32 %v2636, %v2814
    %v2839 = vsub.f32 %v2638, %v2815
    %v2840 = vsub.f32 %v2642, %v2814
    %v2841 = vsub.f32 %v2644, %v2815
    %v2842 = vsub.f32 %v2646, %v2814
    %v2843 = vsub.f32 %v2648, %v2815
    %v2844 = vsub.f32 %v2652, %v2814
    %v2845 = vsub.f32 %v2654, %v2815
    %v2846 = vsub.f32 %v2656, %v2814
    %v2847 = vsub.f32 %v2658, %v2815
    %v2848 = vsub.f32 %v2662, %v2814
    %v2849 = vsub.f32 %v2664, %v2815
    %v2850 = vsub.f32 %v2666, %v2814
    %v2851 = vsub.f32 %v2668, %v2815
    %v2852 = vsub.f32 %v2672, %v2814
    %v2853 = vsub.f32 %v2674, %v2815
    %v2854 = vsub.f32 %v2676, %v2814
    %v2855 = vsub.f32 %v2678, %v2815
    %v2856 = vsub.f32 %v2682, %v2814
    %v2857 = vsub.f32 %v2684, %v2815
    %v2858 = vsub.f32 %v2686, %v2814
    %v2859 = vsub.f32 %v2688, %v2815
    %v2860 = vsub.f32 %v2692, %v2814
    %v2861 = vsub.f32 %v2694, %v2815
    %v2862 = vsub.f32 %v2696, %v2814
    %v2863 = vsub.f32 %v2698, %v2815
    %v2864 = vsub.f32 %v2702, %v2814
    %v2865 = vsub.f32 %v2704, %v2815
    %v2866 = vsub.f32 %v2706, %v2814
    %v2867 = vsub.f32 %v2708, %v2815
    %v2868 = vsub.f32 %v2712, %v2814
    %v2869 = vsub.f32 %v2714, %v2815
    %v2870 = vsub.f32 %v2716, %v2814
    %v2871 = vsub.f32 %v2718, %v2815
    %v2872 = vsub.f32 %v2722, %v2814
    %v2873 = vsub.f32 %v2724, %v2815
    %v2874 = vsub.f32 %v2726, %v2814
    %v2875 = vsub.f32 %v2728, %v2815
    %v2876 = vsub.f32 %v2732, %v2814
    %v2877 = vsub.f32 %v2734, %v2815
    %v2878 = vsub.f32 %v2736, %v2814
    %v2879 = vsub.f32 %v2738, %v2815
    %v2880 = vmul.f32 %v2816, %v2816
    %v2881 = vmul.f32 %v2817, %v2817
    %v2882 = vmul.f32 %v2818, %v2818
    %v2883 = vmul.f32 %v2819, %v2819
    %v2884 = vmul.f32 %v2820, %v2820
    %v2885 = vmul.f32 %v2821, %v2821
    %v2886 = vmul.f32 %v2822, %v2822
    %v2887 = vmul.f32 %v2823, %v2823
    %v2888 = vmul.f32 %v2824, %v2824
    %v2889 = vmul.f32 %v2825, %v2825
    %v2890 = vmul.f32 %v2826, %v2826
    %v2891 = vmul.f32 %v2827, %v2827
    %v2892 = vmul.f32 %v2828, %v2828
    %v2893 = vmul.f32 %v2829, %v2829
    %v2894 = vmul.f32 %v2830, %v2830
    %v2895 = vmul.f32 %v2831, %v2831
    %v2896 = vmul.f32 %v2832, %v2832
    %v2897 = vmul.f32 %v2833, %v2833
    %v2898 = vmul.f32 %v2834, %v2834
    %v2899 = vmul.f32 %v2835, %v2835
    %v2900 = vmul.f32 %v2836, %v2836
    %v2901 = vmul.f32 %v2837, %v2837
    %v2902 = vmul.f32 %v2838, %v2838
    %v2903 = vmul.f32 %v2839, %v2839
    %v2904 = vmul.f32 %v2840, %v2840
    %v2905 = vmul.f32 %v2841, %v2841
    %v2906 = vmul.f32 %v2842, %v2842
    %v2907 = vmul.f32 %v2843, %v2843
    %v2908 = vmul.f32 %v2844, %v2844
    %v2909 = vmul.f32 %v2845, %v2845
    %v2910 = vmul.f32 %v2846, %v2846
    %v2911 = vmul.f32 %v2847, %v2847
    %v2912 = vmul.f32 %v2848, %v2848
    %v2913 = vmul.f32 %v2849, %v2849
    %v2914 = vmul.f32 %v2850, %v2850
    %v2915 = vmul.f32 %v2851, %v2851
    %v2916 = vmul.f32 %v2852, %v2852
    %v2917 = vmul.f32 %v2853, %v2853
    %v2918 = vmul.f32 %v2854, %v2854
    %v2919 = vmul.f32 %v2855, %v2855
    %v2920 = vmul.f32 %v2856, %v2856
    %v2921 = vmul.f32 %v2857, %v2857
    %v2922 = vmul.f32 %v2858, %v2858
    %v2923 = vmul.f32 %v2859, %v2859
    %v2924 = vmul.f32 %v2860, %v2860
    %v2925 = vmul.f32 %v2861, %v2861
    %v2926 = vmul.f32 %v2862, %v2862
    %v2927 = vmul.f32 %v2863, %v2863
    %v2928 = vmul.f32 %v2864, %v2864
    %v2929 = vmul.f32 %v2865, %v2865
    %v2930 = vmul.f32 %v2866, %v2866
    %v2931 = vmul.f32 %v2867, %v2867
    %v2932 = vmul.f32 %v2868, %v2868
    %v2933 = vmul.f32 %v2869, %v2869
    %v2934 = vmul.f32 %v2870, %v2870
    %v2935 = vmul.f32 %v2871, %v2871
    %v2936 = vmul.f32 %v2872, %v2872
    %v2937 = vmul.f32 %v2873, %v2873
    %v2938 = vmul.f32 %v2874, %v2874
    %v2939 = vmul.f32 %v2875, %v2875
    %v2940 = vmul.f32 %v2876, %v2876
    %v2941 = vmul.f32 %v2877, %v2877
    %v2942 = vmul.f32 %v2878, %v2878
    %v2943 = vmul.f32 %v2879, %v2879
    %v2944 = vadd.f32 %v2880, %v2882
    %v2945 = vadd.f32 %v2944, %v2884
    %v2946 = vadd.f32 %v2945, %v2886
    %v2947 = vadd.f32 %v2946, %v2888
    %v2948 = vadd.f32 %v2947, %v2890
    %v2949 = vadd.f32 %v2948, %v2892
    %v2950 = vadd.f32 %v2949, %v2894
    %v2951 = vadd.f32 %v2950, %v2896
    %v2952 = vadd.f32 %v2951, %v2898
    %v2953 = vadd.f32 %v2952, %v2900
    %v2954 = vadd.f32 %v2953, %v2902
    %v2955 = vadd.f32 %v2954, %v2904
    %v2956 = vadd.f32 %v2955, %v2906
    %v2957 = vadd.f32 %v2956, %v2908
    %v2958 = vadd.f32 %v2957, %v2910
    %v2959 = vadd.f32 %v2958, %v2912
    %v2960 = vadd.f32 %v2959, %v2914
    %v2961 = vadd.f32 %v2960, %v2916
    %v2962 = vadd.f32 %v2961, %v2918
    %v2963 = vadd.f32 %v2962, %v2920
    %v2964 = vadd.f32 %v2963, %v2922
    %v2965 = vadd.f32 %v2964, %v2924
    %v2966 = vadd.f32 %v2965, %v2926
    %v2967 = vadd.f32 %v2966, %v2928
    %v2968 = vadd.f32 %v2967, %v2930
    %v2969 = vadd.f32 %v2968, %v2932
    %v2970 = vadd.f32 %v2969, %v2934
    %v2971 = vadd.f32 %v2970, %v2936
    %v2972 = vadd.f32 %v2971, %v2938
    %v2973 = vadd.f32 %v2972, %v2940
    %v2974 = vadd.f32 %v2973, %v2942
    %v2975 = vrot.slane %v2974, 4
    %v2976 = vadd.f32 %v2974, %v2975
    %v2977 = vrot.slane %v2976, 2
    %v2978 = vadd.f32 %v2976, %v2977
    %v2979 = vrot.slane %v2978, 1
    %v2980 = vadd.f32 %v2978, %v2979
    %v2981 = vadd.f32 %v2881, %v2883
    %v2982 = vadd.f32 %v2981, %v2885
    %v2983 = vadd.f32 %v2982, %v2887
    %v2984 = vadd.f32 %v2983, %v2889
    %v2985 = vadd.f32 %v2984, %v2891
    %v2986 = vadd.f32 %v2985, %v2893
    %v2987 = vadd.f32 %v2986, %v2895
    %v2988 = vadd.f32 %v2987, %v2897
    %v2989 = vadd.f32 %v2988, %v2899
    %v2990 = vadd.f32 %v2989, %v2901
    %v2991 = vadd.f32 %v2990, %v2903
    %v2992 = vadd.f32 %v2991, %v2905
    %v2993 = vadd.f32 %v2992, %v2907
    %v2994 = vadd.f32 %v2993, %v2909
    %v2995 = vadd.f32 %v2994, %v2911
    %v2996 = vadd.f32 %v2995, %v2913
    %v2997 = vadd.f32 %v2996, %v2915
    %v2998 = vadd.f32 %v2997, %v2917
    %v2999 = vadd.f32 %v2998, %v2919
    %v3000 = vadd.f32 %v2999, %v2921
    %v3001 = vadd.f32 %v3000, %v2923
    %v3002 = vadd.f32 %v3001, %v2925
    %v3003 = vadd.f32 %v3002, %v2927
    %v3004 = vadd.f32 %v3003, %v2929
    %v3005 = vadd.f32 %v3004, %v2931
    %v3006 = vadd.f32 %v3005, %v2933
    %v3007 = vadd.f32 %v3006, %v2935
    %v3008 = vadd.f32 %v3007, %v2937
    %v3009 = vadd.f32 %v3008, %v2939
    %v3010 = vadd.f32 %v3009, %v2941
    %v3011 = vadd.f32 %v3010, %v2943
    %v3012 = vrot.slane %v3011, 4
    %v3013 = vadd.f32 %v3011, %v3012
    %v3014 = vrot.slane %v3013, 2
    %v3015 = vadd.f32 %v3013, %v3014
    %v3016 = vrot.slane %v3015, 1
    %v3017 = vadd.f32 %v3015, %v3016
    %v3018 = vmul.f32 %v2980, %v643
    %v3019 = vmul.f32 %v3017, %v643
    %v3020 = vld [vmem:[%s8] sm:$0x3]
    %v3021 = vadd.f32 %v3018, 1e-05
    %v3022 = vadd.f32 %v3019, 1e-05
    %v3023 = vrsqrt.pop %v3021
    %v3024 = vrsqrt.pop %v3022
    %v3027 = vcombine.low %v3023, %v3024
    %v3029 = vunpack.c.l.s4 1966171168
    %v3030 = vunpack.c.0.s8 %v3029
    %v3031 = vlaneseq
    %v3032 = vshrl.u32 %v3031, 7
    %v3033 = vsub.s32 %v3030, %v3032
    %v3034 = vrot.slane %v3027, %v3033
    %v3036 = vunpack.c.l.s4 1966171168
    %v3037 = vunpack.c.0.s8 %v3036
    %v3038 = vlaneseq
    %v3039 = vshrl.u32 %v3038, 7
    %v3040 = vsub.s32 %v3037, %v3039
    %v3041 = vrot.slane %v3034, %v3040
    %v3043 = vmul.f32 %v3020, %v3041
    %v3044 = vld [vmem:[%s9] sm:$0x3]
    %v3046 = vlaneseq
    %v3047 = vshrl.u32 %v3046, 7
    %v3048 = vsub.s32 0, %v3047
    %v3049 = vrot.slane %v3043, %v3048
    %v3050 = vlaneseq
    %v3051 = vshrl.u32 %v3050, 7
    %v3052 = vsub.s32 1, %v3051
    %v3053 = vrot.slane %v3043, %v3052
    %v3056 = vmul.f32 %v2814, %v3049
    %v3057 = vmul.f32 %v2815, %v3053
    %v3060 = vcombine.low %v3056, %v3057
    %v3062 = vunpack.c.l.s4 1966171168
    %v3063 = vunpack.c.0.s8 %v3062
    %v3064 = vlaneseq
    %v3065 = vshrl.u32 %v3064, 7
    %v3066 = vsub.s32 %v3063, %v3065
    %v3067 = vrot.slane %v3060, %v3066
    %v3069 = vunpack.c.l.s4 1966171168
    %v3070 = vunpack.c.0.s8 %v3069
    %v3071 = vlaneseq
    %v3072 = vshrl.u32 %v3071, 7
    %v3073 = vsub.s32 %v3070, %v3072
    %v3074 = vrot.slane %v3067, %v3073
    %v3076 = vsub.f32 %v3044, %v3074
    %v3077 = vmul.f32 %v2582, %v3049
    %v3078 = vmul.f32 %v2584, %v3053
    %v3079 = vmul.f32 %v2586, %v3049
    %v3080 = vmul.f32 %v2588, %v3053
    %v3081 = vmul.f32 %v2592, %v3049
    %v3082 = vmul.f32 %v2594, %v3053
    %v3083 = vmul.f32 %v2596, %v3049
    %v3084 = vmul.f32 %v2598, %v3053
    %v3085 = vmul.f32 %v2602, %v3049
    %v3086 = vmul.f32 %v2604, %v3053
    %v3087 = vmul.f32 %v2606, %v3049
    %v3088 = vmul.f32 %v2608, %v3053
    %v3089 = vmul.f32 %v2612, %v3049
    %v3090 = vmul.f32 %v2614, %v3053
    %v3091 = vmul.f32 %v2616, %v3049
    %v3092 = vmul.f32 %v2618, %v3053
    %v3093 = vmul.f32 %v2622, %v3049
    %v3094 = vmul.f32 %v2624, %v3053
    %v3095 = vmul.f32 %v2626, %v3049
    %v3096 = vmul.f32 %v2628, %v3053
    %v3097 = vmul.f32 %v2632, %v3049
    %v3098 = vmul.f32 %v2634, %v3053
    %v3099 = vmul.f32 %v2636, %v3049
    %v3100 = vmul.f32 %v2638, %v3053
    %v3101 = vmul.f32 %v2642, %v3049
    %v3102 = vmul.f32 %v2644, %v3053
    %v3103 = vmul.f32 %v2646, %v3049
    %v3104 = vmul.f32 %v2648, %v3053
    %v3105 = vmul.f32 %v2652, %v3049
    %v3106 = vmul.f32 %v2654, %v3053
    %v3107 = vmul.f32 %v2656, %v3049
    %v3108 = vmul.f32 %v2658, %v3053
    %v3109 = vmul.f32 %v2662, %v3049
    %v3110 = vmul.f32 %v2664, %v3053
    %v3111 = vmul.f32 %v2666, %v3049
    %v3112 = vmul.f32 %v2668, %v3053
    %v3113 = vmul.f32 %v2672, %v3049
    %v3114 = vmul.f32 %v2674, %v3053
    %v3115 = vmul.f32 %v2676, %v3049
    %v3116 = vmul.f32 %v2678, %v3053
    %v3117 = vmul.f32 %v2682, %v3049
    %v3118 = vmul.f32 %v2684, %v3053
    %v3119 = vmul.f32 %v2686, %v3049
    %v3120 = vmul.f32 %v2688, %v3053
    %v3121 = vmul.f32 %v2692, %v3049
    %v3122 = vmul.f32 %v2694, %v3053
    %v3123 = vmul.f32 %v2696, %v3049
    %v3124 = vmul.f32 %v2698, %v3053
    %v3125 = vmul.f32 %v2702, %v3049
    %v3126 = vmul.f32 %v2704, %v3053
    %v3127 = vmul.f32 %v2706, %v3049
    %v3128 = vmul.f32 %v2708, %v3053
    %v3129 = vmul.f32 %v2712, %v3049
    %v3130 = vmul.f32 %v2714, %v3053
    %v3131 = vmul.f32 %v2716, %v3049
    %v3132 = vmul.f32 %v2718, %v3053
    %v3133 = vmul.f32 %v2722, %v3049
    %v3134 = vmul.f32 %v2724, %v3053
    %v3135 = vmul.f32 %v2726, %v3049
    %v3136 = vmul.f32 %v2728, %v3053
    %v3137 = vmul.f32 %v2732, %v3049
    %v3138 = vmul.f32 %v2734, %v3053
    %v3139 = vmul.f32 %v2736, %v3049
    %v3140 = vmul.f32 %v2738, %v3053
    %v3142 = vlaneseq
    %v3143 = vshrl.u32 %v3142, 7
    %v3144 = vsub.s32 0, %v3143
    %v3145 = vrot.slane %v3076, %v3144
    %v3146 = vlaneseq
    %v3147 = vshrl.u32 %v3146, 7
    %v3148 = vsub.s32 1, %v3147
    %v3149 = vrot.slane %v3076, %v3148
    %v3152 = vadd.f32 %v3077, %v3145
    %v3153 = vadd.f32 %v3078, %v3149
    %v3154 = vadd.f32 %v3079, %v3145
    %v3155 = vadd.f32 %v3080, %v3149
    %v3156 = vadd.f32 %v3081, %v3145
    %v3157 = vadd.f32 %v3082, %v3149
    %v3158 = vadd.f32 %v3083, %v3145
    %v3159 = vadd.f32 %v3084, %v3149
    %v3160 = vadd.f32 %v3085, %v3145
    %v3161 = vadd.f32 %v3086, %v3149
    %v3162 = vadd.f32 %v3087, %v3145
    %v3163 = vadd.f32 %v3088, %v3149
    %v3164 = vadd.f32 %v3089, %v3145
    %v3165 = vadd.f32 %v3090, %v3149
    %v3166 = vadd.f32 %v3091, %v3145
    %v3167 = vadd.f32 %v3092, %v3149
    %v3168 = vadd.f32 %v3093, %v3145
    %v3169 = vadd.f32 %v3094, %v3149
    %v3170 = vadd.f32 %v3095, %v3145
    %v3171 = vadd.f32 %v3096, %v3149
    %v3172 = vadd.f32 %v3097, %v3145
    %v3173 = vadd.f32 %v3098, %v3149
    %v3174 = vadd.f32 %v3099, %v3145
    %v3175 = vadd.f32 %v3100, %v3149
    %v3176 = vadd.f32 %v3101, %v3145
    %v3177 = vadd.f32 %v3102, %v3149
    %v3178 = vadd.f32 %v3103, %v3145
    %v3179 = vadd.f32 %v3104, %v3149
    %v3180 = vadd.f32 %v3105, %v3145
    %v3181 = vadd.f32 %v3106, %v3149
    %v3182 = vadd.f32 %v3107, %v3145
    %v3183 = vadd.f32 %v3108, %v3149
    %v3184 = vadd.f32 %v3109, %v3145
    %v3185 = vadd.f32 %v3110, %v3149
    %v3186 = vadd.f32 %v3111, %v3145
    %v3187 = vadd.f32 %v3112, %v3149
    %v3188 = vadd.f32 %v3113, %v3145
    %v3189 = vadd.f32 %v3114, %v3149
    %v3190 = vadd.f32 %v3115, %v3145
    %v3191 = vadd.f32 %v3116, %v3149
    %v3192 = vadd.f32 %v3117, %v3145
    %v3193 = vadd.f32 %v3118, %v3149
    %v3194 = vadd.f32 %v3119, %v3145
    %v3195 = vadd.f32 %v3120, %v3149
    %v3196 = vadd.f32 %v3121, %v3145
    %v3197 = vadd.f32 %v3122, %v3149
    %v3198 = vadd.f32 %v3123, %v3145
    %v3199 = vadd.f32 %v3124, %v3149
    %v3200 = vadd.f32 %v3125, %v3145
    %v3201 = vadd.f32 %v3126, %v3149
    %v3202 = vadd.f32 %v3127, %v3145
    %v3203 = vadd.f32 %v3128, %v3149
    %v3204 = vadd.f32 %v3129, %v3145
    %v3205 = vadd.f32 %v3130, %v3149
    %v3206 = vadd.f32 %v3131, %v3145
    %v3207 = vadd.f32 %v3132, %v3149
    %v3208 = vadd.f32 %v3133, %v3145
    %v3209 = vadd.f32 %v3134, %v3149
    %v3210 = vadd.f32 %v3135, %v3145
    %v3211 = vadd.f32 %v3136, %v3149
    %v3212 = vadd.f32 %v3137, %v3145
    %v3213 = vadd.f32 %v3138, %v3149
    %v3214 = vadd.f32 %v3139, %v3145
    %v3215 = vadd.f32 %v3140, %v3149
    %vm3216 = vcmp.ge.f32.partialorder %v3152, 0.0
    %vm3217 = vcmp.ge.f32.partialorder %v3153, 0.0
    %vm3218 = vcmp.ge.f32.partialorder %v3154, 0.0
    %vm3219 = vcmp.ge.f32.partialorder %v3155, 0.0
    %vm3220 = vcmp.ge.f32.partialorder %v3156, 0.0
    %vm3221 = vcmp.ge.f32.partialorder %v3157, 0.0
    %vm3222 = vcmp.ge.f32.partialorder %v3158, 0.0
    %vm3223 = vcmp.ge.f32.partialorder %v3159, 0.0
    %vm3224 = vcmp.ge.f32.partialorder %v3160, 0.0
    %vm3225 = vcmp.ge.f32.partialorder %v3161, 0.0
    %vm3226 = vcmp.ge.f32.partialorder %v3162, 0.0
    %vm3227 = vcmp.ge.f32.partialorder %v3163, 0.0
    %vm3228 = vcmp.ge.f32.partialorder %v3164, 0.0
    %vm3229 = vcmp.ge.f32.partialorder %v3165, 0.0
    %vm3230 = vcmp.ge.f32.partialorder %v3166, 0.0
    %vm3231 = vcmp.ge.f32.partialorder %v3167, 0.0
    %vm3232 = vcmp.ge.f32.partialorder %v3168, 0.0
    %vm3233 = vcmp.ge.f32.partialorder %v3169, 0.0
    %vm3234 = vcmp.ge.f32.partialorder %v3170, 0.0
    %vm3235 = vcmp.ge.f32.partialorder %v3171, 0.0
    %vm3236 = vcmp.ge.f32.partialorder %v3172, 0.0
    %vm3237 = vcmp.ge.f32.partialorder %v3173, 0.0
    %vm3238 = vcmp.ge.f32.partialorder %v3174, 0.0
    %vm3239 = vcmp.ge.f32.partialorder %v3175, 0.0
    %vm3240 = vcmp.ge.f32.partialorder %v3176, 0.0
    %vm3241 = vcmp.ge.f32.partialorder %v3177, 0.0
    %vm3242 = vcmp.ge.f32.partialorder %v3178, 0.0
    %vm3243 = vcmp.ge.f32.partialorder %v3179, 0.0
    %vm3244 = vcmp.ge.f32.partialorder %v3180, 0.0
    %vm3245 = vcmp.ge.f32.partialorder %v3181, 0.0
    %vm3246 = vcmp.ge.f32.partialorder %v3182, 0.0
    %vm3247 = vcmp.ge.f32.partialorder %v3183, 0.0
    %vm3248 = vcmp.ge.f32.partialorder %v3184, 0.0
    %vm3249 = vcmp.ge.f32.partialorder %v3185, 0.0
    %vm3250 = vcmp.ge.f32.partialorder %v3186, 0.0
    %vm3251 = vcmp.ge.f32.partialorder %v3187, 0.0
    %vm3252 = vcmp.ge.f32.partialorder %v3188, 0.0
    %vm3253 = vcmp.ge.f32.partialorder %v3189, 0.0
    %vm3254 = vcmp.ge.f32.partialorder %v3190, 0.0
    %vm3255 = vcmp.ge.f32.partialorder %v3191, 0.0
    %vm3256 = vcmp.ge.f32.partialorder %v3192, 0.0
    %vm3257 = vcmp.ge.f32.partialorder %v3193, 0.0
    %vm3258 = vcmp.ge.f32.partialorder %v3194, 0.0
    %vm3259 = vcmp.ge.f32.partialorder %v3195, 0.0
    %vm3260 = vcmp.ge.f32.partialorder %v3196, 0.0
    %vm3261 = vcmp.ge.f32.partialorder %v3197, 0.0
    %vm3262 = vcmp.ge.f32.partialorder %v3198, 0.0
    %vm3263 = vcmp.ge.f32.partialorder %v3199, 0.0
    %vm3264 = vcmp.ge.f32.partialorder %v3200, 0.0
    %vm3265 = vcmp.ge.f32.partialorder %v3201, 0.0
    %vm3266 = vcmp.ge.f32.partialorder %v3202, 0.0
    %vm3267 = vcmp.ge.f32.partialorder %v3203, 0.0
    %vm3268 = vcmp.ge.f32.partialorder %v3204, 0.0
    %vm3269 = vcmp.ge.f32.partialorder %v3205, 0.0
    %vm3270 = vcmp.ge.f32.partialorder %v3206, 0.0
    %vm3271 = vcmp.ge.f32.partialorder %v3207, 0.0
    %vm3272 = vcmp.ge.f32.partialorder %v3208, 0.0
    %vm3273 = vcmp.ge.f32.partialorder %v3209, 0.0
    %vm3274 = vcmp.ge.f32.partialorder %v3210, 0.0
    %vm3275 = vcmp.ge.f32.partialorder %v3211, 0.0
    %vm3276 = vcmp.ge.f32.partialorder %v3212, 0.0
    %vm3277 = vcmp.ge.f32.partialorder %v3213, 0.0
    %vm3278 = vcmp.ge.f32.partialorder %v3214, 0.0
    %vm3279 = vcmp.ge.f32.partialorder %v3215, 0.0
    %v3280 = vmul.f32 %v3152, 0.01
    %v3281 = vmul.f32 %v3153, 0.01
    %v3282 = vmul.f32 %v3154, 0.01
    %v3283 = vmul.f32 %v3155, 0.01
    %v3284 = vmul.f32 %v3156, 0.01
    %v3285 = vmul.f32 %v3157, 0.01
    %v3286 = vmul.f32 %v3158, 0.01
    %v3287 = vmul.f32 %v3159, 0.01
    %v3288 = vmul.f32 %v3160, 0.01
    %v3289 = vmul.f32 %v3161, 0.01
    %v3290 = vmul.f32 %v3162, 0.01
    %v3291 = vmul.f32 %v3163, 0.01
    %v3292 = vmul.f32 %v3164, 0.01
    %v3293 = vmul.f32 %v3165, 0.01
    %v3294 = vmul.f32 %v3166, 0.01
    %v3295 = vmul.f32 %v3167, 0.01
    %v3296 = vmul.f32 %v3168, 0.01
    %v3297 = vmul.f32 %v3169, 0.01
    %v3298 = vmul.f32 %v3170, 0.01
    %v3299 = vmul.f32 %v3171, 0.01
    %v3300 = vmul.f32 %v3172, 0.01
    %v3301 = vmul.f32 %v3173, 0.01
    %v3302 = vmul.f32 %v3174, 0.01
    %v3303 = vmul.f32 %v3175, 0.01
    %v3304 = vmul.f32 %v3176, 0.01
    %v3305 = vmul.f32 %v3177, 0.01
    %v3306 = vmul.f32 %v3178, 0.01
    %v3307 = vmul.f32 %v3179, 0.01
    %v3308 = vmul.f32 %v3180, 0.01
    %v3309 = vmul.f32 %v3181, 0.01
    %v3310 = vmul.f32 %v3182, 0.01
    %v3311 = vmul.f32 %v3183, 0.01
    %v3312 = vmul.f32 %v3184, 0.01
    %v3313 = vmul.f32 %v3185, 0.01
    %v3314 = vmul.f32 %v3186, 0.01
    %v3315 = vmul.f32 %v3187, 0.01
    %v3316 = vmul.f32 %v3188, 0.01
    %v3317 = vmul.f32 %v3189, 0.01
    %v3318 = vmul.f32 %v3190, 0.01
    %v3319 = vmul.f32 %v3191, 0.01
    %v3320 = vmul.f32 %v3192, 0.01
    %v3321 = vmul.f32 %v3193, 0.01
    %v3322 = vmul.f32 %v3194, 0.01
    %v3323 = vmul.f32 %v3195, 0.01
    %v3324 = vmul.f32 %v3196, 0.01
    %v3325 = vmul.f32 %v3197, 0.01
    %v3326 = vmul.f32 %v3198, 0.01
    %v3327 = vmul.f32 %v3199, 0.01
    %v3328 = vmul.f32 %v3200, 0.01
    %v3329 = vmul.f32 %v3201, 0.01
    %v3330 = vmul.f32 %v3202, 0.01
    %v3331 = vmul.f32 %v3203, 0.01
    %v3332 = vmul.f32 %v3204, 0.01
    %v3333 = vmul.f32 %v3205, 0.01
    %v3334 = vmul.f32 %v3206, 0.01
    %v3335 = vmul.f32 %v3207, 0.01
    %v3336 = vmul.f32 %v3208, 0.01
    %v3337 = vmul.f32 %v3209, 0.01
    %v3338 = vmul.f32 %v3210, 0.01
    %v3339 = vmul.f32 %v3211, 0.01
    %v3340 = vmul.f32 %v3212, 0.01
    %v3341 = vmul.f32 %v3213, 0.01
    %v3342 = vmul.f32 %v3214, 0.01
    %v3343 = vmul.f32 %v3215, 0.01
    %v3344 = vsel %vm3216, %v3152, %v3280
    %v3345 = vsel %vm3217, %v3153, %v3281
    %v3346 = vsel %vm3218, %v3154, %v3282
    %v3347 = vsel %vm3219, %v3155, %v3283
    %v3348 = vsel %vm3220, %v3156, %v3284
    %v3349 = vsel %vm3221, %v3157, %v3285
    %v3350 = vsel %vm3222, %v3158, %v3286
    %v3351 = vsel %vm3223, %v3159, %v3287
    %v3352 = vsel %vm3224, %v3160, %v3288
    %v3353 = vsel %vm3225, %v3161, %v3289
    %v3354 = vsel %vm3226, %v3162, %v3290
    %v3355 = vsel %vm3227, %v3163, %v3291
    %v3356 = vsel %vm3228, %v3164, %v3292
    %v3357 = vsel %vm3229, %v3165, %v3293
    %v3358 = vsel %vm3230, %v3166, %v3294
    %v3359 = vsel %vm3231, %v3167, %v3295
    %v3360 = vsel %vm3232, %v3168, %v3296
    %v3361 = vsel %vm3233, %v3169, %v3297
    %v3362 = vsel %vm3234, %v3170, %v3298
    %v3363 = vsel %vm3235, %v3171, %v3299
    %v3364 = vsel %vm3236, %v3172, %v3300
    %v3365 = vsel %vm3237, %v3173, %v3301
    %v3366 = vsel %vm3238, %v3174, %v3302
    %v3367 = vsel %vm3239, %v3175, %v3303
    %v3368 = vsel %vm3240, %v3176, %v3304
    %v3369 = vsel %vm3241, %v3177, %v3305
    %v3370 = vsel %vm3242, %v3178, %v3306
    %v3371 = vsel %vm3243, %v3179, %v3307
    %v3372 = vsel %vm3244, %v3180, %v3308
    %v3373 = vsel %vm3245, %v3181, %v3309
    %v3374 = vsel %vm3246, %v3182, %v3310
    %v3375 = vsel %vm3247, %v3183, %v3311
    %v3376 = vsel %vm3248, %v3184, %v3312
    %v3377 = vsel %vm3249, %v3185, %v3313
    %v3378 = vsel %vm3250, %v3186, %v3314
    %v3379 = vsel %vm3251, %v3187, %v3315
    %v3380 = vsel %vm3252, %v3188, %v3316
    %v3381 = vsel %vm3253, %v3189, %v3317
    %v3382 = vsel %vm3254, %v3190, %v3318
    %v3383 = vsel %vm3255, %v3191, %v3319
    %v3384 = vsel %vm3256, %v3192, %v3320
    %v3385 = vsel %vm3257, %v3193, %v3321
    %v3386 = vsel %vm3258, %v3194, %v3322
    %v3387 = vsel %vm3259, %v3195, %v3323
    %v3388 = vsel %vm3260, %v3196, %v3324
    %v3389 = vsel %vm3261, %v3197, %v3325
    %v3390 = vsel %vm3262, %v3198, %v3326
    %v3391 = vsel %vm3263, %v3199, %v3327
    %v3392 = vsel %vm3264, %v3200, %v3328
    %v3393 = vsel %vm3265, %v3201, %v3329
    %v3394 = vsel %vm3266, %v3202, %v3330
    %v3395 = vsel %vm3267, %v3203, %v3331
    %v3396 = vsel %vm3268, %v3204, %v3332
    %v3397 = vsel %vm3269, %v3205, %v3333
    %v3398 = vsel %vm3270, %v3206, %v3334
    %v3399 = vsel %vm3271, %v3207, %v3335
    %v3400 = vsel %vm3272, %v3208, %v3336
    %v3401 = vsel %vm3273, %v3209, %v3337
    %v3402 = vsel %vm3274, %v3210, %v3338
    %v3403 = vsel %vm3275, %v3211, %v3339
    %v3404 = vsel %vm3276, %v3212, %v3340
    %v3405 = vsel %vm3277, %v3213, %v3341
    %v3406 = vsel %vm3278, %v3214, %v3342
    %v3407 = vsel %vm3279, %v3215, %v3343
    %v3408 = vld [vmem:[#allocation11] sm:$0xff]
    %v3409 = vld [vmem:[#allocation11 + $0x8] sm:$0xff]
    %v3410 = vld [vmem:[#allocation11 + $0x10] sm:$0xff]
    %v3411 = vld [vmem:[#allocation11 + $0x18] sm:$0xff]
    %v3412 = vld [vmem:[#allocation11 + $0x20] sm:$0xff]
    %v3413 = vld [vmem:[#allocation11 + $0x28] sm:$0xff]
    %v3414 = vld [vmem:[#allocation11 + $0x30] sm:$0xff]
    %v3415 = vld [vmem:[#allocation11 + $0x38] sm:$0xff]
    %v3416 = vld [vmem:[#allocation11 + $0x40] sm:$0xff]
    %v3417 = vld [vmem:[#allocation11 + $0x48] sm:$0xff]
    %v3418 = vld [vmem:[#allocation11 + $0x50] sm:$0xff]
    %v3419 = vld [vmem:[#allocation11 + $0x58] sm:$0xff]
    %v3420 = vld [vmem:[#allocation11 + $0x60] sm:$0xff]
    %v3421 = vld [vmem:[#allocation11 + $0x68] sm:$0xff]
    %v3422 = vld [vmem:[#allocation11 + $0x70] sm:$0xff]
    %v3423 = vld [vmem:[#allocation11 + $0x78] sm:$0xff]
    %v3424 = vld [vmem:[#allocation11 + $0x80] sm:$0xff]
    %v3425 = vld [vmem:[#allocation11 + $0x88] sm:$0xff]
    %v3426 = vld [vmem:[#allocation11 + $0x90] sm:$0xff]
    %v3427 = vld [vmem:[#allocation11 + $0x98] sm:$0xff]
    %v3428 = vld [vmem:[#allocation11 + $0xa0] sm:$0xff]
    %v3429 = vld [vmem:[#allocation11 + $0xa8] sm:$0xff]
    %v3430 = vld [vmem:[#allocation11 + $0xb0] sm:$0xff]
    %v3431 = vld [vmem:[#allocation11 + $0xb8] sm:$0xff]
    %v3432 = vld [vmem:[#allocation11 + $0xc0] sm:$0xff]
    %v3433 = vld [vmem:[#allocation11 + $0xc8] sm:$0xff]
    %v3434 = vld [vmem:[#allocation11 + $0xd0] sm:$0xff]
    %v3435 = vld [vmem:[#allocation11 + $0xd8] sm:$0xff]
    %v3436 = vld [vmem:[#allocation11 + $0xe0] sm:$0xff]
    %v3437 = vld [vmem:[#allocation11 + $0xe8] sm:$0xff]
    %v3438 = vld [vmem:[#allocation11 + $0xf0] sm:$0xff]
    %v3439 = vld [vmem:[#allocation11 + $0xf8] sm:$0xff]
    %v3440 = vpack.c.bf16 %v3346, %v3344
    %v3441 = vpack.c.bf16 %v3347, %v3345
    %v3442 = vpack.c.bf16 %v3350, %v3348
    %v3443 = vpack.c.bf16 %v3351, %v3349
    %v3444 = vpack.c.bf16 %v3354, %v3352
    %v3445 = vpack.c.bf16 %v3355, %v3353
    %v3446 = vpack.c.bf16 %v3358, %v3356
    %v3447 = vpack.c.bf16 %v3359, %v3357
    %v3448 = vpack.c.bf16 %v3362, %v3360
    %v3449 = vpack.c.bf16 %v3363, %v3361
    %v3450 = vpack.c.bf16 %v3366, %v3364
    %v3451 = vpack.c.bf16 %v3367, %v3365
    %v3452 = vpack.c.bf16 %v3370, %v3368
    %v3453 = vpack.c.bf16 %v3371, %v3369
    %v3454 = vpack.c.bf16 %v3374, %v3372
    %v3455 = vpack.c.bf16 %v3375, %v3373
    %v3456 = vpack.c.bf16 %v3378, %v3376
    %v3457 = vpack.c.bf16 %v3379, %v3377
    %v3458 = vpack.c.bf16 %v3382, %v3380
    %v3459 = vpack.c.bf16 %v3383, %v3381
    %v3460 = vpack.c.bf16 %v3386, %v3384
    %v3461 = vpack.c.bf16 %v3387, %v3385
    %v3462 = vpack.c.bf16 %v3390, %v3388
    %v3463 = vpack.c.bf16 %v3391, %v3389
    %v3464 = vpack.c.bf16 %v3394, %v3392
    %v3465 = vpack.c.bf16 %v3395, %v3393
    %v3466 = vpack.c.bf16 %v3398, %v3396
    %v3467 = vpack.c.bf16 %v3399, %v3397
    %v3468 = vpack.c.bf16 %v3402, %v3400
    %v3469 = vpack.c.bf16 %v3403, %v3401
    %v3470 = vpack.c.bf16 %v3406, %v3404
    %v3471 = vpack.c.bf16 %v3407, %v3405
    %v3504 = vunpack.c.l.b16 %v3408
    %v3505 = vunpack.c.h.b16 %v3408
    %v3506 = vunpack.c.l.b16 %v3409
    %v3507 = vunpack.c.h.b16 %v3409
    %v3508 = vunpack.c.l.b16 %v3410
    %v3509 = vunpack.c.h.b16 %v3410
    %v3510 = vunpack.c.l.b16 %v3411
    %v3511 = vunpack.c.h.b16 %v3411
    %v3512 = vunpack.c.l.b16 %v3412
    %v3513 = vunpack.c.h.b16 %v3412
    %v3514 = vunpack.c.l.b16 %v3413
    %v3515 = vunpack.c.h.b16 %v3413
    %v3516 = vunpack.c.l.b16 %v3414
    %v3517 = vunpack.c.h.b16 %v3414
    %v3518 = vunpack.c.l.b16 %v3415
    %v3519 = vunpack.c.h.b16 %v3415
    %v3520 = vunpack.c.l.b16 %v3416
    %v3521 = vunpack.c.h.b16 %v3416
    %v3522 = vunpack.c.l.b16 %v3417
    %v3523 = vunpack.c.h.b16 %v3417
    %v3524 = vunpack.c.l.b16 %v3418
    %v3525 = vunpack.c.h.b16 %v3418
    %v3526 = vunpack.c.l.b16 %v3419
    %v3527 = vunpack.c.h.b16 %v3419
    %v3528 = vunpack.c.l.b16 %v3420
    %v3529 = vunpack.c.h.b16 %v3420
    %v3530 = vunpack.c.l.b16 %v3421
    %v3531 = vunpack.c.h.b16 %v3421
    %v3532 = vunpack.c.l.b16 %v3422
    %v3533 = vunpack.c.h.b16 %v3422
    %v3534 = vunpack.c.l.b16 %v3423
    %v3535 = vunpack.c.h.b16 %v3423
    %v3536 = vunpack.c.l.b16 %v3424
    %v3537 = vunpack.c.h.b16 %v3424
    %v3538 = vunpack.c.l.b16 %v3425
    %v3539 = vunpack.c.h.b16 %v3425
    %v3540 = vunpack.c.l.b16 %v3426
    %v3541 = vunpack.c.h.b16 %v3426
    %v3542 = vunpack.c.l.b16 %v3427
    %v3543 = vunpack.c.h.b16 %v3427
    %v3544 = vunpack.c.l.b16 %v3428
    %v3545 = vunpack.c.h.b16 %v3428
    %v3546 = vunpack.c.l.b16 %v3429
    %v3547 = vunpack.c.h.b16 %v3429
    %v3548 = vunpack.c.l.b16 %v3430
    %v3549 = vunpack.c.h.b16 %v3430
    %v3550 = vunpack.c.l.b16 %v3431
    %v3551 = vunpack.c.h.b16 %v3431
    %v3552 = vunpack.c.l.b16 %v3432
    %v3553 = vunpack.c.h.b16 %v3432
    %v3554 = vunpack.c.l.b16 %v3433
    %v3555 = vunpack.c.h.b16 %v3433
    %v3556 = vunpack.c.l.b16 %v3434
    %v3557 = vunpack.c.h.b16 %v3434
    %v3558 = vunpack.c.l.b16 %v3435
    %v3559 = vunpack.c.h.b16 %v3435
    %v3560 = vunpack.c.l.b16 %v3436
    %v3561 = vunpack.c.h.b16 %v3436
    %v3562 = vunpack.c.l.b16 %v3437
    %v3563 = vunpack.c.h.b16 %v3437
    %v3564 = vunpack.c.l.b16 %v3438
    %v3565 = vunpack.c.h.b16 %v3438
    %v3566 = vunpack.c.l.b16 %v3439
    %v3567 = vunpack.c.h.b16 %v3439
    %v3568 = vpack.c.b16 %v3506, %v3504
    %v3569 = vpack.c.b16 %v3507, %v3505
    %v3570 = vpack.c.b16 %v3510, %v3508
    %v3571 = vpack.c.b16 %v3511, %v3509
    %v3572 = vpack.c.b16 %v3514, %v3512
    %v3573 = vpack.c.b16 %v3515, %v3513
    %v3574 = vpack.c.b16 %v3518, %v3516
    %v3575 = vpack.c.b16 %v3519, %v3517
    %v3576 = vpack.c.b16 %v3522, %v3520
    %v3577 = vpack.c.b16 %v3523, %v3521
    %v3578 = vpack.c.b16 %v3526, %v3524
    %v3579 = vpack.c.b16 %v3527, %v3525
    %v3580 = vpack.c.b16 %v3530, %v3528
    %v3581 = vpack.c.b16 %v3531, %v3529
    %v3582 = vpack.c.b16 %v3534, %v3532
    %v3583 = vpack.c.b16 %v3535, %v3533
    %v3584 = vpack.c.b16 %v3538, %v3536
    %v3585 = vpack.c.b16 %v3539, %v3537
    %v3586 = vpack.c.b16 %v3542, %v3540
    %v3587 = vpack.c.b16 %v3543, %v3541
    %v3588 = vpack.c.b16 %v3546, %v3544
    %v3589 = vpack.c.b16 %v3547, %v3545
    %v3590 = vpack.c.b16 %v3550, %v3548
    %v3591 = vpack.c.b16 %v3551, %v3549
    %v3592 = vpack.c.b16 %v3554, %v3552
    %v3593 = vpack.c.b16 %v3555, %v3553
    %v3594 = vpack.c.b16 %v3558, %v3556
    %v3595 = vpack.c.b16 %v3559, %v3557
    %v3596 = vpack.c.b16 %v3562, %v3560
    %v3597 = vpack.c.b16 %v3563, %v3561
    %v3598 = vpack.c.b16 %v3566, %v3564
    %v3599 = vpack.c.b16 %v3567, %v3565
    %3632 = vmatprep.subr.bf16.mxu0 %v3569
    %3633 = vmatpush1.bf16.msra.mxu0 %v3568
    %3634 = vmatprep.subr.bf16.mxu0 %v3571
    %3635 = vmatpush1.bf16.msra.mxu0 %v3570
    %3636 = vmatprep.subr.bf16.mxu0 %v3573
    %3637 = vmatpush1.bf16.msra.mxu0 %v3572
    %3638 = vmatprep.subr.bf16.mxu0 %v3575
    %3639 = vmatpush1.bf16.msra.mxu0 %v3574
    %3640 = vmatprep.subr.bf16.mxu0 %v3577
    %3641 = vmatpush1.bf16.msra.mxu0 %v3576
    %3642 = vmatprep.subr.bf16.mxu0 %v3579
    %3643 = vmatpush1.bf16.msra.mxu0 %v3578
    %3644 = vmatprep.subr.bf16.mxu0 %v3581
    %3645 = vmatpush1.bf16.msra.mxu0 %v3580
    %3646 = vmatprep.subr.bf16.mxu0 %v3583
    %3647 = vmatpush1.bf16.msra.mxu0 %v3582
    %3648 = vmatprep.subr.bf16.mxu0 %v3585
    %3649 = vmatpush1.bf16.msra.mxu0 %v3584
    %3650 = vmatprep.subr.bf16.mxu0 %v3587
    %3651 = vmatpush1.bf16.msra.mxu0 %v3586
    %3652 = vmatprep.subr.bf16.mxu0 %v3589
    %3653 = vmatpush1.bf16.msra.mxu0 %v3588
    %3654 = vmatprep.subr.bf16.mxu0 %v3591
    %3655 = vmatpush1.bf16.msra.mxu0 %v3590
    %3656 = vmatprep.subr.bf16.mxu0 %v3593
    %3657 = vmatpush1.bf16.msra.mxu0 %v3592
    %3658 = vmatprep.subr.bf16.mxu0 %v3595
    %3659 = vmatpush1.bf16.msra.mxu0 %v3594
    %3660 = vmatprep.subr.bf16.mxu0 %v3597
    %3661 = vmatpush1.bf16.msra.mxu0 %v3596
    %3662 = vmatprep.subr.bf16.mxu0 %v3599
    %3663 = vmatpush1.bf16.msra.mxu0 %v3598
    %3664 = vmatprep.mubr.bf16.mxu0 %v3441
    %3665 = vmatmul.mubr.bf16.gmra.mrb[0].mxu0 %v3440
    %v3666 = vpop.f32.mrb[0].mxu0
    %v3667 = vadd.f32 0.0, %v3666
    %v3668 = vpop.f32.mrb[0].mxu0
    %v3669 = vadd.f32 0.0, %v3668
    %v3670 = vpop.f32.mrb[0].mxu0
    %v3671 = vadd.f32 0.0, %v3670
    %v3672 = vpop.f32.mrb[0].mxu0
    %v3673 = vadd.f32 0.0, %v3672
    %3674 = vmatprep.mubr.bf16.mxu0 %v3443
    %3675 = vmatmul.mubr.bf16.gmra.mrb[0].mxu0 %v3442
    %v3676 = vpop.f32.mrb[0].mxu0
    %v3677 = vadd.f32 0.0, %v3676
    %v3678 = vpop.f32.mrb[0].mxu0
    %v3679 = vadd.f32 0.0, %v3678
    %v3680 = vpop.f32.mrb[0].mxu0
    %v3681 = vadd.f32 0.0, %v3680
    %v3682 = vpop.f32.mrb[0].mxu0
    %v3683 = vadd.f32 0.0, %v3682
    %3684 = vmatprep.mubr.bf16.mxu0 %v3445
    %3685 = vmatmul.mubr.bf16.gmra.mrb[0].mxu0 %v3444
    %v3686 = vpop.f32.mrb[0].mxu0
    %v3687 = vadd.f32 0.0, %v3686
    %v3688 = vpop.f32.mrb[0].mxu0
    %v3689 = vadd.f32 0.0, %v3688
    %v3690 = vpop.f32.mrb[0].mxu0
    %v3691 = vadd.f32 0.0, %v3690
    %v3692 = vpop.f32.mrb[0].mxu0
    %v3693 = vadd.f32 0.0, %v3692
    %3694 = vmatprep.mubr.bf16.mxu0 %v3447
    %3695 = vmatmul.mubr.bf16.gmra.mrb[0].mxu0 %v3446
    %v3696 = vpop.f32.mrb[0].mxu0
    %v3697 = vadd.f32 0.0, %v3696
    %v3698 = vpop.f32.mrb[0].mxu0
    %v3699 = vadd.f32 0.0, %v3698
    %v3700 = vpop.f32.mrb[0].mxu0
    %v3701 = vadd.f32 0.0, %v3700
    %v3702 = vpop.f32.mrb[0].mxu0
    %v3703 = vadd.f32 0.0, %v3702
    %3704 = vmatprep.mubr.bf16.mxu0 %v3449
    %3705 = vmatmul.mubr.bf16.gmra.mrb[0].mxu0 %v3448
    %v3706 = vpop.f32.mrb[0].mxu0
    %v3707 = vadd.f32 0.0, %v3706
    %v3708 = vpop.f32.mrb[0].mxu0
    %v3709 = vadd.f32 0.0, %v3708
    %v3710 = vpop.f32.mrb[0].mxu0
    %v3711 = vadd.f32 0.0, %v3710
    %v3712 = vpop.f32.mrb[0].mxu0
    %v3713 = vadd.f32 0.0, %v3712
    %3714 = vmatprep.mubr.bf16.mxu0 %v3451
    %3715 = vmatmul.mubr.bf16.gmra.mrb[0].mxu0 %v3450
    %v3716 = vpop.f32.mrb[0].mxu0
    %v3717 = vadd.f32 0.0, %v3716
    %v3718 = vpop.f32.mrb[0].mxu0
    %v3719 = vadd.f32 0.0, %v3718
    %v3720 = vpop.f32.mrb[0].mxu0
    %v3721 = vadd.f32 0.0, %v3720
    %v3722 = vpop.f32.mrb[0].mxu0
    %v3723 = vadd.f32 0.0, %v3722
    %3724 = vmatprep.mubr.bf16.mxu0 %v3453
    %3725 = vmatmul.mubr.bf16.gmra.mrb[0].mxu0 %v3452
    %v3726 = vpop.f32.mrb[0].mxu0
    %v3727 = vadd.f32 0.0, %v3726
    %v3728 = vpop.f32.mrb[0].mxu0
    %v3729 = vadd.f32 0.0, %v3728
    %v3730 = vpop.f32.mrb[0].mxu0
    %v3731 = vadd.f32 0.0, %v3730
    %v3732 = vpop.f32.mrb[0].mxu0
    %v3733 = vadd.f32 0.0, %v3732
    %3734 = vmatprep.mubr.bf16.mxu0 %v3455
    %3735 = vmatmul.mubr.bf16.gmra.mrb[0].mxu0 %v3454
    %v3736 = vpop.f32.mrb[0].mxu0
    %v3737 = vadd.f32 0.0, %v3736
    %v3738 = vpop.f32.mrb[0].mxu0
    %v3739 = vadd.f32 0.0, %v3738
    %v3740 = vpop.f32.mrb[0].mxu0
    %v3741 = vadd.f32 0.0, %v3740
    %v3742 = vpop.f32.mrb[0].mxu0
    %v3743 = vadd.f32 0.0, %v3742
    %3744 = vmatprep.mubr.bf16.mxu0 %v3457
    %3745 = vmatmul.mubr.bf16.gmra.mrb[0].mxu0 %v3456
    %v3746 = vpop.f32.mrb[0].mxu0
    %v3747 = vadd.f32 0.0, %v3746
    %v3748 = vpop.f32.mrb[0].mxu0
    %v3749 = vadd.f32 0.0, %v3748
    %v3750 = vpop.f32.mrb[0].mxu0
    %v3751 = vadd.f32 0.0, %v3750
    %v3752 = vpop.f32.mrb[0].mxu0
    %v3753 = vadd.f32 0.0, %v3752
    %3754 = vmatprep.mubr.bf16.mxu0 %v3459
    %3755 = vmatmul.mubr.bf16.gmra.mrb[0].mxu0 %v3458
    %v3756 = vpop.f32.mrb[0].mxu0
    %v3757 = vadd.f32 0.0, %v3756
    %v3758 = vpop.f32.mrb[0].mxu0
    %v3759 = vadd.f32 0.0, %v3758
    %v3760 = vpop.f32.mrb[0].mxu0
    %v3761 = vadd.f32 0.0, %v3760
    %v3762 = vpop.f32.mrb[0].mxu0
    %v3763 = vadd.f32 0.0, %v3762
    %3764 = vmatprep.mubr.bf16.mxu0 %v3461
    %3765 = vmatmul.mubr.bf16.gmra.mrb[0].mxu0 %v3460
    %v3766 = vpop.f32.mrb[0].mxu0
    %v3767 = vadd.f32 0.0, %v3766
    %v3768 = vpop.f32.mrb[0].mxu0
    %v3769 = vadd.f32 0.0, %v3768
    %v3770 = vpop.f32.mrb[0].mxu0
    %v3771 = vadd.f32 0.0, %v3770
    %v3772 = vpop.f32.mrb[0].mxu0
    %v3773 = vadd.f32 0.0, %v3772
    %3774 = vmatprep.mubr.bf16.mxu0 %v3463
    %3775 = vmatmul.mubr.bf16.gmra.mrb[0].mxu0 %v3462
    %v3776 = vpop.f32.mrb[0].mxu0
    %v3777 = vadd.f32 0.0, %v3776
    %v3778 = vpop.f32.mrb[0].mxu0
    %v3779 = vadd.f32 0.0, %v3778
    %v3780 = vpop.f32.mrb[0].mxu0
    %v3781 = vadd.f32 0.0, %v3780
    %v3782 = vpop.f32.mrb[0].mxu0
    %v3783 = vadd.f32 0.0, %v3782
    %3784 = vmatprep.mubr.bf16.mxu0 %v3465
    %3785 = vmatmul.mubr.bf16.gmra.mrb[0].mxu0 %v3464
    %v3786 = vpop.f32.mrb[0].mxu0
    %v3787 = vadd.f32 0.0, %v3786
    %v3788 = vpop.f32.mrb[0].mxu0
    %v3789 = vadd.f32 0.0, %v3788
    %v3790 = vpop.f32.mrb[0].mxu0
    %v3791 = vadd.f32 0.0, %v3790
    %v3792 = vpop.f32.mrb[0].mxu0
    %v3793 = vadd.f32 0.0, %v3792
    %3794 = vmatprep.mubr.bf16.mxu0 %v3467
    %3795 = vmatmul.mubr.bf16.gmra.mrb[0].mxu0 %v3466
    %v3796 = vpop.f32.mrb[0].mxu0
    %v3797 = vadd.f32 0.0, %v3796
    %v3798 = vpop.f32.mrb[0].mxu0
    %v3799 = vadd.f32 0.0, %v3798
    %v3800 = vpop.f32.mrb[0].mxu0
    %v3801 = vadd.f32 0.0, %v3800
    %v3802 = vpop.f32.mrb[0].mxu0
    %v3803 = vadd.f32 0.0, %v3802
    %3804 = vmatprep.mubr.bf16.mxu0 %v3469
    %3805 = vmatmul.mubr.bf16.gmra.mrb[0].mxu0 %v3468
    %v3806 = vpop.f32.mrb[0].mxu0
    %v3807 = vadd.f32 0.0, %v3806
    %v3808 = vpop.f32.mrb[0].mxu0
    %v3809 = vadd.f32 0.0, %v3808
    %v3810 = vpop.f32.mrb[0].mxu0
    %v3811 = vadd.f32 0.0, %v3810
    %v3812 = vpop.f32.mrb[0].mxu0
    %v3813 = vadd.f32 0.0, %v3812
    %3814 = vmatprep.mubr.bf16.mxu0 %v3471
    %3815 = vmatmul.mubr.bf16.gmra.mrb[0].mxu0 %v3470
    %v3816 = vpop.f32.mrb[0].mxu0
    %v3817 = vadd.f32 0.0, %v3816
    %v3818 = vpop.f32.mrb[0].mxu0
    %v3819 = vadd.f32 0.0, %v3818
    %v3820 = vpop.f32.mrb[0].mxu0
    %v3821 = vadd.f32 0.0, %v3820
    %v3822 = vpop.f32.mrb[0].mxu0
    %v3823 = vadd.f32 0.0, %v3822
    %3824 = vdwg.mxu0
    %v3825 = vadd.f32 %v3667, %v3671
    %v3826 = vadd.f32 %v3825, %v3677
    %v3827 = vadd.f32 %v3826, %v3681
    %v3828 = vadd.f32 %v3827, %v3687
    %v3829 = vadd.f32 %v3828, %v3691
    %v3830 = vadd.f32 %v3829, %v3697
    %v3831 = vadd.f32 %v3830, %v3701
    %v3832 = vadd.f32 %v3831, %v3707
    %v3833 = vadd.f32 %v3832, %v3711
    %v3834 = vadd.f32 %v3833, %v3717
    %v3835 = vadd.f32 %v3834, %v3721
    %v3836 = vadd.f32 %v3835, %v3727
    %v3837 = vadd.f32 %v3836, %v3731
    %v3838 = vadd.f32 %v3837, %v3737
    %v3839 = vadd.f32 %v3838, %v3741
    %v3840 = vadd.f32 %v3839, %v3747
    %v3841 = vadd.f32 %v3840, %v3751
    %v3842 = vadd.f32 %v3841, %v3757
    %v3843 = vadd.f32 %v3842, %v3761
    %v3844 = vadd.f32 %v3843, %v3767
    %v3845 = vadd.f32 %v3844, %v3771
    %v3846 = vadd.f32 %v3845, %v3777
    %v3847 = vadd.f32 %v3846, %v3781
    %v3848 = vadd.f32 %v3847, %v3787
    %v3849 = vadd.f32 %v3848, %v3791
    %v3850 = vadd.f32 %v3849, %v3797
    %v3851 = vadd.f32 %v3850, %v3801
    %v3852 = vadd.f32 %v3851, %v3807
    %v3853 = vadd.f32 %v3852, %v3811
    %v3854 = vadd.f32 %v3853, %v3817
    %v3855 = vadd.f32 %v3854, %v3821
    %v3856 = vrot.slane %v3855, 4
    %v3857 = vadd.f32 %v3855, %v3856
    %v3858 = vrot.slane %v3857, 2
    %v3859 = vadd.f32 %v3857, %v3858
    %v3860 = vrot.slane %v3859, 1
    %v3861 = vadd.f32 %v3859, %v3860
    %v3862 = vadd.f32 %v3669, %v3673
    %v3863 = vadd.f32 %v3862, %v3679
    %v3864 = vadd.f32 %v3863, %v3683
    %v3865 = vadd.f32 %v3864, %v3689
    %v3866 = vadd.f32 %v3865, %v3693
    %v3867 = vadd.f32 %v3866, %v3699
    %v3868 = vadd.f32 %v3867, %v3703
    %v3869 = vadd.f32 %v3868, %v3709
    %v3870 = vadd.f32 %v3869, %v3713
    %v3871 = vadd.f32 %v3870, %v3719
    %v3872 = vadd.f32 %v3871, %v3723
    %v3873 = vadd.f32 %v3872, %v3729
    %v3874 = vadd.f32 %v3873, %v3733
    %v3875 = vadd.f32 %v3874, %v3739
    %v3876 = vadd.f32 %v3875, %v3743
    %v3877 = vadd.f32 %v3876, %v3749
    %v3878 = vadd.f32 %v3877, %v3753
    %v3879 = vadd.f32 %v3878, %v3759
    %v3880 = vadd.f32 %v3879, %v3763
    %v3881 = vadd.f32 %v3880, %v3769
    %v3882 = vadd.f32 %v3881, %v3773
    %v3883 = vadd.f32 %v3882, %v3779
    %v3884 = vadd.f32 %v3883, %v3783
    %v3885 = vadd.f32 %v3884, %v3789
    %v3886 = vadd.f32 %v3885, %v3793
    %v3887 = vadd.f32 %v3886, %v3799
    %v3888 = vadd.f32 %v3887, %v3803
    %v3889 = vadd.f32 %v3888, %v3809
    %v3890 = vadd.f32 %v3889, %v3813
    %v3891 = vadd.f32 %v3890, %v3819
    %v3892 = vadd.f32 %v3891, %v3823
    %v3893 = vrot.slane %v3892, 4
    %v3894 = vadd.f32 %v3892, %v3893
    %v3895 = vrot.slane %v3894, 2
    %v3896 = vadd.f32 %v3894, %v3895
    %v3897 = vrot.slane %v3896, 1
    %v3898 = vadd.f32 %v3896, %v3897
    %v3899 = vmul.f32 %v3861, %v643
    %v3900 = vmul.f32 %v3898, %v643
    %v3901 = vsub.f32 %v3667, %v3899
    %v3902 = vsub.f32 %v3669, %v3900
    %v3903 = vsub.f32 %v3671, %v3899
    %v3904 = vsub.f32 %v3673, %v3900
    %v3905 = vsub.f32 %v3677, %v3899
    %v3906 = vsub.f32 %v3679, %v3900
    %v3907 = vsub.f32 %v3681, %v3899
    %v3908 = vsub.f32 %v3683, %v3900
    %v3909 = vsub.f32 %v3687, %v3899
    %v3910 = vsub.f32 %v3689, %v3900
    %v3911 = vsub.f32 %v3691, %v3899
    %v3912 = vsub.f32 %v3693, %v3900
    %v3913 = vsub.f32 %v3697, %v3899
    %v3914 = vsub.f32 %v3699, %v3900
    %v3915 = vsub.f32 %v3701, %v3899
    %v3916 = vsub.f32 %v3703, %v3900
    %v3917 = vsub.f32 %v3707, %v3899
    %v3918 = vsub.f32 %v3709, %v3900
    %v3919 = vsub.f32 %v3711, %v3899
    %v3920 = vsub.f32 %v3713, %v3900
    %v3921 = vsub.f32 %v3717, %v3899
    %v3922 = vsub.f32 %v3719, %v3900
    %v3923 = vsub.f32 %v3721, %v3899
    %v3924 = vsub.f32 %v3723, %v3900
    %v3925 = vsub.f32 %v3727, %v3899
    %v3926 = vsub.f32 %v3729, %v3900
    %v3927 = vsub.f32 %v3731, %v3899
    %v3928 = vsub.f32 %v3733, %v3900
    %v3929 = vsub.f32 %v3737, %v3899
    %v3930 = vsub.f32 %v3739, %v3900
    %v3931 = vsub.f32 %v3741, %v3899
    %v3932 = vsub.f32 %v3743, %v3900
    %v3933 = vsub.f32 %v3747, %v3899
    %v3934 = vsub.f32 %v3749, %v3900
    %v3935 = vsub.f32 %v3751, %v3899
    %v3936 = vsub.f32 %v3753, %v3900
    %v3937 = vsub.f32 %v3757, %v3899
    %v3938 = vsub.f32 %v3759, %v3900
    %v3939 = vsub.f32 %v3761, %v3899
    %v3940 = vsub.f32 %v3763, %v3900
    %v3941 = vsub.f32 %v3767, %v3899
    %v3942 = vsub.f32 %v3769, %v3900
    %v3943 = vsub.f32 %v3771, %v3899
    %v3944 = vsub.f32 %v3773, %v3900
    %v3945 = vsub.f32 %v3777, %v3899
    %v3946 = vsub.f32 %v3779, %v3900
    %v3947 = vsub.f32 %v3781, %v3899
    %v3948 = vsub.f32 %v3783, %v3900
    %v3949 = vsub.f32 %v3787, %v3899
    %v3950 = vsub.f32 %v3789, %v3900
    %v3951 = vsub.f32 %v3791, %v3899
    %v3952 = vsub.f32 %v3793, %v3900
    %v3953 = vsub.f32 %v3797, %v3899
    %v3954 = vsub.f32 %v3799, %v3900
    %v3955 = vsub.f32 %v3801, %v3899
    %v3956 = vsub.f32 %v3803, %v3900
    %v3957 = vsub.f32 %v3807, %v3899
    %v3958 = vsub.f32 %v3809, %v3900
    %v3959 = vsub.f32 %v3811, %v3899
    %v3960 = vsub.f32 %v3813, %v3900
    %v3961 = vsub.f32 %v3817, %v3899
    %v3962 = vsub.f32 %v3819, %v3900
    %v3963 = vsub.f32 %v3821, %v3899
    %v3964 = vsub.f32 %v3823, %v3900
    %v3965 = vmul.f32 %v3901, %v3901
    %v3966 = vmul.f32 %v3902, %v3902
    %v3967 = vmul.f32 %v3903, %v3903
    %v3968 = vmul.f32 %v3904, %v3904
    %v3969 = vmul.f32 %v3905, %v3905
    %v3970 = vmul.f32 %v3906, %v3906
    %v3971 = vmul.f32 %v3907, %v3907
    %v3972 = vmul.f32 %v3908, %v3908
    %v3973 = vmul.f32 %v3909, %v3909
    %v3974 = vmul.f32 %v3910, %v3910
    %v3975 = vmul.f32 %v3911, %v3911
    %v3976 = vmul.f32 %v3912, %v3912
    %v3977 = vmul.f32 %v3913, %v3913
    %v3978 = vmul.f32 %v3914, %v3914
    %v3979 = vmul.f32 %v3915, %v3915
    %v3980 = vmul.f32 %v3916, %v3916
    %v3981 = vmul.f32 %v3917, %v3917
    %v3982 = vmul.f32 %v3918, %v3918
    %v3983 = vmul.f32 %v3919, %v3919
    %v3984 = vmul.f32 %v3920, %v3920
    %v3985 = vmul.f32 %v3921, %v3921
    %v3986 = vmul.f32 %v3922, %v3922
    %v3987 = vmul.f32 %v3923, %v3923
    %v3988 = vmul.f32 %v3924, %v3924
    %v3989 = vmul.f32 %v3925, %v3925
    %v3990 = vmul.f32 %v3926, %v3926
    %v3991 = vmul.f32 %v3927, %v3927
    %v3992 = vmul.f32 %v3928, %v3928
    %v3993 = vmul.f32 %v3929, %v3929
    %v3994 = vmul.f32 %v3930, %v3930
    %v3995 = vmul.f32 %v3931, %v3931
    %v3996 = vmul.f32 %v3932, %v3932
    %v3997 = vmul.f32 %v3933, %v3933
    %v3998 = vmul.f32 %v3934, %v3934
    %v3999 = vmul.f32 %v3935, %v3935
    %v4000 = vmul.f32 %v3936, %v3936
    %v4001 = vmul.f32 %v3937, %v3937
    %v4002 = vmul.f32 %v3938, %v3938
    %v4003 = vmul.f32 %v3939, %v3939
    %v4004 = vmul.f32 %v3940, %v3940
    %v4005 = vmul.f32 %v3941, %v3941
    %v4006 = vmul.f32 %v3942, %v3942
    %v4007 = vmul.f32 %v3943, %v3943
    %v4008 = vmul.f32 %v3944, %v3944
    %v4009 = vmul.f32 %v3945, %v3945
    %v4010 = vmul.f32 %v3946, %v3946
    %v4011 = vmul.f32 %v3947, %v3947
    %v4012 = vmul.f32 %v3948, %v3948
    %v4013 = vmul.f32 %v3949, %v3949
    %v4014 = vmul.f32 %v3950, %v3950
    %v4015 = vmul.f32 %v3951, %v3951
    %v4016 = vmul.f32 %v3952, %v3952
    %v4017 = vmul.f32 %v3953, %v3953
    %v4018 = vmul.f32 %v3954, %v3954
    %v4019 = vmul.f32 %v3955, %v3955
    %v4020 = vmul.f32 %v3956, %v3956
    %v4021 = vmul.f32 %v3957, %v3957
    %v4022 = vmul.f32 %v3958, %v3958
    %v4023 = vmul.f32 %v3959, %v3959
    %v4024 = vmul.f32 %v3960, %v3960
    %v4025 = vmul.f32 %v3961, %v3961
    %v4026 = vmul.f32 %v3962, %v3962
    %v4027 = vmul.f32 %v3963, %v3963
    %v4028 = vmul.f32 %v3964, %v3964
    %v4029 = vadd.f32 %v3965, %v3967
    %v4030 = vadd.f32 %v4029, %v3969
    %v4031 = vadd.f32 %v4030, %v3971
    %v4032 = vadd.f32 %v4031, %v3973
    %v4033 = vadd.f32 %v4032, %v3975
    %v4034 = vadd.f32 %v4033, %v3977
    %v4035 = vadd.f32 %v4034, %v3979
    %v4036 = vadd.f32 %v4035, %v3981
    %v4037 = vadd.f32 %v4036, %v3983
    %v4038 = vadd.f32 %v4037, %v3985
    %v4039 = vadd.f32 %v4038, %v3987
    %v4040 = vadd.f32 %v4039, %v3989
    %v4041 = vadd.f32 %v4040, %v3991
    %v4042 = vadd.f32 %v4041, %v3993
    %v4043 = vadd.f32 %v4042, %v3995
    %v4044 = vadd.f32 %v4043, %v3997
    %v4045 = vadd.f32 %v4044, %v3999
    %v4046 = vadd.f32 %v4045, %v4001
    %v4047 = vadd.f32 %v4046, %v4003
    %v4048 = vadd.f32 %v4047, %v4005
    %v4049 = vadd.f32 %v4048, %v4007
    %v4050 = vadd.f32 %v4049, %v4009
    %v4051 = vadd.f32 %v4050, %v4011
    %v4052 = vadd.f32 %v4051, %v4013
    %v4053 = vadd.f32 %v4052, %v4015
    %v4054 = vadd.f32 %v4053, %v4017
    %v4055 = vadd.f32 %v4054, %v4019
    %v4056 = vadd.f32 %v4055, %v4021
    %v4057 = vadd.f32 %v4056, %v4023
    %v4058 = vadd.f32 %v4057, %v4025
    %v4059 = vadd.f32 %v4058, %v4027
    %v4060 = vrot.slane %v4059, 4
    %v4061 = vadd.f32 %v4059, %v4060
    %v4062 = vrot.slane %v4061, 2
    %v4063 = vadd.f32 %v4061, %v4062
    %v4064 = vrot.slane %v4063, 1
    %v4065 = vadd.f32 %v4063, %v4064
    %v4066 = vadd.f32 %v3966, %v3968
    %v4067 = vadd.f32 %v4066, %v3970
    %v4068 = vadd.f32 %v4067, %v3972
    %v4069 = vadd.f32 %v4068, %v3974
    %v4070 = vadd.f32 %v4069, %v3976
    %v4071 = vadd.f32 %v4070, %v3978
    %v4072 = vadd.f32 %v4071, %v3980
    %v4073 = vadd.f32 %v4072, %v3982
    %v4074 = vadd.f32 %v4073, %v3984
    %v4075 = vadd.f32 %v4074, %v3986
    %v4076 = vadd.f32 %v4075, %v3988
    %v4077 = vadd.f32 %v4076, %v3990
    %v4078 = vadd.f32 %v4077, %v3992
    %v4079 = vadd.f32 %v4078, %v3994
    %v4080 = vadd.f32 %v4079, %v3996
    %v4081 = vadd.f32 %v4080, %v3998
    %v4082 = vadd.f32 %v4081, %v4000
    %v4083 = vadd.f32 %v4082, %v4002
    %v4084 = vadd.f32 %v4083, %v4004
    %v4085 = vadd.f32 %v4084, %v4006
    %v4086 = vadd.f32 %v4085, %v4008
    %v4087 = vadd.f32 %v4086, %v4010
    %v4088 = vadd.f32 %v4087, %v4012
    %v4089 = vadd.f32 %v4088, %v4014
    %v4090 = vadd.f32 %v4089, %v4016
    %v4091 = vadd.f32 %v4090, %v4018
    %v4092 = vadd.f32 %v4091, %v4020
    %v4093 = vadd.f32 %v4092, %v4022
    %v4094 = vadd.f32 %v4093, %v4024
    %v4095 = vadd.f32 %v4094, %v4026
    %v4096 = vadd.f32 %v4095, %v4028
    %v4097 = vrot.slane %v4096, 4
    %v4098 = vadd.f32 %v4096, %v4097
    %v4099 = vrot.slane %v4098, 2
    %v4100 = vadd.f32 %v4098, %v4099
    %v4101 = vrot.slane %v4100, 1
    %v4102 = vadd.f32 %v4100, %v4101
    %v4103 = vmul.f32 %v4065, %v643
    %v4104 = vmul.f32 %v4102, %v643
    %v4105 = vld [vmem:[%s11] sm:$0x3]
    %v4106 = vadd.f32 %v4103, 1e-05
    %v4107 = vadd.f32 %v4104, 1e-05
    %v4108 = vrsqrt.pop %v4106
    %v4109 = vrsqrt.pop %v4107
    %v4112 = vcombine.low %v4108, %v4109
    %v4114 = vunpack.c.l.s4 1966171168
    %v4115 = vunpack.c.0.s8 %v4114
    %v4116 = vlaneseq
    %v4117 = vshrl.u32 %v4116, 7
    %v4118 = vsub.s32 %v4115, %v4117
    %v4119 = vrot.slane %v4112, %v4118
    %v4121 = vunpack.c.l.s4 1966171168
    %v4122 = vunpack.c.0.s8 %v4121
    %v4123 = vlaneseq
    %v4124 = vshrl.u32 %v4123, 7
    %v4125 = vsub.s32 %v4122, %v4124
    %v4126 = vrot.slane %v4119, %v4125
    %v4128 = vmul.f32 %v4105, %v4126
    %v4129 = vld [vmem:[%s12] sm:$0x3]
    %v4131 = vlaneseq
    %v4132 = vshrl.u32 %v4131, 7
    %v4133 = vsub.s32 0, %v4132
    %v4134 = vrot.slane %v4128, %v4133
    %v4135 = vlaneseq
    %v4136 = vshrl.u32 %v4135, 7
    %v4137 = vsub.s32 1, %v4136
    %v4138 = vrot.slane %v4128, %v4137
    %v4141 = vmul.f32 %v3899, %v4134
    %v4142 = vmul.f32 %v3900, %v4138
    %v4145 = vcombine.low %v4141, %v4142
    %v4147 = vunpack.c.l.s4 1966171168
    %v4148 = vunpack.c.0.s8 %v4147
    %v4149 = vlaneseq
    %v4150 = vshrl.u32 %v4149, 7
    %v4151 = vsub.s32 %v4148, %v4150
    %v4152 = vrot.slane %v4145, %v4151
    %v4154 = vunpack.c.l.s4 1966171168
    %v4155 = vunpack.c.0.s8 %v4154
    %v4156 = vlaneseq
    %v4157 = vshrl.u32 %v4156, 7
    %v4158 = vsub.s32 %v4155, %v4157
    %v4159 = vrot.slane %v4152, %v4158
    %v4161 = vsub.f32 %v4129, %v4159
    %v4162 = vmul.f32 %v3667, %v4134
    %v4163 = vmul.f32 %v3669, %v4138
    %v4164 = vmul.f32 %v3671, %v4134
    %v4165 = vmul.f32 %v3673, %v4138
    %v4166 = vmul.f32 %v3677, %v4134
    %v4167 = vmul.f32 %v3679, %v4138
    %v4168 = vmul.f32 %v3681, %v4134
    %v4169 = vmul.f32 %v3683, %v4138
    %v4170 = vmul.f32 %v3687, %v4134
    %v4171 = vmul.f32 %v3689, %v4138
    %v4172 = vmul.f32 %v3691, %v4134
    %v4173 = vmul.f32 %v3693, %v4138
    %v4174 = vmul.f32 %v3697, %v4134
    %v4175 = vmul.f32 %v3699, %v4138
    %v4176 = vmul.f32 %v3701, %v4134
    %v4177 = vmul.f32 %v3703, %v4138
    %v4178 = vmul.f32 %v3707, %v4134
    %v4179 = vmul.f32 %v3709, %v4138
    %v4180 = vmul.f32 %v3711, %v4134
    %v4181 = vmul.f32 %v3713, %v4138
    %v4182 = vmul.f32 %v3717, %v4134
    %v4183 = vmul.f32 %v3719, %v4138
    %v4184 = vmul.f32 %v3721, %v4134
    %v4185 = vmul.f32 %v3723, %v4138
    %v4186 = vmul.f32 %v3727, %v4134
    %v4187 = vmul.f32 %v3729, %v4138
    %v4188 = vmul.f32 %v3731, %v4134
    %v4189 = vmul.f32 %v3733, %v4138
    %v4190 = vmul.f32 %v3737, %v4134
    %v4191 = vmul.f32 %v3739, %v4138
    %v4192 = vmul.f32 %v3741, %v4134
    %v4193 = vmul.f32 %v3743, %v4138
    %v4194 = vmul.f32 %v3747, %v4134
    %v4195 = vmul.f32 %v3749, %v4138
    %v4196 = vmul.f32 %v3751, %v4134
    %v4197 = vmul.f32 %v3753, %v4138
    %v4198 = vmul.f32 %v3757, %v4134
    %v4199 = vmul.f32 %v3759, %v4138
    %v4200 = vmul.f32 %v3761, %v4134
    %v4201 = vmul.f32 %v3763, %v4138
    %v4202 = vmul.f32 %v3767, %v4134
    %v4203 = vmul.f32 %v3769, %v4138
    %v4204 = vmul.f32 %v3771, %v4134
    %v4205 = vmul.f32 %v3773, %v4138
    %v4206 = vmul.f32 %v3777, %v4134
    %v4207 = vmul.f32 %v3779, %v4138
    %v4208 = vmul.f32 %v3781, %v4134
    %v4209 = vmul.f32 %v3783, %v4138
    %v4210 = vmul.f32 %v3787, %v4134
    %v4211 = vmul.f32 %v3789, %v4138
    %v4212 = vmul.f32 %v3791, %v4134
    %v4213 = vmul.f32 %v3793, %v4138
    %v4214 = vmul.f32 %v3797, %v4134
    %v4215 = vmul.f32 %v3799, %v4138
    %v4216 = vmul.f32 %v3801, %v4134
    %v4217 = vmul.f32 %v3803, %v4138
    %v4218 = vmul.f32 %v3807, %v4134
    %v4219 = vmul.f32 %v3809, %v4138
    %v4220 = vmul.f32 %v3811, %v4134
    %v4221 = vmul.f32 %v3813, %v4138
    %v4222 = vmul.f32 %v3817, %v4134
    %v4223 = vmul.f32 %v3819, %v4138
    %v4224 = vmul.f32 %v3821, %v4134
    %v4225 = vmul.f32 %v3823, %v4138
    %v4227 = vlaneseq
    %v4228 = vshrl.u32 %v4227, 7
    %v4229 = vsub.s32 0, %v4228
    %v4230 = vrot.slane %v4161, %v4229
    %v4231 = vlaneseq
    %v4232 = vshrl.u32 %v4231, 7
    %v4233 = vsub.s32 1, %v4232
    %v4234 = vrot.slane %v4161, %v4233
    %v4237 = vadd.f32 %v4162, %v4230
    %v4238 = vadd.f32 %v4163, %v4234
    %v4239 = vadd.f32 %v4164, %v4230
    %v4240 = vadd.f32 %v4165, %v4234
    %v4241 = vadd.f32 %v4166, %v4230
    %v4242 = vadd.f32 %v4167, %v4234
    %v4243 = vadd.f32 %v4168, %v4230
    %v4244 = vadd.f32 %v4169, %v4234
    %v4245 = vadd.f32 %v4170, %v4230
    %v4246 = vadd.f32 %v4171, %v4234
    %v4247 = vadd.f32 %v4172, %v4230
    %v4248 = vadd.f32 %v4173, %v4234
    %v4249 = vadd.f32 %v4174, %v4230
    %v4250 = vadd.f32 %v4175, %v4234
    %v4251 = vadd.f32 %v4176, %v4230
    %v4252 = vadd.f32 %v4177, %v4234
    %v4253 = vadd.f32 %v4178, %v4230
    %v4254 = vadd.f32 %v4179, %v4234
    %v4255 = vadd.f32 %v4180, %v4230
    %v4256 = vadd.f32 %v4181, %v4234
    %v4257 = vadd.f32 %v4182, %v4230
    %v4258 = vadd.f32 %v4183, %v4234
    %v4259 = vadd.f32 %v4184, %v4230
    %v4260 = vadd.f32 %v4185, %v4234
    %v4261 = vadd.f32 %v4186, %v4230
    %v4262 = vadd.f32 %v4187, %v4234
    %v4263 = vadd.f32 %v4188, %v4230
    %v4264 = vadd.f32 %v4189, %v4234
    %v4265 = vadd.f32 %v4190, %v4230
    %v4266 = vadd.f32 %v4191, %v4234
    %v4267 = vadd.f32 %v4192, %v4230
    %v4268 = vadd.f32 %v4193, %v4234
    %v4269 = vadd.f32 %v4194, %v4230
    %v4270 = vadd.f32 %v4195, %v4234
    %v4271 = vadd.f32 %v4196, %v4230
    %v4272 = vadd.f32 %v4197, %v4234
    %v4273 = vadd.f32 %v4198, %v4230
    %v4274 = vadd.f32 %v4199, %v4234
    %v4275 = vadd.f32 %v4200, %v4230
    %v4276 = vadd.f32 %v4201, %v4234
    %v4277 = vadd.f32 %v4202, %v4230
    %v4278 = vadd.f32 %v4203, %v4234
    %v4279 = vadd.f32 %v4204, %v4230
    %v4280 = vadd.f32 %v4205, %v4234
    %v4281 = vadd.f32 %v4206, %v4230
    %v4282 = vadd.f32 %v4207, %v4234
    %v4283 = vadd.f32 %v4208, %v4230
    %v4284 = vadd.f32 %v4209, %v4234
    %v4285 = vadd.f32 %v4210, %v4230
    %v4286 = vadd.f32 %v4211, %v4234
    %v4287 = vadd.f32 %v4212, %v4230
    %v4288 = vadd.f32 %v4213, %v4234
    %v4289 = vadd.f32 %v4214, %v4230
    %v4290 = vadd.f32 %v4215, %v4234
    %v4291 = vadd.f32 %v4216, %v4230
    %v4292 = vadd.f32 %v4217, %v4234
    %v4293 = vadd.f32 %v4218, %v4230
    %v4294 = vadd.f32 %v4219, %v4234
    %v4295 = vadd.f32 %v4220, %v4230
    %v4296 = vadd.f32 %v4221, %v4234
    %v4297 = vadd.f32 %v4222, %v4230
    %v4298 = vadd.f32 %v4223, %v4234
    %v4299 = vadd.f32 %v4224, %v4230
    %v4300 = vadd.f32 %v4225, %v4234
    %vm4301 = vcmp.ge.f32.partialorder %v4237, 0.0
    %vm4302 = vcmp.ge.f32.partialorder %v4238, 0.0
    %vm4303 = vcmp.ge.f32.partialorder %v4239, 0.0
    %vm4304 = vcmp.ge.f32.partialorder %v4240, 0.0
    %vm4305 = vcmp.ge.f32.partialorder %v4241, 0.0
    %vm4306 = vcmp.ge.f32.partialorder %v4242, 0.0
    %vm4307 = vcmp.ge.f32.partialorder %v4243, 0.0
    %vm4308 = vcmp.ge.f32.partialorder %v4244, 0.0
    %vm4309 = vcmp.ge.f32.partialorder %v4245, 0.0
    %vm4310 = vcmp.ge.f32.partialorder %v4246, 0.0
    %vm4311 = vcmp.ge.f32.partialorder %v4247, 0.0
    %vm4312 = vcmp.ge.f32.partialorder %v4248, 0.0
    %vm4313 = vcmp.ge.f32.partialorder %v4249, 0.0
    %vm4314 = vcmp.ge.f32.partialorder %v4250, 0.0
    %vm4315 = vcmp.ge.f32.partialorder %v4251, 0.0
    %vm4316 = vcmp.ge.f32.partialorder %v4252, 0.0
    %vm4317 = vcmp.ge.f32.partialorder %v4253, 0.0
    %vm4318 = vcmp.ge.f32.partialorder %v4254, 0.0
    %vm4319 = vcmp.ge.f32.partialorder %v4255, 0.0
    %vm4320 = vcmp.ge.f32.partialorder %v4256, 0.0
    %vm4321 = vcmp.ge.f32.partialorder %v4257, 0.0
    %vm4322 = vcmp.ge.f32.partialorder %v4258, 0.0
    %vm4323 = vcmp.ge.f32.partialorder %v4259, 0.0
    %vm4324 = vcmp.ge.f32.partialorder %v4260, 0.0
    %vm4325 = vcmp.ge.f32.partialorder %v4261, 0.0
    %vm4326 = vcmp.ge.f32.partialorder %v4262, 0.0
    %vm4327 = vcmp.ge.f32.partialorder %v4263, 0.0
    %vm4328 = vcmp.ge.f32.partialorder %v4264, 0.0
    %vm4329 = vcmp.ge.f32.partialorder %v4265, 0.0
    %vm4330 = vcmp.ge.f32.partialorder %v4266, 0.0
    %vm4331 = vcmp.ge.f32.partialorder %v4267, 0.0
    %vm4332 = vcmp.ge.f32.partialorder %v4268, 0.0
    %vm4333 = vcmp.ge.f32.partialorder %v4269, 0.0
    %vm4334 = vcmp.ge.f32.partialorder %v4270, 0.0
    %vm4335 = vcmp.ge.f32.partialorder %v4271, 0.0
    %vm4336 = vcmp.ge.f32.partialorder %v4272, 0.0
    %vm4337 = vcmp.ge.f32.partialorder %v4273, 0.0
    %vm4338 = vcmp.ge.f32.partialorder %v4274, 0.0
    %vm4339 = vcmp.ge.f32.partialorder %v4275, 0.0
    %vm4340 = vcmp.ge.f32.partialorder %v4276, 0.0
    %vm4341 = vcmp.ge.f32.partialorder %v4277, 0.0
    %vm4342 = vcmp.ge.f32.partialorder %v4278, 0.0
    %vm4343 = vcmp.ge.f32.partialorder %v4279, 0.0
    %vm4344 = vcmp.ge.f32.partialorder %v4280, 0.0
    %vm4345 = vcmp.ge.f32.partialorder %v4281, 0.0
    %vm4346 = vcmp.ge.f32.partialorder %v4282, 0.0
    %vm4347 = vcmp.ge.f32.partialorder %v4283, 0.0
    %vm4348 = vcmp.ge.f32.partialorder %v4284, 0.0
    %vm4349 = vcmp.ge.f32.partialorder %v4285, 0.0
    %vm4350 = vcmp.ge.f32.partialorder %v4286, 0.0
    %vm4351 = vcmp.ge.f32.partialorder %v4287, 0.0
    %vm4352 = vcmp.ge.f32.partialorder %v4288, 0.0
    %vm4353 = vcmp.ge.f32.partialorder %v4289, 0.0
    %vm4354 = vcmp.ge.f32.partialorder %v4290, 0.0
    %vm4355 = vcmp.ge.f32.partialorder %v4291, 0.0
    %vm4356 = vcmp.ge.f32.partialorder %v4292, 0.0
    %vm4357 = vcmp.ge.f32.partialorder %v4293, 0.0
    %vm4358 = vcmp.ge.f32.partialorder %v4294, 0.0
    %vm4359 = vcmp.ge.f32.partialorder %v4295, 0.0
    %vm4360 = vcmp.ge.f32.partialorder %v4296, 0.0
    %vm4361 = vcmp.ge.f32.partialorder %v4297, 0.0
    %vm4362 = vcmp.ge.f32.partialorder %v4298, 0.0
    %vm4363 = vcmp.ge.f32.partialorder %v4299, 0.0
    %vm4364 = vcmp.ge.f32.partialorder %v4300, 0.0
    %v4365 = vmul.f32 %v4237, 0.01
    %v4366 = vmul.f32 %v4238, 0.01
    %v4367 = vmul.f32 %v4239, 0.01
    %v4368 = vmul.f32 %v4240, 0.01
    %v4369 = vmul.f32 %v4241, 0.01
    %v4370 = vmul.f32 %v4242, 0.01
    %v4371 = vmul.f32 %v4243, 0.01
    %v4372 = vmul.f32 %v4244, 0.01
    %v4373 = vmul.f32 %v4245, 0.01
    %v4374 = vmul.f32 %v4246, 0.01
    %v4375 = vmul.f32 %v4247, 0.01
    %v4376 = vmul.f32 %v4248, 0.01
    %v4377 = vmul.f32 %v4249, 0.01
    %v4378 = vmul.f32 %v4250, 0.01
    %v4379 = vmul.f32 %v4251, 0.01
    %v4380 = vmul.f32 %v4252, 0.01
    %v4381 = vmul.f32 %v4253, 0.01
    %v4382 = vmul.f32 %v4254, 0.01
    %v4383 = vmul.f32 %v4255, 0.01
    %v4384 = vmul.f32 %v4256, 0.01
    %v4385 = vmul.f32 %v4257, 0.01
    %v4386 = vmul.f32 %v4258, 0.01
    %v4387 = vmul.f32 %v4259, 0.01
    %v4388 = vmul.f32 %v4260, 0.01
    %v4389 = vmul.f32 %v4261, 0.01
    %v4390 = vmul.f32 %v4262, 0.01
    %v4391 = vmul.f32 %v4263, 0.01
    %v4392 = vmul.f32 %v4264, 0.01
    %v4393 = vmul.f32 %v4265, 0.01
    %v4394 = vmul.f32 %v4266, 0.01
    %v4395 = vmul.f32 %v4267, 0.01
    %v4396 = vmul.f32 %v4268, 0.01
    %v4397 = vmul.f32 %v4269, 0.01
    %v4398 = vmul.f32 %v4270, 0.01
    %v4399 = vmul.f32 %v4271, 0.01
    %v4400 = vmul.f32 %v4272, 0.01
    %v4401 = vmul.f32 %v4273, 0.01
    %v4402 = vmul.f32 %v4274, 0.01
    %v4403 = vmul.f32 %v4275, 0.01
    %v4404 = vmul.f32 %v4276, 0.01
    %v4405 = vmul.f32 %v4277, 0.01
    %v4406 = vmul.f32 %v4278, 0.01
    %v4407 = vmul.f32 %v4279, 0.01
    %v4408 = vmul.f32 %v4280, 0.01
    %v4409 = vmul.f32 %v4281, 0.01
    %v4410 = vmul.f32 %v4282, 0.01
    %v4411 = vmul.f32 %v4283, 0.01
    %v4412 = vmul.f32 %v4284, 0.01
    %v4413 = vmul.f32 %v4285, 0.01
    %v4414 = vmul.f32 %v4286, 0.01
    %v4415 = vmul.f32 %v4287, 0.01
    %v4416 = vmul.f32 %v4288, 0.01
    %v4417 = vmul.f32 %v4289, 0.01
    %v4418 = vmul.f32 %v4290, 0.01
    %v4419 = vmul.f32 %v4291, 0.01
    %v4420 = vmul.f32 %v4292, 0.01
    %v4421 = vmul.f32 %v4293, 0.01
    %v4422 = vmul.f32 %v4294, 0.01
    %v4423 = vmul.f32 %v4295, 0.01
    %v4424 = vmul.f32 %v4296, 0.01
    %v4425 = vmul.f32 %v4297, 0.01
    %v4426 = vmul.f32 %v4298, 0.01
    %v4427 = vmul.f32 %v4299, 0.01
    %v4428 = vmul.f32 %v4300, 0.01
    %v4429 = vsel %vm4301, %v4237, %v4365
    %v4430 = vsel %vm4302, %v4238, %v4366
    %v4431 = vsel %vm4303, %v4239, %v4367
    %v4432 = vsel %vm4304, %v4240, %v4368
    %v4433 = vsel %vm4305, %v4241, %v4369
    %v4434 = vsel %vm4306, %v4242, %v4370
    %v4435 = vsel %vm4307, %v4243, %v4371
    %v4436 = vsel %vm4308, %v4244, %v4372
    %v4437 = vsel %vm4309, %v4245, %v4373
    %v4438 = vsel %vm4310, %v4246, %v4374
    %v4439 = vsel %vm4311, %v4247, %v4375
    %v4440 = vsel %vm4312, %v4248, %v4376
    %v4441 = vsel %vm4313, %v4249, %v4377
    %v4442 = vsel %vm4314, %v4250, %v4378
    %v4443 = vsel %vm4315, %v4251, %v4379
    %v4444 = vsel %vm4316, %v4252, %v4380
    %v4445 = vsel %vm4317, %v4253, %v4381
    %v4446 = vsel %vm4318, %v4254, %v4382
    %v4447 = vsel %vm4319, %v4255, %v4383
    %v4448 = vsel %vm4320, %v4256, %v4384
    %v4449 = vsel %vm4321, %v4257, %v4385
    %v4450 = vsel %vm4322, %v4258, %v4386
    %v4451 = vsel %vm4323, %v4259, %v4387
    %v4452 = vsel %vm4324, %v4260, %v4388
    %v4453 = vsel %vm4325, %v4261, %v4389
    %v4454 = vsel %vm4326, %v4262, %v4390
    %v4455 = vsel %vm4327, %v4263, %v4391
    %v4456 = vsel %vm4328, %v4264, %v4392
    %v4457 = vsel %vm4329, %v4265, %v4393
    %v4458 = vsel %vm4330, %v4266, %v4394
    %v4459 = vsel %vm4331, %v4267, %v4395
    %v4460 = vsel %vm4332, %v4268, %v4396
    %v4461 = vsel %vm4333, %v4269, %v4397
    %v4462 = vsel %vm4334, %v4270, %v4398
    %v4463 = vsel %vm4335, %v4271, %v4399
    %v4464 = vsel %vm4336, %v4272, %v4400
    %v4465 = vsel %vm4337, %v4273, %v4401
    %v4466 = vsel %vm4338, %v4274, %v4402
    %v4467 = vsel %vm4339, %v4275, %v4403
    %v4468 = vsel %vm4340, %v4276, %v4404
    %v4469 = vsel %vm4341, %v4277, %v4405
    %v4470 = vsel %vm4342, %v4278, %v4406
    %v4471 = vsel %vm4343, %v4279, %v4407
    %v4472 = vsel %vm4344, %v4280, %v4408
    %v4473 = vsel %vm4345, %v4281, %v4409
    %v4474 = vsel %vm4346, %v4282, %v4410
    %v4475 = vsel %vm4347, %v4283, %v4411
    %v4476 = vsel %vm4348, %v4284, %v4412
    %v4477 = vsel %vm4349, %v4285, %v4413
    %v4478 = vsel %vm4350, %v4286, %v4414
    %v4479 = vsel %vm4351, %v4287, %v4415
    %v4480 = vsel %vm4352, %v4288, %v4416
    %v4481 = vsel %vm4353, %v4289, %v4417
    %v4482 = vsel %vm4354, %v4290, %v4418
    %v4483 = vsel %vm4355, %v4291, %v4419
    %v4484 = vsel %vm4356, %v4292, %v4420
    %v4485 = vsel %vm4357, %v4293, %v4421
    %v4486 = vsel %vm4358, %v4294, %v4422
    %v4487 = vsel %vm4359, %v4295, %v4423
    %v4488 = vsel %vm4360, %v4296, %v4424
    %v4489 = vsel %vm4361, %v4297, %v4425
    %v4490 = vsel %vm4362, %v4298, %v4426
    %v4491 = vsel %vm4363, %v4299, %v4427
    %v4492 = vsel %vm4364, %v4300, %v4428
    %s4493 = smul.u32 4, 32
    %s4494 = smul.u32 %s4493, 7
    %s4495 = sshll.u32 %s4494, 4
    %4496 = dma.done [#allocation3], %s4495
    %v4497 = vld [vmem:[#allocation2] sm:$0xff]
    %v4498 = vld [vmem:[#allocation2 + $0x8] sm:$0xff]
    %v4499 = vld [vmem:[#allocation2 + $0x10] sm:$0xff]
    %v4500 = vld [vmem:[#allocation2 + $0x18] sm:$0xff]
    %v4501 = vld [vmem:[#allocation2 + $0x20] sm:$0xff]
    %v4502 = vld [vmem:[#allocation2 + $0x28] sm:$0xff]
    %v4503 = vld [vmem:[#allocation2 + $0x30] sm:$0xff]
    %v4504 = vld [vmem:[#allocation2 + $0x38] sm:$0xff]
    %v4505 = vld [vmem:[#allocation2 + $0x40] sm:$0xff]
    %v4506 = vld [vmem:[#allocation2 + $0x48] sm:$0xff]
    %v4507 = vld [vmem:[#allocation2 + $0x50] sm:$0xff]
    %v4508 = vld [vmem:[#allocation2 + $0x58] sm:$0xff]
    %v4509 = vld [vmem:[#allocation2 + $0x60] sm:$0xff]
    %v4510 = vld [vmem:[#allocation2 + $0x68] sm:$0xff]
    %v4511 = vld [vmem:[#allocation2 + $0x70] sm:$0xff]
    %v4512 = vld [vmem:[#allocation2 + $0x78] sm:$0xff]
    %v4513 = vld [vmem:[#allocation2 + $0x80] sm:$0xff]
    %v4514 = vld [vmem:[#allocation2 + $0x88] sm:$0xff]
    %v4515 = vld [vmem:[#allocation2 + $0x90] sm:$0xff]
    %v4516 = vld [vmem:[#allocation2 + $0x98] sm:$0xff]
    %v4517 = vld [vmem:[#allocation2 + $0xa0] sm:$0xff]
    %v4518 = vld [vmem:[#allocation2 + $0xa8] sm:$0xff]
    %v4519 = vld [vmem:[#allocation2 + $0xb0] sm:$0xff]
    %v4520 = vld [vmem:[#allocation2 + $0xb8] sm:$0xff]
    %v4521 = vld [vmem:[#allocation2 + $0xc0] sm:$0xff]
    %v4522 = vld [vmem:[#allocation2 + $0xc8] sm:$0xff]
    %v4523 = vld [vmem:[#allocation2 + $0xd0] sm:$0xff]
    %v4524 = vld [vmem:[#allocation2 + $0xd8] sm:$0xff]
    %v4525 = vld [vmem:[#allocation2 + $0xe0] sm:$0xff]
    %v4526 = vld [vmem:[#allocation2 + $0xe8] sm:$0xff]
    %v4527 = vld [vmem:[#allocation2 + $0xf0] sm:$0xff]
    %v4528 = vld [vmem:[#allocation2 + $0xf8] sm:$0xff]
    %v4529 = vld [vmem:[#allocation2 + $0x100] sm:$0xff]
    %v4530 = vld [vmem:[#allocation2 + $0x108] sm:$0xff]
    %v4531 = vld [vmem:[#allocation2 + $0x110] sm:$0xff]
    %v4532 = vld [vmem:[#allocation2 + $0x118] sm:$0xff]
    %v4533 = vld [vmem:[#allocation2 + $0x120] sm:$0xff]
    %v4534 = vld [vmem:[#allocation2 + $0x128] sm:$0xff]
    %v4535 = vld [vmem:[#allocation2 + $0x130] sm:$0xff]
    %v4536 = vld [vmem:[#allocation2 + $0x138] sm:$0xff]
    %v4537 = vld [vmem:[#allocation2 + $0x140] sm:$0xff]
    %v4538 = vld [vmem:[#allocation2 + $0x148] sm:$0xff]
    %v4539 = vld [vmem:[#allocation2 + $0x150] sm:$0xff]
    %v4540 = vld [vmem:[#allocation2 + $0x158] sm:$0xff]
    %v4541 = vld [vmem:[#allocation2 + $0x160] sm:$0xff]
    %v4542 = vld [vmem:[#allocation2 + $0x168] sm:$0xff]
    %v4543 = vld [vmem:[#allocation2 + $0x170] sm:$0xff]
    %v4544 = vld [vmem:[#allocation2 + $0x178] sm:$0xff]
    %v4545 = vld [vmem:[#allocation2 + $0x180] sm:$0xff]
    %v4546 = vld [vmem:[#allocation2 + $0x188] sm:$0xff]
    %v4547 = vld [vmem:[#allocation2 + $0x190] sm:$0xff]
    %v4548 = vld [vmem:[#allocation2 + $0x198] sm:$0xff]
    %v4549 = vld [vmem:[#allocation2 + $0x1a0] sm:$0xff]
    %v4550 = vld [vmem:[#allocation2 + $0x1a8] sm:$0xff]
    %v4551 = vld [vmem:[#allocation2 + $0x1b0] sm:$0xff]
    %v4552 = vld [vmem:[#allocation2 + $0x1b8] sm:$0xff]
    %v4553 = vld [vmem:[#allocation2 + $0x1c0] sm:$0xff]
    %v4554 = vld [vmem:[#allocation2 + $0x1c8] sm:$0xff]
    %v4555 = vld [vmem:[#allocation2 + $0x1d0] sm:$0xff]
    %v4556 = vld [vmem:[#allocation2 + $0x1d8] sm:$0xff]
    %v4557 = vld [vmem:[#allocation2 + $0x1e0] sm:$0xff]
    %v4558 = vld [vmem:[#allocation2 + $0x1e8] sm:$0xff]
    %v4559 = vld [vmem:[#allocation2 + $0x1f0] sm:$0xff]
    %v4560 = vld [vmem:[#allocation2 + $0x1f8] sm:$0xff]
    %v4561 = vld [vmem:[#allocation2 + $0x200] sm:$0xff]
    %v4562 = vld [vmem:[#allocation2 + $0x208] sm:$0xff]
    %v4563 = vld [vmem:[#allocation2 + $0x210] sm:$0xff]
    %v4564 = vld [vmem:[#allocation2 + $0x218] sm:$0xff]
    %v4565 = vld [vmem:[#allocation2 + $0x220] sm:$0xff]
    %v4566 = vld [vmem:[#allocation2 + $0x228] sm:$0xff]
    %v4567 = vld [vmem:[#allocation2 + $0x230] sm:$0xff]
    %v4568 = vld [vmem:[#allocation2 + $0x238] sm:$0xff]
    %v4569 = vld [vmem:[#allocation2 + $0x240] sm:$0xff]
    %v4570 = vld [vmem:[#allocation2 + $0x248] sm:$0xff]
    %v4571 = vld [vmem:[#allocation2 + $0x250] sm:$0xff]
    %v4572 = vld [vmem:[#allocation2 + $0x258] sm:$0xff]
    %v4573 = vld [vmem:[#allocation2 + $0x260] sm:$0xff]
    %v4574 = vld [vmem:[#allocation2 + $0x268] sm:$0xff]
    %v4575 = vld [vmem:[#allocation2 + $0x270] sm:$0xff]
    %v4576 = vld [vmem:[#allocation2 + $0x278] sm:$0xff]
    %v4577 = vld [vmem:[#allocation2 + $0x280] sm:$0xff]
    %v4578 = vld [vmem:[#allocation2 + $0x288] sm:$0xff]
    %v4579 = vld [vmem:[#allocation2 + $0x290] sm:$0xff]
    %v4580 = vld [vmem:[#allocation2 + $0x298] sm:$0xff]
    %v4581 = vld [vmem:[#allocation2 + $0x2a0] sm:$0xff]
    %v4582 = vld [vmem:[#allocation2 + $0x2a8] sm:$0xff]
    %v4583 = vld [vmem:[#allocation2 + $0x2b0] sm:$0xff]
    %v4584 = vld [vmem:[#allocation2 + $0x2b8] sm:$0xff]
    %v4585 = vld [vmem:[#allocation2 + $0x2c0] sm:$0xff]
    %v4586 = vld [vmem:[#allocation2 + $0x2c8] sm:$0xff]
    %v4587 = vld [vmem:[#allocation2 + $0x2d0] sm:$0xff]
    %v4588 = vld [vmem:[#allocation2 + $0x2d8] sm:$0xff]
    %v4589 = vld [vmem:[#allocation2 + $0x2e0] sm:$0xff]
    %v4590 = vld [vmem:[#allocation2 + $0x2e8] sm:$0xff]
    %v4591 = vld [vmem:[#allocation2 + $0x2f0] sm:$0xff]
    %v4592 = vld [vmem:[#allocation2 + $0x2f8] sm:$0xff]
    %v4593 = vld [vmem:[#allocation2 + $0x300] sm:$0xff]
    %v4594 = vld [vmem:[#allocation2 + $0x308] sm:$0xff]
    %v4595 = vld [vmem:[#allocation2 + $0x310] sm:$0xff]
    %v4596 = vld [vmem:[#allocation2 + $0x318] sm:$0xff]
    %v4597 = vld [vmem:[#allocation2 + $0x320] sm:$0xff]
    %v4598 = vld [vmem:[#allocation2 + $0x328] sm:$0xff]
    %v4599 = vld [vmem:[#allocation2 + $0x330] sm:$0xff]
    %v4600 = vld [vmem:[#allocation2 + $0x338] sm:$0xff]
    %v4601 = vld [vmem:[#allocation2 + $0x340] sm:$0xff]
    %v4602 = vld [vmem:[#allocation2 + $0x348] sm:$0xff]
    %v4603 = vld [vmem:[#allocation2 + $0x350] sm:$0xff]
    %v4604 = vld [vmem:[#allocation2 + $0x358] sm:$0xff]
    %v4605 = vld [vmem:[#allocation2 + $0x360] sm:$0xff]
    %v4606 = vld [vmem:[#allocation2 + $0x368] sm:$0xff]
    %v4607 = vld [vmem:[#allocation2 + $0x370] sm:$0xff]
    %v4608 = vld [vmem:[#allocation2 + $0x378] sm:$0xff]
    %v4609 = vpack.c.bf16 %v4431, %v4429
    %v4610 = vpack.c.bf16 %v4432, %v4430
    %v4611 = vpack.c.bf16 %v4435, %v4433
    %v4612 = vpack.c.bf16 %v4436, %v4434
    %v4613 = vpack.c.bf16 %v4439, %v4437
    %v4614 = vpack.c.bf16 %v4440, %v4438
    %v4615 = vpack.c.bf16 %v4443, %v4441
    %v4616 = vpack.c.bf16 %v4444, %v4442
    %v4617 = vpack.c.bf16 %v4447, %v4445
    %v4618 = vpack.c.bf16 %v4448, %v4446
    %v4619 = vpack.c.bf16 %v4451, %v4449
    %v4620 = vpack.c.bf16 %v4452, %v4450
    %v4621 = vpack.c.bf16 %v4455, %v4453
    %v4622 = vpack.c.bf16 %v4456, %v4454
    %v4623 = vpack.c.bf16 %v4459, %v4457
    %v4624 = vpack.c.bf16 %v4460, %v4458
    %v4625 = vpack.c.bf16 %v4463, %v4461
    %v4626 = vpack.c.bf16 %v4464, %v4462
    %v4627 = vpack.c.bf16 %v4467, %v4465
    %v4628 = vpack.c.bf16 %v4468, %v4466
    %v4629 = vpack.c.bf16 %v4471, %v4469
    %v4630 = vpack.c.bf16 %v4472, %v4470
    %v4631 = vpack.c.bf16 %v4475, %v4473
    %v4632 = vpack.c.bf16 %v4476, %v4474
    %v4633 = vpack.c.bf16 %v4479, %v4477
    %v4634 = vpack.c.bf16 %v4480, %v4478
    %v4635 = vpack.c.bf16 %v4483, %v4481
    %v4636 = vpack.c.bf16 %v4484, %v4482
    %v4637 = vpack.c.bf16 %v4487, %v4485
    %v4638 = vpack.c.bf16 %v4488, %v4486
    %v4639 = vpack.c.bf16 %v4491, %v4489
    %v4640 = vpack.c.bf16 %v4492, %v4490
    %4641 = vmatprep.subr.bf16.mxu0 %v4498
    %4642 = vmatpush1.bf16.msra.mxu0 %v4497
    %4643 = vmatprep.subr.bf16.mxu0 %v4505
    %4644 = vmatpush1.bf16.msra.mxu0 %v4504
    %4645 = vmatprep.subr.bf16.mxu0 %v4512
    %4646 = vmatpush1.bf16.msra.mxu0 %v4511
    %4647 = vmatprep.subr.bf16.mxu0 %v4519
    %4648 = vmatpush1.bf16.msra.mxu0 %v4518
    %4649 = vmatprep.subr.bf16.mxu0 %v4526
    %4650 = vmatpush1.bf16.msra.mxu0 %v4525
    %4651 = vmatprep.subr.bf16.mxu0 %v4533
    %4652 = vmatpush1.bf16.msra.mxu0 %v4532
    %4653 = vmatprep.subr.bf16.mxu0 %v4540
    %4654 = vmatpush1.bf16.msra.mxu0 %v4539
    %4655 = vmatprep.subr.bf16.mxu0 %v4547
    %4656 = vmatpush1.bf16.msra.mxu0 %v4546
    %4657 = vmatprep.subr.bf16.mxu0 %v4554
    %4658 = vmatpush1.bf16.msra.mxu0 %v4553
    %4659 = vmatprep.subr.bf16.mxu0 %v4561
    %4660 = vmatpush1.bf16.msra.mxu0 %v4560
    %4661 = vmatprep.subr.bf16.mxu0 %v4568
    %4662 = vmatpush1.bf16.msra.mxu0 %v4567
    %4663 = vmatprep.subr.bf16.mxu0 %v4575
    %4664 = vmatpush1.bf16.msra.mxu0 %v4574
    %4665 = vmatprep.subr.bf16.mxu0 %v4582
    %4666 = vmatpush1.bf16.msra.mxu0 %v4581
    %4667 = vmatprep.subr.bf16.mxu0 %v4589
    %4668 = vmatpush1.bf16.msra.mxu0 %v4588
    %4669 = vmatprep.subr.bf16.mxu0 %v4596
    %4670 = vmatpush1.bf16.msra.mxu0 %v4595
    %4671 = vmatprep.subr.bf16.mxu0 %v4603
    %4672 = vmatpush1.bf16.msra.mxu0 %v4602
    %4673 = vmatprep.mubr.bf16.mxu0 %v4610
    %4674 = vmatmul.mubr.bf16.gmra.mrb[0].mxu0 %v4609
    %v4675 = vpop.f32.mrb[0].mxu0
    %v4676 = vadd.f32 0.0, %v4675
    %v4677 = vpop.f32.mrb[0].mxu0
    %v4678 = vadd.f32 0.0, %v4677
    %v4679 = vpop.f32.mrb[0].mxu0
    %v4680 = vadd.f32 0.0, %v4679
    %v4681 = vpop.f32.mrb[0].mxu0
    %v4682 = vadd.f32 0.0, %v4681
    %4683 = vmatprep.mubr.bf16.mxu0 %v4612
    %4684 = vmatmul.mubr.bf16.gmra.mrb[0].mxu0 %v4611
    %v4685 = vpop.f32.mrb[0].mxu0
    %v4686 = vadd.f32 0.0, %v4685
    %v4687 = vpop.f32.mrb[0].mxu0
    %v4688 = vadd.f32 0.0, %v4687
    %v4689 = vpop.f32.mrb[0].mxu0
    %v4690 = vadd.f32 0.0, %v4689
    %v4691 = vpop.f32.mrb[0].mxu0
    %v4692 = vadd.f32 0.0, %v4691
    %4693 = vmatprep.mubr.bf16.mxu0 %v4614
    %4694 = vmatmul.mubr.bf16.gmra.mrb[0].mxu0 %v4613
    %v4695 = vpop.f32.mrb[0].mxu0
    %v4696 = vadd.f32 0.0, %v4695
    %v4697 = vpop.f32.mrb[0].mxu0
    %v4698 = vadd.f32 0.0, %v4697
    %v4699 = vpop.f32.mrb[0].mxu0
    %v4700 = vadd.f32 0.0, %v4699
    %v4701 = vpop.f32.mrb[0].mxu0
    %v4702 = vadd.f32 0.0, %v4701
    %4703 = vmatprep.mubr.bf16.mxu0 %v4616
    %4704 = vmatmul.mubr.bf16.gmra.mrb[0].mxu0 %v4615
    %v4705 = vpop.f32.mrb[0].mxu0
    %v4706 = vadd.f32 0.0, %v4705
    %v4707 = vpop.f32.mrb[0].mxu0
    %v4708 = vadd.f32 0.0, %v4707
    %v4709 = vpop.f32.mrb[0].mxu0
    %v4710 = vadd.f32 0.0, %v4709
    %v4711 = vpop.f32.mrb[0].mxu0
    %v4712 = vadd.f32 0.0, %v4711
    %4713 = vmatprep.mubr.bf16.mxu0 %v4618
    %4714 = vmatmul.mubr.bf16.gmra.mrb[0].mxu0 %v4617
    %v4715 = vpop.f32.mrb[0].mxu0
    %v4716 = vadd.f32 0.0, %v4715
    %v4717 = vpop.f32.mrb[0].mxu0
    %v4718 = vadd.f32 0.0, %v4717
    %v4719 = vpop.f32.mrb[0].mxu0
    %v4720 = vadd.f32 0.0, %v4719
    %v4721 = vpop.f32.mrb[0].mxu0
    %v4722 = vadd.f32 0.0, %v4721
    %4723 = vmatprep.mubr.bf16.mxu0 %v4620
    %4724 = vmatmul.mubr.bf16.gmra.mrb[0].mxu0 %v4619
    %v4725 = vpop.f32.mrb[0].mxu0
    %v4726 = vadd.f32 0.0, %v4725
    %v4727 = vpop.f32.mrb[0].mxu0
    %v4728 = vadd.f32 0.0, %v4727
    %v4729 = vpop.f32.mrb[0].mxu0
    %v4730 = vadd.f32 0.0, %v4729
    %v4731 = vpop.f32.mrb[0].mxu0
    %v4732 = vadd.f32 0.0, %v4731
    %4733 = vmatprep.mubr.bf16.mxu0 %v4622
    %4734 = vmatmul.mubr.bf16.gmra.mrb[0].mxu0 %v4621
    %v4735 = vpop.f32.mrb[0].mxu0
    %v4736 = vadd.f32 0.0, %v4735
    %v4737 = vpop.f32.mrb[0].mxu0
    %v4738 = vadd.f32 0.0, %v4737
    %v4739 = vpop.f32.mrb[0].mxu0
    %v4740 = vadd.f32 0.0, %v4739
    %v4741 = vpop.f32.mrb[0].mxu0
    %v4742 = vadd.f32 0.0, %v4741
    %4743 = vmatprep.mubr.bf16.mxu0 %v4624
    %4744 = vmatmul.mubr.bf16.gmra.mrb[0].mxu0 %v4623
    %v4745 = vpop.f32.mrb[0].mxu0
    %v4746 = vadd.f32 0.0, %v4745
    %v4747 = vpop.f32.mrb[0].mxu0
    %v4748 = vadd.f32 0.0, %v4747
    %v4749 = vpop.f32.mrb[0].mxu0
    %v4750 = vadd.f32 0.0, %v4749
    %v4751 = vpop.f32.mrb[0].mxu0
    %v4752 = vadd.f32 0.0, %v4751
    %4753 = vmatprep.mubr.bf16.mxu0 %v4626
    %4754 = vmatmul.mubr.bf16.gmra.mrb[0].mxu0 %v4625
    %v4755 = vpop.f32.mrb[0].mxu0
    %v4756 = vadd.f32 0.0, %v4755
    %v4757 = vpop.f32.mrb[0].mxu0
    %v4758 = vadd.f32 0.0, %v4757
    %v4759 = vpop.f32.mrb[0].mxu0
    %v4760 = vadd.f32 0.0, %v4759
    %v4761 = vpop.f32.mrb[0].mxu0
    %v4762 = vadd.f32 0.0, %v4761
    %4763 = vmatprep.mubr.bf16.mxu0 %v4628
    %4764 = vmatmul.mubr.bf16.gmra.mrb[0].mxu0 %v4627
    %v4765 = vpop.f32.mrb[0].mxu0
    %v4766 = vadd.f32 0.0, %v4765
    %v4767 = vpop.f32.mrb[0].mxu0
    %v4768 = vadd.f32 0.0, %v4767
    %v4769 = vpop.f32.mrb[0].mxu0
    %v4770 = vadd.f32 0.0, %v4769
    %v4771 = vpop.f32.mrb[0].mxu0
    %v4772 = vadd.f32 0.0, %v4771
    %4773 = vmatprep.mubr.bf16.mxu0 %v4630
    %4774 = vmatmul.mubr.bf16.gmra.mrb[0].mxu0 %v4629
    %v4775 = vpop.f32.mrb[0].mxu0
    %v4776 = vadd.f32 0.0, %v4775
    %v4777 = vpop.f32.mrb[0].mxu0
    %v4778 = vadd.f32 0.0, %v4777
    %v4779 = vpop.f32.mrb[0].mxu0
    %v4780 = vadd.f32 0.0, %v4779
    %v4781 = vpop.f32.mrb[0].mxu0
    %v4782 = vadd.f32 0.0, %v4781
    %4783 = vmatprep.mubr.bf16.mxu0 %v4632
    %4784 = vmatmul.mubr.bf16.gmra.mrb[0].mxu0 %v4631
    %v4785 = vpop.f32.mrb[0].mxu0
    %v4786 = vadd.f32 0.0, %v4785
    %v4787 = vpop.f32.mrb[0].mxu0
    %v4788 = vadd.f32 0.0, %v4787
    %v4789 = vpop.f32.mrb[0].mxu0
    %v4790 = vadd.f32 0.0, %v4789
    %v4791 = vpop.f32.mrb[0].mxu0
    %v4792 = vadd.f32 0.0, %v4791
    %4793 = vmatprep.mubr.bf16.mxu0 %v4634
    %4794 = vmatmul.mubr.bf16.gmra.mrb[0].mxu0 %v4633
    %v4795 = vpop.f32.mrb[0].mxu0
    %v4796 = vadd.f32 0.0, %v4795
    %v4797 = vpop.f32.mrb[0].mxu0
    %v4798 = vadd.f32 0.0, %v4797
    %v4799 = vpop.f32.mrb[0].mxu0
    %v4800 = vadd.f32 0.0, %v4799
    %v4801 = vpop.f32.mrb[0].mxu0
    %v4802 = vadd.f32 0.0, %v4801
    %4803 = vmatprep.mubr.bf16.mxu0 %v4636
    %4804 = vmatmul.mubr.bf16.gmra.mrb[0].mxu0 %v4635
    %v4805 = vpop.f32.mrb[0].mxu0
    %v4806 = vadd.f32 0.0, %v4805
    %v4807 = vpop.f32.mrb[0].mxu0
    %v4808 = vadd.f32 0.0, %v4807
    %v4809 = vpop.f32.mrb[0].mxu0
    %v4810 = vadd.f32 0.0, %v4809
    %v4811 = vpop.f32.mrb[0].mxu0
    %v4812 = vadd.f32 0.0, %v4811
    %4813 = vmatprep.mubr.bf16.mxu0 %v4638
    %4814 = vmatmul.mubr.bf16.gmra.mrb[0].mxu0 %v4637
    %v4815 = vpop.f32.mrb[0].mxu0
    %v4816 = vadd.f32 0.0, %v4815
    %v4817 = vpop.f32.mrb[0].mxu0
    %v4818 = vadd.f32 0.0, %v4817
    %v4819 = vpop.f32.mrb[0].mxu0
    %v4820 = vadd.f32 0.0, %v4819
    %v4821 = vpop.f32.mrb[0].mxu0
    %v4822 = vadd.f32 0.0, %v4821
    %4823 = vmatprep.mubr.bf16.mxu0 %v4640
    %4824 = vmatmul.mubr.bf16.gmra.mrb[0].mxu0 %v4639
    %v4825 = vpop.f32.mrb[0].mxu0
    %v4826 = vadd.f32 0.0, %v4825
    %v4827 = vpop.f32.mrb[0].mxu0
    %v4828 = vadd.f32 0.0, %v4827
    %v4829 = vpop.f32.mrb[0].mxu0
    %v4830 = vadd.f32 0.0, %v4829
    %v4831 = vpop.f32.mrb[0].mxu0
    %v4832 = vadd.f32 0.0, %v4831
    %4833 = vdwg.mxu0
    %4834 = vmatprep.subr.bf16.mxu0 %v4500
    %4835 = vmatpush1.bf16.msra.mxu0 %v4499
    %4836 = vmatprep.subr.bf16.mxu0 %v4507
    %4837 = vmatpush1.bf16.msra.mxu0 %v4506
    %4838 = vmatprep.subr.bf16.mxu0 %v4514
    %4839 = vmatpush1.bf16.msra.mxu0 %v4513
    %4840 = vmatprep.subr.bf16.mxu0 %v4521
    %4841 = vmatpush1.bf16.msra.mxu0 %v4520
    %4842 = vmatprep.subr.bf16.mxu0 %v4528
    %4843 = vmatpush1.bf16.msra.mxu0 %v4527
    %4844 = vmatprep.subr.bf16.mxu0 %v4535
    %4845 = vmatpush1.bf16.msra.mxu0 %v4534
    %4846 = vmatprep.subr.bf16.mxu0 %v4542
    %4847 = vmatpush1.bf16.msra.mxu0 %v4541
    %4848 = vmatprep.subr.bf16.mxu0 %v4549
    %4849 = vmatpush1.bf16.msra.mxu0 %v4548
    %4850 = vmatprep.subr.bf16.mxu0 %v4556
    %4851 = vmatpush1.bf16.msra.mxu0 %v4555
    %4852 = vmatprep.subr.bf16.mxu0 %v4563
    %4853 = vmatpush1.bf16.msra.mxu0 %v4562
    %4854 = vmatprep.subr.bf16.mxu0 %v4570
    %4855 = vmatpush1.bf16.msra.mxu0 %v4569
    %4856 = vmatprep.subr.bf16.mxu0 %v4577
    %4857 = vmatpush1.bf16.msra.mxu0 %v4576
    %4858 = vmatprep.subr.bf16.mxu0 %v4584
    %4859 = vmatpush1.bf16.msra.mxu0 %v4583
    %4860 = vmatprep.subr.bf16.mxu0 %v4591
    %4861 = vmatpush1.bf16.msra.mxu0 %v4590
    %4862 = vmatprep.subr.bf16.mxu0 %v4598
    %4863 = vmatpush1.bf16.msra.mxu0 %v4597
    %4864 = vmatprep.subr.bf16.mxu0 %v4605
    %4865 = vmatpush1.bf16.msra.mxu0 %v4604
    %4866 = vmatprep.mubr.bf16.mxu0 %v4610
    %4867 = vmatmul.mubr.bf16.gmra.mrb[0].mxu0 %v4609
    %v4868 = vpop.f32.mrb[0].mxu0
    %v4869 = vadd.f32 0.0, %v4868
    %v4870 = vpop.f32.mrb[0].mxu0
    %v4871 = vadd.f32 0.0, %v4870
    %v4872 = vpop.f32.mrb[0].mxu0
    %v4873 = vadd.f32 0.0, %v4872
    %v4874 = vpop.f32.mrb[0].mxu0
    %v4875 = vadd.f32 0.0, %v4874
    %4876 = vmatprep.mubr.bf16.mxu0 %v4612
    %4877 = vmatmul.mubr.bf16.gmra.mrb[0].mxu0 %v4611
    %v4878 = vpop.f32.mrb[0].mxu0
    %v4879 = vadd.f32 0.0, %v4878
    %v4880 = vpop.f32.mrb[0].mxu0
    %v4881 = vadd.f32 0.0, %v4880
    %v4882 = vpop.f32.mrb[0].mxu0
    %v4883 = vadd.f32 0.0, %v4882
    %v4884 = vpop.f32.mrb[0].mxu0
    %v4885 = vadd.f32 0.0, %v4884
    %4886 = vmatprep.mubr.bf16.mxu0 %v4614
    %4887 = vmatmul.mubr.bf16.gmra.mrb[0].mxu0 %v4613
    %v4888 = vpop.f32.mrb[0].mxu0
    %v4889 = vadd.f32 0.0, %v4888
    %v4890 = vpop.f32.mrb[0].mxu0
    %v4891 = vadd.f32 0.0, %v4890
    %v4892 = vpop.f32.mrb[0].mxu0
    %v4893 = vadd.f32 0.0, %v4892
    %v4894 = vpop.f32.mrb[0].mxu0
    %v4895 = vadd.f32 0.0, %v4894
    %4896 = vmatprep.mubr.bf16.mxu0 %v4616
    %4897 = vmatmul.mubr.bf16.gmra.mrb[0].mxu0 %v4615
    %v4898 = vpop.f32.mrb[0].mxu0
    %v4899 = vadd.f32 0.0, %v4898
    %v4900 = vpop.f32.mrb[0].mxu0
    %v4901 = vadd.f32 0.0, %v4900
    %v4902 = vpop.f32.mrb[0].mxu0
    %v4903 = vadd.f32 0.0, %v4902
    %v4904 = vpop.f32.mrb[0].mxu0
    %v4905 = vadd.f32 0.0, %v4904
    %4906 = vmatprep.mubr.bf16.mxu0 %v4618
    %4907 = vmatmul.mubr.bf16.gmra.mrb[0].mxu0 %v4617
    %v4908 = vpop.f32.mrb[0].mxu0
    %v4909 = vadd.f32 0.0, %v4908
    %v4910 = vpop.f32.mrb[0].mxu0
    %v4911 = vadd.f32 0.0, %v4910
    %v4912 = vpop.f32.mrb[0].mxu0
    %v4913 = vadd.f32 0.0, %v4912
    %v4914 = vpop.f32.mrb[0].mxu0
    %v4915 = vadd.f32 0.0, %v4914
    %4916 = vmatprep.mubr.bf16.mxu0 %v4620
    %4917 = vmatmul.mubr.bf16.gmra.mrb[0].mxu0 %v4619
    %v4918 = vpop.f32.mrb[0].mxu0
    %v4919 = vadd.f32 0.0, %v4918
    %v4920 = vpop.f32.mrb[0].mxu0
    %v4921 = vadd.f32 0.0, %v4920
    %v4922 = vpop.f32.mrb[0].mxu0
    %v4923 = vadd.f32 0.0, %v4922
    %v4924 = vpop.f32.mrb[0].mxu0
    %v4925 = vadd.f32 0.0, %v4924
    %4926 = vmatprep.mubr.bf16.mxu0 %v4622
    %4927 = vmatmul.mubr.bf16.gmra.mrb[0].mxu0 %v4621
    %v4928 = vpop.f32.mrb[0].mxu0
    %v4929 = vadd.f32 0.0, %v4928
    %v4930 = vpop.f32.mrb[0].mxu0
    %v4931 = vadd.f32 0.0, %v4930
    %v4932 = vpop.f32.mrb[0].mxu0
    %v4933 = vadd.f32 0.0, %v4932
    %v4934 = vpop.f32.mrb[0].mxu0
    %v4935 = vadd.f32 0.0, %v4934
    %4936 = vmatprep.mubr.bf16.mxu0 %v4624
    %4937 = vmatmul.mubr.bf16.gmra.mrb[0].mxu0 %v4623
    %v4938 = vpop.f32.mrb[0].mxu0
    %v4939 = vadd.f32 0.0, %v4938
    %v4940 = vpop.f32.mrb[0].mxu0
    %v4941 = vadd.f32 0.0, %v4940
    %v4942 = vpop.f32.mrb[0].mxu0
    %v4943 = vadd.f32 0.0, %v4942
    %v4944 = vpop.f32.mrb[0].mxu0
    %v4945 = vadd.f32 0.0, %v4944
    %4946 = vmatprep.mubr.bf16.mxu0 %v4626
    %4947 = vmatmul.mubr.bf16.gmra.mrb[0].mxu0 %v4625
    %v4948 = vpop.f32.mrb[0].mxu0
    %v4949 = vadd.f32 0.0, %v4948
    %v4950 = vpop.f32.mrb[0].mxu0
    %v4951 = vadd.f32 0.0, %v4950
    %v4952 = vpop.f32.mrb[0].mxu0
    %v4953 = vadd.f32 0.0, %v4952
    %v4954 = vpop.f32.mrb[0].mxu0
    %v4955 = vadd.f32 0.0, %v4954
    %4956 = vmatprep.mubr.bf16.mxu0 %v4628
    %4957 = vmatmul.mubr.bf16.gmra.mrb[0].mxu0 %v4627
    %v4958 = vpop.f32.mrb[0].mxu0
    %v4959 = vadd.f32 0.0, %v4958
    %v4960 = vpop.f32.mrb[0].mxu0
    %v4961 = vadd.f32 0.0, %v4960
    %v4962 = vpop.f32.mrb[0].mxu0
    %v4963 = vadd.f32 0.0, %v4962
    %v4964 = vpop.f32.mrb[0].mxu0
    %v4965 = vadd.f32 0.0, %v4964
    %4966 = vmatprep.mubr.bf16.mxu0 %v4630
    %4967 = vmatmul.mubr.bf16.gmra.mrb[0].mxu0 %v4629
    %v4968 = vpop.f32.mrb[0].mxu0
    %v4969 = vadd.f32 0.0, %v4968
    %v4970 = vpop.f32.mrb[0].mxu0
    %v4971 = vadd.f32 0.0, %v4970
    %v4972 = vpop.f32.mrb[0].mxu0
    %v4973 = vadd.f32 0.0, %v4972
    %v4974 = vpop.f32.mrb[0].mxu0
    %v4975 = vadd.f32 0.0, %v4974
    %4976 = vmatprep.mubr.bf16.mxu0 %v4632
    %4977 = vmatmul.mubr.bf16.gmra.mrb[0].mxu0 %v4631
    %v4978 = vpop.f32.mrb[0].mxu0
    %v4979 = vadd.f32 0.0, %v4978
    %v4980 = vpop.f32.mrb[0].mxu0
    %v4981 = vadd.f32 0.0, %v4980
    %v4982 = vpop.f32.mrb[0].mxu0
    %v4983 = vadd.f32 0.0, %v4982
    %v4984 = vpop.f32.mrb[0].mxu0
    %v4985 = vadd.f32 0.0, %v4984
    %4986 = vmatprep.mubr.bf16.mxu0 %v4634
    %4987 = vmatmul.mubr.bf16.gmra.mrb[0].mxu0 %v4633
    %v4988 = vpop.f32.mrb[0].mxu0
    %v4989 = vadd.f32 0.0, %v4988
    %v4990 = vpop.f32.mrb[0].mxu0
    %v4991 = vadd.f32 0.0, %v4990
    %v4992 = vpop.f32.mrb[0].mxu0
    %v4993 = vadd.f32 0.0, %v4992
    %v4994 = vpop.f32.mrb[0].mxu0
    %v4995 = vadd.f32 0.0, %v4994
    %4996 = vmatprep.mubr.bf16.mxu0 %v4636
    %4997 = vmatmul.mubr.bf16.gmra.mrb[0].mxu0 %v4635
    %v4998 = vpop.f32.mrb[0].mxu0
    %v4999 = vadd.f32 0.0, %v4998
    %v5000 = vpop.f32.mrb[0].mxu0
    %v5001 = vadd.f32 0.0, %v5000
    %v5002 = vpop.f32.mrb[0].mxu0
    %v5003 = vadd.f32 0.0, %v5002
    %v5004 = vpop.f32.mrb[0].mxu0
    %v5005 = vadd.f32 0.0, %v5004
    %5006 = vmatprep.mubr.bf16.mxu0 %v4638
    %5007 = vmatmul.mubr.bf16.gmra.mrb[0].mxu0 %v4637
    %v5008 = vpop.f32.mrb[0].mxu0
    %v5009 = vadd.f32 0.0, %v5008
    %v5010 = vpop.f32.mrb[0].mxu0
    %v5011 = vadd.f32 0.0, %v5010
    %v5012 = vpop.f32.mrb[0].mxu0
    %v5013 = vadd.f32 0.0, %v5012
    %v5014 = vpop.f32.mrb[0].mxu0
    %v5015 = vadd.f32 0.0, %v5014
    %5016 = vmatprep.mubr.bf16.mxu0 %v4640
    %5017 = vmatmul.mubr.bf16.gmra.mrb[0].mxu0 %v4639
    %v5018 = vpop.f32.mrb[0].mxu0
    %v5019 = vadd.f32 0.0, %v5018
    %v5020 = vpop.f32.mrb[0].mxu0
    %v5021 = vadd.f32 0.0, %v5020
    %v5022 = vpop.f32.mrb[0].mxu0
    %v5023 = vadd.f32 0.0, %v5022
    %v5024 = vpop.f32.mrb[0].mxu0
    %v5025 = vadd.f32 0.0, %v5024
    %5026 = vdwg.mxu0
    %5027 = vmatprep.subr.bf16.mxu0 %v4502
    %5028 = vmatpush1.bf16.msra.mxu0 %v4501
    %5029 = vmatprep.subr.bf16.mxu0 %v4509
    %5030 = vmatpush1.bf16.msra.mxu0 %v4508
    %5031 = vmatprep.subr.bf16.mxu0 %v4516
    %5032 = vmatpush1.bf16.msra.mxu0 %v4515
    %5033 = vmatprep.subr.bf16.mxu0 %v4523
    %5034 = vmatpush1.bf16.msra.mxu0 %v4522
    %5035 = vmatprep.subr.bf16.mxu0 %v4530
    %5036 = vmatpush1.bf16.msra.mxu0 %v4529
    %5037 = vmatprep.subr.bf16.mxu0 %v4537
    %5038 = vmatpush1.bf16.msra.mxu0 %v4536
    %5039 = vmatprep.subr.bf16.mxu0 %v4544
    %5040 = vmatpush1.bf16.msra.mxu0 %v4543
    %5041 = vmatprep.subr.bf16.mxu0 %v4551
    %5042 = vmatpush1.bf16.msra.mxu0 %v4550
    %5043 = vmatprep.subr.bf16.mxu0 %v4558
    %5044 = vmatpush1.bf16.msra.mxu0 %v4557
    %5045 = vmatprep.subr.bf16.mxu0 %v4565
    %5046 = vmatpush1.bf16.msra.mxu0 %v4564
    %5047 = vmatprep.subr.bf16.mxu0 %v4572
    %5048 = vmatpush1.bf16.msra.mxu0 %v4571
    %5049 = vmatprep.subr.bf16.mxu0 %v4579
    %5050 = vmatpush1.bf16.msra.mxu0 %v4578
    %5051 = vmatprep.subr.bf16.mxu0 %v4586
    %5052 = vmatpush1.bf16.msra.mxu0 %v4585
    %5053 = vmatprep.subr.bf16.mxu0 %v4593
    %5054 = vmatpush1.bf16.msra.mxu0 %v4592
    %5055 = vmatprep.subr.bf16.mxu0 %v4600
    %5056 = vmatpush1.bf16.msra.mxu0 %v4599
    %5057 = vmatprep.subr.bf16.mxu0 %v4607
    %5058 = vmatpush1.bf16.msra.mxu0 %v4606
    %5059 = vmatprep.mubr.bf16.mxu0 %v4610
    %5060 = vmatmul.mubr.bf16.gmra.mrb[0].mxu0 %v4609
    %v5061 = vpop.f32.mrb[0].mxu0
    %v5062 = vadd.f32 0.0, %v5061
    %v5063 = vpop.f32.mrb[0].mxu0
    %v5064 = vadd.f32 0.0, %v5063
    %v5065 = vpop.f32.mrb[0].mxu0
    %v5066 = vadd.f32 0.0, %v5065
    %v5067 = vpop.f32.mrb[0].mxu0
    %v5068 = vadd.f32 0.0, %v5067
    %5069 = vmatprep.mubr.bf16.mxu0 %v4612
    %5070 = vmatmul.mubr.bf16.gmra.mrb[0].mxu0 %v4611
    %v5071 = vpop.f32.mrb[0].mxu0
    %v5072 = vadd.f32 0.0, %v5071
    %v5073 = vpop.f32.mrb[0].mxu0
    %v5074 = vadd.f32 0.0, %v5073
    %v5075 = vpop.f32.mrb[0].mxu0
    %v5076 = vadd.f32 0.0, %v5075
    %v5077 = vpop.f32.mrb[0].mxu0
    %v5078 = vadd.f32 0.0, %v5077
    %5079 = vmatprep.mubr.bf16.mxu0 %v4614
    %5080 = vmatmul.mubr.bf16.gmra.mrb[0].mxu0 %v4613
    %v5081 = vpop.f32.mrb[0].mxu0
    %v5082 = vadd.f32 0.0, %v5081
    %v5083 = vpop.f32.mrb[0].mxu0
    %v5084 = vadd.f32 0.0, %v5083
    %v5085 = vpop.f32.mrb[0].mxu0
    %v5086 = vadd.f32 0.0, %v5085
    %v5087 = vpop.f32.mrb[0].mxu0
    %v5088 = vadd.f32 0.0, %v5087
    %5089 = vmatprep.mubr.bf16.mxu0 %v4616
    %5090 = vmatmul.mubr.bf16.gmra.mrb[0].mxu0 %v4615
    %v5091 = vpop.f32.mrb[0].mxu0
    %v5092 = vadd.f32 0.0, %v5091
    %v5093 = vpop.f32.mrb[0].mxu0
    %v5094 = vadd.f32 0.0, %v5093
    %v5095 = vpop.f32.mrb[0].mxu0
    %v5096 = vadd.f32 0.0, %v5095
    %v5097 = vpop.f32.mrb[0].mxu0
    %v5098 = vadd.f32 0.0, %v5097
    %5099 = vmatprep.mubr.bf16.mxu0 %v4618
    %5100 = vmatmul.mubr.bf16.gmra.mrb[0].mxu0 %v4617
    %v5101 = vpop.f32.mrb[0].mxu0
    %v5102 = vadd.f32 0.0, %v5101
    %v5103 = vpop.f32.mrb[0].mxu0
    %v5104 = vadd.f32 0.0, %v5103
    %v5105 = vpop.f32.mrb[0].mxu0
    %v5106 = vadd.f32 0.0, %v5105
    %v5107 = vpop.f32.mrb[0].mxu0
    %v5108 = vadd.f32 0.0, %v5107
    %5109 = vmatprep.mubr.bf16.mxu0 %v4620
    %5110 = vmatmul.mubr.bf16.gmra.mrb[0].mxu0 %v4619
    %v5111 = vpop.f32.mrb[0].mxu0
    %v5112 = vadd.f32 0.0, %v5111
    %v5113 = vpop.f32.mrb[0].mxu0
    %v5114 = vadd.f32 0.0, %v5113
    %v5115 = vpop.f32.mrb[0].mxu0
    %v5116 = vadd.f32 0.0, %v5115
    %v5117 = vpop.f32.mrb[0].mxu0
    %v5118 = vadd.f32 0.0, %v5117
    %5119 = vmatprep.mubr.bf16.mxu0 %v4622
    %5120 = vmatmul.mubr.bf16.gmra.mrb[0].mxu0 %v4621
    %v5121 = vpop.f32.mrb[0].mxu0
    %v5122 = vadd.f32 0.0, %v5121
    %v5123 = vpop.f32.mrb[0].mxu0
    %v5124 = vadd.f32 0.0, %v5123
    %v5125 = vpop.f32.mrb[0].mxu0
    %v5126 = vadd.f32 0.0, %v5125
    %v5127 = vpop.f32.mrb[0].mxu0
    %v5128 = vadd.f32 0.0, %v5127
    %5129 = vmatprep.mubr.bf16.mxu0 %v4624
    %5130 = vmatmul.mubr.bf16.gmra.mrb[0].mxu0 %v4623
    %v5131 = vpop.f32.mrb[0].mxu0
    %v5132 = vadd.f32 0.0, %v5131
    %v5133 = vpop.f32.mrb[0].mxu0
    %v5134 = vadd.f32 0.0, %v5133
    %v5135 = vpop.f32.mrb[0].mxu0
    %v5136 = vadd.f32 0.0, %v5135
    %v5137 = vpop.f32.mrb[0].mxu0
    %v5138 = vadd.f32 0.0, %v5137
    %5139 = vmatprep.mubr.bf16.mxu0 %v4626
    %5140 = vmatmul.mubr.bf16.gmra.mrb[0].mxu0 %v4625
    %v5141 = vpop.f32.mrb[0].mxu0
    %v5142 = vadd.f32 0.0, %v5141
    %v5143 = vpop.f32.mrb[0].mxu0
    %v5144 = vadd.f32 0.0, %v5143
    %v5145 = vpop.f32.mrb[0].mxu0
    %v5146 = vadd.f32 0.0, %v5145
    %v5147 = vpop.f32.mrb[0].mxu0
    %v5148 = vadd.f32 0.0, %v5147
    %5149 = vmatprep.mubr.bf16.mxu0 %v4628
    %5150 = vmatmul.mubr.bf16.gmra.mrb[0].mxu0 %v4627
    %v5151 = vpop.f32.mrb[0].mxu0
    %v5152 = vadd.f32 0.0, %v5151
    %v5153 = vpop.f32.mrb[0].mxu0
    %v5154 = vadd.f32 0.0, %v5153
    %v5155 = vpop.f32.mrb[0].mxu0
    %v5156 = vadd.f32 0.0, %v5155
    %v5157 = vpop.f32.mrb[0].mxu0
    %v5158 = vadd.f32 0.0, %v5157
    %5159 = vmatprep.mubr.bf16.mxu0 %v4630
    %5160 = vmatmul.mubr.bf16.gmra.mrb[0].mxu0 %v4629
    %v5161 = vpop.f32.mrb[0].mxu0
    %v5162 = vadd.f32 0.0, %v5161
    %v5163 = vpop.f32.mrb[0].mxu0
    %v5164 = vadd.f32 0.0, %v5163
    %v5165 = vpop.f32.mrb[0].mxu0
    %v5166 = vadd.f32 0.0, %v5165
    %v5167 = vpop.f32.mrb[0].mxu0
    %v5168 = vadd.f32 0.0, %v5167
    %5169 = vmatprep.mubr.bf16.mxu0 %v4632
    %5170 = vmatmul.mubr.bf16.gmra.mrb[0].mxu0 %v4631
    %v5171 = vpop.f32.mrb[0].mxu0
    %v5172 = vadd.f32 0.0, %v5171
    %v5173 = vpop.f32.mrb[0].mxu0
    %v5174 = vadd.f32 0.0, %v5173
    %v5175 = vpop.f32.mrb[0].mxu0
    %v5176 = vadd.f32 0.0, %v5175
    %v5177 = vpop.f32.mrb[0].mxu0
    %v5178 = vadd.f32 0.0, %v5177
    %5179 = vmatprep.mubr.bf16.mxu0 %v4634
    %5180 = vmatmul.mubr.bf16.gmra.mrb[0].mxu0 %v4633
    %v5181 = vpop.f32.mrb[0].mxu0
    %v5182 = vadd.f32 0.0, %v5181
    %v5183 = vpop.f32.mrb[0].mxu0
    %v5184 = vadd.f32 0.0, %v5183
    %v5185 = vpop.f32.mrb[0].mxu0
    %v5186 = vadd.f32 0.0, %v5185
    %v5187 = vpop.f32.mrb[0].mxu0
    %v5188 = vadd.f32 0.0, %v5187
    %5189 = vmatprep.mubr.bf16.mxu0 %v4636
    %5190 = vmatmul.mubr.bf16.gmra.mrb[0].mxu0 %v4635
    %v5191 = vpop.f32.mrb[0].mxu0
    %v5192 = vadd.f32 0.0, %v5191
    %v5193 = vpop.f32.mrb[0].mxu0
    %v5194 = vadd.f32 0.0, %v5193
    %v5195 = vpop.f32.mrb[0].mxu0
    %v5196 = vadd.f32 0.0, %v5195
    %v5197 = vpop.f32.mrb[0].mxu0
    %v5198 = vadd.f32 0.0, %v5197
    %5199 = vmatprep.mubr.bf16.mxu0 %v4638
    %5200 = vmatmul.mubr.bf16.gmra.mrb[0].mxu0 %v4637
    %v5201 = vpop.f32.mrb[0].mxu0
    %v5202 = vadd.f32 0.0, %v5201
    %v5203 = vpop.f32.mrb[0].mxu0
    %v5204 = vadd.f32 0.0, %v5203
    %v5205 = vpop.f32.mrb[0].mxu0
    %v5206 = vadd.f32 0.0, %v5205
    %v5207 = vpop.f32.mrb[0].mxu0
    %v5208 = vadd.f32 0.0, %v5207
    %5209 = vmatprep.mubr.bf16.mxu0 %v4640
    %5210 = vmatmul.mubr.bf16.gmra.mrb[0].mxu0 %v4639
    %v5211 = vpop.f32.mrb[0].mxu0
    %v5212 = vadd.f32 0.0, %v5211
    %v5213 = vpop.f32.mrb[0].mxu0
    %v5214 = vadd.f32 0.0, %v5213
    %v5215 = vpop.f32.mrb[0].mxu0
    %v5216 = vadd.f32 0.0, %v5215
    %v5217 = vpop.f32.mrb[0].mxu0
    %v5218 = vadd.f32 0.0, %v5217
    %5219 = vdwg.mxu0
    %5220 = vmatprep.subr.bf16.mxu0 0
    %5221 = vmatpush1.bf16.msra.mxu0 %v4503
    %5222 = vmatprep.subr.bf16.mxu0 0
    %5223 = vmatpush1.bf16.msra.mxu0 %v4510
    %5224 = vmatprep.subr.bf16.mxu0 0
    %5225 = vmatpush1.bf16.msra.mxu0 %v4517
    %5226 = vmatprep.subr.bf16.mxu0 0
    %5227 = vmatpush1.bf16.msra.mxu0 %v4524
    %5228 = vmatprep.subr.bf16.mxu0 0
    %5229 = vmatpush1.bf16.msra.mxu0 %v4531
    %5230 = vmatprep.subr.bf16.mxu0 0
    %5231 = vmatpush1.bf16.msra.mxu0 %v4538
    %5232 = vmatprep.subr.bf16.mxu0 0
    %5233 = vmatpush1.bf16.msra.mxu0 %v4545
    %5234 = vmatprep.subr.bf16.mxu0 0
    %5235 = vmatpush1.bf16.msra.mxu0 %v4552
    %5236 = vmatprep.subr.bf16.mxu0 0
    %5237 = vmatpush1.bf16.msra.mxu0 %v4559
    %5238 = vmatprep.subr.bf16.mxu0 0
    %5239 = vmatpush1.bf16.msra.mxu0 %v4566
    %5240 = vmatprep.subr.bf16.mxu0 0
    %5241 = vmatpush1.bf16.msra.mxu0 %v4573
    %5242 = vmatprep.subr.bf16.mxu0 0
    %5243 = vmatpush1.bf16.msra.mxu0 %v4580
    %5244 = vmatprep.subr.bf16.mxu0 0
    %5245 = vmatpush1.bf16.msra.mxu0 %v4587
    %5246 = vmatprep.subr.bf16.mxu0 0
    %5247 = vmatpush1.bf16.msra.mxu0 %v4594
    %5248 = vmatprep.subr.bf16.mxu0 0
    %5249 = vmatpush1.bf16.msra.mxu0 %v4601
    %5250 = vmatprep.subr.bf16.mxu0 0
    %5251 = vmatpush1.bf16.msra.mxu0 %v4608
    %5252 = vmatprep.mubr.bf16.mxu0 %v4610
    %5253 = vmatmul.mubr.bf16.gmra.mrb[0].mxu0 %v4609
    %v5254 = vpop.f32.mrb[0].mxu0
    %v5255 = vadd.f32 0.0, %v5254
    %v5256 = vpop.f32.mrb[0].mxu0
    %v5257 = vpop.f32.mrb[0].mxu0
    %v5258 = vadd.f32 0.0, %v5257
    %v5259 = vpop.f32.mrb[0].mxu0
    %5260 = vmatprep.mubr.bf16.mxu0 %v4612
    %5261 = vmatmul.mubr.bf16.gmra.mrb[0].mxu0 %v4611
    %v5262 = vpop.f32.mrb[0].mxu0
    %v5263 = vadd.f32 0.0, %v5262
    %v5264 = vpop.f32.mrb[0].mxu0
    %v5265 = vpop.f32.mrb[0].mxu0
    %v5266 = vadd.f32 0.0, %v5265
    %v5267 = vpop.f32.mrb[0].mxu0
    %5268 = vmatprep.mubr.bf16.mxu0 %v4614
    %5269 = vmatmul.mubr.bf16.gmra.mrb[0].mxu0 %v4613
    %v5270 = vpop.f32.mrb[0].mxu0
    %v5271 = vadd.f32 0.0, %v5270
    %v5272 = vpop.f32.mrb[0].mxu0
    %v5273 = vpop.f32.mrb[0].mxu0
    %v5274 = vadd.f32 0.0, %v5273
    %v5275 = vpop.f32.mrb[0].mxu0
    %5276 = vmatprep.mubr.bf16.mxu0 %v4616
    %5277 = vmatmul.mubr.bf16.gmra.mrb[0].mxu0 %v4615
    %v5278 = vpop.f32.mrb[0].mxu0
    %v5279 = vadd.f32 0.0, %v5278
    %v5280 = vpop.f32.mrb[0].mxu0
    %v5281 = vpop.f32.mrb[0].mxu0
    %v5282 = vadd.f32 0.0, %v5281
    %v5283 = vpop.f32.mrb[0].mxu0
    %5284 = vmatprep.mubr.bf16.mxu0 %v4618
    %5285 = vmatmul.mubr.bf16.gmra.mrb[0].mxu0 %v4617
    %v5286 = vpop.f32.mrb[0].mxu0
    %v5287 = vadd.f32 0.0, %v5286
    %v5288 = vpop.f32.mrb[0].mxu0
    %v5289 = vpop.f32.mrb[0].mxu0
    %v5290 = vadd.f32 0.0, %v5289
    %v5291 = vpop.f32.mrb[0].mxu0
    %5292 = vmatprep.mubr.bf16.mxu0 %v4620
    %5293 = vmatmul.mubr.bf16.gmra.mrb[0].mxu0 %v4619
    %v5294 = vpop.f32.mrb[0].mxu0
    %v5295 = vadd.f32 0.0, %v5294
    %v5296 = vpop.f32.mrb[0].mxu0
    %v5297 = vpop.f32.mrb[0].mxu0
    %v5298 = vadd.f32 0.0, %v5297
    %v5299 = vpop.f32.mrb[0].mxu0
    %5300 = vmatprep.mubr.bf16.mxu0 %v4622
    %5301 = vmatmul.mubr.bf16.gmra.mrb[0].mxu0 %v4621
    %v5302 = vpop.f32.mrb[0].mxu0
    %v5303 = vadd.f32 0.0, %v5302
    %v5304 = vpop.f32.mrb[0].mxu0
    %v5305 = vpop.f32.mrb[0].mxu0
    %v5306 = vadd.f32 0.0, %v5305
    %v5307 = vpop.f32.mrb[0].mxu0
    %5308 = vmatprep.mubr.bf16.mxu0 %v4624
    %5309 = vmatmul.mubr.bf16.gmra.mrb[0].mxu0 %v4623
    %v5310 = vpop.f32.mrb[0].mxu0
    %v5311 = vadd.f32 0.0, %v5310
    %v5312 = vpop.f32.mrb[0].mxu0
    %v5313 = vpop.f32.mrb[0].mxu0
    %v5314 = vadd.f32 0.0, %v5313
    %v5315 = vpop.f32.mrb[0].mxu0
    %5316 = vmatprep.mubr.bf16.mxu0 %v4626
    %5317 = vmatmul.mubr.bf16.gmra.mrb[0].mxu0 %v4625
    %v5318 = vpop.f32.mrb[0].mxu0
    %v5319 = vadd.f32 0.0, %v5318
    %v5320 = vpop.f32.mrb[0].mxu0
    %v5321 = vpop.f32.mrb[0].mxu0
    %v5322 = vadd.f32 0.0, %v5321
    %v5323 = vpop.f32.mrb[0].mxu0
    %5324 = vmatprep.mubr.bf16.mxu0 %v4628
    %5325 = vmatmul.mubr.bf16.gmra.mrb[0].mxu0 %v4627
    %v5326 = vpop.f32.mrb[0].mxu0
    %v5327 = vadd.f32 0.0, %v5326
    %v5328 = vpop.f32.mrb[0].mxu0
    %v5329 = vpop.f32.mrb[0].mxu0
    %v5330 = vadd.f32 0.0, %v5329
    %v5331 = vpop.f32.mrb[0].mxu0
    %5332 = vmatprep.mubr.bf16.mxu0 %v4630
    %5333 = vmatmul.mubr.bf16.gmra.mrb[0].mxu0 %v4629
    %v5334 = vpop.f32.mrb[0].mxu0
    %v5335 = vadd.f32 0.0, %v5334
    %v5336 = vpop.f32.mrb[0].mxu0
    %v5337 = vpop.f32.mrb[0].mxu0
    %v5338 = vadd.f32 0.0, %v5337
    %v5339 = vpop.f32.mrb[0].mxu0
    %5340 = vmatprep.mubr.bf16.mxu0 %v4632
    %5341 = vmatmul.mubr.bf16.gmra.mrb[0].mxu0 %v4631
    %v5342 = vpop.f32.mrb[0].mxu0
    %v5343 = vadd.f32 0.0, %v5342
    %v5344 = vpop.f32.mrb[0].mxu0
    %v5345 = vpop.f32.mrb[0].mxu0
    %v5346 = vadd.f32 0.0, %v5345
    %v5347 = vpop.f32.mrb[0].mxu0
    %5348 = vmatprep.mubr.bf16.mxu0 %v4634
    %5349 = vmatmul.mubr.bf16.gmra.mrb[0].mxu0 %v4633
    %v5350 = vpop.f32.mrb[0].mxu0
    %v5351 = vadd.f32 0.0, %v5350
    %v5352 = vpop.f32.mrb[0].mxu0
    %v5353 = vpop.f32.mrb[0].mxu0
    %v5354 = vadd.f32 0.0, %v5353
    %v5355 = vpop.f32.mrb[0].mxu0
    %5356 = vmatprep.mubr.bf16.mxu0 %v4636
    %5357 = vmatmul.mubr.bf16.gmra.mrb[0].mxu0 %v4635
    %v5358 = vpop.f32.mrb[0].mxu0
    %v5359 = vadd.f32 0.0, %v5358
    %v5360 = vpop.f32.mrb[0].mxu0
    %v5361 = vpop.f32.mrb[0].mxu0
    %v5362 = vadd.f32 0.0, %v5361
    %v5363 = vpop.f32.mrb[0].mxu0
    %5364 = vmatprep.mubr.bf16.mxu0 %v4638
    %5365 = vmatmul.mubr.bf16.gmra.mrb[0].mxu0 %v4637
    %v5366 = vpop.f32.mrb[0].mxu0
    %v5367 = vadd.f32 0.0, %v5366
    %v5368 = vpop.f32.mrb[0].mxu0
    %v5369 = vpop.f32.mrb[0].mxu0
    %v5370 = vadd.f32 0.0, %v5369
    %v5371 = vpop.f32.mrb[0].mxu0
    %5372 = vmatprep.mubr.bf16.mxu0 %v4640
    %5373 = vmatmul.mubr.bf16.gmra.mrb[0].mxu0 %v4639
    %v5374 = vpop.f32.mrb[0].mxu0
    %v5375 = vadd.f32 0.0, %v5374
    %v5376 = vpop.f32.mrb[0].mxu0
    %v5377 = vpop.f32.mrb[0].mxu0
    %v5378 = vadd.f32 0.0, %v5377
    %v5379 = vpop.f32.mrb[0].mxu0
    %5380 = vdwg.mxu0
    %v5381 = vld [vmem:[%s14] sm:$0x7f]
    %v5383 = vlaneseq
    %v5384 = vshrl.u32 %v5383, 7
    %v5385 = vsub.s32 0, %v5384
    %v5386 = vrot.slane %v5381, %v5385
    %v5387 = vlaneseq
    %v5388 = vshrl.u32 %v5387, 7
    %v5389 = vsub.s32 1, %v5388
    %v5390 = vrot.slane %v5381, %v5389
    %v5391 = vlaneseq
    %v5392 = vshrl.u32 %v5391, 7
    %v5393 = vsub.s32 2, %v5392
    %v5394 = vrot.slane %v5381, %v5393
    %v5395 = vlaneseq
    %v5396 = vshrl.u32 %v5395, 7
    %v5397 = vsub.s32 3, %v5396
    %v5398 = vrot.slane %v5381, %v5397
    %v5399 = vlaneseq
    %v5400 = vshrl.u32 %v5399, 7
    %v5401 = vsub.s32 4, %v5400
    %v5402 = vrot.slane %v5381, %v5401
    %v5403 = vlaneseq
    %v5404 = vshrl.u32 %v5403, 7
    %v5405 = vsub.s32 5, %v5404
    %v5406 = vrot.slane %v5381, %v5405
    %v5407 = vlaneseq
    %v5408 = vshrl.u32 %v5407, 7
    %v5409 = vsub.s32 6, %v5408
    %v5410 = vrot.slane %v5381, %v5409
    %v5418 = vadd.f32 %v4676, %v5386
    %v5419 = vadd.f32 %v4678, %v5390
    %v5420 = vadd.f32 %v4869, %v5394
    %v5421 = vadd.f32 %v4871, %v5398
    %v5422 = vadd.f32 %v5062, %v5402
    %v5423 = vadd.f32 %v5064, %v5406
    %v5424 = vadd.f32 %v5255, %v5410
    %v5425 = vadd.f32 %v4680, %v5386
    %v5426 = vadd.f32 %v4682, %v5390
    %v5427 = vadd.f32 %v4873, %v5394
    %v5428 = vadd.f32 %v4875, %v5398
    %v5429 = vadd.f32 %v5066, %v5402
    %v5430 = vadd.f32 %v5068, %v5406
    %v5431 = vadd.f32 %v5258, %v5410
    %v5432 = vadd.f32 %v4686, %v5386
    %v5433 = vadd.f32 %v4688, %v5390
    %v5434 = vadd.f32 %v4879, %v5394
    %v5435 = vadd.f32 %v4881, %v5398
    %v5436 = vadd.f32 %v5072, %v5402
    %v5437 = vadd.f32 %v5074, %v5406
    %v5438 = vadd.f32 %v5263, %v5410
    %v5439 = vadd.f32 %v4690, %v5386
    %v5440 = vadd.f32 %v4692, %v5390
    %v5441 = vadd.f32 %v4883, %v5394
    %v5442 = vadd.f32 %v4885, %v5398
    %v5443 = vadd.f32 %v5076, %v5402
    %v5444 = vadd.f32 %v5078, %v5406
    %v5445 = vadd.f32 %v5266, %v5410
    %v5446 = vadd.f32 %v4696, %v5386
    %v5447 = vadd.f32 %v4698, %v5390
    %v5448 = vadd.f32 %v4889, %v5394
    %v5449 = vadd.f32 %v4891, %v5398
    %v5450 = vadd.f32 %v5082, %v5402
    %v5451 = vadd.f32 %v5084, %v5406
    %v5452 = vadd.f32 %v5271, %v5410
    %v5453 = vadd.f32 %v4700, %v5386
    %v5454 = vadd.f32 %v4702, %v5390
    %v5455 = vadd.f32 %v4893, %v5394
    %v5456 = vadd.f32 %v4895, %v5398
    %v5457 = vadd.f32 %v5086, %v5402
    %v5458 = vadd.f32 %v5088, %v5406
    %v5459 = vadd.f32 %v5274, %v5410
    %v5460 = vadd.f32 %v4706, %v5386
    %v5461 = vadd.f32 %v4708, %v5390
    %v5462 = vadd.f32 %v4899, %v5394
    %v5463 = vadd.f32 %v4901, %v5398
    %v5464 = vadd.f32 %v5092, %v5402
    %v5465 = vadd.f32 %v5094, %v5406
    %v5466 = vadd.f32 %v5279, %v5410
    %v5467 = vadd.f32 %v4710, %v5386
    %v5468 = vadd.f32 %v4712, %v5390
    %v5469 = vadd.f32 %v4903, %v5394
    %v5470 = vadd.f32 %v4905, %v5398
    %v5471 = vadd.f32 %v5096, %v5402
    %v5472 = vadd.f32 %v5098, %v5406
    %v5473 = vadd.f32 %v5282, %v5410
    %v5474 = vadd.f32 %v4716, %v5386
    %v5475 = vadd.f32 %v4718, %v5390
    %v5476 = vadd.f32 %v4909, %v5394
    %v5477 = vadd.f32 %v4911, %v5398
    %v5478 = vadd.f32 %v5102, %v5402
    %v5479 = vadd.f32 %v5104, %v5406
    %v5480 = vadd.f32 %v5287, %v5410
    %v5481 = vadd.f32 %v4720, %v5386
    %v5482 = vadd.f32 %v4722, %v5390
    %v5483 = vadd.f32 %v4913, %v5394
    %v5484 = vadd.f32 %v4915, %v5398
    %v5485 = vadd.f32 %v5106, %v5402
    %v5486 = vadd.f32 %v5108, %v5406
    %v5487 = vadd.f32 %v5290, %v5410
    %v5488 = vadd.f32 %v4726, %v5386
    %v5489 = vadd.f32 %v4728, %v5390
    %v5490 = vadd.f32 %v4919, %v5394
    %v5491 = vadd.f32 %v4921, %v5398
    %v5492 = vadd.f32 %v5112, %v5402
    %v5493 = vadd.f32 %v5114, %v5406
    %v5494 = vadd.f32 %v5295, %v5410
    %v5495 = vadd.f32 %v4730, %v5386
    %v5496 = vadd.f32 %v4732, %v5390
    %v5497 = vadd.f32 %v4923, %v5394
    %v5498 = vadd.f32 %v4925, %v5398
    %v5499 = vadd.f32 %v5116, %v5402
    %v5500 = vadd.f32 %v5118, %v5406
    %v5501 = vadd.f32 %v5298, %v5410
    %v5502 = vadd.f32 %v4736, %v5386
    %v5503 = vadd.f32 %v4738, %v5390
    %v5504 = vadd.f32 %v4929, %v5394
    %v5505 = vadd.f32 %v4931, %v5398
    %v5506 = vadd.f32 %v5122, %v5402
    %v5507 = vadd.f32 %v5124, %v5406
    %v5508 = vadd.f32 %v5303, %v5410
    %v5509 = vadd.f32 %v4740, %v5386
    %v5510 = vadd.f32 %v4742, %v5390
    %v5511 = vadd.f32 %v4933, %v5394
    %v5512 = vadd.f32 %v4935, %v5398
    %v5513 = vadd.f32 %v5126, %v5402
    %v5514 = vadd.f32 %v5128, %v5406
    %v5515 = vadd.f32 %v5306, %v5410
    %v5516 = vadd.f32 %v4746, %v5386
    %v5517 = vadd.f32 %v4748, %v5390
    %v5518 = vadd.f32 %v4939, %v5394
    %v5519 = vadd.f32 %v4941, %v5398
    %v5520 = vadd.f32 %v5132, %v5402
    %v5521 = vadd.f32 %v5134, %v5406
    %v5522 = vadd.f32 %v5311, %v5410
    %v5523 = vadd.f32 %v4750, %v5386
    %v5524 = vadd.f32 %v4752, %v5390
    %v5525 = vadd.f32 %v4943, %v5394
    %v5526 = vadd.f32 %v4945, %v5398
    %v5527 = vadd.f32 %v5136, %v5402
    %v5528 = vadd.f32 %v5138, %v5406
    %v5529 = vadd.f32 %v5314, %v5410
    %v5530 = vadd.f32 %v4756, %v5386
    %v5531 = vadd.f32 %v4758, %v5390
    %v5532 = vadd.f32 %v4949, %v5394
    %v5533 = vadd.f32 %v4951, %v5398
    %v5534 = vadd.f32 %v5142, %v5402
    %v5535 = vadd.f32 %v5144, %v5406
    %v5536 = vadd.f32 %v5319, %v5410
    %v5537 = vadd.f32 %v4760, %v5386
    %v5538 = vadd.f32 %v4762, %v5390
    %v5539 = vadd.f32 %v4953, %v5394
    %v5540 = vadd.f32 %v4955, %v5398
    %v5541 = vadd.f32 %v5146, %v5402
    %v5542 = vadd.f32 %v5148, %v5406
    %v5543 = vadd.f32 %v5322, %v5410
    %v5544 = vadd.f32 %v4766, %v5386
    %v5545 = vadd.f32 %v4768, %v5390
    %v5546 = vadd.f32 %v4959, %v5394
    %v5547 = vadd.f32 %v4961, %v5398
    %v5548 = vadd.f32 %v5152, %v5402
    %v5549 = vadd.f32 %v5154, %v5406
    %v5550 = vadd.f32 %v5327, %v5410
    %v5551 = vadd.f32 %v4770, %v5386
    %v5552 = vadd.f32 %v4772, %v5390
    %v5553 = vadd.f32 %v4963, %v5394
    %v5554 = vadd.f32 %v4965, %v5398
    %v5555 = vadd.f32 %v5156, %v5402
    %v5556 = vadd.f32 %v5158, %v5406
    %v5557 = vadd.f32 %v5330, %v5410
    %v5558 = vadd.f32 %v4776, %v5386
    %v5559 = vadd.f32 %v4778, %v5390
    %v5560 = vadd.f32 %v4969, %v5394
    %v5561 = vadd.f32 %v4971, %v5398
    %v5562 = vadd.f32 %v5162, %v5402
    %v5563 = vadd.f32 %v5164, %v5406
    %v5564 = vadd.f32 %v5335, %v5410
    %v5565 = vadd.f32 %v4780, %v5386
    %v5566 = vadd.f32 %v4782, %v5390
    %v5567 = vadd.f32 %v4973, %v5394
    %v5568 = vadd.f32 %v4975, %v5398
    %v5569 = vadd.f32 %v5166, %v5402
    %v5570 = vadd.f32 %v5168, %v5406
    %v5571 = vadd.f32 %v5338, %v5410
    %v5572 = vadd.f32 %v4786, %v5386
    %v5573 = vadd.f32 %v4788, %v5390
    %v5574 = vadd.f32 %v4979, %v5394
    %v5575 = vadd.f32 %v4981, %v5398
    %v5576 = vadd.f32 %v5172, %v5402
    %v5577 = vadd.f32 %v5174, %v5406
    %v5578 = vadd.f32 %v5343, %v5410
    %v5579 = vadd.f32 %v4790, %v5386
    %v5580 = vadd.f32 %v4792, %v5390
    %v5581 = vadd.f32 %v4983, %v5394
    %v5582 = vadd.f32 %v4985, %v5398
    %v5583 = vadd.f32 %v5176, %v5402
    %v5584 = vadd.f32 %v5178, %v5406
    %v5585 = vadd.f32 %v5346, %v5410
    %v5586 = vadd.f32 %v4796, %v5386
    %v5587 = vadd.f32 %v4798, %v5390
    %v5588 = vadd.f32 %v4989, %v5394
    %v5589 = vadd.f32 %v4991, %v5398
    %v5590 = vadd.f32 %v5182, %v5402
    %v5591 = vadd.f32 %v5184, %v5406
    %v5592 = vadd.f32 %v5351, %v5410
    %v5593 = vadd.f32 %v4800, %v5386
    %v5594 = vadd.f32 %v4802, %v5390
    %v5595 = vadd.f32 %v4993, %v5394
    %v5596 = vadd.f32 %v4995, %v5398
    %v5597 = vadd.f32 %v5186, %v5402
    %v5598 = vadd.f32 %v5188, %v5406
    %v5599 = vadd.f32 %v5354, %v5410
    %v5600 = vadd.f32 %v4806, %v5386
    %v5601 = vadd.f32 %v4808, %v5390
    %v5602 = vadd.f32 %v4999, %v5394
    %v5603 = vadd.f32 %v5001, %v5398
    %v5604 = vadd.f32 %v5192, %v5402
    %v5605 = vadd.f32 %v5194, %v5406
    %v5606 = vadd.f32 %v5359, %v5410
    %v5607 = vadd.f32 %v4810, %v5386
    %v5608 = vadd.f32 %v4812, %v5390
    %v5609 = vadd.f32 %v5003, %v5394
    %v5610 = vadd.f32 %v5005, %v5398
    %v5611 = vadd.f32 %v5196, %v5402
    %v5612 = vadd.f32 %v5198, %v5406
    %v5613 = vadd.f32 %v5362, %v5410
    %v5614 = vadd.f32 %v4816, %v5386
    %v5615 = vadd.f32 %v4818, %v5390
    %v5616 = vadd.f32 %v5009, %v5394
    %v5617 = vadd.f32 %v5011, %v5398
    %v5618 = vadd.f32 %v5202, %v5402
    %v5619 = vadd.f32 %v5204, %v5406
    %v5620 = vadd.f32 %v5367, %v5410
    %v5621 = vadd.f32 %v4820, %v5386
    %v5622 = vadd.f32 %v4822, %v5390
    %v5623 = vadd.f32 %v5013, %v5394
    %v5624 = vadd.f32 %v5015, %v5398
    %v5625 = vadd.f32 %v5206, %v5402
    %v5626 = vadd.f32 %v5208, %v5406
    %v5627 = vadd.f32 %v5370, %v5410
    %v5628 = vadd.f32 %v4826, %v5386
    %v5629 = vadd.f32 %v4828, %v5390
    %v5630 = vadd.f32 %v5019, %v5394
    %v5631 = vadd.f32 %v5021, %v5398
    %v5632 = vadd.f32 %v5212, %v5402
    %v5633 = vadd.f32 %v5214, %v5406
    %v5634 = vadd.f32 %v5375, %v5410
    %v5635 = vadd.f32 %v4830, %v5386
    %v5636 = vadd.f32 %v4832, %v5390
    %v5637 = vadd.f32 %v5023, %v5394
    %v5638 = vadd.f32 %v5025, %v5398
    %v5639 = vadd.f32 %v5216, %v5402
    %v5640 = vadd.f32 %v5218, %v5406
    %v5641 = vadd.f32 %v5378, %v5410
    %v5642 = vtanh.pop %v5418
    %v5643 = vtanh.pop %v5419
    %v5644 = vtanh.pop %v5420
    %v5645 = vtanh.pop %v5421
    %v5646 = vtanh.pop %v5422
    %v5647 = vtanh.pop %v5423
    %v5648 = vtanh.pop %v5424
    %v5649 = vtanh.pop %v5425
    %v5650 = vtanh.pop %v5426
    %v5651 = vtanh.pop %v5427
    %v5652 = vtanh.pop %v5428
    %v5653 = vtanh.pop %v5429
    %v5654 = vtanh.pop %v5430
    %v5655 = vtanh.pop %v5431
    %v5656 = vtanh.pop %v5432
    %v5657 = vtanh.pop %v5433
    %v5658 = vtanh.pop %v5434
    %v5659 = vtanh.pop %v5435
    %v5660 = vtanh.pop %v5436
    %v5661 = vtanh.pop %v5437
    %v5662 = vtanh.pop %v5438
    %v5663 = vtanh.pop %v5439
    %v5664 = vtanh.pop %v5440
    %v5665 = vtanh.pop %v5441
    %v5666 = vtanh.pop %v5442
    %v5667 = vtanh.pop %v5443
    %v5668 = vtanh.pop %v5444
    %v5669 = vtanh.pop %v5445
    %v5670 = vtanh.pop %v5446
    %v5671 = vtanh.pop %v5447
    %v5672 = vtanh.pop %v5448
    %v5673 = vtanh.pop %v5449
    %v5674 = vtanh.pop %v5450
    %v5675 = vtanh.pop %v5451
    %v5676 = vtanh.pop %v5452
    %v5677 = vtanh.pop %v5453
    %v5678 = vtanh.pop %v5454
    %v5679 = vtanh.pop %v5455
    %v5680 = vtanh.pop %v5456
    %v5681 = vtanh.pop %v5457
    %v5682 = vtanh.pop %v5458
    %v5683 = vtanh.pop %v5459
    %v5684 = vtanh.pop %v5460
    %v5685 = vtanh.pop %v5461
    %v5686 = vtanh.pop %v5462
    %v5687 = vtanh.pop %v5463
    %v5688 = vtanh.pop %v5464
    %v5689 = vtanh.pop %v5465
    %v5690 = vtanh.pop %v5466
    %v5691 = vtanh.pop %v5467
    %v5692 = vtanh.pop %v5468
    %v5693 = vtanh.pop %v5469
    %v5694 = vtanh.pop %v5470
    %v5695 = vtanh.pop %v5471
    %v5696 = vtanh.pop %v5472
    %v5697 = vtanh.pop %v5473
    %v5698 = vtanh.pop %v5474
    %v5699 = vtanh.pop %v5475
    %v5700 = vtanh.pop %v5476
    %v5701 = vtanh.pop %v5477
    %v5702 = vtanh.pop %v5478
    %v5703 = vtanh.pop %v5479
    %v5704 = vtanh.pop %v5480
    %v5705 = vtanh.pop %v5481
    %v5706 = vtanh.pop %v5482
    %v5707 = vtanh.pop %v5483
    %v5708 = vtanh.pop %v5484
    %v5709 = vtanh.pop %v5485
    %v5710 = vtanh.pop %v5486
    %v5711 = vtanh.pop %v5487
    %v5712 = vtanh.pop %v5488
    %v5713 = vtanh.pop %v5489
    %v5714 = vtanh.pop %v5490
    %v5715 = vtanh.pop %v5491
    %v5716 = vtanh.pop %v5492
    %v5717 = vtanh.pop %v5493
    %v5718 = vtanh.pop %v5494
    %v5719 = vtanh.pop %v5495
    %v5720 = vtanh.pop %v5496
    %v5721 = vtanh.pop %v5497
    %v5722 = vtanh.pop %v5498
    %v5723 = vtanh.pop %v5499
    %v5724 = vtanh.pop %v5500
    %v5725 = vtanh.pop %v5501
    %v5726 = vtanh.pop %v5502
    %v5727 = vtanh.pop %v5503
    %v5728 = vtanh.pop %v5504
    %v5729 = vtanh.pop %v5505
    %v5730 = vtanh.pop %v5506
    %v5731 = vtanh.pop %v5507
    %v5732 = vtanh.pop %v5508
    %v5733 = vtanh.pop %v5509
    %v5734 = vtanh.pop %v5510
    %v5735 = vtanh.pop %v5511
    %v5736 = vtanh.pop %v5512
    %v5737 = vtanh.pop %v5513
    %v5738 = vtanh.pop %v5514
    %v5739 = vtanh.pop %v5515
    %v5740 = vtanh.pop %v5516
    %v5741 = vtanh.pop %v5517
    %v5742 = vtanh.pop %v5518
    %v5743 = vtanh.pop %v5519
    %v5744 = vtanh.pop %v5520
    %v5745 = vtanh.pop %v5521
    %v5746 = vtanh.pop %v5522
    %v5747 = vtanh.pop %v5523
    %v5748 = vtanh.pop %v5524
    %v5749 = vtanh.pop %v5525
    %v5750 = vtanh.pop %v5526
    %v5751 = vtanh.pop %v5527
    %v5752 = vtanh.pop %v5528
    %v5753 = vtanh.pop %v5529
    %v5754 = vtanh.pop %v5530
    %v5755 = vtanh.pop %v5531
    %v5756 = vtanh.pop %v5532
    %v5757 = vtanh.pop %v5533
    %v5758 = vtanh.pop %v5534
    %v5759 = vtanh.pop %v5535
    %v5760 = vtanh.pop %v5536
    %v5761 = vtanh.pop %v5537
    %v5762 = vtanh.pop %v5538
    %v5763 = vtanh.pop %v5539
    %v5764 = vtanh.pop %v5540
    %v5765 = vtanh.pop %v5541
    %v5766 = vtanh.pop %v5542
    %v5767 = vtanh.pop %v5543
    %v5768 = vtanh.pop %v5544
    %v5769 = vtanh.pop %v5545
    %v5770 = vtanh.pop %v5546
    %v5771 = vtanh.pop %v5547
    %v5772 = vtanh.pop %v5548
    %v5773 = vtanh.pop %v5549
    %v5774 = vtanh.pop %v5550
    %v5775 = vtanh.pop %v5551
    %v5776 = vtanh.pop %v5552
    %v5777 = vtanh.pop %v5553
    %v5778 = vtanh.pop %v5554
    %v5779 = vtanh.pop %v5555
    %v5780 = vtanh.pop %v5556
    %v5781 = vtanh.pop %v5557
    %v5782 = vtanh.pop %v5558
    %v5783 = vtanh.pop %v5559
    %v5784 = vtanh.pop %v5560
    %v5785 = vtanh.pop %v5561
    %v5786 = vtanh.pop %v5562
    %v5787 = vtanh.pop %v5563
    %v5788 = vtanh.pop %v5564
    %v5789 = vtanh.pop %v5565
    %v5790 = vtanh.pop %v5566
    %v5791 = vtanh.pop %v5567
    %v5792 = vtanh.pop %v5568
    %v5793 = vtanh.pop %v5569
    %v5794 = vtanh.pop %v5570
    %v5795 = vtanh.pop %v5571
    %v5796 = vtanh.pop %v5572
    %v5797 = vtanh.pop %v5573
    %v5798 = vtanh.pop %v5574
    %v5799 = vtanh.pop %v5575
    %v5800 = vtanh.pop %v5576
    %v5801 = vtanh.pop %v5577
    %v5802 = vtanh.pop %v5578
    %v5803 = vtanh.pop %v5579
    %v5804 = vtanh.pop %v5580
    %v5805 = vtanh.pop %v5581
    %v5806 = vtanh.pop %v5582
    %v5807 = vtanh.pop %v5583
    %v5808 = vtanh.pop %v5584
    %v5809 = vtanh.pop %v5585
    %v5810 = vtanh.pop %v5586
    %v5811 = vtanh.pop %v5587
    %v5812 = vtanh.pop %v5588
    %v5813 = vtanh.pop %v5589
    %v5814 = vtanh.pop %v5590
    %v5815 = vtanh.pop %v5591
    %v5816 = vtanh.pop %v5592
    %v5817 = vtanh.pop %v5593
    %v5818 = vtanh.pop %v5594
    %v5819 = vtanh.pop %v5595
    %v5820 = vtanh.pop %v5596
    %v5821 = vtanh.pop %v5597
    %v5822 = vtanh.pop %v5598
    %v5823 = vtanh.pop %v5599
    %v5824 = vtanh.pop %v5600
    %v5825 = vtanh.pop %v5601
    %v5826 = vtanh.pop %v5602
    %v5827 = vtanh.pop %v5603
    %v5828 = vtanh.pop %v5604
    %v5829 = vtanh.pop %v5605
    %v5830 = vtanh.pop %v5606
    %v5831 = vtanh.pop %v5607
    %v5832 = vtanh.pop %v5608
    %v5833 = vtanh.pop %v5609
    %v5834 = vtanh.pop %v5610
    %v5835 = vtanh.pop %v5611
    %v5836 = vtanh.pop %v5612
    %v5837 = vtanh.pop %v5613
    %v5838 = vtanh.pop %v5614
    %v5839 = vtanh.pop %v5615
    %v5840 = vtanh.pop %v5616
    %v5841 = vtanh.pop %v5617
    %v5842 = vtanh.pop %v5618
    %v5843 = vtanh.pop %v5619
    %v5844 = vtanh.pop %v5620
    %v5845 = vtanh.pop %v5621
    %v5846 = vtanh.pop %v5622
    %v5847 = vtanh.pop %v5623
    %v5848 = vtanh.pop %v5624
    %v5849 = vtanh.pop %v5625
    %v5850 = vtanh.pop %v5626
    %v5851 = vtanh.pop %v5627
    %v5852 = vtanh.pop %v5628
    %v5853 = vtanh.pop %v5629
    %v5854 = vtanh.pop %v5630
    %v5855 = vtanh.pop %v5631
    %v5856 = vtanh.pop %v5632
    %v5857 = vtanh.pop %v5633
    %v5858 = vtanh.pop %v5634
    %v5859 = vtanh.pop %v5635
    %v5860 = vtanh.pop %v5636
    %v5861 = vtanh.pop %v5637
    %v5862 = vtanh.pop %v5638
    %v5863 = vtanh.pop %v5639
    %v5864 = vtanh.pop %v5640
    %v5865 = vtanh.pop %v5641
    %v5866 = vpack.c.bf16 %v5649, %v5642
    %v5867 = vpack.c.bf16 %v5650, %v5643
    %v5868 = vpack.c.bf16 %v5651, %v5644
    %v5869 = vpack.c.bf16 %v5652, %v5645
    %v5870 = vpack.c.bf16 %v5653, %v5646
    %v5871 = vpack.c.bf16 %v5654, %v5647
    %v5872 = vpack.c.bf16 %v5655, %v5648
    %v5873 = vpack.c.bf16 %v5663, %v5656
    %v5874 = vpack.c.bf16 %v5664, %v5657
    %v5875 = vpack.c.bf16 %v5665, %v5658
    %v5876 = vpack.c.bf16 %v5666, %v5659
    %v5877 = vpack.c.bf16 %v5667, %v5660
    %v5878 = vpack.c.bf16 %v5668, %v5661
    %v5879 = vpack.c.bf16 %v5669, %v5662
    %v5880 = vpack.c.bf16 %v5677, %v5670
    %v5881 = vpack.c.bf16 %v5678, %v5671
    %v5882 = vpack.c.bf16 %v5679, %v5672
    %v5883 = vpack.c.bf16 %v5680, %v5673
    %v5884 = vpack.c.bf16 %v5681, %v5674
    %v5885 = vpack.c.bf16 %v5682, %v5675
    %v5886 = vpack.c.bf16 %v5683, %v5676
    %v5887 = vpack.c.bf16 %v5691, %v5684
    %v5888 = vpack.c.bf16 %v5692, %v5685
    %v5889 = vpack.c.bf16 %v5693, %v5686
    %v5890 = vpack.c.bf16 %v5694, %v5687
    %v5891 = vpack.c.bf16 %v5695, %v5688
    %v5892 = vpack.c.bf16 %v5696, %v5689
    %v5893 = vpack.c.bf16 %v5697, %v5690
    %v5894 = vpack.c.bf16 %v5705, %v5698
    %v5895 = vpack.c.bf16 %v5706, %v5699
    %v5896 = vpack.c.bf16 %v5707, %v5700
    %v5897 = vpack.c.bf16 %v5708, %v5701
    %v5898 = vpack.c.bf16 %v5709, %v5702
    %v5899 = vpack.c.bf16 %v5710, %v5703
    %v5900 = vpack.c.bf16 %v5711, %v5704
    %v5901 = vpack.c.bf16 %v5719, %v5712
    %v5902 = vpack.c.bf16 %v5720, %v5713
    %v5903 = vpack.c.bf16 %v5721, %v5714
    %v5904 = vpack.c.bf16 %v5722, %v5715
    %v5905 = vpack.c.bf16 %v5723, %v5716
    %v5906 = vpack.c.bf16 %v5724, %v5717
    %v5907 = vpack.c.bf16 %v5725, %v5718
    %v5908 = vpack.c.bf16 %v5733, %v5726
    %v5909 = vpack.c.bf16 %v5734, %v5727
    %v5910 = vpack.c.bf16 %v5735, %v5728
    %v5911 = vpack.c.bf16 %v5736, %v5729
    %v5912 = vpack.c.bf16 %v5737, %v5730
    %v5913 = vpack.c.bf16 %v5738, %v5731
    %v5914 = vpack.c.bf16 %v5739, %v5732
    %v5915 = vpack.c.bf16 %v5747, %v5740
    %v5916 = vpack.c.bf16 %v5748, %v5741
    %v5917 = vpack.c.bf16 %v5749, %v5742
    %v5918 = vpack.c.bf16 %v5750, %v5743
    %v5919 = vpack.c.bf16 %v5751, %v5744
    %v5920 = vpack.c.bf16 %v5752, %v5745
    %v5921 = vpack.c.bf16 %v5753, %v5746
    %v5922 = vpack.c.bf16 %v5761, %v5754
    %v5923 = vpack.c.bf16 %v5762, %v5755
    %v5924 = vpack.c.bf16 %v5763, %v5756
    %v5925 = vpack.c.bf16 %v5764, %v5757
    %v5926 = vpack.c.bf16 %v5765, %v5758
    %v5927 = vpack.c.bf16 %v5766, %v5759
    %v5928 = vpack.c.bf16 %v5767, %v5760
    %v5929 = vpack.c.bf16 %v5775, %v5768
    %v5930 = vpack.c.bf16 %v5776, %v5769
    %v5931 = vpack.c.bf16 %v5777, %v5770
    %v5932 = vpack.c.bf16 %v5778, %v5771
    %v5933 = vpack.c.bf16 %v5779, %v5772
    %v5934 = vpack.c.bf16 %v5780, %v5773
    %v5935 = vpack.c.bf16 %v5781, %v5774
    %v5936 = vpack.c.bf16 %v5789, %v5782
    %v5937 = vpack.c.bf16 %v5790, %v5783
    %v5938 = vpack.c.bf16 %v5791, %v5784
    %v5939 = vpack.c.bf16 %v5792, %v5785
    %v5940 = vpack.c.bf16 %v5793, %v5786
    %v5941 = vpack.c.bf16 %v5794, %v5787
    %v5942 = vpack.c.bf16 %v5795, %v5788
    %v5943 = vpack.c.bf16 %v5803, %v5796
    %v5944 = vpack.c.bf16 %v5804, %v5797
    %v5945 = vpack.c.bf16 %v5805, %v5798
    %v5946 = vpack.c.bf16 %v5806, %v5799
    %v5947 = vpack.c.bf16 %v5807, %v5800
    %v5948 = vpack.c.bf16 %v5808, %v5801
    %v5949 = vpack.c.bf16 %v5809, %v5802
    %v5950 = vpack.c.bf16 %v5817, %v5810
    %v5951 = vpack.c.bf16 %v5818, %v5811
    %v5952 = vpack.c.bf16 %v5819, %v5812
    %v5953 = vpack.c.bf16 %v5820, %v5813
    %v5954 = vpack.c.bf16 %v5821, %v5814
    %v5955 = vpack.c.bf16 %v5822, %v5815
    %v5956 = vpack.c.bf16 %v5823, %v5816
    %v5957 = vpack.c.bf16 %v5831, %v5824
    %v5958 = vpack.c.bf16 %v5832, %v5825
    %v5959 = vpack.c.bf16 %v5833, %v5826
    %v5960 = vpack.c.bf16 %v5834, %v5827
    %v5961 = vpack.c.bf16 %v5835, %v5828
    %v5962 = vpack.c.bf16 %v5836, %v5829
    %v5963 = vpack.c.bf16 %v5837, %v5830
    %v5964 = vpack.c.bf16 %v5845, %v5838
    %v5965 = vpack.c.bf16 %v5846, %v5839
    %v5966 = vpack.c.bf16 %v5847, %v5840
    %v5967 = vpack.c.bf16 %v5848, %v5841
    %v5968 = vpack.c.bf16 %v5849, %v5842
    %v5969 = vpack.c.bf16 %v5850, %v5843
    %v5970 = vpack.c.bf16 %v5851, %v5844
    %v5971 = vpack.c.bf16 %v5859, %v5852
    %v5972 = vpack.c.bf16 %v5860, %v5853
    %v5973 = vpack.c.bf16 %v5861, %v5854
    %v5974 = vpack.c.bf16 %v5862, %v5855
    %v5975 = vpack.c.bf16 %v5863, %v5856
    %v5976 = vpack.c.bf16 %v5864, %v5857
    %v5977 = vpack.c.bf16 %v5865, %v5858
    %v6090 = vunpack.c.l.b16 %v5866
    %v6091 = vunpack.c.l.b16 %v5867
    %v6092 = vunpack.c.l.b16 %v5868
    %v6093 = vunpack.c.l.b16 %v5869
    %v6094 = vunpack.c.l.b16 %v5870
    %v6095 = vunpack.c.l.b16 %v5871
    %v6096 = vunpack.c.l.b16 %v5872
    %v6097 = vunpack.c.h.b16 %v5866
    %v6098 = vunpack.c.h.b16 %v5867
    %v6099 = vunpack.c.h.b16 %v5868
    %v6100 = vunpack.c.h.b16 %v5869
    %v6101 = vunpack.c.h.b16 %v5870
    %v6102 = vunpack.c.h.b16 %v5871
    %v6103 = vunpack.c.h.b16 %v5872
    %v6104 = vunpack.c.l.b16 %v5873
    %v6105 = vunpack.c.l.b16 %v5874
    %v6106 = vunpack.c.l.b16 %v5875
    %v6107 = vunpack.c.l.b16 %v5876
    %v6108 = vunpack.c.l.b16 %v5877
    %v6109 = vunpack.c.l.b16 %v5878
    %v6110 = vunpack.c.l.b16 %v5879
    %v6111 = vunpack.c.h.b16 %v5873
    %v6112 = vunpack.c.h.b16 %v5874
    %v6113 = vunpack.c.h.b16 %v5875
    %v6114 = vunpack.c.h.b16 %v5876
    %v6115 = vunpack.c.h.b16 %v5877
    %v6116 = vunpack.c.h.b16 %v5878
    %v6117 = vunpack.c.h.b16 %v5879
    %v6118 = vunpack.c.l.b16 %v5880
    %v6119 = vunpack.c.l.b16 %v5881
    %v6120 = vunpack.c.l.b16 %v5882
    %v6121 = vunpack.c.l.b16 %v5883
    %v6122 = vunpack.c.l.b16 %v5884
    %v6123 = vunpack.c.l.b16 %v5885
    %v6124 = vunpack.c.l.b16 %v5886
    %v6125 = vunpack.c.h.b16 %v5880
    %v6126 = vunpack.c.h.b16 %v5881
    %v6127 = vunpack.c.h.b16 %v5882
    %v6128 = vunpack.c.h.b16 %v5883
    %v6129 = vunpack.c.h.b16 %v5884
    %v6130 = vunpack.c.h.b16 %v5885
    %v6131 = vunpack.c.h.b16 %v5886
    %v6132 = vunpack.c.l.b16 %v5887
    %v6133 = vunpack.c.l.b16 %v5888
    %v6134 = vunpack.c.l.b16 %v5889
    %v6135 = vunpack.c.l.b16 %v5890
    %v6136 = vunpack.c.l.b16 %v5891
    %v6137 = vunpack.c.l.b16 %v5892
    %v6138 = vunpack.c.l.b16 %v5893
    %v6139 = vunpack.c.h.b16 %v5887
    %v6140 = vunpack.c.h.b16 %v5888
    %v6141 = vunpack.c.h.b16 %v5889
    %v6142 = vunpack.c.h.b16 %v5890
    %v6143 = vunpack.c.h.b16 %v5891
    %v6144 = vunpack.c.h.b16 %v5892
    %v6145 = vunpack.c.h.b16 %v5893
    %v6146 = vunpack.c.l.b16 %v5894
    %v6147 = vunpack.c.l.b16 %v5895
    %v6148 = vunpack.c.l.b16 %v5896
    %v6149 = vunpack.c.l.b16 %v5897
    %v6150 = vunpack.c.l.b16 %v5898
    %v6151 = vunpack.c.l.b16 %v5899
    %v6152 = vunpack.c.l.b16 %v5900
    %v6153 = vunpack.c.h.b16 %v5894
    %v6154 = vunpack.c.h.b16 %v5895
    %v6155 = vunpack.c.h.b16 %v5896
    %v6156 = vunpack.c.h.b16 %v5897
    %v6157 = vunpack.c.h.b16 %v5898
    %v6158 = vunpack.c.h.b16 %v5899
    %v6159 = vunpack.c.h.b16 %v5900
    %v6160 = vunpack.c.l.b16 %v5901
    %v6161 = vunpack.c.l.b16 %v5902
    %v6162 = vunpack.c.l.b16 %v5903
    %v6163 = vunpack.c.l.b16 %v5904
    %v6164 = vunpack.c.l.b16 %v5905
    %v6165 = vunpack.c.l.b16 %v5906
    %v6166 = vunpack.c.l.b16 %v5907
    %v6167 = vunpack.c.h.b16 %v5901
    %v6168 = vunpack.c.h.b16 %v5902
    %v6169 = vunpack.c.h.b16 %v5903
    %v6170 = vunpack.c.h.b16 %v5904
    %v6171 = vunpack.c.h.b16 %v5905
    %v6172 = vunpack.c.h.b16 %v5906
    %v6173 = vunpack.c.h.b16 %v5907
    %v6174 = vunpack.c.l.b16 %v5908
    %v6175 = vunpack.c.l.b16 %v5909
    %v6176 = vunpack.c.l.b16 %v5910
    %v6177 = vunpack.c.l.b16 %v5911
    %v6178 = vunpack.c.l.b16 %v5912
    %v6179 = vunpack.c.l.b16 %v5913
    %v6180 = vunpack.c.l.b16 %v5914
    %v6181 = vunpack.c.h.b16 %v5908
    %v6182 = vunpack.c.h.b16 %v5909
    %v6183 = vunpack.c.h.b16 %v5910
    %v6184 = vunpack.c.h.b16 %v5911
    %v6185 = vunpack.c.h.b16 %v5912
    %v6186 = vunpack.c.h.b16 %v5913
    %v6187 = vunpack.c.h.b16 %v5914
    %v6188 = vunpack.c.l.b16 %v5915
    %v6189 = vunpack.c.l.b16 %v5916
    %v6190 = vunpack.c.l.b16 %v5917
    %v6191 = vunpack.c.l.b16 %v5918
    %v6192 = vunpack.c.l.b16 %v5919
    %v6193 = vunpack.c.l.b16 %v5920
    %v6194 = vunpack.c.l.b16 %v5921
    %v6195 = vunpack.c.h.b16 %v5915
    %v6196 = vunpack.c.h.b16 %v5916
    %v6197 = vunpack.c.h.b16 %v5917
    %v6198 = vunpack.c.h.b16 %v5918
    %v6199 = vunpack.c.h.b16 %v5919
    %v6200 = vunpack.c.h.b16 %v5920
    %v6201 = vunpack.c.h.b16 %v5921
    %v6202 = vunpack.c.l.b16 %v5922
    %v6203 = vunpack.c.l.b16 %v5923
    %v6204 = vunpack.c.l.b16 %v5924
    %v6205 = vunpack.c.l.b16 %v5925
    %v6206 = vunpack.c.l.b16 %v5926
    %v6207 = vunpack.c.l.b16 %v5927
    %v6208 = vunpack.c.l.b16 %v5928
    %v6209 = vunpack.c.h.b16 %v5922
    %v6210 = vunpack.c.h.b16 %v5923
    %v6211 = vunpack.c.h.b16 %v5924
    %v6212 = vunpack.c.h.b16 %v5925
    %v6213 = vunpack.c.h.b16 %v5926
    %v6214 = vunpack.c.h.b16 %v5927
    %v6215 = vunpack.c.h.b16 %v5928
    %v6216 = vunpack.c.l.b16 %v5929
    %v6217 = vunpack.c.l.b16 %v5930
    %v6218 = vunpack.c.l.b16 %v5931
    %v6219 = vunpack.c.l.b16 %v5932
    %v6220 = vunpack.c.l.b16 %v5933
    %v6221 = vunpack.c.l.b16 %v5934
    %v6222 = vunpack.c.l.b16 %v5935
    %v6223 = vunpack.c.h.b16 %v5929
    %v6224 = vunpack.c.h.b16 %v5930
    %v6225 = vunpack.c.h.b16 %v5931
    %v6226 = vunpack.c.h.b16 %v5932
    %v6227 = vunpack.c.h.b16 %v5933
    %v6228 = vunpack.c.h.b16 %v5934
    %v6229 = vunpack.c.h.b16 %v5935
    %v6230 = vunpack.c.l.b16 %v5936
    %v6231 = vunpack.c.l.b16 %v5937
    %v6232 = vunpack.c.l.b16 %v5938
    %v6233 = vunpack.c.l.b16 %v5939
    %v6234 = vunpack.c.l.b16 %v5940
    %v6235 = vunpack.c.l.b16 %v5941
    %v6236 = vunpack.c.l.b16 %v5942
    %v6237 = vunpack.c.h.b16 %v5936
    %v6238 = vunpack.c.h.b16 %v5937
    %v6239 = vunpack.c.h.b16 %v5938
    %v6240 = vunpack.c.h.b16 %v5939
    %v6241 = vunpack.c.h.b16 %v5940
    %v6242 = vunpack.c.h.b16 %v5941
    %v6243 = vunpack.c.h.b16 %v5942
    %v6244 = vunpack.c.l.b16 %v5943
    %v6245 = vunpack.c.l.b16 %v5944
    %v6246 = vunpack.c.l.b16 %v5945
    %v6247 = vunpack.c.l.b16 %v5946
    %v6248 = vunpack.c.l.b16 %v5947
    %v6249 = vunpack.c.l.b16 %v5948
    %v6250 = vunpack.c.l.b16 %v5949
    %v6251 = vunpack.c.h.b16 %v5943
    %v6252 = vunpack.c.h.b16 %v5944
    %v6253 = vunpack.c.h.b16 %v5945
    %v6254 = vunpack.c.h.b16 %v5946
    %v6255 = vunpack.c.h.b16 %v5947
    %v6256 = vunpack.c.h.b16 %v5948
    %v6257 = vunpack.c.h.b16 %v5949
    %v6258 = vunpack.c.l.b16 %v5950
    %v6259 = vunpack.c.l.b16 %v5951
    %v6260 = vunpack.c.l.b16 %v5952
    %v6261 = vunpack.c.l.b16 %v5953
    %v6262 = vunpack.c.l.b16 %v5954
    %v6263 = vunpack.c.l.b16 %v5955
    %v6264 = vunpack.c.l.b16 %v5956
    %v6265 = vunpack.c.h.b16 %v5950
    %v6266 = vunpack.c.h.b16 %v5951
    %v6267 = vunpack.c.h.b16 %v5952
    %v6268 = vunpack.c.h.b16 %v5953
    %v6269 = vunpack.c.h.b16 %v5954
    %v6270 = vunpack.c.h.b16 %v5955
    %v6271 = vunpack.c.h.b16 %v5956
    %v6272 = vunpack.c.l.b16 %v5957
    %v6273 = vunpack.c.l.b16 %v5958
    %v6274 = vunpack.c.l.b16 %v5959
    %v6275 = vunpack.c.l.b16 %v5960
    %v6276 = vunpack.c.l.b16 %v5961
    %v6277 = vunpack.c.l.b16 %v5962
    %v6278 = vunpack.c.l.b16 %v5963
    %v6279 = vunpack.c.h.b16 %v5957
    %v6280 = vunpack.c.h.b16 %v5958
    %v6281 = vunpack.c.h.b16 %v5959
    %v6282 = vunpack.c.h.b16 %v5960
    %v6283 = vunpack.c.h.b16 %v5961
    %v6284 = vunpack.c.h.b16 %v5962
    %v6285 = vunpack.c.h.b16 %v5963
    %v6286 = vunpack.c.l.b16 %v5964
    %v6287 = vunpack.c.l.b16 %v5965
    %v6288 = vunpack.c.l.b16 %v5966
    %v6289 = vunpack.c.l.b16 %v5967
    %v6290 = vunpack.c.l.b16 %v5968
    %v6291 = vunpack.c.l.b16 %v5969
    %v6292 = vunpack.c.l.b16 %v5970
    %v6293 = vunpack.c.h.b16 %v5964
    %v6294 = vunpack.c.h.b16 %v5965
    %v6295 = vunpack.c.h.b16 %v5966
    %v6296 = vunpack.c.h.b16 %v5967
    %v6297 = vunpack.c.h.b16 %v5968
    %v6298 = vunpack.c.h.b16 %v5969
    %v6299 = vunpack.c.h.b16 %v5970
    %v6300 = vunpack.c.l.b16 %v5971
    %v6301 = vunpack.c.l.b16 %v5972
    %v6302 = vunpack.c.l.b16 %v5973
    %v6303 = vunpack.c.l.b16 %v5974
    %v6304 = vunpack.c.l.b16 %v5975
    %v6305 = vunpack.c.l.b16 %v5976
    %v6306 = vunpack.c.l.b16 %v5977
    %v6307 = vunpack.c.h.b16 %v5971
    %v6308 = vunpack.c.h.b16 %v5972
    %v6309 = vunpack.c.h.b16 %v5973
    %v6310 = vunpack.c.h.b16 %v5974
    %v6311 = vunpack.c.h.b16 %v5975
    %v6312 = vunpack.c.h.b16 %v5976
    %v6313 = vunpack.c.h.b16 %v5977
    %v6314 = vpack.c.b16 %v6091, %v6090
    %v6315 = vpack.c.b16 %v6093, %v6092
    %v6316 = vpack.c.b16 %v6095, %v6094
    %v6317 = vpack.c.b16 %v6096, %v6096
    %v6318 = vpack.c.b16 %v6098, %v6097
    %v6319 = vpack.c.b16 %v6100, %v6099
    %v6320 = vpack.c.b16 %v6102, %v6101
    %v6321 = vpack.c.b16 %v6103, %v6103
    %v6322 = vpack.c.b16 %v6105, %v6104
    %v6323 = vpack.c.b16 %v6107, %v6106
    %v6324 = vpack.c.b16 %v6109, %v6108
    %v6325 = vpack.c.b16 %v6110, %v6110
    %v6326 = vpack.c.b16 %v6112, %v6111
    %v6327 = vpack.c.b16 %v6114, %v6113
    %v6328 = vpack.c.b16 %v6116, %v6115
    %v6329 = vpack.c.b16 %v6117, %v6117
    %v6330 = vpack.c.b16 %v6119, %v6118
    %v6331 = vpack.c.b16 %v6121, %v6120
    %v6332 = vpack.c.b16 %v6123, %v6122
    %v6333 = vpack.c.b16 %v6124, %v6124
    %v6334 = vpack.c.b16 %v6126, %v6125
    %v6335 = vpack.c.b16 %v6128, %v6127
    %v6336 = vpack.c.b16 %v6130, %v6129
    %v6337 = vpack.c.b16 %v6131, %v6131
    %v6338 = vpack.c.b16 %v6133, %v6132
    %v6339 = vpack.c.b16 %v6135, %v6134
    %v6340 = vpack.c.b16 %v6137, %v6136
    %v6341 = vpack.c.b16 %v6138, %v6138
    %v6342 = vpack.c.b16 %v6140, %v6139
    %v6343 = vpack.c.b16 %v6142, %v6141
    %v6344 = vpack.c.b16 %v6144, %v6143
    %v6345 = vpack.c.b16 %v6145, %v6145
    %v6346 = vpack.c.b16 %v6147, %v6146
    %v6347 = vpack.c.b16 %v6149, %v6148
    %v6348 = vpack.c.b16 %v6151, %v6150
    %v6349 = vpack.c.b16 %v6152, %v6152
    %v6350 = vpack.c.b16 %v6154, %v6153
    %v6351 = vpack.c.b16 %v6156, %v6155
    %v6352 = vpack.c.b16 %v6158, %v6157
    %v6353 = vpack.c.b16 %v6159, %v6159
    %v6354 = vpack.c.b16 %v6161, %v6160
    %v6355 = vpack.c.b16 %v6163, %v6162
    %v6356 = vpack.c.b16 %v6165, %v6164
    %v6357 = vpack.c.b16 %v6166, %v6166
    %v6358 = vpack.c.b16 %v6168, %v6167
    %v6359 = vpack.c.b16 %v6170, %v6169
    %v6360 = vpack.c.b16 %v6172, %v6171
    %v6361 = vpack.c.b16 %v6173, %v6173
    %v6362 = vpack.c.b16 %v6175, %v6174
    %v6363 = vpack.c.b16 %v6177, %v6176
    %v6364 = vpack.c.b16 %v6179, %v6178
    %v6365 = vpack.c.b16 %v6180, %v6180
    %v6366 = vpack.c.b16 %v6182, %v6181
    %v6367 = vpack.c.b16 %v6184, %v6183
    %v6368 = vpack.c.b16 %v6186, %v6185
    %v6369 = vpack.c.b16 %v6187, %v6187
    %v6370 = vpack.c.b16 %v6189, %v6188
    %v6371 = vpack.c.b16 %v6191, %v6190
    %v6372 = vpack.c.b16 %v6193, %v6192
    %v6373 = vpack.c.b16 %v6194, %v6194
    %v6374 = vpack.c.b16 %v6196, %v6195
    %v6375 = vpack.c.b16 %v6198, %v6197
    %v6376 = vpack.c.b16 %v6200, %v6199
    %v6377 = vpack.c.b16 %v6201, %v6201
    %v6378 = vpack.c.b16 %v6203, %v6202
    %v6379 = vpack.c.b16 %v6205, %v6204
    %v6380 = vpack.c.b16 %v6207, %v6206
    %v6381 = vpack.c.b16 %v6208, %v6208
    %v6382 = vpack.c.b16 %v6210, %v6209
    %v6383 = vpack.c.b16 %v6212, %v6211
    %v6384 = vpack.c.b16 %v6214, %v6213
    %v6385 = vpack.c.b16 %v6215, %v6215
    %v6386 = vpack.c.b16 %v6217, %v6216
    %v6387 = vpack.c.b16 %v6219, %v6218
    %v6388 = vpack.c.b16 %v6221, %v6220
    %v6389 = vpack.c.b16 %v6222, %v6222
    %v6390 = vpack.c.b16 %v6224, %v6223
    %v6391 = vpack.c.b16 %v6226, %v6225
    %v6392 = vpack.c.b16 %v6228, %v6227
    %v6393 = vpack.c.b16 %v6229, %v6229
    %v6394 = vpack.c.b16 %v6231, %v6230
    %v6395 = vpack.c.b16 %v6233, %v6232
    %v6396 = vpack.c.b16 %v6235, %v6234
    %v6397 = vpack.c.b16 %v6236, %v6236
    %v6398 = vpack.c.b16 %v6238, %v6237
    %v6399 = vpack.c.b16 %v6240, %v6239
    %v6400 = vpack.c.b16 %v6242, %v6241
    %v6401 = vpack.c.b16 %v6243, %v6243
    %v6402 = vpack.c.b16 %v6245, %v6244
    %v6403 = vpack.c.b16 %v6247, %v6246
    %v6404 = vpack.c.b16 %v6249, %v6248
    %v6405 = vpack.c.b16 %v6250, %v6250
    %v6406 = vpack.c.b16 %v6252, %v6251
    %v6407 = vpack.c.b16 %v6254, %v6253
    %v6408 = vpack.c.b16 %v6256, %v6255
    %v6409 = vpack.c.b16 %v6257, %v6257
    %v6410 = vpack.c.b16 %v6259, %v6258
    %v6411 = vpack.c.b16 %v6261, %v6260
    %v6412 = vpack.c.b16 %v6263, %v6262
    %v6413 = vpack.c.b16 %v6264, %v6264
    %v6414 = vpack.c.b16 %v6266, %v6265
    %v6415 = vpack.c.b16 %v6268, %v6267
    %v6416 = vpack.c.b16 %v6270, %v6269
    %v6417 = vpack.c.b16 %v6271, %v6271
    %v6418 = vpack.c.b16 %v6273, %v6272
    %v6419 = vpack.c.b16 %v6275, %v6274
    %v6420 = vpack.c.b16 %v6277, %v6276
    %v6421 = vpack.c.b16 %v6278, %v6278
    %v6422 = vpack.c.b16 %v6280, %v6279
    %v6423 = vpack.c.b16 %v6282, %v6281
    %v6424 = vpack.c.b16 %v6284, %v6283
    %v6425 = vpack.c.b16 %v6285, %v6285
    %v6426 = vpack.c.b16 %v6287, %v6286
    %v6427 = vpack.c.b16 %v6289, %v6288
    %v6428 = vpack.c.b16 %v6291, %v6290
    %v6429 = vpack.c.b16 %v6292, %v6292
    %v6430 = vpack.c.b16 %v6294, %v6293
    %v6431 = vpack.c.b16 %v6296, %v6295
    %v6432 = vpack.c.b16 %v6298, %v6297
    %v6433 = vpack.c.b16 %v6299, %v6299
    %v6434 = vpack.c.b16 %v6301, %v6300
    %v6435 = vpack.c.b16 %v6303, %v6302
    %v6436 = vpack.c.b16 %v6305, %v6304
    %v6437 = vpack.c.b16 %v6306, %v6306
    %v6438 = vpack.c.b16 %v6308, %v6307
    %v6439 = vpack.c.b16 %v6310, %v6309
    %v6440 = vpack.c.b16 %v6312, %v6311
    %v6441 = vpack.c.b16 %v6313, %v6313
    %6570 = vst [vmem:[%s15] sm:$0xff] %v6314
    %6571 = vst [vmem:[%s15 + $0x8] sm:$0xff] %v6315
    %6572 = vst [vmem:[%s15 + $0x10] sm:$0xff] %v6316
    %vm6573 = vcmask 125952
    %6574 = vst.msk [vmem:[%s15 + $0x18] sm:$0xf] %vm6573, %v6317
    %6575 = vst [vmem:[%s15 + $0x1c] sm:$0xff] %v6318
    %6576 = vst [vmem:[%s15 + $0x24] sm:$0xff] %v6319
    %6577 = vst [vmem:[%s15 + $0x2c] sm:$0xff] %v6320
    %6578 = vst.msk [vmem:[%s15 + $0x34] sm:$0xf] %vm6573, %v6321
    %6579 = vst [vmem:[%s15 + $0x38] sm:$0xff] %v6322
    %6580 = vst [vmem:[%s15 + $0x40] sm:$0xff] %v6323
    %6581 = vst [vmem:[%s15 + $0x48] sm:$0xff] %v6324
    %6582 = vst.msk [vmem:[%s15 + $0x50] sm:$0xf] %vm6573, %v6325
    %6583 = vst [vmem:[%s15 + $0x54] sm:$0xff] %v6326
    %6584 = vst [vmem:[%s15 + $0x5c] sm:$0xff] %v6327
    %6585 = vst [vmem:[%s15 + $0x64] sm:$0xff] %v6328
    %6586 = vst.msk [vmem:[%s15 + $0x6c] sm:$0xf] %vm6573, %v6329
    %6587 = vst [vmem:[%s15 + $0x70] sm:$0xff] %v6330
    %6588 = vst [vmem:[%s15 + $0x78] sm:$0xff] %v6331
    %6589 = vst [vmem:[%s15 + $0x80] sm:$0xff] %v6332
    %6590 = vst.msk [vmem:[%s15 + $0x88] sm:$0xf] %vm6573, %v6333
    %6591 = vst [vmem:[%s15 + $0x8c] sm:$0xff] %v6334
    %6592 = vst [vmem:[%s15 + $0x94] sm:$0xff] %v6335
    %6593 = vst [vmem:[%s15 + $0x9c] sm:$0xff] %v6336
    %6594 = vst.msk [vmem:[%s15 + $0xa4] sm:$0xf] %vm6573, %v6337
    %6595 = vst [vmem:[%s15 + $0xa8] sm:$0xff] %v6338
    %6596 = vst [vmem:[%s15 + $0xb0] sm:$0xff] %v6339
    %6597 = vst [vmem:[%s15 + $0xb8] sm:$0xff] %v6340
    %6598 = vst.msk [vmem:[%s15 + $0xc0] sm:$0xf] %vm6573, %v6341
    %6599 = vst [vmem:[%s15 + $0xc4] sm:$0xff] %v6342
    %6600 = vst [vmem:[%s15 + $0xcc] sm:$0xff] %v6343
    %6601 = vst [vmem:[%s15 + $0xd4] sm:$0xff] %v6344
    %6602 = vst.msk [vmem:[%s15 + $0xdc] sm:$0xf] %vm6573, %v6345
    %6603 = vst [vmem:[%s15 + $0xe0] sm:$0xff] %v6346
    %6604 = vst [vmem:[%s15 + $0xe8] sm:$0xff] %v6347
    %6605 = vst [vmem:[%s15 + $0xf0] sm:$0xff] %v6348
    %6606 = vst.msk [vmem:[%s15 + $0xf8] sm:$0xf] %vm6573, %v6349
    %6607 = vst [vmem:[%s15 + $0xfc] sm:$0xff] %v6350
    %6608 = vst [vmem:[%s15 + $0x104] sm:$0xff] %v6351
    %6609 = vst [vmem:[%s15 + $0x10c] sm:$0xff] %v6352
    %6610 = vst.msk [vmem:[%s15 + $0x114] sm:$0xf] %vm6573, %v6353
    %6611 = vst [vmem:[%s15 + $0x118] sm:$0xff] %v6354
    %6612 = vst [vmem:[%s15 + $0x120] sm:$0xff] %v6355
    %6613 = vst [vmem:[%s15 + $0x128] sm:$0xff] %v6356
    %6614 = vst.msk [vmem:[%s15 + $0x130] sm:$0xf] %vm6573, %v6357
    %6615 = vst [vmem:[%s15 + $0x134] sm:$0xff] %v6358
    %6616 = vst [vmem:[%s15 + $0x13c] sm:$0xff] %v6359
    %6617 = vst [vmem:[%s15 + $0x144] sm:$0xff] %v6360
    %6618 = vst.msk [vmem:[%s15 + $0x14c] sm:$0xf] %vm6573, %v6361
    %6619 = vst [vmem:[%s15 + $0x150] sm:$0xff] %v6362
    %6620 = vst [vmem:[%s15 + $0x158] sm:$0xff] %v6363
    %6621 = vst [vmem:[%s15 + $0x160] sm:$0xff] %v6364
    %6622 = vst.msk [vmem:[%s15 + $0x168] sm:$0xf] %vm6573, %v6365
    %6623 = vst [vmem:[%s15 + $0x16c] sm:$0xff] %v6366
    %6624 = vst [vmem:[%s15 + $0x174] sm:$0xff] %v6367
    %6625 = vst [vmem:[%s15 + $0x17c] sm:$0xff] %v6368
    %6626 = vst.msk [vmem:[%s15 + $0x184] sm:$0xf] %vm6573, %v6369
    %6627 = vst [vmem:[%s15 + $0x188] sm:$0xff] %v6370
    %6628 = vst [vmem:[%s15 + $0x190] sm:$0xff] %v6371
    %6629 = vst [vmem:[%s15 + $0x198] sm:$0xff] %v6372
    %6630 = vst.msk [vmem:[%s15 + $0x1a0] sm:$0xf] %vm6573, %v6373
    %6631 = vst [vmem:[%s15 + $0x1a4] sm:$0xff] %v6374
    %6632 = vst [vmem:[%s15 + $0x1ac] sm:$0xff] %v6375
    %6633 = vst [vmem:[%s15 + $0x1b4] sm:$0xff] %v6376
    %6634 = vst.msk [vmem:[%s15 + $0x1bc] sm:$0xf] %vm6573, %v6377
    %6635 = vst [vmem:[%s15 + $0x1c0] sm:$0xff] %v6378
    %6636 = vst [vmem:[%s15 + $0x1c8] sm:$0xff] %v6379
    %6637 = vst [vmem:[%s15 + $0x1d0] sm:$0xff] %v6380
    %6638 = vst.msk [vmem:[%s15 + $0x1d8] sm:$0xf] %vm6573, %v6381
    %6639 = vst [vmem:[%s15 + $0x1dc] sm:$0xff] %v6382
    %6640 = vst [vmem:[%s15 + $0x1e4] sm:$0xff] %v6383
    %6641 = vst [vmem:[%s15 + $0x1ec] sm:$0xff] %v6384
    %6642 = vst.msk [vmem:[%s15 + $0x1f4] sm:$0xf] %vm6573, %v6385
    %6643 = vst [vmem:[%s15 + $0x1f8] sm:$0xff] %v6386
    %6644 = vst [vmem:[%s15 + $0x200] sm:$0xff] %v6387
    %6645 = vst [vmem:[%s15 + $0x208] sm:$0xff] %v6388
    %6646 = vst.msk [vmem:[%s15 + $0x210] sm:$0xf] %vm6573, %v6389
    %6647 = vst [vmem:[%s15 + $0x214] sm:$0xff] %v6390
    %6648 = vst [vmem:[%s15 + $0x21c] sm:$0xff] %v6391
    %6649 = vst [vmem:[%s15 + $0x224] sm:$0xff] %v6392
    %6650 = vst.msk [vmem:[%s15 + $0x22c] sm:$0xf] %vm6573, %v6393
    %6651 = vst [vmem:[%s15 + $0x230] sm:$0xff] %v6394
    %6652 = vst [vmem:[%s15 + $0x238] sm:$0xff] %v6395
    %6653 = vst [vmem:[%s15 + $0x240] sm:$0xff] %v6396
    %6654 = vst.msk [vmem:[%s15 + $0x248] sm:$0xf] %vm6573, %v6397
    %6655 = vst [vmem:[%s15 + $0x24c] sm:$0xff] %v6398
    %6656 = vst [vmem:[%s15 + $0x254] sm:$0xff] %v6399
    %6657 = vst [vmem:[%s15 + $0x25c] sm:$0xff] %v6400
    %6658 = vst.msk [vmem:[%s15 + $0x264] sm:$0xf] %vm6573, %v6401
    %6659 = vst [vmem:[%s15 + $0x268] sm:$0xff] %v6402
    %6660 = vst [vmem:[%s15 + $0x270] sm:$0xff] %v6403
    %6661 = vst [vmem:[%s15 + $0x278] sm:$0xff] %v6404
    %6662 = vst.msk [vmem:[%s15 + $0x280] sm:$0xf] %vm6573, %v6405
    %6663 = vst [vmem:[%s15 + $0x284] sm:$0xff] %v6406
    %6664 = vst [vmem:[%s15 + $0x28c] sm:$0xff] %v6407
    %6665 = vst [vmem:[%s15 + $0x294] sm:$0xff] %v6408
    %6666 = vst.msk [vmem:[%s15 + $0x29c] sm:$0xf] %vm6573, %v6409
    %6667 = vst [vmem:[%s15 + $0x2a0] sm:$0xff] %v6410
    %6668 = vst [vmem:[%s15 + $0x2a8] sm:$0xff] %v6411
    %6669 = vst [vmem:[%s15 + $0x2b0] sm:$0xff] %v6412
    %6670 = vst.msk [vmem:[%s15 + $0x2b8] sm:$0xf] %vm6573, %v6413
    %6671 = vst [vmem:[%s15 + $0x2bc] sm:$0xff] %v6414
    %6672 = vst [vmem:[%s15 + $0x2c4] sm:$0xff] %v6415
    %6673 = vst [vmem:[%s15 + $0x2cc] sm:$0xff] %v6416
    %6674 = vst.msk [vmem:[%s15 + $0x2d4] sm:$0xf] %vm6573, %v6417
    %6675 = vst [vmem:[%s15 + $0x2d8] sm:$0xff] %v6418
    %6676 = vst [vmem:[%s15 + $0x2e0] sm:$0xff] %v6419
    %6677 = vst [vmem:[%s15 + $0x2e8] sm:$0xff] %v6420
    %6678 = vst.msk [vmem:[%s15 + $0x2f0] sm:$0xf] %vm6573, %v6421
    %6679 = vst [vmem:[%s15 + $0x2f4] sm:$0xff] %v6422
    %6680 = vst [vmem:[%s15 + $0x2fc] sm:$0xff] %v6423
    %6681 = vst [vmem:[%s15 + $0x304] sm:$0xff] %v6424
    %6682 = vst.msk [vmem:[%s15 + $0x30c] sm:$0xf] %vm6573, %v6425
    %6683 = vst [vmem:[%s15 + $0x310] sm:$0xff] %v6426
    %6684 = vst [vmem:[%s15 + $0x318] sm:$0xff] %v6427
    %6685 = vst [vmem:[%s15 + $0x320] sm:$0xff] %v6428
    %6686 = vst.msk [vmem:[%s15 + $0x328] sm:$0xf] %vm6573, %v6429
    %6687 = vst [vmem:[%s15 + $0x32c] sm:$0xff] %v6430
    %6688 = vst [vmem:[%s15 + $0x334] sm:$0xff] %v6431
    %6689 = vst [vmem:[%s15 + $0x33c] sm:$0xff] %v6432
    %6690 = vst.msk [vmem:[%s15 + $0x344] sm:$0xf] %vm6573, %v6433
    %6691 = vst [vmem:[%s15 + $0x348] sm:$0xff] %v6434
    %6692 = vst [vmem:[%s15 + $0x350] sm:$0xff] %v6435
    %6693 = vst [vmem:[%s15 + $0x358] sm:$0xff] %v6436
    %6694 = vst.msk [vmem:[%s15 + $0x360] sm:$0xf] %vm6573, %v6437
    %6695 = vst [vmem:[%s15 + $0x364] sm:$0xff] %v6438
    %6696 = vst [vmem:[%s15 + $0x36c] sm:$0xff] %v6439
    %6697 = vst [vmem:[%s15 + $0x374] sm:$0xff] %v6440
    %6698 = vst.msk [vmem:[%s15 + $0x37c] sm:$0xf] %vm6573, %v6441
    // Predicated region
    $region78: #{tpu_custom_call.1} parent=1 // pred_check
      _
    $region79: #{tpu_custom_call.1} parent=1 // pred_check_branch
      %6700 = sbr.rel (0) target = $region81
    $region80: #{tpu_custom_call.1} parent=1 // pred_region
      _
    $region81: #{tpu_custom_call.1} parent=1 // pred_fallthru
      _
    // Predicated region
    $region82: #{tpu_custom_call.1} parent=1 // pred_check
      _
    $region83: #{tpu_custom_call.1} parent=1 // pred_check_branch
      %6702 = sbr.rel (0) target = $region85
    $region84: #{tpu_custom_call.1} parent=1 // pred_region
      _
    $region85: #{tpu_custom_call.1} parent=1 // pred_fallthru
      _
    %6703 = vsyncpa [#allocation5], 1
    %6704 = vsyncpa [#allocation7], 1
    %6705 = vsyncpa [#allocation10], 1
  %6706 = vsyncmov [#allocation3]
  %s6707 = vpop.sfrf %6706
  %p6708 = scmp.eq.s32.totalorder %s6707, 0
  %p6709 = pneg %p6708
  %6711 = shalt.err (%p6709)

</llo_original>
